<compile_context>
chip_gen: v5e
topology: v5e:2x2
jax: 0.10.0
libtpu: 0.0.40
codegen_flags: <defaults>
</compile_context>

<pallas_src>
import functools

import numpy as np
import jax
import jax.numpy as jnp
from jax.experimental import pallas as pl
from jax.experimental.pallas import tpu as pltpu


_COL0 = 8      # sublane-tile-aligned column offset of the image in padded scratches
_EPS = 1e-5    # GroupNorm eps


def _sigmoid(t):
    return 1.0 / (1.0 + jnp.exp(-t))


def _fused_net_kernel(H, W,
                      x_ref, sa_ref,
                      w1_ref, b1_ref, w2_ref, b2_ref,
                      w3_ref, b3_ref, w4_ref, b4_ref,
                      o_ref,
                      xp_in, xp_a, xp_b):
    HW = H * W

    def pad_into(xp, val_hwc):
        # Zero the halo scratch, then drop the (H, W, C) image at row 1 /
        # column _COL0.  _COL0 and W are multiples of 8, so the store lands on
        # whole sublane tiles (no masking / sublane shifting needed).
        xp[...] = jnp.zeros(xp.shape, xp.dtype)
        xp[1:H + 1, _COL0:_COL0 + W, :] = val_hwc

    def conv3x3(xp, w_ref, b_ref, cin, cout):
        # 'same' 3x3 conv as 9 statically-shifted window matmuls on the MXU,
        # accumulated in f32.  Boundary taps read the zero halo.
        acc = jnp.zeros((HW, cout), jnp.float32)
        for kh in range(3):
            for kw in range(3):
                c0 = _COL0 - 1 + kw
                patch = xp[kh:kh + H, c0:c0 + W, :].reshape(HW, cin)
                acc = acc + jnp.dot(patch, w_ref[kh, kw],
                                    preferred_element_type=jnp.float32)
        return acc + b_ref[...]

    # ---- stage 1: merged ms1|pan1 conv (5 -> 64, block-diagonal weight) -----
    pad_into(xp_in, x_ref[0])
    cat1 = conv3x3(xp_in, w1_ref, b1_ref, 5, 64)               # (HW, 64)

    # ---- stage 2: sa_layer(64, groups=32) ------------------------------------
    s = sa_ref[...]                                            # (1, 4) scalars
    saw1, sab1, saw2, sab2 = s[:, 0:1], s[:, 1:2], s[:, 2:3], s[:, 3:4]
    mean_c = jnp.mean(cat1, axis=0, keepdims=True)             # (1, 64)
    var_c = jnp.mean((cat1 - mean_c) ** 2, axis=0, keepdims=True)
    gate_even = _sigmoid(saw1 * mean_c + sab1)                 # avg-pool branch
    vn = (cat1 - mean_c) * jax.lax.rsqrt(var_c + _EPS)         # GroupNorm(1,1)
    gate_odd = _sigmoid(saw2 * vn + sab2)
    lane = jax.lax.broadcasted_iota(jnp.int32, (HW, 64), 1)
    sa = jnp.where(lane % 2 == 0, cat1 * gate_even, cat1 * gate_odd)

    # ---- stage 3: merged ms2|pan2 conv (64 -> 64) ----------------------------
    # channel_shuffle(.,2) + chunk are already folded into w2's Cin axis.
    pad_into(xp_a, sa.reshape(H, W, 64))
    mp = conv3x3(xp_a, w2_ref, b2_ref, 64, 64)                 # (HW, 64)

    # ---- stage 4: _CrossNeuronBlock ------------------------------------------
    m = jnp.mean(mp, axis=0, keepdims=True)                    # (1, 64)
    mrow = jnp.broadcast_to(m, (64, 64))                       # [i, j] = m_j
    mcol = jnp.broadcast_to(m.T, (64, 64))                     # [i, j] = m_i
    score = -((mrow - mcol) ** 2)                              # -(m_j - m_i)^2
    score = score - jnp.max(score, axis=0, keepdims=True)
    e = jnp.exp(score)
    attn = e / jnp.sum(e, axis=0, keepdims=True)               # softmax over i (torch dim=1)
    out = jnp.dot(mp, attn, preferred_element_type=jnp.float32)
    mp = jnp.maximum(mp + 0.1 * out, 0.0)                      # relu(residual + 0.1*out)

    # ---- stage 5: mp1 conv (64 -> 32) ----------------------------------------
    pad_into(xp_a, mp.reshape(H, W, 64))
    mp1 = conv3x3(xp_a, w3_ref, b3_ref, 64, 32)                # (HW, 32)

    # ---- stage 6: mp2 conv (32 -> 4) + store ---------------------------------
    pad_into(xp_b, mp1.reshape(H, W, 32))
    o_ref[0] = conv3x3(xp_b, w4_ref, b4_ref, 32, 4)            # (HW, 4)


def _prepare_fused_weights(p):
    # conv1: block-diagonal merge of ms1 (4->32) and pan1 (1->32) -> (3,3,5,64).
    w1 = jnp.zeros((3, 3, 5, 64), jnp.float32)
    w1 = w1.at[:, :, 0:4, 0:32].set(p['ms1_w'])
    w1 = w1.at[:, :, 4:5, 32:64].set(p['pan1_w'])
    b1 = jnp.concatenate([p['ms1_b'], p['pan1_b']]).reshape(1, 64)

    # channel_shuffle(.,2) + chunk folded into the Cin axis of the merged
    # block-diagonal ms2|pan2 weight: shuffled[n] = sa_out[perm[n]].
    idx = np.arange(64)
    perm = np.where(idx % 2 == 0, idx // 2, 32 + idx // 2)
    w2 = jnp.zeros((3, 3, 64, 64), jnp.float32)
    w2 = w2.at[:, :, perm[:32], 0:32].set(p['ms2_w'])          # feeds ms2 outputs 0..31
    w2 = w2.at[:, :, perm[32:], 32:64].set(p['pan2_w'])        # feeds pan2 outputs 32..63
    b2 = jnp.concatenate([p['ms2_b'], p['pan2_b']]).reshape(1, 64)

    w3 = p['mp1_w']
    b3 = p['mp1_b'].reshape(1, 32)
    w4 = p['mp2_w']
    b4 = p['mp2_b'].reshape(1, 4)
    return w1, b1, w2, b2, w3, b3, w4, b4


def net_forward_nhwc(ms, pan, p):
    B, H, W, _ = ms.shape
    HW = H * W
    Wp = W + 2 * _COL0                                         # padded scratch width
    x_in = jnp.concatenate([ms, pan], axis=-1)                 # (B, H, W, 5) network input
    w1, b1, w2, b2, w3, b3, w4, b4 = _prepare_fused_weights(p)

    kernel = functools.partial(_fused_net_kernel, H, W)
    out_flat = pl.pallas_call(
        kernel,
        out_shape=jax.ShapeDtypeStruct((B, HW, 4), jnp.float32),
        grid=(B,),
        in_specs=[
            pl.BlockSpec((1, H, W, 5), lambda b: (b, 0, 0, 0)),
            pl.BlockSpec((1, 4), lambda b: (0, 0)),
            pl.BlockSpec((3, 3, 5, 64), lambda b: (0, 0, 0, 0)),
            pl.BlockSpec((1, 64), lambda b: (0, 0)),
            pl.BlockSpec((3, 3, 64, 64), lambda b: (0, 0, 0, 0)),
            pl.BlockSpec((1, 64), lambda b: (0, 0)),
            pl.BlockSpec((3, 3, 64, 32), lambda b: (0, 0, 0, 0)),
            pl.BlockSpec((1, 32), lambda b: (0, 0)),
            pl.BlockSpec((3, 3, 32, 4), lambda b: (0, 0, 0, 0)),
            pl.BlockSpec((1, 4), lambda b: (0, 0)),
        ],
        out_specs=pl.BlockSpec((1, HW, 4), lambda b: (b, 0, 0)),
        scratch_shapes=[
            pltpu.VMEM((H + 2, Wp, 5), jnp.float32),
            pltpu.VMEM((H + 2, Wp, 64), jnp.float32),
            pltpu.VMEM((H + 2, Wp, 32), jnp.float32),
        ],
        compiler_params=pltpu.CompilerParams(
            dimension_semantics=("parallel",)),
    )(x_in, p['sa'], w1, b1, w2, b2, w3, b3, w4, b4)
    return out_flat.reshape(B, H, W, 4)


@jax.jit
def net_forward(ms_nchw, pan_nchw, p):
    ms = jnp.transpose(ms_nchw, (0, 2, 3, 1))
    pan = jnp.transpose(pan_nchw, (0, 2, 3, 1))
    out = net_forward_nhwc(ms, pan, p)
    return jnp.transpose(out, (0, 3, 1, 2))                    # (B, 4, H, W)


def init_params(key):
    def init_conv(k, cin, cout):
        kw_, kb_ = jax.random.split(k)
        bound = 1.0 / float((3 * 3 * cin) ** 0.5)
        w = jax.random.uniform(kw_, (3, 3, cin, cout), jnp.float32, -bound, bound)
        b = jax.random.uniform(kb_, (cout,), jnp.float32, -bound, bound)
        return w, b

    ks = jax.random.split(key, 7)
    p = {}
    p['ms1_w'], p['ms1_b'] = init_conv(ks[0], 4, 32)
    p['pan1_w'], p['pan1_b'] = init_conv(ks[1], 1, 32)
    p['ms2_w'], p['ms2_b'] = init_conv(ks[2], 32, 32)
    p['pan2_w'], p['pan2_b'] = init_conv(ks[3], 32, 32)
    p['mp1_w'], p['mp1_b'] = init_conv(ks[4], 64, 32)
    p['mp2_w'], p['mp2_b'] = init_conv(ks[5], 32, 4)
    # sa_layer's two 1x1 convs are 1->1 channel => one scalar weight/bias each
    # (fan_in = 1 => U(-1, 1)).  Packed as [w1, b1, w2, b2].
    p['sa'] = jax.random.uniform(ks[6], (1, 4), jnp.float32, -1.0, 1.0)
    return p


if __name__ == "__main__":
    key = jax.random.PRNGKey(0)
    k_params, k_ms, k_pan = jax.random.split(key, 3)

    params = init_params(k_params)

    B, H, W = 2, 16, 16
    # Example inputs in PyTorch NCHW convention.
    ms_nchw = jax.random.normal(k_ms, (B, 4, H, W), jnp.float32)
    pan_nchw = jax.random.normal(k_pan, (B, 1, H, W), jnp.float32)

    out = net_forward(ms_nchw, pan_nchw, params)               # (B, 4, H, W)
    jax.block_until_ready(out)

    assert out.shape == (B, 4, H, W)
    print("KERNEL_OK")
</pallas_src>

<mosaic_0001>
module attributes {stable_mosaic.version = 11 : i64} {
  func.func @_fused_net_kernel(%arg0: i32, %arg1: memref<1x16x16x5xf32, #tpu.memory_space<vmem>>, %arg2: memref<1x4xf32, #tpu.memory_space<vmem>>, %arg3: memref<3x3x5x64xf32, #tpu.memory_space<vmem>>, %arg4: memref<1x64xf32, #tpu.memory_space<vmem>>, %arg5: memref<3x3x64x64xf32, #tpu.memory_space<vmem>>, %arg6: memref<1x64xf32, #tpu.memory_space<vmem>>, %arg7: memref<3x3x64x32xf32, #tpu.memory_space<vmem>>, %arg8: memref<1x32xf32, #tpu.memory_space<vmem>>, %arg9: memref<3x3x32x4xf32, #tpu.memory_space<vmem>>, %arg10: memref<1x4xf32, #tpu.memory_space<vmem>>, %arg11: memref<1x256x4xf32, #tpu.memory_space<vmem>>, %arg12: memref<18x32x5xf32, #tpu.memory_space<vmem>>, %arg13: memref<18x32x64xf32, #tpu.memory_space<vmem>>, %arg14: memref<18x32x32xf32, #tpu.memory_space<vmem>>) attributes {dimension_semantics = [#tpu.dimension_semantics<parallel>], iteration_bounds = array<i64: 2>, scalar_prefetch = 0 : i64, scratch_operands = 3 : i64, tpu.core_type = #tpu.core_type<tc>, window_params = [{transform_indices = @transform_0, window_bounds = array<i64: 1, 16, 16, 5>}, {pipeline_mode = #tpu.pipeline_mode<synchronous>, transform_indices = @transform_1, window_bounds = array<i64: 1, 4>}, {pipeline_mode = #tpu.pipeline_mode<synchronous>, transform_indices = @transform_2, window_bounds = array<i64: 3, 3, 5, 64>}, {pipeline_mode = #tpu.pipeline_mode<synchronous>, transform_indices = @transform_3, window_bounds = array<i64: 1, 64>}, {pipeline_mode = #tpu.pipeline_mode<synchronous>, transform_indices = @transform_4, window_bounds = array<i64: 3, 3, 64, 64>}, {pipeline_mode = #tpu.pipeline_mode<synchronous>, transform_indices = @transform_5, window_bounds = array<i64: 1, 64>}, {pipeline_mode = #tpu.pipeline_mode<synchronous>, transform_indices = @transform_6, window_bounds = array<i64: 3, 3, 64, 32>}, {pipeline_mode = #tpu.pipeline_mode<synchronous>, transform_indices = @transform_7, window_bounds = array<i64: 1, 32>}, {pipeline_mode = #tpu.pipeline_mode<synchronous>, transform_indices = @transform_8, window_bounds = array<i64: 3, 3, 32, 4>}, {pipeline_mode = #tpu.pipeline_mode<synchronous>, transform_indices = @transform_9, window_bounds = array<i64: 1, 4>}, {transform_indices = @transform_10, window_bounds = array<i64: 1, 256, 4>}]} {
    %c0 = arith.constant 0 : index
    %c0_0 = arith.constant 0 : index
    %c0_1 = arith.constant 0 : index
    %c0_2 = arith.constant 0 : index
    %0 = vector.load %arg1[%c0, %c0_0, %c0_1, %c0_2] : memref<1x16x16x5xf32, #tpu.memory_space<vmem>>, vector<1x16x16x5xf32>
    %1 = vector.shape_cast %0 : vector<1x16x16x5xf32> to vector<16x16x5xf32>
    %cst = arith.constant 0.000000e+00 : f32
    %2 = vector.broadcast %cst : f32 to vector<18x32x5xf32>
    %c0_3 = arith.constant 0 : index
    %c0_4 = arith.constant 0 : index
    %c0_5 = arith.constant 0 : index
    %3 = vector.load %arg12[%c0_3, %c0_4, %c0_5] : memref<18x32x5xf32, #tpu.memory_space<vmem>>, vector<18x32x5xf32>
    tpu.vector_store %arg12[%c0_3, %c0_4, %c0_5], %2 {strides = array<i32>} : memref<18x32x5xf32, #tpu.memory_space<vmem>>, vector<18x32x5xf32>,
    %c1 = arith.constant 1 : index
    %c8 = arith.constant 8 : index
    %c0_6 = arith.constant 0 : index
    %4 = vector.load %arg12[%c1, %c8, %c0_6] : memref<18x32x5xf32, #tpu.memory_space<vmem>>, vector<16x16x5xf32>
    tpu.vector_store %arg12[%c1, %c8, %c0_6], %1 {strides = array<i32>} : memref<18x32x5xf32, #tpu.memory_space<vmem>>, vector<16x16x5xf32>,
    %cst_7 = arith.constant 0.000000e+00 : f32
    %5 = vector.broadcast %cst_7 : f32 to vector<256x64xf32>
    %c0_8 = arith.constant 0 : index
    %c7 = arith.constant 7 : index
    %c0_9 = arith.constant 0 : index
    %6 = vector.load %arg12[%c0_8, %c7, %c0_9] : memref<18x32x5xf32, #tpu.memory_space<vmem>>, vector<16x16x5xf32>
    %7 = vector.shape_cast %6 : vector<16x16x5xf32> to vector<256x5xf32>
    %c0_10 = arith.constant 0 : index
    %c0_11 = arith.constant 0 : index
    %c0_12 = arith.constant 0 : index
    %c0_13 = arith.constant 0 : index
    %8 = vector.load %arg3[%c0_10, %c0_11, %c0_12, %c0_13] : memref<3x3x5x64xf32, #tpu.memory_space<vmem>>, vector<1x1x5x64xf32>
    %9 = vector.shape_cast %8 : vector<1x1x5x64xf32> to vector<5x64xf32>
    %cst_14 = arith.constant dense<0.000000e+00> : vector<256x64xf32>
    %10 = tpu.matmul %7, %9, %cst_14 {dimension_numbers = #tpu.dot_dimension_numbers<[1], [0], [0], [1], [0, 0, 1, 1], [], []>} : vector<256x5xf32>, vector<5x64xf32>, vector<256x64xf32> -> vector<256x64xf32>
    %11 = arith.addf %5, %10 : vector<256x64xf32>
    %c0_15 = arith.constant 0 : index
    %c8_16 = arith.constant 8 : index
    %c0_17 = arith.constant 0 : index
    %12 = vector.load %arg12[%c0_15, %c8_16, %c0_17] : memref<18x32x5xf32, #tpu.memory_space<vmem>>, vector<16x16x5xf32>
    %13 = vector.shape_cast %12 : vector<16x16x5xf32> to vector<256x5xf32>
    %c0_18 = arith.constant 0 : index
    %c1_19 = arith.constant 1 : index
    %c0_20 = arith.constant 0 : index
    %c0_21 = arith.constant 0 : index
    %14 = vector.load %arg3[%c0_18, %c1_19, %c0_20, %c0_21] : memref<3x3x5x64xf32, #tpu.memory_space<vmem>>, vector<1x1x5x64xf32>
    %15 = vector.shape_cast %14 : vector<1x1x5x64xf32> to vector<5x64xf32>
    %cst_22 = arith.constant dense<0.000000e+00> : vector<256x64xf32>
    %16 = tpu.matmul %13, %15, %cst_22 {dimension_numbers = #tpu.dot_dimension_numbers<[1], [0], [0], [1], [0, 0, 1, 1], [], []>} : vector<256x5xf32>, vector<5x64xf32>, vector<256x64xf32> -> vector<256x64xf32>
    %17 = arith.addf %11, %16 : vector<256x64xf32>
    %c0_23 = arith.constant 0 : index
    %c9 = arith.constant 9 : index
    %c0_24 = arith.constant 0 : index
    %18 = vector.load %arg12[%c0_23, %c9, %c0_24] : memref<18x32x5xf32, #tpu.memory_space<vmem>>, vector<16x16x5xf32>
    %19 = vector.shape_cast %18 : vector<16x16x5xf32> to vector<256x5xf32>
    %c0_25 = arith.constant 0 : index
    %c2 = arith.constant 2 : index
    %c0_26 = arith.constant 0 : index
    %c0_27 = arith.constant 0 : index
    %20 = vector.load %arg3[%c0_25, %c2, %c0_26, %c0_27] : memref<3x3x5x64xf32, #tpu.memory_space<vmem>>, vector<1x1x5x64xf32>
    %21 = vector.shape_cast %20 : vector<1x1x5x64xf32> to vector<5x64xf32>
    %cst_28 = arith.constant dense<0.000000e+00> : vector<256x64xf32>
    %22 = tpu.matmul %19, %21, %cst_28 {dimension_numbers = #tpu.dot_dimension_numbers<[1], [0], [0], [1], [0, 0, 1, 1], [], []>} : vector<256x5xf32>, vector<5x64xf32>, vector<256x64xf32> -> vector<256x64xf32>
    %23 = arith.addf %17, %22 : vector<256x64xf32>
    %c1_29 = arith.constant 1 : index
    %c7_30 = arith.constant 7 : index
    %c0_31 = arith.constant 0 : index
    %24 = vector.load %arg12[%c1_29, %c7_30, %c0_31] : memref<18x32x5xf32, #tpu.memory_space<vmem>>, vector<16x16x5xf32>
    %25 = vector.shape_cast %24 : vector<16x16x5xf32> to vector<256x5xf32>
    %c1_32 = arith.constant 1 : index
    %c0_33 = arith.constant 0 : index
    %c0_34 = arith.constant 0 : index
    %c0_35 = arith.constant 0 : index
    %26 = vector.load %arg3[%c1_32, %c0_33, %c0_34, %c0_35] : memref<3x3x5x64xf32, #tpu.memory_space<vmem>>, vector<1x1x5x64xf32>
    %27 = vector.shape_cast %26 : vector<1x1x5x64xf32> to vector<5x64xf32>
    %cst_36 = arith.constant dense<0.000000e+00> : vector<256x64xf32>
    %28 = tpu.matmul %25, %27, %cst_36 {dimension_numbers = #tpu.dot_dimension_numbers<[1], [0], [0], [1], [0, 0, 1, 1], [], []>} : vector<256x5xf32>, vector<5x64xf32>, vector<256x64xf32> -> vector<256x64xf32>
    %29 = arith.addf %23, %28 : vector<256x64xf32>
    %c1_37 = arith.constant 1 : index
    %c8_38 = arith.constant 8 : index
    %c0_39 = arith.constant 0 : index
    %30 = vector.load %arg12[%c1_37, %c8_38, %c0_39] : memref<18x32x5xf32, #tpu.memory_space<vmem>>, vector<16x16x5xf32>
    %31 = vector.shape_cast %30 : vector<16x16x5xf32> to vector<256x5xf32>
    %c1_40 = arith.constant 1 : index
    %c1_41 = arith.constant 1 : index
    %c0_42 = arith.constant 0 : index
    %c0_43 = arith.constant 0 : index
    %32 = vector.load %arg3[%c1_40, %c1_41, %c0_42, %c0_43] : memref<3x3x5x64xf32, #tpu.memory_space<vmem>>, vector<1x1x5x64xf32>
    %33 = vector.shape_cast %32 : vector<1x1x5x64xf32> to vector<5x64xf32>
    %cst_44 = arith.constant dense<0.000000e+00> : vector<256x64xf32>
    %34 = tpu.matmul %31, %33, %cst_44 {dimension_numbers = #tpu.dot_dimension_numbers<[1], [0], [0], [1], [0, 0, 1, 1], [], []>} : vector<256x5xf32>, vector<5x64xf32>, vector<256x64xf32> -> vector<256x64xf32>
    %35 = arith.addf %29, %34 : vector<256x64xf32>
    %c1_45 = arith.constant 1 : index
    %c9_46 = arith.constant 9 : index
    %c0_47 = arith.constant 0 : index
    %36 = vector.load %arg12[%c1_45, %c9_46, %c0_47] : memref<18x32x5xf32, #tpu.memory_space<vmem>>, vector<16x16x5xf32>
    %37 = vector.shape_cast %36 : vector<16x16x5xf32> to vector<256x5xf32>
    %c1_48 = arith.constant 1 : index
    %c2_49 = arith.constant 2 : index
    %c0_50 = arith.constant 0 : index
    %c0_51 = arith.constant 0 : index
    %38 = vector.load %arg3[%c1_48, %c2_49, %c0_50, %c0_51] : memref<3x3x5x64xf32, #tpu.memory_space<vmem>>, vector<1x1x5x64xf32>
    %39 = vector.shape_cast %38 : vector<1x1x5x64xf32> to vector<5x64xf32>
    %cst_52 = arith.constant dense<0.000000e+00> : vector<256x64xf32>
    %40 = tpu.matmul %37, %39, %cst_52 {dimension_numbers = #tpu.dot_dimension_numbers<[1], [0], [0], [1], [0, 0, 1, 1], [], []>} : vector<256x5xf32>, vector<5x64xf32>, vector<256x64xf32> -> vector<256x64xf32>
    %41 = arith.addf %35, %40 : vector<256x64xf32>
    %c2_53 = arith.constant 2 : index
    %c7_54 = arith.constant 7 : index
    %c0_55 = arith.constant 0 : index
    %42 = vector.load %arg12[%c2_53, %c7_54, %c0_55] : memref<18x32x5xf32, #tpu.memory_space<vmem>>, vector<16x16x5xf32>
    %43 = vector.shape_cast %42 : vector<16x16x5xf32> to vector<256x5xf32>
    %c2_56 = arith.constant 2 : index
    %c0_57 = arith.constant 0 : index
    %c0_58 = arith.constant 0 : index
    %c0_59 = arith.constant 0 : index
    %44 = vector.load %arg3[%c2_56, %c0_57, %c0_58, %c0_59] : memref<3x3x5x64xf32, #tpu.memory_space<vmem>>, vector<1x1x5x64xf32>
    %45 = vector.shape_cast %44 : vector<1x1x5x64xf32> to vector<5x64xf32>
    %cst_60 = arith.constant dense<0.000000e+00> : vector<256x64xf32>
    %46 = tpu.matmul %43, %45, %cst_60 {dimension_numbers = #tpu.dot_dimension_numbers<[1], [0], [0], [1], [0, 0, 1, 1], [], []>} : vector<256x5xf32>, vector<5x64xf32>, vector<256x64xf32> -> vector<256x64xf32>
    %47 = arith.addf %41, %46 : vector<256x64xf32>
    %c2_61 = arith.constant 2 : index
    %c8_62 = arith.constant 8 : index
    %c0_63 = arith.constant 0 : index
    %48 = vector.load %arg12[%c2_61, %c8_62, %c0_63] : memref<18x32x5xf32, #tpu.memory_space<vmem>>, vector<16x16x5xf32>
    %49 = vector.shape_cast %48 : vector<16x16x5xf32> to vector<256x5xf32>
    %c2_64 = arith.constant 2 : index
    %c1_65 = arith.constant 1 : index
    %c0_66 = arith.constant 0 : index
    %c0_67 = arith.constant 0 : index
    %50 = vector.load %arg3[%c2_64, %c1_65, %c0_66, %c0_67] : memref<3x3x5x64xf32, #tpu.memory_space<vmem>>, vector<1x1x5x64xf32>
    %51 = vector.shape_cast %50 : vector<1x1x5x64xf32> to vector<5x64xf32>
    %cst_68 = arith.constant dense<0.000000e+00> : vector<256x64xf32>
    %52 = tpu.matmul %49, %51, %cst_68 {dimension_numbers = #tpu.dot_dimension_numbers<[1], [0], [0], [1], [0, 0, 1, 1], [], []>} : vector<256x5xf32>, vector<5x64xf32>, vector<256x64xf32> -> vector<256x64xf32>
    %53 = arith.addf %47, %52 : vector<256x64xf32>
    %c2_69 = arith.constant 2 : index
    %c9_70 = arith.constant 9 : index
    %c0_71 = arith.constant 0 : index
    %54 = vector.load %arg12[%c2_69, %c9_70, %c0_71] : memref<18x32x5xf32, #tpu.memory_space<vmem>>, vector<16x16x5xf32>
    %55 = vector.shape_cast %54 : vector<16x16x5xf32> to vector<256x5xf32>
    %c2_72 = arith.constant 2 : index
    %c2_73 = arith.constant 2 : index
    %c0_74 = arith.constant 0 : index
    %c0_75 = arith.constant 0 : index
    %56 = vector.load %arg3[%c2_72, %c2_73, %c0_74, %c0_75] : memref<3x3x5x64xf32, #tpu.memory_space<vmem>>, vector<1x1x5x64xf32>
    %57 = vector.shape_cast %56 : vector<1x1x5x64xf32> to vector<5x64xf32>
    %cst_76 = arith.constant dense<0.000000e+00> : vector<256x64xf32>
    %58 = tpu.matmul %55, %57, %cst_76 {dimension_numbers = #tpu.dot_dimension_numbers<[1], [0], [0], [1], [0, 0, 1, 1], [], []>} : vector<256x5xf32>, vector<5x64xf32>, vector<256x64xf32> -> vector<256x64xf32>
    %59 = arith.addf %53, %58 : vector<256x64xf32>
    %c0_77 = arith.constant 0 : index
    %c0_78 = arith.constant 0 : index
    %60 = vector.load %arg4[%c0_77, %c0_78] : memref<1x64xf32, #tpu.memory_space<vmem>>, vector<1x64xf32>
    %61 = vector.broadcast %60 : vector<1x64xf32> to vector<256x64xf32>
    %62 = arith.addf %59, %61 : vector<256x64xf32>
    %c0_79 = arith.constant 0 : index
    %c0_80 = arith.constant 0 : index
    %63 = vector.load %arg2[%c0_79, %c0_80] : memref<1x4xf32, #tpu.memory_space<vmem>>, vector<1x4xf32>
    %64 = vector.extract_strided_slice %63 {offsets = [0, 0], sizes = [1, 1], strides = [1, 1]} : vector<1x4xf32> to vector<1x1xf32>
    %65 = vector.extract_strided_slice %63 {offsets = [0, 1], sizes = [1, 1], strides = [1, 1]} : vector<1x4xf32> to vector<1x1xf32>
    %66 = vector.extract_strided_slice %63 {offsets = [0, 2], sizes = [1, 1], strides = [1, 1]} : vector<1x4xf32> to vector<1x1xf32>
    %67 = vector.extract_strided_slice %63 {offsets = [0, 3], sizes = [1, 1], strides = [1, 1]} : vector<1x4xf32> to vector<1x1xf32>
    %cst_81 = arith.constant dense<0.000000e+00> : vector<64xf32>
    %68 = vector.multi_reduction <add>, %62, %cst_81 [0] : vector<256x64xf32> to vector<64xf32>
    %69 = vector.shape_cast %68 : vector<64xf32> to vector<1x64xf32>
    %cst_82 = arith.constant 2.560000e+02 : f32
    %70 = vector.broadcast %cst_82 : f32 to vector<1x64xf32>
    %71 = arith.divf %69, %70 : vector<1x64xf32>
    %72 = vector.broadcast %71 : vector<1x64xf32> to vector<256x64xf32>
    %73 = arith.subf %62, %72 : vector<256x64xf32>
    %74 = arith.mulf %73, %73 : vector<256x64xf32>
    %cst_83 = arith.constant dense<0.000000e+00> : vector<64xf32>
    %75 = vector.multi_reduction <add>, %74, %cst_83 [0] : vector<256x64xf32> to vector<64xf32>
    %76 = vector.shape_cast %75 : vector<64xf32> to vector<1x64xf32>
    %cst_84 = arith.constant 2.560000e+02 : f32
    %77 = vector.broadcast %cst_84 : f32 to vector<1x64xf32>
    %78 = arith.divf %76, %77 : vector<1x64xf32>
    %79 = vector.broadcast %64 : vector<1x1xf32> to vector<1x64xf32>
    %80 = arith.mulf %79, %71 : vector<1x64xf32>
    %81 = vector.broadcast %65 : vector<1x1xf32> to vector<1x64xf32>
    %82 = arith.addf %80, %81 : vector<1x64xf32>
    %cst_85 = arith.constant 0.000000e+00 : f32
    %83 = vector.broadcast %cst_85 : f32 to vector<1x64xf32>
    %84 = arith.subf %83, %82 : vector<1x64xf32>
    %85 = math.exp %84 : vector<1x64xf32>
    %cst_86 = arith.constant 1.000000e+00 : f32
    %86 = vector.broadcast %cst_86 : f32 to vector<1x64xf32>
    %87 = arith.addf %86, %85 : vector<1x64xf32>
    %cst_87 = arith.constant 1.000000e+00 : f32
    %88 = vector.broadcast %cst_87 : f32 to vector<1x64xf32>
    %89 = arith.divf %88, %87 : vector<1x64xf32>
    %90 = vector.broadcast %71 : vector<1x64xf32> to vector<256x64xf32>
    %91 = arith.subf %62, %90 : vector<256x64xf32>
    %cst_88 = arith.constant 9.99999974E-6 : f32
    %92 = vector.broadcast %cst_88 : f32 to vector<1x64xf32>
    %93 = arith.addf %78, %92 : vector<1x64xf32>
    %94 = math.rsqrt %93 : vector<1x64xf32>
    %95 = vector.broadcast %94 : vector<1x64xf32> to vector<256x64xf32>
    %96 = arith.mulf %91, %95 : vector<256x64xf32>
    %97 = vector.broadcast %66 : vector<1x1xf32> to vector<256x64xf32>
    %98 = arith.mulf %97, %96 : vector<256x64xf32>
    %99 = vector.broadcast %67 : vector<1x1xf32> to vector<256x64xf32>
    %100 = arith.addf %98, %99 : vector<256x64xf32>
    %cst_89 = arith.constant 0.000000e+00 : f32
    %101 = vector.broadcast %cst_89 : f32 to vector<256x64xf32>
    %102 = arith.subf %101, %100 : vector<256x64xf32>
    %103 = math.exp %102 : vector<256x64xf32>
    %cst_90 = arith.constant 1.000000e+00 : f32
    %104 = vector.broadcast %cst_90 : f32 to vector<256x64xf32>
    %105 = arith.addf %104, %103 : vector<256x64xf32>
    %cst_91 = arith.constant 1.000000e+00 : f32
    %106 = vector.broadcast %cst_91 : f32 to vector<256x64xf32>
    %107 = arith.divf %106, %105 : vector<256x64xf32>
    %108 = tpu.iota {dimensions = array<i32: 1>} : vector<256x64xi32>
    %c2_i32 = arith.constant 2 : i32
    %c0_i32 = arith.constant 0 : i32
    %109 = arith.cmpi eq, %c2_i32, %c0_i32 : i32
    %c1_i32 = arith.constant 1 : i32
    %110 = arith.select %109, %c1_i32, %c2_i32 : i32
    %111 = vector.broadcast %110 : i32 to vector<256x64xi32>
    %112 = arith.remsi %108, %111 : vector<256x64xi32>
    %c0_i32_92 = arith.constant 0 : i32
    %113 = vector.broadcast %c0_i32_92 : i32 to vector<256x64xi32>
    %114 = arith.cmpi ne, %112, %113 : vector<256x64xi32>
    %c0_i32_93 = arith.constant 0 : i32
    %115 = vector.broadcast %c0_i32_93 : i32 to vector<256x64xi32>
    %116 = arith.cmpi slt, %112, %115 : vector<256x64xi32>
    %c0_i32_94 = arith.constant 0 : i32
    %117 = arith.cmpi slt, %110, %c0_i32_94 : i32
    %118 = vector.broadcast %117 : i1 to vector<256x64xi1>
    %119 = vector.broadcast %118 : vector<256x64xi1> to vector<256x64xi1>
    %120 = arith.xori %116, %119 : vector<256x64xi1>
    %121 = arith.andi %120, %114 : vector<256x64xi1>
    %122 = vector.broadcast %110 : i32 to vector<256x64xi32>
    %123 = arith.addi %112, %122 : vector<256x64xi32>
    %124 = arith.select %121, %123, %112 : vector<256x64xi1>, vector<256x64xi32>
    %c0_i32_95 = arith.constant 0 : i32
    %125 = vector.broadcast %c0_i32_95 : i32 to vector<256x64xi32>
    %126 = arith.cmpi eq, %124, %125 : vector<256x64xi32>
    %127 = vector.broadcast %89 : vector<1x64xf32> to vector<256x64xf32>
    %128 = arith.mulf %62, %127 : vector<256x64xf32>
    %129 = arith.mulf %62, %107 : vector<256x64xf32>
    %130 = arith.select %126, %128, %129 : vector<256x64xi1>, vector<256x64xf32>
    %131 = vector.shape_cast %130 : vector<256x64xf32> to vector<16x16x64xf32>
    %cst_96 = arith.constant 0.000000e+00 : f32
    %132 = vector.broadcast %cst_96 : f32 to vector<18x32x64xf32>
    %c0_97 = arith.constant 0 : index
    %c0_98 = arith.constant 0 : index
    %c0_99 = arith.constant 0 : index
    %133 = vector.load %arg13[%c0_97, %c0_98, %c0_99] : memref<18x32x64xf32, #tpu.memory_space<vmem>>, vector<18x32x64xf32>
    tpu.vector_store %arg13[%c0_97, %c0_98, %c0_99], %132 {strides = array<i32>} : memref<18x32x64xf32, #tpu.memory_space<vmem>>, vector<18x32x64xf32>,
    %c1_100 = arith.constant 1 : index
    %c8_101 = arith.constant 8 : index
    %c0_102 = arith.constant 0 : index
    %134 = vector.load %arg13[%c1_100, %c8_101, %c0_102] : memref<18x32x64xf32, #tpu.memory_space<vmem>>, vector<16x16x64xf32>
    tpu.vector_store %arg13[%c1_100, %c8_101, %c0_102], %131 {strides = array<i32>} : memref<18x32x64xf32, #tpu.memory_space<vmem>>, vector<16x16x64xf32>,
    %cst_103 = arith.constant 0.000000e+00 : f32
    %135 = vector.broadcast %cst_103 : f32 to vector<256x64xf32>
    %c0_104 = arith.constant 0 : index
    %c7_105 = arith.constant 7 : index
    %c0_106 = arith.constant 0 : index
    %136 = vector.load %arg13[%c0_104, %c7_105, %c0_106] : memref<18x32x64xf32, #tpu.memory_space<vmem>>, vector<16x16x64xf32>
    %137 = vector.shape_cast %136 : vector<16x16x64xf32> to vector<256x64xf32>
    %c0_107 = arith.constant 0 : index
    %c0_108 = arith.constant 0 : index
    %c0_109 = arith.constant 0 : index
    %c0_110 = arith.constant 0 : index
    %138 = vector.load %arg5[%c0_107, %c0_108, %c0_109, %c0_110] : memref<3x3x64x64xf32, #tpu.memory_space<vmem>>, vector<1x1x64x64xf32>
    %139 = vector.shape_cast %138 : vector<1x1x64x64xf32> to vector<64x64xf32>
    %cst_111 = arith.constant dense<0.000000e+00> : vector<256x64xf32>
    %140 = tpu.matmul %137, %139, %cst_111 {dimension_numbers = #tpu.dot_dimension_numbers<[1], [0], [0], [1], [0, 0, 1, 1], [], []>} : vector<256x64xf32>, vector<64x64xf32>, vector<256x64xf32> -> vector<256x64xf32>
    %141 = arith.addf %135, %140 : vector<256x64xf32>
    %c0_112 = arith.constant 0 : index
    %c8_113 = arith.constant 8 : index
    %c0_114 = arith.constant 0 : index
    %142 = vector.load %arg13[%c0_112, %c8_113, %c0_114] : memref<18x32x64xf32, #tpu.memory_space<vmem>>, vector<16x16x64xf32>
    %143 = vector.shape_cast %142 : vector<16x16x64xf32> to vector<256x64xf32>
    %c0_115 = arith.constant 0 : index
    %c1_116 = arith.constant 1 : index
    %c0_117 = arith.constant 0 : index
    %c0_118 = arith.constant 0 : index
    %144 = vector.load %arg5[%c0_115, %c1_116, %c0_117, %c0_118] : memref<3x3x64x64xf32, #tpu.memory_space<vmem>>, vector<1x1x64x64xf32>
    %145 = vector.shape_cast %144 : vector<1x1x64x64xf32> to vector<64x64xf32>
    %cst_119 = arith.constant dense<0.000000e+00> : vector<256x64xf32>
    %146 = tpu.matmul %143, %145, %cst_119 {dimension_numbers = #tpu.dot_dimension_numbers<[1], [0], [0], [1], [0, 0, 1, 1], [], []>} : vector<256x64xf32>, vector<64x64xf32>, vector<256x64xf32> -> vector<256x64xf32>
    %147 = arith.addf %141, %146 : vector<256x64xf32>
    %c0_120 = arith.constant 0 : index
    %c9_121 = arith.constant 9 : index
    %c0_122 = arith.constant 0 : index
    %148 = vector.load %arg13[%c0_120, %c9_121, %c0_122] : memref<18x32x64xf32, #tpu.memory_space<vmem>>, vector<16x16x64xf32>
    %149 = vector.shape_cast %148 : vector<16x16x64xf32> to vector<256x64xf32>
    %c0_123 = arith.constant 0 : index
    %c2_124 = arith.constant 2 : index
    %c0_125 = arith.constant 0 : index
    %c0_126 = arith.constant 0 : index
    %150 = vector.load %arg5[%c0_123, %c2_124, %c0_125, %c0_126] : memref<3x3x64x64xf32, #tpu.memory_space<vmem>>, vector<1x1x64x64xf32>
    %151 = vector.shape_cast %150 : vector<1x1x64x64xf32> to vector<64x64xf32>
    %cst_127 = arith.constant dense<0.000000e+00> : vector<256x64xf32>
    %152 = tpu.matmul %149, %151, %cst_127 {dimension_numbers = #tpu.dot_dimension_numbers<[1], [0], [0], [1], [0, 0, 1, 1], [], []>} : vector<256x64xf32>, vector<64x64xf32>, vector<256x64xf32> -> vector<256x64xf32>
    %153 = arith.addf %147, %152 : vector<256x64xf32>
    %c1_128 = arith.constant 1 : index
    %c7_129 = arith.constant 7 : index
    %c0_130 = arith.constant 0 : index
    %154 = vector.load %arg13[%c1_128, %c7_129, %c0_130] : memref<18x32x64xf32, #tpu.memory_space<vmem>>, vector<16x16x64xf32>
    %155 = vector.shape_cast %154 : vector<16x16x64xf32> to vector<256x64xf32>
    %c1_131 = arith.constant 1 : index
    %c0_132 = arith.constant 0 : index
    %c0_133 = arith.constant 0 : index
    %c0_134 = arith.constant 0 : index
    %156 = vector.load %arg5[%c1_131, %c0_132, %c0_133, %c0_134] : memref<3x3x64x64xf32, #tpu.memory_space<vmem>>, vector<1x1x64x64xf32>
    %157 = vector.shape_cast %156 : vector<1x1x64x64xf32> to vector<64x64xf32>
    %cst_135 = arith.constant dense<0.000000e+00> : vector<256x64xf32>
    %158 = tpu.matmul %155, %157, %cst_135 {dimension_numbers = #tpu.dot_dimension_numbers<[1], [0], [0], [1], [0, 0, 1, 1], [], []>} : vector<256x64xf32>, vector<64x64xf32>, vector<256x64xf32> -> vector<256x64xf32>
    %159 = arith.addf %153, %158 : vector<256x64xf32>
    %c1_136 = arith.constant 1 : index
    %c8_137 = arith.constant 8 : index
    %c0_138 = arith.constant 0 : index
    %160 = vector.load %arg13[%c1_136, %c8_137, %c0_138] : memref<18x32x64xf32, #tpu.memory_space<vmem>>, vector<16x16x64xf32>
    %161 = vector.shape_cast %160 : vector<16x16x64xf32> to vector<256x64xf32>
    %c1_139 = arith.constant 1 : index
    %c1_140 = arith.constant 1 : index
    %c0_141 = arith.constant 0 : index
    %c0_142 = arith.constant 0 : index
    %162 = vector.load %arg5[%c1_139, %c1_140, %c0_141, %c0_142] : memref<3x3x64x64xf32, #tpu.memory_space<vmem>>, vector<1x1x64x64xf32>
    %163 = vector.shape_cast %162 : vector<1x1x64x64xf32> to vector<64x64xf32>
    %cst_143 = arith.constant dense<0.000000e+00> : vector<256x64xf32>
    %164 = tpu.matmul %161, %163, %cst_143 {dimension_numbers = #tpu.dot_dimension_numbers<[1], [0], [0], [1], [0, 0, 1, 1], [], []>} : vector<256x64xf32>, vector<64x64xf32>, vector<256x64xf32> -> vector<256x64xf32>
    %165 = arith.addf %159, %164 : vector<256x64xf32>
    %c1_144 = arith.constant 1 : index
    %c9_145 = arith.constant 9 : index
    %c0_146 = arith.constant 0 : index
    %166 = vector.load %arg13[%c1_144, %c9_145, %c0_146] : memref<18x32x64xf32, #tpu.memory_space<vmem>>, vector<16x16x64xf32>
    %167 = vector.shape_cast %166 : vector<16x16x64xf32> to vector<256x64xf32>
    %c1_147 = arith.constant 1 : index
    %c2_148 = arith.constant 2 : index
    %c0_149 = arith.constant 0 : index
    %c0_150 = arith.constant 0 : index
    %168 = vector.load %arg5[%c1_147, %c2_148, %c0_149, %c0_150] : memref<3x3x64x64xf32, #tpu.memory_space<vmem>>, vector<1x1x64x64xf32>
    %169 = vector.shape_cast %168 : vector<1x1x64x64xf32> to vector<64x64xf32>
    %cst_151 = arith.constant dense<0.000000e+00> : vector<256x64xf32>
    %170 = tpu.matmul %167, %169, %cst_151 {dimension_numbers = #tpu.dot_dimension_numbers<[1], [0], [0], [1], [0, 0, 1, 1], [], []>} : vector<256x64xf32>, vector<64x64xf32>, vector<256x64xf32> -> vector<256x64xf32>
    %171 = arith.addf %165, %170 : vector<256x64xf32>
    %c2_152 = arith.constant 2 : index
    %c7_153 = arith.constant 7 : index
    %c0_154 = arith.constant 0 : index
    %172 = vector.load %arg13[%c2_152, %c7_153, %c0_154] : memref<18x32x64xf32, #tpu.memory_space<vmem>>, vector<16x16x64xf32>
    %173 = vector.shape_cast %172 : vector<16x16x64xf32> to vector<256x64xf32>
    %c2_155 = arith.constant 2 : index
    %c0_156 = arith.constant 0 : index
    %c0_157 = arith.constant 0 : index
    %c0_158 = arith.constant 0 : index
    %174 = vector.load %arg5[%c2_155, %c0_156, %c0_157, %c0_158] : memref<3x3x64x64xf32, #tpu.memory_space<vmem>>, vector<1x1x64x64xf32>
    %175 = vector.shape_cast %174 : vector<1x1x64x64xf32> to vector<64x64xf32>
    %cst_159 = arith.constant dense<0.000000e+00> : vector<256x64xf32>
    %176 = tpu.matmul %173, %175, %cst_159 {dimension_numbers = #tpu.dot_dimension_numbers<[1], [0], [0], [1], [0, 0, 1, 1], [], []>} : vector<256x64xf32>, vector<64x64xf32>, vector<256x64xf32> -> vector<256x64xf32>
    %177 = arith.addf %171, %176 : vector<256x64xf32>
    %c2_160 = arith.constant 2 : index
    %c8_161 = arith.constant 8 : index
    %c0_162 = arith.constant 0 : index
    %178 = vector.load %arg13[%c2_160, %c8_161, %c0_162] : memref<18x32x64xf32, #tpu.memory_space<vmem>>, vector<16x16x64xf32>
    %179 = vector.shape_cast %178 : vector<16x16x64xf32> to vector<256x64xf32>
    %c2_163 = arith.constant 2 : index
    %c1_164 = arith.constant 1 : index
    %c0_165 = arith.constant 0 : index
    %c0_166 = arith.constant 0 : index
    %180 = vector.load %arg5[%c2_163, %c1_164, %c0_165, %c0_166] : memref<3x3x64x64xf32, #tpu.memory_space<vmem>>, vector<1x1x64x64xf32>
    %181 = vector.shape_cast %180 : vector<1x1x64x64xf32> to vector<64x64xf32>
    %cst_167 = arith.constant dense<0.000000e+00> : vector<256x64xf32>
    %182 = tpu.matmul %179, %181, %cst_167 {dimension_numbers = #tpu.dot_dimension_numbers<[1], [0], [0], [1], [0, 0, 1, 1], [], []>} : vector<256x64xf32>, vector<64x64xf32>, vector<256x64xf32> -> vector<256x64xf32>
    %183 = arith.addf %177, %182 : vector<256x64xf32>
    %c2_168 = arith.constant 2 : index
    %c9_169 = arith.constant 9 : index
    %c0_170 = arith.constant 0 : index
    %184 = vector.load %arg13[%c2_168, %c9_169, %c0_170] : memref<18x32x64xf32, #tpu.memory_space<vmem>>, vector<16x16x64xf32>
    %185 = vector.shape_cast %184 : vector<16x16x64xf32> to vector<256x64xf32>
    %c2_171 = arith.constant 2 : index
    %c2_172 = arith.constant 2 : index
    %c0_173 = arith.constant 0 : index
    %c0_174 = arith.constant 0 : index
    %186 = vector.load %arg5[%c2_171, %c2_172, %c0_173, %c0_174] : memref<3x3x64x64xf32, #tpu.memory_space<vmem>>, vector<1x1x64x64xf32>
    %187 = vector.shape_cast %186 : vector<1x1x64x64xf32> to vector<64x64xf32>
    %cst_175 = arith.constant dense<0.000000e+00> : vector<256x64xf32>
    %188 = tpu.matmul %185, %187, %cst_175 {dimension_numbers = #tpu.dot_dimension_numbers<[1], [0], [0], [1], [0, 0, 1, 1], [], []>} : vector<256x64xf32>, vector<64x64xf32>, vector<256x64xf32> -> vector<256x64xf32>
    %189 = arith.addf %183, %188 : vector<256x64xf32>
    %c0_176 = arith.constant 0 : index
    %c0_177 = arith.constant 0 : index
    %190 = vector.load %arg6[%c0_176, %c0_177] : memref<1x64xf32, #tpu.memory_space<vmem>>, vector<1x64xf32>
    %191 = vector.broadcast %190 : vector<1x64xf32> to vector<256x64xf32>
    %192 = arith.addf %189, %191 : vector<256x64xf32>
    %cst_178 = arith.constant dense<0.000000e+00> : vector<64xf32>
    %193 = vector.multi_reduction <add>, %192, %cst_178 [0] : vector<256x64xf32> to vector<64xf32>
    %194 = vector.shape_cast %193 : vector<64xf32> to vector<1x64xf32>
    %cst_179 = arith.constant 2.560000e+02 : f32
    %195 = vector.broadcast %cst_179 : f32 to vector<1x64xf32>
    %196 = arith.divf %194, %195 : vector<1x64xf32>
    %197 = vector.shape_cast %196 : vector<1x64xf32> to vector<1x64xf32>
    %198 = vector.broadcast %197 : vector<1x64xf32> to vector<64x64xf32>
    %199 = tpu.transpose %196, [1, 0] : vector<1x64xf32> -> vector<64x1xf32>
    %200 = vector.shape_cast %199 : vector<64x1xf32> to vector<64x1xf32>
    %201 = vector.broadcast %200 : vector<64x1xf32> to vector<64x64xf32>
    %202 = arith.subf %198, %201 : vector<64x64xf32>
    %203 = arith.mulf %202, %202 : vector<64x64xf32>
    %cst_180 = arith.constant 0.000000e+00 : f32
    %204 = vector.broadcast %cst_180 : f32 to vector<64x64xf32>
    %205 = arith.subf %204, %203 : vector<64x64xf32>
    %cst_181 = arith.constant dense<0xFF800000> : vector<64xf32>
    %206 = vector.multi_reduction <maximumf>, %205, %cst_181 [0] : vector<64x64xf32> to vector<64xf32>
    %207 = vector.shape_cast %206 : vector<64xf32> to vector<1x64xf32>
    %208 = vector.broadcast %207 : vector<1x64xf32> to vector<64x64xf32>
    %209 = arith.subf %205, %208 : vector<64x64xf32>
    %210 = math.exp %209 : vector<64x64xf32>
    %cst_182 = arith.constant dense<0.000000e+00> : vector<64xf32>
    %211 = vector.multi_reduction <add>, %210, %cst_182 [0] : vector<64x64xf32> to vector<64xf32>
    %212 = vector.shape_cast %211 : vector<64xf32> to vector<1x64xf32>
    %213 = vector.broadcast %212 : vector<1x64xf32> to vector<64x64xf32>
    %214 = arith.divf %210, %213 : vector<64x64xf32>
    %cst_183 = arith.constant dense<0.000000e+00> : vector<256x64xf32>
    %215 = tpu.matmul %192, %214, %cst_183 {dimension_numbers = #tpu.dot_dimension_numbers<[1], [0], [0], [1], [0, 0, 1, 1], [], []>} : vector<256x64xf32>, vector<64x64xf32>, vector<256x64xf32> -> vector<256x64xf32>
    %cst_184 = arith.constant 1.000000e-01 : f32
    %216 = vector.broadcast %cst_184 : f32 to vector<256x64xf32>
    %217 = arith.mulf %216, %215 : vector<256x64xf32>
    %218 = arith.addf %192, %217 : vector<256x64xf32>
    %cst_185 = arith.constant 0.000000e+00 : f32
    %219 = vector.broadcast %cst_185 : f32 to vector<256x64xf32>
    %220 = arith.maximumf %218, %219 : vector<256x64xf32>
    %221 = vector.shape_cast %220 : vector<256x64xf32> to vector<16x16x64xf32>
    %cst_186 = arith.constant 0.000000e+00 : f32
    %222 = vector.broadcast %cst_186 : f32 to vector<18x32x64xf32>
    %c0_187 = arith.constant 0 : index
    %c0_188 = arith.constant 0 : index
    %c0_189 = arith.constant 0 : index
    %223 = vector.load %arg13[%c0_187, %c0_188, %c0_189] : memref<18x32x64xf32, #tpu.memory_space<vmem>>, vector<18x32x64xf32>
    tpu.vector_store %arg13[%c0_187, %c0_188, %c0_189], %222 {strides = array<i32>} : memref<18x32x64xf32, #tpu.memory_space<vmem>>, vector<18x32x64xf32>,
    %c1_190 = arith.constant 1 : index
    %c8_191 = arith.constant 8 : index
    %c0_192 = arith.constant 0 : index
    %224 = vector.load %arg13[%c1_190, %c8_191, %c0_192] : memref<18x32x64xf32, #tpu.memory_space<vmem>>, vector<16x16x64xf32>
    tpu.vector_store %arg13[%c1_190, %c8_191, %c0_192], %221 {strides = array<i32>} : memref<18x32x64xf32, #tpu.memory_space<vmem>>, vector<16x16x64xf32>,
    %cst_193 = arith.constant 0.000000e+00 : f32
    %225 = vector.broadcast %cst_193 : f32 to vector<256x32xf32>
    %c0_194 = arith.constant 0 : index
    %c7_195 = arith.constant 7 : index
    %c0_196 = arith.constant 0 : index
    %226 = vector.load %arg13[%c0_194, %c7_195, %c0_196] : memref<18x32x64xf32, #tpu.memory_space<vmem>>, vector<16x16x64xf32>
    %227 = vector.shape_cast %226 : vector<16x16x64xf32> to vector<256x64xf32>
    %c0_197 = arith.constant 0 : index
    %c0_198 = arith.constant 0 : index
    %c0_199 = arith.constant 0 : index
    %c0_200 = arith.constant 0 : index
    %228 = vector.load %arg7[%c0_197, %c0_198, %c0_199, %c0_200] : memref<3x3x64x32xf32, #tpu.memory_space<vmem>>, vector<1x1x64x32xf32>
    %229 = vector.shape_cast %228 : vector<1x1x64x32xf32> to vector<64x32xf32>
    %cst_201 = arith.constant dense<0.000000e+00> : vector<256x32xf32>
    %230 = tpu.matmul %227, %229, %cst_201 {dimension_numbers = #tpu.dot_dimension_numbers<[1], [0], [0], [1], [0, 0, 1, 1], [], []>} : vector<256x64xf32>, vector<64x32xf32>, vector<256x32xf32> -> vector<256x32xf32>
    %231 = arith.addf %225, %230 : vector<256x32xf32>
    %c0_202 = arith.constant 0 : index
    %c8_203 = arith.constant 8 : index
    %c0_204 = arith.constant 0 : index
    %232 = vector.load %arg13[%c0_202, %c8_203, %c0_204] : memref<18x32x64xf32, #tpu.memory_space<vmem>>, vector<16x16x64xf32>
    %233 = vector.shape_cast %232 : vector<16x16x64xf32> to vector<256x64xf32>
    %c0_205 = arith.constant 0 : index
    %c1_206 = arith.constant 1 : index
    %c0_207 = arith.constant 0 : index
    %c0_208 = arith.constant 0 : index
    %234 = vector.load %arg7[%c0_205, %c1_206, %c0_207, %c0_208] : memref<3x3x64x32xf32, #tpu.memory_space<vmem>>, vector<1x1x64x32xf32>
    %235 = vector.shape_cast %234 : vector<1x1x64x32xf32> to vector<64x32xf32>
    %cst_209 = arith.constant dense<0.000000e+00> : vector<256x32xf32>
    %236 = tpu.matmul %233, %235, %cst_209 {dimension_numbers = #tpu.dot_dimension_numbers<[1], [0], [0], [1], [0, 0, 1, 1], [], []>} : vector<256x64xf32>, vector<64x32xf32>, vector<256x32xf32> -> vector<256x32xf32>
    %237 = arith.addf %231, %236 : vector<256x32xf32>
    %c0_210 = arith.constant 0 : index
    %c9_211 = arith.constant 9 : index
    %c0_212 = arith.constant 0 : index
    %238 = vector.load %arg13[%c0_210, %c9_211, %c0_212] : memref<18x32x64xf32, #tpu.memory_space<vmem>>, vector<16x16x64xf32>
    %239 = vector.shape_cast %238 : vector<16x16x64xf32> to vector<256x64xf32>
    %c0_213 = arith.constant 0 : index
    %c2_214 = arith.constant 2 : index
    %c0_215 = arith.constant 0 : index
    %c0_216 = arith.constant 0 : index
    %240 = vector.load %arg7[%c0_213, %c2_214, %c0_215, %c0_216] : memref<3x3x64x32xf32, #tpu.memory_space<vmem>>, vector<1x1x64x32xf32>
    %241 = vector.shape_cast %240 : vector<1x1x64x32xf32> to vector<64x32xf32>
    %cst_217 = arith.constant dense<0.000000e+00> : vector<256x32xf32>
    %242 = tpu.matmul %239, %241, %cst_217 {dimension_numbers = #tpu.dot_dimension_numbers<[1], [0], [0], [1], [0, 0, 1, 1], [], []>} : vector<256x64xf32>, vector<64x32xf32>, vector<256x32xf32> -> vector<256x32xf32>
    %243 = arith.addf %237, %242 : vector<256x32xf32>
    %c1_218 = arith.constant 1 : index
    %c7_219 = arith.constant 7 : index
    %c0_220 = arith.constant 0 : index
    %244 = vector.load %arg13[%c1_218, %c7_219, %c0_220] : memref<18x32x64xf32, #tpu.memory_space<vmem>>, vector<16x16x64xf32>
    %245 = vector.shape_cast %244 : vector<16x16x64xf32> to vector<256x64xf32>
    %c1_221 = arith.constant 1 : index
    %c0_222 = arith.constant 0 : index
    %c0_223 = arith.constant 0 : index
    %c0_224 = arith.constant 0 : index
    %246 = vector.load %arg7[%c1_221, %c0_222, %c0_223, %c0_224] : memref<3x3x64x32xf32, #tpu.memory_space<vmem>>, vector<1x1x64x32xf32>
    %247 = vector.shape_cast %246 : vector<1x1x64x32xf32> to vector<64x32xf32>
    %cst_225 = arith.constant dense<0.000000e+00> : vector<256x32xf32>
    %248 = tpu.matmul %245, %247, %cst_225 {dimension_numbers = #tpu.dot_dimension_numbers<[1], [0], [0], [1], [0, 0, 1, 1], [], []>} : vector<256x64xf32>, vector<64x32xf32>, vector<256x32xf32> -> vector<256x32xf32>
    %249 = arith.addf %243, %248 : vector<256x32xf32>
    %c1_226 = arith.constant 1 : index
    %c8_227 = arith.constant 8 : index
    %c0_228 = arith.constant 0 : index
    %250 = vector.load %arg13[%c1_226, %c8_227, %c0_228] : memref<18x32x64xf32, #tpu.memory_space<vmem>>, vector<16x16x64xf32>
    %251 = vector.shape_cast %250 : vector<16x16x64xf32> to vector<256x64xf32>
    %c1_229 = arith.constant 1 : index
    %c1_230 = arith.constant 1 : index
    %c0_231 = arith.constant 0 : index
    %c0_232 = arith.constant 0 : index
    %252 = vector.load %arg7[%c1_229, %c1_230, %c0_231, %c0_232] : memref<3x3x64x32xf32, #tpu.memory_space<vmem>>, vector<1x1x64x32xf32>
    %253 = vector.shape_cast %252 : vector<1x1x64x32xf32> to vector<64x32xf32>
    %cst_233 = arith.constant dense<0.000000e+00> : vector<256x32xf32>
    %254 = tpu.matmul %251, %253, %cst_233 {dimension_numbers = #tpu.dot_dimension_numbers<[1], [0], [0], [1], [0, 0, 1, 1], [], []>} : vector<256x64xf32>, vector<64x32xf32>, vector<256x32xf32> -> vector<256x32xf32>
    %255 = arith.addf %249, %254 : vector<256x32xf32>
    %c1_234 = arith.constant 1 : index
    %c9_235 = arith.constant 9 : index
    %c0_236 = arith.constant 0 : index
    %256 = vector.load %arg13[%c1_234, %c9_235, %c0_236] : memref<18x32x64xf32, #tpu.memory_space<vmem>>, vector<16x16x64xf32>
    %257 = vector.shape_cast %256 : vector<16x16x64xf32> to vector<256x64xf32>
    %c1_237 = arith.constant 1 : index
    %c2_238 = arith.constant 2 : index
    %c0_239 = arith.constant 0 : index
    %c0_240 = arith.constant 0 : index
    %258 = vector.load %arg7[%c1_237, %c2_238, %c0_239, %c0_240] : memref<3x3x64x32xf32, #tpu.memory_space<vmem>>, vector<1x1x64x32xf32>
    %259 = vector.shape_cast %258 : vector<1x1x64x32xf32> to vector<64x32xf32>
    %cst_241 = arith.constant dense<0.000000e+00> : vector<256x32xf32>
    %260 = tpu.matmul %257, %259, %cst_241 {dimension_numbers = #tpu.dot_dimension_numbers<[1], [0], [0], [1], [0, 0, 1, 1], [], []>} : vector<256x64xf32>, vector<64x32xf32>, vector<256x32xf32> -> vector<256x32xf32>
    %261 = arith.addf %255, %260 : vector<256x32xf32>
    %c2_242 = arith.constant 2 : index
    %c7_243 = arith.constant 7 : index
    %c0_244 = arith.constant 0 : index
    %262 = vector.load %arg13[%c2_242, %c7_243, %c0_244] : memref<18x32x64xf32, #tpu.memory_space<vmem>>, vector<16x16x64xf32>
    %263 = vector.shape_cast %262 : vector<16x16x64xf32> to vector<256x64xf32>
    %c2_245 = arith.constant 2 : index
    %c0_246 = arith.constant 0 : index
    %c0_247 = arith.constant 0 : index
    %c0_248 = arith.constant 0 : index
    %264 = vector.load %arg7[%c2_245, %c0_246, %c0_247, %c0_248] : memref<3x3x64x32xf32, #tpu.memory_space<vmem>>, vector<1x1x64x32xf32>
    %265 = vector.shape_cast %264 : vector<1x1x64x32xf32> to vector<64x32xf32>
    %cst_249 = arith.constant dense<0.000000e+00> : vector<256x32xf32>
    %266 = tpu.matmul %263, %265, %cst_249 {dimension_numbers = #tpu.dot_dimension_numbers<[1], [0], [0], [1], [0, 0, 1, 1], [], []>} : vector<256x64xf32>, vector<64x32xf32>, vector<256x32xf32> -> vector<256x32xf32>
    %267 = arith.addf %261, %266 : vector<256x32xf32>
    %c2_250 = arith.constant 2 : index
    %c8_251 = arith.constant 8 : index
    %c0_252 = arith.constant 0 : index
    %268 = vector.load %arg13[%c2_250, %c8_251, %c0_252] : memref<18x32x64xf32, #tpu.memory_space<vmem>>, vector<16x16x64xf32>
    %269 = vector.shape_cast %268 : vector<16x16x64xf32> to vector<256x64xf32>
    %c2_253 = arith.constant 2 : index
    %c1_254 = arith.constant 1 : index
    %c0_255 = arith.constant 0 : index
    %c0_256 = arith.constant 0 : index
    %270 = vector.load %arg7[%c2_253, %c1_254, %c0_255, %c0_256] : memref<3x3x64x32xf32, #tpu.memory_space<vmem>>, vector<1x1x64x32xf32>
    %271 = vector.shape_cast %270 : vector<1x1x64x32xf32> to vector<64x32xf32>
    %cst_257 = arith.constant dense<0.000000e+00> : vector<256x32xf32>
    %272 = tpu.matmul %269, %271, %cst_257 {dimension_numbers = #tpu.dot_dimension_numbers<[1], [0], [0], [1], [0, 0, 1, 1], [], []>} : vector<256x64xf32>, vector<64x32xf32>, vector<256x32xf32> -> vector<256x32xf32>
    %273 = arith.addf %267, %272 : vector<256x32xf32>
    %c2_258 = arith.constant 2 : index
    %c9_259 = arith.constant 9 : index
    %c0_260 = arith.constant 0 : index
    %274 = vector.load %arg13[%c2_258, %c9_259, %c0_260] : memref<18x32x64xf32, #tpu.memory_space<vmem>>, vector<16x16x64xf32>
    %275 = vector.shape_cast %274 : vector<16x16x64xf32> to vector<256x64xf32>
    %c2_261 = arith.constant 2 : index
    %c2_262 = arith.constant 2 : index
    %c0_263 = arith.constant 0 : index
    %c0_264 = arith.constant 0 : index
    %276 = vector.load %arg7[%c2_261, %c2_262, %c0_263, %c0_264] : memref<3x3x64x32xf32, #tpu.memory_space<vmem>>, vector<1x1x64x32xf32>
    %277 = vector.shape_cast %276 : vector<1x1x64x32xf32> to vector<64x32xf32>
    %cst_265 = arith.constant dense<0.000000e+00> : vector<256x32xf32>
    %278 = tpu.matmul %275, %277, %cst_265 {dimension_numbers = #tpu.dot_dimension_numbers<[1], [0], [0], [1], [0, 0, 1, 1], [], []>} : vector<256x64xf32>, vector<64x32xf32>, vector<256x32xf32> -> vector<256x32xf32>
    %279 = arith.addf %273, %278 : vector<256x32xf32>
    %c0_266 = arith.constant 0 : index
    %c0_267 = arith.constant 0 : index
    %280 = vector.load %arg8[%c0_266, %c0_267] : memref<1x32xf32, #tpu.memory_space<vmem>>, vector<1x32xf32>
    %281 = vector.broadcast %280 : vector<1x32xf32> to vector<256x32xf32>
    %282 = arith.addf %279, %281 : vector<256x32xf32>
    %283 = vector.shape_cast %282 : vector<256x32xf32> to vector<16x16x32xf32>
    %cst_268 = arith.constant 0.000000e+00 : f32
    %284 = vector.broadcast %cst_268 : f32 to vector<18x32x32xf32>
    %c0_269 = arith.constant 0 : index
    %c0_270 = arith.constant 0 : index
    %c0_271 = arith.constant 0 : index
    %285 = vector.load %arg14[%c0_269, %c0_270, %c0_271] : memref<18x32x32xf32, #tpu.memory_space<vmem>>, vector<18x32x32xf32>
    tpu.vector_store %arg14[%c0_269, %c0_270, %c0_271], %284 {strides = array<i32>} : memref<18x32x32xf32, #tpu.memory_space<vmem>>, vector<18x32x32xf32>,
    %c1_272 = arith.constant 1 : index
    %c8_273 = arith.constant 8 : index
    %c0_274 = arith.constant 0 : index
    %286 = vector.load %arg14[%c1_272, %c8_273, %c0_274] : memref<18x32x32xf32, #tpu.memory_space<vmem>>, vector<16x16x32xf32>
    tpu.vector_store %arg14[%c1_272, %c8_273, %c0_274], %283 {strides = array<i32>} : memref<18x32x32xf32, #tpu.memory_space<vmem>>, vector<16x16x32xf32>,
    %cst_275 = arith.constant 0.000000e+00 : f32
    %287 = vector.broadcast %cst_275 : f32 to vector<256x4xf32>
    %c0_276 = arith.constant 0 : index
    %c7_277 = arith.constant 7 : index
    %c0_278 = arith.constant 0 : index
    %288 = vector.load %arg14[%c0_276, %c7_277, %c0_278] : memref<18x32x32xf32, #tpu.memory_space<vmem>>, vector<16x16x32xf32>
    %289 = vector.shape_cast %288 : vector<16x16x32xf32> to vector<256x32xf32>
    %c0_279 = arith.constant 0 : index
    %c0_280 = arith.constant 0 : index
    %c0_281 = arith.constant 0 : index
    %c0_282 = arith.constant 0 : index
    %290 = vector.load %arg9[%c0_279, %c0_280, %c0_281, %c0_282] : memref<3x3x32x4xf32, #tpu.memory_space<vmem>>, vector<1x1x32x4xf32>
    %291 = vector.shape_cast %290 : vector<1x1x32x4xf32> to vector<32x4xf32>
    %cst_283 = arith.constant dense<0.000000e+00> : vector<256x4xf32>
    %292 = tpu.matmul %289, %291, %cst_283 {dimension_numbers = #tpu.dot_dimension_numbers<[1], [0], [0], [1], [0, 0, 1, 1], [], []>} : vector<256x32xf32>, vector<32x4xf32>, vector<256x4xf32> -> vector<256x4xf32>
    %293 = arith.addf %287, %292 : vector<256x4xf32>
    %c0_284 = arith.constant 0 : index
    %c8_285 = arith.constant 8 : index
    %c0_286 = arith.constant 0 : index
    %294 = vector.load %arg14[%c0_284, %c8_285, %c0_286] : memref<18x32x32xf32, #tpu.memory_space<vmem>>, vector<16x16x32xf32>
    %295 = vector.shape_cast %294 : vector<16x16x32xf32> to vector<256x32xf32>
    %c0_287 = arith.constant 0 : index
    %c1_288 = arith.constant 1 : index
    %c0_289 = arith.constant 0 : index
    %c0_290 = arith.constant 0 : index
    %296 = vector.load %arg9[%c0_287, %c1_288, %c0_289, %c0_290] : memref<3x3x32x4xf32, #tpu.memory_space<vmem>>, vector<1x1x32x4xf32>
    %297 = vector.shape_cast %296 : vector<1x1x32x4xf32> to vector<32x4xf32>
    %cst_291 = arith.constant dense<0.000000e+00> : vector<256x4xf32>
    %298 = tpu.matmul %295, %297, %cst_291 {dimension_numbers = #tpu.dot_dimension_numbers<[1], [0], [0], [1], [0, 0, 1, 1], [], []>} : vector<256x32xf32>, vector<32x4xf32>, vector<256x4xf32> -> vector<256x4xf32>
    %299 = arith.addf %293, %298 : vector<256x4xf32>
    %c0_292 = arith.constant 0 : index
    %c9_293 = arith.constant 9 : index
    %c0_294 = arith.constant 0 : index
    %300 = vector.load %arg14[%c0_292, %c9_293, %c0_294] : memref<18x32x32xf32, #tpu.memory_space<vmem>>, vector<16x16x32xf32>
    %301 = vector.shape_cast %300 : vector<16x16x32xf32> to vector<256x32xf32>
    %c0_295 = arith.constant 0 : index
    %c2_296 = arith.constant 2 : index
    %c0_297 = arith.constant 0 : index
    %c0_298 = arith.constant 0 : index
    %302 = vector.load %arg9[%c0_295, %c2_296, %c0_297, %c0_298] : memref<3x3x32x4xf32, #tpu.memory_space<vmem>>, vector<1x1x32x4xf32>
    %303 = vector.shape_cast %302 : vector<1x1x32x4xf32> to vector<32x4xf32>
    %cst_299 = arith.constant dense<0.000000e+00> : vector<256x4xf32>
    %304 = tpu.matmul %301, %303, %cst_299 {dimension_numbers = #tpu.dot_dimension_numbers<[1], [0], [0], [1], [0, 0, 1, 1], [], []>} : vector<256x32xf32>, vector<32x4xf32>, vector<256x4xf32> -> vector<256x4xf32>
    %305 = arith.addf %299, %304 : vector<256x4xf32>
    %c1_300 = arith.constant 1 : index
    %c7_301 = arith.constant 7 : index
    %c0_302 = arith.constant 0 : index
    %306 = vector.load %arg14[%c1_300, %c7_301, %c0_302] : memref<18x32x32xf32, #tpu.memory_space<vmem>>, vector<16x16x32xf32>
    %307 = vector.shape_cast %306 : vector<16x16x32xf32> to vector<256x32xf32>
    %c1_303 = arith.constant 1 : index
    %c0_304 = arith.constant 0 : index
    %c0_305 = arith.constant 0 : index
    %c0_306 = arith.constant 0 : index
    %308 = vector.load %arg9[%c1_303, %c0_304, %c0_305, %c0_306] : memref<3x3x32x4xf32, #tpu.memory_space<vmem>>, vector<1x1x32x4xf32>
    %309 = vector.shape_cast %308 : vector<1x1x32x4xf32> to vector<32x4xf32>
    %cst_307 = arith.constant dense<0.000000e+00> : vector<256x4xf32>
    %310 = tpu.matmul %307, %309, %cst_307 {dimension_numbers = #tpu.dot_dimension_numbers<[1], [0], [0], [1], [0, 0, 1, 1], [], []>} : vector<256x32xf32>, vector<32x4xf32>, vector<256x4xf32> -> vector<256x4xf32>
    %311 = arith.addf %305, %310 : vector<256x4xf32>
    %c1_308 = arith.constant 1 : index
    %c8_309 = arith.constant 8 : index
    %c0_310 = arith.constant 0 : index
    %312 = vector.load %arg14[%c1_308, %c8_309, %c0_310] : memref<18x32x32xf32, #tpu.memory_space<vmem>>, vector<16x16x32xf32>
    %313 = vector.shape_cast %312 : vector<16x16x32xf32> to vector<256x32xf32>
    %c1_311 = arith.constant 1 : index
    %c1_312 = arith.constant 1 : index
    %c0_313 = arith.constant 0 : index
    %c0_314 = arith.constant 0 : index
    %314 = vector.load %arg9[%c1_311, %c1_312, %c0_313, %c0_314] : memref<3x3x32x4xf32, #tpu.memory_space<vmem>>, vector<1x1x32x4xf32>
    %315 = vector.shape_cast %314 : vector<1x1x32x4xf32> to vector<32x4xf32>
    %cst_315 = arith.constant dense<0.000000e+00> : vector<256x4xf32>
    %316 = tpu.matmul %313, %315, %cst_315 {dimension_numbers = #tpu.dot_dimension_numbers<[1], [0], [0], [1], [0, 0, 1, 1], [], []>} : vector<256x32xf32>, vector<32x4xf32>, vector<256x4xf32> -> vector<256x4xf32>
    %317 = arith.addf %311, %316 : vector<256x4xf32>
    %c1_316 = arith.constant 1 : index
    %c9_317 = arith.constant 9 : index
    %c0_318 = arith.constant 0 : index
    %318 = vector.load %arg14[%c1_316, %c9_317, %c0_318] : memref<18x32x32xf32, #tpu.memory_space<vmem>>, vector<16x16x32xf32>
    %319 = vector.shape_cast %318 : vector<16x16x32xf32> to vector<256x32xf32>
    %c1_319 = arith.constant 1 : index
    %c2_320 = arith.constant 2 : index
    %c0_321 = arith.constant 0 : index
    %c0_322 = arith.constant 0 : index
    %320 = vector.load %arg9[%c1_319, %c2_320, %c0_321, %c0_322] : memref<3x3x32x4xf32, #tpu.memory_space<vmem>>, vector<1x1x32x4xf32>
    %321 = vector.shape_cast %320 : vector<1x1x32x4xf32> to vector<32x4xf32>
    %cst_323 = arith.constant dense<0.000000e+00> : vector<256x4xf32>
    %322 = tpu.matmul %319, %321, %cst_323 {dimension_numbers = #tpu.dot_dimension_numbers<[1], [0], [0], [1], [0, 0, 1, 1], [], []>} : vector<256x32xf32>, vector<32x4xf32>, vector<256x4xf32> -> vector<256x4xf32>
    %323 = arith.addf %317, %322 : vector<256x4xf32>
    %c2_324 = arith.constant 2 : index
    %c7_325 = arith.constant 7 : index
    %c0_326 = arith.constant 0 : index
    %324 = vector.load %arg14[%c2_324, %c7_325, %c0_326] : memref<18x32x32xf32, #tpu.memory_space<vmem>>, vector<16x16x32xf32>
    %325 = vector.shape_cast %324 : vector<16x16x32xf32> to vector<256x32xf32>
    %c2_327 = arith.constant 2 : index
    %c0_328 = arith.constant 0 : index
    %c0_329 = arith.constant 0 : index
    %c0_330 = arith.constant 0 : index
    %326 = vector.load %arg9[%c2_327, %c0_328, %c0_329, %c0_330] : memref<3x3x32x4xf32, #tpu.memory_space<vmem>>, vector<1x1x32x4xf32>
    %327 = vector.shape_cast %326 : vector<1x1x32x4xf32> to vector<32x4xf32>
    %cst_331 = arith.constant dense<0.000000e+00> : vector<256x4xf32>
    %328 = tpu.matmul %325, %327, %cst_331 {dimension_numbers = #tpu.dot_dimension_numbers<[1], [0], [0], [1], [0, 0, 1, 1], [], []>} : vector<256x32xf32>, vector<32x4xf32>, vector<256x4xf32> -> vector<256x4xf32>
    %329 = arith.addf %323, %328 : vector<256x4xf32>
    %c2_332 = arith.constant 2 : index
    %c8_333 = arith.constant 8 : index
    %c0_334 = arith.constant 0 : index
    %330 = vector.load %arg14[%c2_332, %c8_333, %c0_334] : memref<18x32x32xf32, #tpu.memory_space<vmem>>, vector<16x16x32xf32>
    %331 = vector.shape_cast %330 : vector<16x16x32xf32> to vector<256x32xf32>
    %c2_335 = arith.constant 2 : index
    %c1_336 = arith.constant 1 : index
    %c0_337 = arith.constant 0 : index
    %c0_338 = arith.constant 0 : index
    %332 = vector.load %arg9[%c2_335, %c1_336, %c0_337, %c0_338] : memref<3x3x32x4xf32, #tpu.memory_space<vmem>>, vector<1x1x32x4xf32>
    %333 = vector.shape_cast %332 : vector<1x1x32x4xf32> to vector<32x4xf32>
    %cst_339 = arith.constant dense<0.000000e+00> : vector<256x4xf32>
    %334 = tpu.matmul %331, %333, %cst_339 {dimension_numbers = #tpu.dot_dimension_numbers<[1], [0], [0], [1], [0, 0, 1, 1], [], []>} : vector<256x32xf32>, vector<32x4xf32>, vector<256x4xf32> -> vector<256x4xf32>
    %335 = arith.addf %329, %334 : vector<256x4xf32>
    %c2_340 = arith.constant 2 : index
    %c9_341 = arith.constant 9 : index
    %c0_342 = arith.constant 0 : index
    %336 = vector.load %arg14[%c2_340, %c9_341, %c0_342] : memref<18x32x32xf32, #tpu.memory_space<vmem>>, vector<16x16x32xf32>
    %337 = vector.shape_cast %336 : vector<16x16x32xf32> to vector<256x32xf32>
    %c2_343 = arith.constant 2 : index
    %c2_344 = arith.constant 2 : index
    %c0_345 = arith.constant 0 : index
    %c0_346 = arith.constant 0 : index
    %338 = vector.load %arg9[%c2_343, %c2_344, %c0_345, %c0_346] : memref<3x3x32x4xf32, #tpu.memory_space<vmem>>, vector<1x1x32x4xf32>
    %339 = vector.shape_cast %338 : vector<1x1x32x4xf32> to vector<32x4xf32>
    %cst_347 = arith.constant dense<0.000000e+00> : vector<256x4xf32>
    %340 = tpu.matmul %337, %339, %cst_347 {dimension_numbers = #tpu.dot_dimension_numbers<[1], [0], [0], [1], [0, 0, 1, 1], [], []>} : vector<256x32xf32>, vector<32x4xf32>, vector<256x4xf32> -> vector<256x4xf32>
    %341 = arith.addf %335, %340 : vector<256x4xf32>
    %c0_348 = arith.constant 0 : index
    %c0_349 = arith.constant 0 : index
    %342 = vector.load %arg10[%c0_348, %c0_349] : memref<1x4xf32, #tpu.memory_space<vmem>>, vector<1x4xf32>
    %343 = vector.broadcast %342 : vector<1x4xf32> to vector<256x4xf32>
    %344 = arith.addf %341, %343 : vector<256x4xf32>
    %c0_350 = arith.constant 0 : index
    %c0_351 = arith.constant 0 : index
    %c0_352 = arith.constant 0 : index
    %345 = vector.load %arg11[%c0_350, %c0_351, %c0_352] : memref<1x256x4xf32, #tpu.memory_space<vmem>>, vector<1x256x4xf32>
    %346 = vector.shape_cast %345 : vector<1x256x4xf32> to vector<256x4xf32>
    %347 = vector.shape_cast %344 : vector<256x4xf32> to vector<1x256x4xf32>
    tpu.vector_store %arg11[%c0_350, %c0_351, %c0_352], %347 {strides = array<i32>} : memref<1x256x4xf32, #tpu.memory_space<vmem>>, vector<1x256x4xf32>,
    return
  }
  func.func @transform_0(%arg0: i32) -> (i32, i32, i32, i32) {
    %c0_i32 = arith.constant 0 : i32
    %c0_i32_0 = arith.constant 0 : i32
    %c0_i32_1 = arith.constant 0 : i32
    %c0_i32_2 = arith.constant 0 : i32
    return %arg0, %c0_i32, %c0_i32_0, %c0_i32_1 : i32, i32, i32, i32
  }
  func.func @transform_1(%arg0: i32) -> (i32, i32) {
    %c0_i32 = arith.constant 0 : i32
    %c0_i32_0 = arith.constant 0 : i32
    %c0_i32_1 = arith.constant 0 : i32
    return %c0_i32, %c0_i32_0 : i32, i32
  }
  func.func @transform_2(%arg0: i32) -> (i32, i32, i32, i32) {
    %c0_i32 = arith.constant 0 : i32
    %c0_i32_0 = arith.constant 0 : i32
    %c0_i32_1 = arith.constant 0 : i32
    %c0_i32_2 = arith.constant 0 : i32
    %c0_i32_3 = arith.constant 0 : i32
    return %c0_i32, %c0_i32_0, %c0_i32_1, %c0_i32_2 : i32, i32, i32, i32
  }
  func.func @transform_3(%arg0: i32) -> (i32, i32) {
    %c0_i32 = arith.constant 0 : i32
    %c0_i32_0 = arith.constant 0 : i32
    %c0_i32_1 = arith.constant 0 : i32
    return %c0_i32, %c0_i32_0 : i32, i32
  }
  func.func @transform_4(%arg0: i32) -> (i32, i32, i32, i32) {
    %c0_i32 = arith.constant 0 : i32
    %c0_i32_0 = arith.constant 0 : i32
    %c0_i32_1 = arith.constant 0 : i32
    %c0_i32_2 = arith.constant 0 : i32
    %c0_i32_3 = arith.constant 0 : i32
    return %c0_i32, %c0_i32_0, %c0_i32_1, %c0_i32_2 : i32, i32, i32, i32
  }
  func.func @transform_5(%arg0: i32) -> (i32, i32) {
    %c0_i32 = arith.constant 0 : i32
    %c0_i32_0 = arith.constant 0 : i32
    %c0_i32_1 = arith.constant 0 : i32
    return %c0_i32, %c0_i32_0 : i32, i32
  }
  func.func @transform_6(%arg0: i32) -> (i32, i32, i32, i32) {
    %c0_i32 = arith.constant 0 : i32
    %c0_i32_0 = arith.constant 0 : i32
    %c0_i32_1 = arith.constant 0 : i32
    %c0_i32_2 = arith.constant 0 : i32
    %c0_i32_3 = arith.constant 0 : i32
    return %c0_i32, %c0_i32_0, %c0_i32_1, %c0_i32_2 : i32, i32, i32, i32
  }
  func.func @transform_7(%arg0: i32) -> (i32, i32) {
    %c0_i32 = arith.constant 0 : i32
    %c0_i32_0 = arith.constant 0 : i32
    %c0_i32_1 = arith.constant 0 : i32
    return %c0_i32, %c0_i32_0 : i32, i32
  }
  func.func @transform_8(%arg0: i32) -> (i32, i32, i32, i32) {
    %c0_i32 = arith.constant 0 : i32
    %c0_i32_0 = arith.constant 0 : i32
    %c0_i32_1 = arith.constant 0 : i32
    %c0_i32_2 = arith.constant 0 : i32
    %c0_i32_3 = arith.constant 0 : i32
    return %c0_i32, %c0_i32_0, %c0_i32_1, %c0_i32_2 : i32, i32, i32, i32
  }
  func.func @transform_9(%arg0: i32) -> (i32, i32) {
    %c0_i32 = arith.constant 0 : i32
    %c0_i32_0 = arith.constant 0 : i32
    %c0_i32_1 = arith.constant 0 : i32
    return %c0_i32, %c0_i32_0 : i32, i32
  }
  func.func @transform_10(%arg0: i32) -> (i32, i32, i32) {
    %c0_i32 = arith.constant 0 : i32
    %c0_i32_0 = arith.constant 0 : i32
    %c0_i32_1 = arith.constant 0 : i32
    return %arg0, %c0_i32, %c0_i32_0 : i32, i32, i32
  }
}

</mosaic_0001>

<llo_original>
// kernel: net_forward.1
$region0: #{net_forward.1}
  #allocation0 [shape = 'u32[]', space=smem, size = 0x4, offset = 0x4, fixed_abs, tag = 'smem constant byte address 0x4 - core index']
  #allocation1 [shape = 'u32[72,128]{1,0:T(1,128)}', space=vmem, size = 0x9000, scoped, tag = 'internal scratch']
  #allocation2 [shape = 'f32[18,32,5]{2,1,0:T(8,128)}', space=vmem, size = 0x48000, scoped, tag = 'scratch operand']
  #allocation3 [shape = 'f32[18,32,64]{2,1,0:T(8,128)}', space=vmem, size = 0x48000, scoped, tag = 'scratch operand']
  #allocation4 [shape = 'f32[18,32,32]{2,1,0:T(8,128)}', space=vmem, size = 0x48000, scoped, tag = 'scratch operand']
  %s0 = inlined_call_operand.vmem [shape: f32[2,16,16,5], index: 0, kind: input, shape index: {}]
  %s1 = inlined_call_operand.vmem [shape: f32[1,4], index: 1, kind: input, shape index: {}]
  %s2 = inlined_call_operand.vmem [shape: f32[3,3,5,64], index: 2, kind: input, shape index: {}]
  %s3 = inlined_call_operand.vmem [shape: f32[1,64], index: 3, kind: input, shape index: {}]
  %s4 = inlined_call_operand.vmem [shape: f32[3,3,64,64], index: 4, kind: input, shape index: {}]
  %s5 = inlined_call_operand.vmem [shape: f32[1,64], index: 5, kind: input, shape index: {}]
  %s6 = inlined_call_operand.vmem [shape: f32[3,3,64,32], index: 6, kind: input, shape index: {}]
  %s7 = inlined_call_operand.vmem [shape: f32[1,32], index: 7, kind: input, shape index: {}]
  %s8 = inlined_call_operand.vmem [shape: f32[3,3,32,4], index: 8, kind: input, shape index: {}]
  %s9 = inlined_call_operand.vmem [shape: f32[1,4], index: 9, kind: input, shape index: {}]
  %s10 = inlined_call_operand.vmem [shape: f32[2,256,4], index: 10, kind: output, shape index: {}]
  %s11 = sld [smem:[#allocation0]]
  $region73: #{net_forward.1} parent=0
    _
  %s13 = ssub.s32 1, %s11
  %s14 = scalar_select 0, %s13, %s11
  loop: start=0, step=1, limit=4
  $region2: #{net_forward.1} parent=0 // loop_pre_header
    _
  $region3: #{net_forward.1} parent=0 // loop_header
    %s16 = sphi 0, %s20
    %p17 = scmp.ge.s32.totalorder %s16, 4
    %s26 = sphi 0, %s28
    %s29 = sphi 0, %s26
    %s30 = sphi 0, %s29
    %s46 = sphi 0, %s30
    %s50 = sphi 0, %s50
    %s52 = sphi 0, %s50
    %s53 = sphi 0, %s52
    %s67 = sphi 0, %s53
    %s71 = sphi 0, %s71
    %s73 = sphi 0, %s71
    %s74 = sphi 0, %s73
    %s88 = sphi 0, %s74
    %s92 = sphi 0, %s92
    %s94 = sphi 0, %s92
    %s95 = sphi 0, %s94
    %s109 = sphi 0, %s95
    %s113 = sphi 0, %s113
    %s115 = sphi 0, %s113
    %s116 = sphi 0, %s115
    %s130 = sphi 0, %s116
    %s134 = sphi 0, %s134
    %s136 = sphi 0, %s134
    %s137 = sphi 0, %s136
    %s151 = sphi 0, %s137
    %s155 = sphi 0, %s155
    %s157 = sphi 0, %s155
    %s158 = sphi 0, %s157
    %s172 = sphi 0, %s158
    %s176 = sphi 0, %s176
    %s178 = sphi 0, %s176
    %s179 = sphi 0, %s178
    %s193 = sphi 0, %s179
    %s197 = sphi 0, %s197
    %s199 = sphi 0, %s197
    %s200 = sphi 0, %s199
    %s214 = sphi 0, %s200
    %s218 = sphi 0, %s218
    %s220 = sphi 0, %s218
    %s221 = sphi 0, %s220
    %s235 = sphi 0, %s221
    %s241 = sphi 0, %s243
    %s244 = sphi 0, %s241
    %s245 = sphi 0, %s244
    %s261 = sphi 0, %s245
  $region4: #{net_forward.1} parent=0 // loop_header_branch
    %19 = sbr.rel (%p17) target = $region8
  $region5: #{net_forward.1} parent=0 // loop_body
    %s21 = ssub.s32 %s16, 1
    %s22 = ssub.s32 %s16, 2
    %s23 = sadd.s32 %s16, 1
    %s24 = ssub.s32 %s16, %s23
    %p25 = scmp.eq.s32.totalorder %s24, 0
    %s27 = sadd.s32 %s26, 1
    %s28 = scalar_select %p25, %s26, %s27
    %p31 = pneg %p25
    %p32 = scmp.eq.s32.totalorder %s16, 1
    %p33 = por %p31, %p32
    %p34 = scmp.ne.s32.totalorder %s26, %s29
    %p35 = scmp.eq.s32.totalorder %s16, 0
    %p36 = por %p34, %p35
    %p37 = scmp.ne.s32.totalorder %s26, %s29
    %p38 = scmp.eq.s32.totalorder %s21, 1
    %p39 = por %p37, %p38
    %p40 = scmp.ne.s32.totalorder %s29, %s30
    %p41 = scmp.eq.s32.totalorder %s21, 0
    %p42 = por %p40, %p41
    %p43 = scmp.ne.s32.totalorder %s29, %s30
    %p44 = scmp.eq.s32.totalorder %s22, 1
    %p45 = por %p43, %p44
    %p47 = scmp.ne.s32.totalorder %s30, %s46
    %p48 = scmp.eq.s32.totalorder %s22, 0
    %p49 = por %p47, %p48
    %s51 = sadd.s32 %s50, 1
    %p54 = scmp.eq.s32.totalorder %s16, 1
    %p55 = scmp.ne.s32.totalorder %s50, %s52
    %p56 = scmp.eq.s32.totalorder %s16, 0
    %p57 = por %p55, %p56
    %p58 = scmp.ne.s32.totalorder %s50, %s52
    %p59 = scmp.eq.s32.totalorder %s21, 1
    %p60 = por %p58, %p59
    %p61 = scmp.ne.s32.totalorder %s52, %s53
    %p62 = scmp.eq.s32.totalorder %s21, 0
    %p63 = por %p61, %p62
    %p64 = scmp.ne.s32.totalorder %s52, %s53
    %p65 = scmp.eq.s32.totalorder %s22, 1
    %p66 = por %p64, %p65
    %p68 = scmp.ne.s32.totalorder %s53, %s67
    %p69 = scmp.eq.s32.totalorder %s22, 0
    %p70 = por %p68, %p69
    %s72 = sadd.s32 %s71, 1
    %p75 = scmp.eq.s32.totalorder %s16, 1
    %p76 = scmp.ne.s32.totalorder %s71, %s73
    %p77 = scmp.eq.s32.totalorder %s16, 0
    %p78 = por %p76, %p77
    %p79 = scmp.ne.s32.totalorder %s71, %s73
    %p80 = scmp.eq.s32.totalorder %s21, 1
    %p81 = por %p79, %p80
    %p82 = scmp.ne.s32.totalorder %s73, %s74
    %p83 = scmp.eq.s32.totalorder %s21, 0
    %p84 = por %p82, %p83
    %p85 = scmp.ne.s32.totalorder %s73, %s74
    %p86 = scmp.eq.s32.totalorder %s22, 1
    %p87 = por %p85, %p86
    %p89 = scmp.ne.s32.totalorder %s74, %s88
    %p90 = scmp.eq.s32.totalorder %s22, 0
    %p91 = por %p89, %p90
    %s93 = sadd.s32 %s92, 1
    %p96 = scmp.eq.s32.totalorder %s16, 1
    %p97 = scmp.ne.s32.totalorder %s92, %s94
    %p98 = scmp.eq.s32.totalorder %s16, 0
    %p99 = por %p97, %p98
    %p100 = scmp.ne.s32.totalorder %s92, %s94
    %p101 = scmp.eq.s32.totalorder %s21, 1
    %p102 = por %p100, %p101
    %p103 = scmp.ne.s32.totalorder %s94, %s95
    %p104 = scmp.eq.s32.totalorder %s21, 0
    %p105 = por %p103, %p104
    %p106 = scmp.ne.s32.totalorder %s94, %s95
    %p107 = scmp.eq.s32.totalorder %s22, 1
    %p108 = por %p106, %p107
    %p110 = scmp.ne.s32.totalorder %s95, %s109
    %p111 = scmp.eq.s32.totalorder %s22, 0
    %p112 = por %p110, %p111
    %s114 = sadd.s32 %s113, 1
    %p117 = scmp.eq.s32.totalorder %s16, 1
    %p118 = scmp.ne.s32.totalorder %s113, %s115
    %p119 = scmp.eq.s32.totalorder %s16, 0
    %p120 = por %p118, %p119
    %p121 = scmp.ne.s32.totalorder %s113, %s115
    %p122 = scmp.eq.s32.totalorder %s21, 1
    %p123 = por %p121, %p122
    %p124 = scmp.ne.s32.totalorder %s115, %s116
    %p125 = scmp.eq.s32.totalorder %s21, 0
    %p126 = por %p124, %p125
    %p127 = scmp.ne.s32.totalorder %s115, %s116
    %p128 = scmp.eq.s32.totalorder %s22, 1
    %p129 = por %p127, %p128
    %p131 = scmp.ne.s32.totalorder %s116, %s130
    %p132 = scmp.eq.s32.totalorder %s22, 0
    %p133 = por %p131, %p132
    %s135 = sadd.s32 %s134, 1
    %p138 = scmp.eq.s32.totalorder %s16, 1
    %p139 = scmp.ne.s32.totalorder %s134, %s136
    %p140 = scmp.eq.s32.totalorder %s16, 0
    %p141 = por %p139, %p140
    %p142 = scmp.ne.s32.totalorder %s134, %s136
    %p143 = scmp.eq.s32.totalorder %s21, 1
    %p144 = por %p142, %p143
    %p145 = scmp.ne.s32.totalorder %s136, %s137
    %p146 = scmp.eq.s32.totalorder %s21, 0
    %p147 = por %p145, %p146
    %p148 = scmp.ne.s32.totalorder %s136, %s137
    %p149 = scmp.eq.s32.totalorder %s22, 1
    %p150 = por %p148, %p149
    %p152 = scmp.ne.s32.totalorder %s137, %s151
    %p153 = scmp.eq.s32.totalorder %s22, 0
    %p154 = por %p152, %p153
    %s156 = sadd.s32 %s155, 1
    %p159 = scmp.eq.s32.totalorder %s16, 1
    %p160 = scmp.ne.s32.totalorder %s155, %s157
    %p161 = scmp.eq.s32.totalorder %s16, 0
    %p162 = por %p160, %p161
    %p163 = scmp.ne.s32.totalorder %s155, %s157
    %p164 = scmp.eq.s32.totalorder %s21, 1
    %p165 = por %p163, %p164
    %p166 = scmp.ne.s32.totalorder %s157, %s158
    %p167 = scmp.eq.s32.totalorder %s21, 0
    %p168 = por %p166, %p167
    %p169 = scmp.ne.s32.totalorder %s157, %s158
    %p170 = scmp.eq.s32.totalorder %s22, 1
    %p171 = por %p169, %p170
    %p173 = scmp.ne.s32.totalorder %s158, %s172
    %p174 = scmp.eq.s32.totalorder %s22, 0
    %p175 = por %p173, %p174
    %s177 = sadd.s32 %s176, 1
    %p180 = scmp.eq.s32.totalorder %s16, 1
    %p181 = scmp.ne.s32.totalorder %s176, %s178
    %p182 = scmp.eq.s32.totalorder %s16, 0
    %p183 = por %p181, %p182
    %p184 = scmp.ne.s32.totalorder %s176, %s178
    %p185 = scmp.eq.s32.totalorder %s21, 1
    %p186 = por %p184, %p185
    %p187 = scmp.ne.s32.totalorder %s178, %s179
    %p188 = scmp.eq.s32.totalorder %s21, 0
    %p189 = por %p187, %p188
    %p190 = scmp.ne.s32.totalorder %s178, %s179
    %p191 = scmp.eq.s32.totalorder %s22, 1
    %p192 = por %p190, %p191
    %p194 = scmp.ne.s32.totalorder %s179, %s193
    %p195 = scmp.eq.s32.totalorder %s22, 0
    %p196 = por %p194, %p195
    %s198 = sadd.s32 %s197, 1
    %p201 = scmp.eq.s32.totalorder %s16, 1
    %p202 = scmp.ne.s32.totalorder %s197, %s199
    %p203 = scmp.eq.s32.totalorder %s16, 0
    %p204 = por %p202, %p203
    %p205 = scmp.ne.s32.totalorder %s197, %s199
    %p206 = scmp.eq.s32.totalorder %s21, 1
    %p207 = por %p205, %p206
    %p208 = scmp.ne.s32.totalorder %s199, %s200
    %p209 = scmp.eq.s32.totalorder %s21, 0
    %p210 = por %p208, %p209
    %p211 = scmp.ne.s32.totalorder %s199, %s200
    %p212 = scmp.eq.s32.totalorder %s22, 1
    %p213 = por %p211, %p212
    %p215 = scmp.ne.s32.totalorder %s200, %s214
    %p216 = scmp.eq.s32.totalorder %s22, 0
    %p217 = por %p215, %p216
    %s219 = sadd.s32 %s218, 1
    %p222 = scmp.eq.s32.totalorder %s16, 1
    %p223 = scmp.ne.s32.totalorder %s218, %s220
    %p224 = scmp.eq.s32.totalorder %s16, 0
    %p225 = por %p223, %p224
    %p226 = scmp.ne.s32.totalorder %s218, %s220
    %p227 = scmp.eq.s32.totalorder %s21, 1
    %p228 = por %p226, %p227
    %p229 = scmp.ne.s32.totalorder %s220, %s221
    %p230 = scmp.eq.s32.totalorder %s21, 0
    %p231 = por %p229, %p230
    %p232 = scmp.ne.s32.totalorder %s220, %s221
    %p233 = scmp.eq.s32.totalorder %s22, 1
    %p234 = por %p232, %p233
    %p236 = scmp.ne.s32.totalorder %s221, %s235
    %p237 = scmp.eq.s32.totalorder %s22, 0
    %p238 = por %p236, %p237
    %s239 = ssub.s32 %s16, %s23
    %p240 = scmp.eq.s32.totalorder %s239, 0
    %s242 = sadd.s32 %s241, 1
    %s243 = scalar_select %p240, %s241, %s242
    %p246 = pneg %p240
    %p247 = scmp.eq.s32.totalorder %s16, 1
    %p248 = por %p246, %p247
    %p249 = scmp.ne.s32.totalorder %s241, %s244
    %p250 = scmp.eq.s32.totalorder %s16, 0
    %p251 = por %p249, %p250
    %p252 = scmp.ne.s32.totalorder %s241, %s244
    %p253 = scmp.eq.s32.totalorder %s21, 1
    %p254 = por %p252, %p253
    %p255 = scmp.ne.s32.totalorder %s244, %s245
    %p256 = scmp.eq.s32.totalorder %s21, 0
    %p257 = por %p255, %p256
    %p258 = scmp.ne.s32.totalorder %s244, %s245
    %p259 = scmp.eq.s32.totalorder %s22, 1
    %p260 = por %p258, %p259
    %p262 = scmp.ne.s32.totalorder %s245, %s261
    %p263 = scmp.eq.s32.totalorder %s22, 0
    %p264 = por %p262, %p263
    %p265 = scmp.le.s32.totalorder 1, %s16
    %p266 = scmp.lt.s32.totalorder %s16, 3
    %p267 = pnand %p265, %p266
    %p268 = pneg %p267
    // Predicated region
    $region9: #{net_forward.1} parent=5 // pred_check
      _
    $region10: #{net_forward.1} parent=5 // pred_check_branch
      %270 = sbr.rel (%p267) target = $region12
    $region11: #{net_forward.1} parent=5 // pred_region
      %s271 = ssub.s32 %s16, 1
      // Predicated region
      $region13: #{net_forward.1} parent=11 // pred_check
        %p272 = pneg %p63
      $region14: #{net_forward.1} parent=11 // pred_check_branch
        %274 = sbr.rel (%p272) target = $region16
      $region15: #{net_forward.1} parent=11 // pred_region
        _
      $region16: #{net_forward.1} parent=11 // pred_fallthru
        _
      // Predicated region
      $region17: #{net_forward.1} parent=11 // pred_check
        %p275 = pneg %p84
      $region18: #{net_forward.1} parent=11 // pred_check_branch
        %277 = sbr.rel (%p275) target = $region20
      $region19: #{net_forward.1} parent=11 // pred_region
        _
      $region20: #{net_forward.1} parent=11 // pred_fallthru
        _
      // Predicated region
      $region21: #{net_forward.1} parent=11 // pred_check
        %p278 = pneg %p105
      $region22: #{net_forward.1} parent=11 // pred_check_branch
        %280 = sbr.rel (%p278) target = $region24
      $region23: #{net_forward.1} parent=11 // pred_region
        _
      $region24: #{net_forward.1} parent=11 // pred_fallthru
        _
      // Predicated region
      $region25: #{net_forward.1} parent=11 // pred_check
        %p281 = pneg %p126
      $region26: #{net_forward.1} parent=11 // pred_check_branch
        %283 = sbr.rel (%p281) target = $region28
      $region27: #{net_forward.1} parent=11 // pred_region
        _
      $region28: #{net_forward.1} parent=11 // pred_fallthru
        _
      // Predicated region
      $region29: #{net_forward.1} parent=11 // pred_check
        %p284 = pneg %p147
      $region30: #{net_forward.1} parent=11 // pred_check_branch
        %286 = sbr.rel (%p284) target = $region32
      $region31: #{net_forward.1} parent=11 // pred_region
        _
      $region32: #{net_forward.1} parent=11 // pred_fallthru
        _
      // Predicated region
      $region33: #{net_forward.1} parent=11 // pred_check
        %p287 = pneg %p168
      $region34: #{net_forward.1} parent=11 // pred_check_branch
        %289 = sbr.rel (%p287) target = $region36
      $region35: #{net_forward.1} parent=11 // pred_region
        _
      $region36: #{net_forward.1} parent=11 // pred_fallthru
        _
      // Predicated region
      $region37: #{net_forward.1} parent=11 // pred_check
        %p290 = pneg %p189
      $region38: #{net_forward.1} parent=11 // pred_check_branch
        %292 = sbr.rel (%p290) target = $region40
      $region39: #{net_forward.1} parent=11 // pred_region
        _
      $region40: #{net_forward.1} parent=11 // pred_fallthru
        _
      // Predicated region
      $region41: #{net_forward.1} parent=11 // pred_check
        %p293 = pneg %p210
      $region42: #{net_forward.1} parent=11 // pred_check_branch
        %295 = sbr.rel (%p293) target = $region44
      $region43: #{net_forward.1} parent=11 // pred_region
        _
      $region44: #{net_forward.1} parent=11 // pred_fallthru
        _
      // Predicated region
      $region45: #{net_forward.1} parent=11 // pred_check
        %p296 = pneg %p231
      $region46: #{net_forward.1} parent=11 // pred_check_branch
        %298 = sbr.rel (%p296) target = $region48
      $region47: #{net_forward.1} parent=11 // pred_region
        _
      $region48: #{net_forward.1} parent=11 // pred_fallthru
        _
    $region12: #{net_forward.1} parent=5 // pred_fallthru
      _
    %p299 = scmp.lt.s32.totalorder %s16, 2
    // Predicated region
    $region49: #{net_forward.1} parent=5 // pred_check
      %p300 = pneg %p299
    $region50: #{net_forward.1} parent=5 // pred_check_branch
      %302 = sbr.rel (%p300) target = $region52
    $region51: #{net_forward.1} parent=5 // pred_region
      // Predicated region
      $region53: #{net_forward.1} parent=51 // pred_check
        %p303 = pneg %p36
      $region54: #{net_forward.1} parent=51 // pred_check_branch
        %305 = sbr.rel (%p303) target = $region56
      $region55: #{net_forward.1} parent=51 // pred_region
        %p306 = scmp.lt.s32.totalorder %s16, 1
        %s307 = scalar_select %p306, %s16, 1
        %s308 = smul.addr %s307, 32
        %s309 = smul.addr %s308, 8
        %s310 = scalar_lea.vmem %s0, %s309
      $region56: #{net_forward.1} parent=51 // pred_fallthru
        _
    $region52: #{net_forward.1} parent=5 // pred_fallthru
      _
    %p311 = scmp.le.s32.totalorder 1, %s16
    %p312 = scmp.lt.s32.totalorder %s16, 3
    %p313 = pnand %p311, %p312
    %p314 = pneg %p313
    // Predicated region
    $region57: #{net_forward.1} parent=5 // pred_check
      _
    $region58: #{net_forward.1} parent=5 // pred_check_branch
      %316 = sbr.rel (%p313) target = $region60
    $region59: #{net_forward.1} parent=5 // pred_region
      %s317 = ssub.s32 %s16, 1
      %p318 = scmp.lt.s32.totalorder %s21, 1
      %s319 = scalar_select %p318, %s21, 1
      %s320 = smul.addr %s319, 32
      %s321 = smul.addr %s320, 8
      %s322 = scalar_lea.vmem %s0, %s321
      %p323 = pneg %p42
      %p324 = pneg %p39
      %p325 = pneg %p63
      %p326 = pneg %p60
      %p327 = pneg %p84
      %p328 = pneg %p81
      %p329 = pneg %p105
      %p330 = pneg %p102
      %p331 = pneg %p126
      %p332 = pneg %p123
      %p333 = pneg %p147
      %p334 = pneg %p144
      %p335 = pneg %p168
      %p336 = pneg %p165
      %p337 = pneg %p189
      %p338 = pneg %p186
      %p339 = pneg %p210
      %p340 = pneg %p207
      %p341 = pneg %p231
      %p342 = pneg %p228
      %p343 = pneg %p257
      %p344 = pneg %p254
      %p345 = scmp.lt.s32.totalorder %s21, 1
      %s346 = scalar_select %p345, %s21, 1
      %s347 = smul.addr %s346, 32
      %s348 = smul.addr %s347, 8
      %s349 = scalar_lea.vmem %s10, %s348
      %p350 = scmp.lt.s32.totalorder %s21, 1
      %s351 = scalar_select %p350, %s21, 1
      %s352 = smul.addr %s351, 32
      %s353 = smul.addr %s352, 8
      %s354 = scalar_lea.vmem %s0, %s353
      %p355 = scmp.lt.s32.totalorder %s21, 1
      %s356 = scalar_select %p355, %s21, 1
      %s357 = smul.addr %s356, 32
      %s358 = smul.addr %s357, 8
      %s359 = scalar_lea.vmem %s10, %s358
      %v360 = vld [vmem:[%s354] sm:$0xff]
      %v361 = vld [vmem:[%s354 + $0x8] sm:$0xff]
      %v362 = vld [vmem:[%s354 + $0x10] sm:$0xff]
      %v363 = vld [vmem:[%s354 + $0x18] sm:$0xff]
      %v364 = vld [vmem:[%s354 + $0x20] sm:$0xff]
      %v365 = vld [vmem:[%s354 + $0x28] sm:$0xff]
      %v366 = vld [vmem:[%s354 + $0x30] sm:$0xff]
      %v367 = vld [vmem:[%s354 + $0x38] sm:$0xff]
      %v368 = vld [vmem:[%s354 + $0x40] sm:$0xff]
      %v369 = vld [vmem:[%s354 + $0x48] sm:$0xff]
      %v370 = vld [vmem:[%s354 + $0x50] sm:$0xff]
      %v371 = vld [vmem:[%s354 + $0x58] sm:$0xff]
      %v372 = vld [vmem:[%s354 + $0x60] sm:$0xff]
      %v373 = vld [vmem:[%s354 + $0x68] sm:$0xff]
      %v374 = vld [vmem:[%s354 + $0x70] sm:$0xff]
      %v375 = vld [vmem:[%s354 + $0x78] sm:$0xff]
      %v376 = vld [vmem:[%s354 + $0x80] sm:$0xff]
      %v377 = vld [vmem:[%s354 + $0x88] sm:$0xff]
      %v378 = vld [vmem:[%s354 + $0x90] sm:$0xff]
      %v379 = vld [vmem:[%s354 + $0x98] sm:$0xff]
      %v380 = vld [vmem:[%s354 + $0xa0] sm:$0xff]
      %v381 = vld [vmem:[%s354 + $0xa8] sm:$0xff]
      %v382 = vld [vmem:[%s354 + $0xb0] sm:$0xff]
      %v383 = vld [vmem:[%s354 + $0xb8] sm:$0xff]
      %v384 = vld [vmem:[%s354 + $0xc0] sm:$0xff]
      %v385 = vld [vmem:[%s354 + $0xc8] sm:$0xff]
      %v386 = vld [vmem:[%s354 + $0xd0] sm:$0xff]
      %v387 = vld [vmem:[%s354 + $0xd8] sm:$0xff]
      %v388 = vld [vmem:[%s354 + $0xe0] sm:$0xff]
      %v389 = vld [vmem:[%s354 + $0xe8] sm:$0xff]
      %v390 = vld [vmem:[%s354 + $0xf0] sm:$0xff]
      %v391 = vld [vmem:[%s354 + $0xf8] sm:$0xff]
      %vm392 = vcmask 39936
      %393 = vst.msk [vmem:[#allocation2] sm:$0xff] %vm392, 0.0
      %394 = vst.msk [vmem:[#allocation2 + $0x8] sm:$0xff] %vm392, 0.0
      %395 = vst.msk [vmem:[#allocation2 + $0x10] sm:$0xff] %vm392, 0.0
      %396 = vst.msk [vmem:[#allocation2 + $0x18] sm:$0xff] %vm392, 0.0
      %397 = vst.msk [vmem:[#allocation2 + $0x20] sm:$0xff] %vm392, 0.0
      %398 = vst.msk [vmem:[#allocation2 + $0x28] sm:$0xff] %vm392, 0.0
      %399 = vst.msk [vmem:[#allocation2 + $0x30] sm:$0xff] %vm392, 0.0
      %400 = vst.msk [vmem:[#allocation2 + $0x38] sm:$0xff] %vm392, 0.0
      %401 = vst.msk [vmem:[#allocation2 + $0x40] sm:$0xff] %vm392, 0.0
      %402 = vst.msk [vmem:[#allocation2 + $0x48] sm:$0xff] %vm392, 0.0
      %403 = vst.msk [vmem:[#allocation2 + $0x50] sm:$0xff] %vm392, 0.0
      %404 = vst.msk [vmem:[#allocation2 + $0x58] sm:$0xff] %vm392, 0.0
      %405 = vst.msk [vmem:[#allocation2 + $0x60] sm:$0xff] %vm392, 0.0
      %406 = vst.msk [vmem:[#allocation2 + $0x68] sm:$0xff] %vm392, 0.0
      %407 = vst.msk [vmem:[#allocation2 + $0x70] sm:$0xff] %vm392, 0.0
      %408 = vst.msk [vmem:[#allocation2 + $0x78] sm:$0xff] %vm392, 0.0
      %409 = vst.msk [vmem:[#allocation2 + $0x80] sm:$0xff] %vm392, 0.0
      %410 = vst.msk [vmem:[#allocation2 + $0x88] sm:$0xff] %vm392, 0.0
      %411 = vst.msk [vmem:[#allocation2 + $0x90] sm:$0xff] %vm392, 0.0
      %412 = vst.msk [vmem:[#allocation2 + $0x98] sm:$0xff] %vm392, 0.0
      %413 = vst.msk [vmem:[#allocation2 + $0xa0] sm:$0xff] %vm392, 0.0
      %414 = vst.msk [vmem:[#allocation2 + $0xa8] sm:$0xff] %vm392, 0.0
      %415 = vst.msk [vmem:[#allocation2 + $0xb0] sm:$0xff] %vm392, 0.0
      %416 = vst.msk [vmem:[#allocation2 + $0xb8] sm:$0xff] %vm392, 0.0
      %417 = vst.msk [vmem:[#allocation2 + $0xc0] sm:$0xff] %vm392, 0.0
      %418 = vst.msk [vmem:[#allocation2 + $0xc8] sm:$0xff] %vm392, 0.0
      %419 = vst.msk [vmem:[#allocation2 + $0xd0] sm:$0xff] %vm392, 0.0
      %420 = vst.msk [vmem:[#allocation2 + $0xd8] sm:$0xff] %vm392, 0.0
      %421 = vst.msk [vmem:[#allocation2 + $0xe0] sm:$0xff] %vm392, 0.0
      %422 = vst.msk [vmem:[#allocation2 + $0xe8] sm:$0xff] %vm392, 0.0
      %423 = vst.msk [vmem:[#allocation2 + $0xf0] sm:$0xff] %vm392, 0.0
      %424 = vst.msk [vmem:[#allocation2 + $0xf8] sm:$0xff] %vm392, 0.0
      %425 = vst.msk [vmem:[#allocation2 + $0x100] sm:$0xff] %vm392, 0.0
      %426 = vst.msk [vmem:[#allocation2 + $0x108] sm:$0xff] %vm392, 0.0
      %427 = vst.msk [vmem:[#allocation2 + $0x110] sm:$0xff] %vm392, 0.0
      %428 = vst.msk [vmem:[#allocation2 + $0x118] sm:$0xff] %vm392, 0.0
      %429 = vst.msk [vmem:[#allocation2 + $0x120] sm:$0xff] %vm392, 0.0
      %430 = vst.msk [vmem:[#allocation2 + $0x128] sm:$0xff] %vm392, 0.0
      %431 = vst.msk [vmem:[#allocation2 + $0x130] sm:$0xff] %vm392, 0.0
      %432 = vst.msk [vmem:[#allocation2 + $0x138] sm:$0xff] %vm392, 0.0
      %433 = vst.msk [vmem:[#allocation2 + $0x140] sm:$0xff] %vm392, 0.0
      %434 = vst.msk [vmem:[#allocation2 + $0x148] sm:$0xff] %vm392, 0.0
      %435 = vst.msk [vmem:[#allocation2 + $0x150] sm:$0xff] %vm392, 0.0
      %436 = vst.msk [vmem:[#allocation2 + $0x158] sm:$0xff] %vm392, 0.0
      %437 = vst.msk [vmem:[#allocation2 + $0x160] sm:$0xff] %vm392, 0.0
      %438 = vst.msk [vmem:[#allocation2 + $0x168] sm:$0xff] %vm392, 0.0
      %439 = vst.msk [vmem:[#allocation2 + $0x170] sm:$0xff] %vm392, 0.0
      %440 = vst.msk [vmem:[#allocation2 + $0x178] sm:$0xff] %vm392, 0.0
      %441 = vst.msk [vmem:[#allocation2 + $0x180] sm:$0xff] %vm392, 0.0
      %442 = vst.msk [vmem:[#allocation2 + $0x188] sm:$0xff] %vm392, 0.0
      %443 = vst.msk [vmem:[#allocation2 + $0x190] sm:$0xff] %vm392, 0.0
      %444 = vst.msk [vmem:[#allocation2 + $0x198] sm:$0xff] %vm392, 0.0
      %445 = vst.msk [vmem:[#allocation2 + $0x1a0] sm:$0xff] %vm392, 0.0
      %446 = vst.msk [vmem:[#allocation2 + $0x1a8] sm:$0xff] %vm392, 0.0
      %447 = vst.msk [vmem:[#allocation2 + $0x1b0] sm:$0xff] %vm392, 0.0
      %448 = vst.msk [vmem:[#allocation2 + $0x1b8] sm:$0xff] %vm392, 0.0
      %449 = vst.msk [vmem:[#allocation2 + $0x1c0] sm:$0xff] %vm392, 0.0
      %450 = vst.msk [vmem:[#allocation2 + $0x1c8] sm:$0xff] %vm392, 0.0
      %451 = vst.msk [vmem:[#allocation2 + $0x1d0] sm:$0xff] %vm392, 0.0
      %452 = vst.msk [vmem:[#allocation2 + $0x1d8] sm:$0xff] %vm392, 0.0
      %453 = vst.msk [vmem:[#allocation2 + $0x1e0] sm:$0xff] %vm392, 0.0
      %454 = vst.msk [vmem:[#allocation2 + $0x1e8] sm:$0xff] %vm392, 0.0
      %455 = vst.msk [vmem:[#allocation2 + $0x1f0] sm:$0xff] %vm392, 0.0
      %456 = vst.msk [vmem:[#allocation2 + $0x1f8] sm:$0xff] %vm392, 0.0
      %457 = vst.msk [vmem:[#allocation2 + $0x200] sm:$0xff] %vm392, 0.0
      %458 = vst.msk [vmem:[#allocation2 + $0x208] sm:$0xff] %vm392, 0.0
      %459 = vst.msk [vmem:[#allocation2 + $0x210] sm:$0xff] %vm392, 0.0
      %460 = vst.msk [vmem:[#allocation2 + $0x218] sm:$0xff] %vm392, 0.0
      %461 = vst.msk [vmem:[#allocation2 + $0x220] sm:$0xff] %vm392, 0.0
      %462 = vst.msk [vmem:[#allocation2 + $0x228] sm:$0xff] %vm392, 0.0
      %463 = vst.msk [vmem:[#allocation2 + $0x230] sm:$0xff] %vm392, 0.0
      %464 = vst.msk [vmem:[#allocation2 + $0x238] sm:$0xff] %vm392, 0.0
      %s465 = scalar_lea.vmem [#allocation2], 32
      %466 = vst.msk [vmem:[%s465 + $0x8] sm:$0xff] %vm392, %v360
      %467 = vst.msk [vmem:[%s465 + $0x10] sm:$0xff] %vm392, %v361
      %468 = vst.msk [vmem:[%s465 + $0x28] sm:$0xff] %vm392, %v362
      %469 = vst.msk [vmem:[%s465 + $0x30] sm:$0xff] %vm392, %v363
      %470 = vst.msk [vmem:[%s465 + $0x48] sm:$0xff] %vm392, %v364
      %471 = vst.msk [vmem:[%s465 + $0x50] sm:$0xff] %vm392, %v365
      %472 = vst.msk [vmem:[%s465 + $0x68] sm:$0xff] %vm392, %v366
      %473 = vst.msk [vmem:[%s465 + $0x70] sm:$0xff] %vm392, %v367
      %474 = vst.msk [vmem:[%s465 + $0x88] sm:$0xff] %vm392, %v368
      %475 = vst.msk [vmem:[%s465 + $0x90] sm:$0xff] %vm392, %v369
      %476 = vst.msk [vmem:[%s465 + $0xa8] sm:$0xff] %vm392, %v370
      %477 = vst.msk [vmem:[%s465 + $0xb0] sm:$0xff] %vm392, %v371
      %478 = vst.msk [vmem:[%s465 + $0xc8] sm:$0xff] %vm392, %v372
      %479 = vst.msk [vmem:[%s465 + $0xd0] sm:$0xff] %vm392, %v373
      %480 = vst.msk [vmem:[%s465 + $0xe8] sm:$0xff] %vm392, %v374
      %481 = vst.msk [vmem:[%s465 + $0xf0] sm:$0xff] %vm392, %v375
      %482 = vst.msk [vmem:[%s465 + $0x108] sm:$0xff] %vm392, %v376
      %483 = vst.msk [vmem:[%s465 + $0x110] sm:$0xff] %vm392, %v377
      %484 = vst.msk [vmem:[%s465 + $0x128] sm:$0xff] %vm392, %v378
      %485 = vst.msk [vmem:[%s465 + $0x130] sm:$0xff] %vm392, %v379
      %486 = vst.msk [vmem:[%s465 + $0x148] sm:$0xff] %vm392, %v380
      %487 = vst.msk [vmem:[%s465 + $0x150] sm:$0xff] %vm392, %v381
      %488 = vst.msk [vmem:[%s465 + $0x168] sm:$0xff] %vm392, %v382
      %489 = vst.msk [vmem:[%s465 + $0x170] sm:$0xff] %vm392, %v383
      %490 = vst.msk [vmem:[%s465 + $0x188] sm:$0xff] %vm392, %v384
      %491 = vst.msk [vmem:[%s465 + $0x190] sm:$0xff] %vm392, %v385
      %492 = vst.msk [vmem:[%s465 + $0x1a8] sm:$0xff] %vm392, %v386
      %493 = vst.msk [vmem:[%s465 + $0x1b0] sm:$0xff] %vm392, %v387
      %494 = vst.msk [vmem:[%s465 + $0x1c8] sm:$0xff] %vm392, %v388
      %495 = vst.msk [vmem:[%s465 + $0x1d0] sm:$0xff] %vm392, %v389
      %496 = vst.msk [vmem:[%s465 + $0x1e8] sm:$0xff] %vm392, %v390
      %497 = vst.msk [vmem:[%s465 + $0x1f0] sm:$0xff] %vm392, %v391
      %v498 = vld [vmem:[#allocation2 + $0x7] sm:$0xff]
      %v499 = vld [vmem:[#allocation2 + $0xf] sm:$0xff]
      %v500 = vld [vmem:[#allocation2 + $0x27] sm:$0xff]
      %v501 = vld [vmem:[#allocation2 + $0x2f] sm:$0xff]
      %v502 = vld [vmem:[#allocation2 + $0x47] sm:$0xff]
      %v503 = vld [vmem:[#allocation2 + $0x4f] sm:$0xff]
      %v504 = vld [vmem:[#allocation2 + $0x67] sm:$0xff]
      %v505 = vld [vmem:[#allocation2 + $0x6f] sm:$0xff]
      %v506 = vld [vmem:[#allocation2 + $0x87] sm:$0xff]
      %v507 = vld [vmem:[#allocation2 + $0x8f] sm:$0xff]
      %v508 = vld [vmem:[#allocation2 + $0xa7] sm:$0xff]
      %v509 = vld [vmem:[#allocation2 + $0xaf] sm:$0xff]
      %v510 = vld [vmem:[#allocation2 + $0xc7] sm:$0xff]
      %v511 = vld [vmem:[#allocation2 + $0xcf] sm:$0xff]
      %v512 = vld [vmem:[#allocation2 + $0xe7] sm:$0xff]
      %v513 = vld [vmem:[#allocation2 + $0xef] sm:$0xff]
      %v514 = vld [vmem:[#allocation2 + $0x107] sm:$0xff]
      %v515 = vld [vmem:[#allocation2 + $0x10f] sm:$0xff]
      %v516 = vld [vmem:[#allocation2 + $0x127] sm:$0xff]
      %v517 = vld [vmem:[#allocation2 + $0x12f] sm:$0xff]
      %v518 = vld [vmem:[#allocation2 + $0x147] sm:$0xff]
      %v519 = vld [vmem:[#allocation2 + $0x14f] sm:$0xff]
      %v520 = vld [vmem:[#allocation2 + $0x167] sm:$0xff]
      %v521 = vld [vmem:[#allocation2 + $0x16f] sm:$0xff]
      %v522 = vld [vmem:[#allocation2 + $0x187] sm:$0xff]
      %v523 = vld [vmem:[#allocation2 + $0x18f] sm:$0xff]
      %v524 = vld [vmem:[#allocation2 + $0x1a7] sm:$0xff]
      %v525 = vld [vmem:[#allocation2 + $0x1af] sm:$0xff]
      %v526 = vld [vmem:[#allocation2 + $0x1c7] sm:$0xff]
      %v527 = vld [vmem:[#allocation2 + $0x1cf] sm:$0xff]
      %v528 = vld [vmem:[#allocation2 + $0x1e7] sm:$0xff]
      %v529 = vld [vmem:[#allocation2 + $0x1ef] sm:$0xff]
      %v530 = vld [vmem:[%s2] sm:$0x1f]
      %v531 = vld [vmem:[#allocation2 + $0x8] sm:$0xff]
      %v532 = vld [vmem:[#allocation2 + $0x10] sm:$0xff]
      %v533 = vld [vmem:[#allocation2 + $0x28] sm:$0xff]
      %v534 = vld [vmem:[#allocation2 + $0x30] sm:$0xff]
      %v535 = vld [vmem:[#allocation2 + $0x48] sm:$0xff]
      %v536 = vld [vmem:[#allocation2 + $0x50] sm:$0xff]
      %v537 = vld [vmem:[#allocation2 + $0x68] sm:$0xff]
      %v538 = vld [vmem:[#allocation2 + $0x70] sm:$0xff]
      %v539 = vld [vmem:[#allocation2 + $0x88] sm:$0xff]
      %v540 = vld [vmem:[#allocation2 + $0x90] sm:$0xff]
      %v541 = vld [vmem:[#allocation2 + $0xa8] sm:$0xff]
      %v542 = vld [vmem:[#allocation2 + $0xb0] sm:$0xff]
      %v543 = vld [vmem:[#allocation2 + $0xc8] sm:$0xff]
      %v544 = vld [vmem:[#allocation2 + $0xd0] sm:$0xff]
      %v545 = vld [vmem:[#allocation2 + $0xe8] sm:$0xff]
      %v546 = vld [vmem:[#allocation2 + $0xf0] sm:$0xff]
      %v547 = vld [vmem:[#allocation2 + $0x108] sm:$0xff]
      %v548 = vld [vmem:[#allocation2 + $0x110] sm:$0xff]
      %v549 = vld [vmem:[#allocation2 + $0x128] sm:$0xff]
      %v550 = vld [vmem:[#allocation2 + $0x130] sm:$0xff]
      %v551 = vld [vmem:[#allocation2 + $0x148] sm:$0xff]
      %v552 = vld [vmem:[#allocation2 + $0x150] sm:$0xff]
      %v553 = vld [vmem:[#allocation2 + $0x168] sm:$0xff]
      %v554 = vld [vmem:[#allocation2 + $0x170] sm:$0xff]
      %v555 = vld [vmem:[#allocation2 + $0x188] sm:$0xff]
      %v556 = vld [vmem:[#allocation2 + $0x190] sm:$0xff]
      %v557 = vld [vmem:[#allocation2 + $0x1a8] sm:$0xff]
      %v558 = vld [vmem:[#allocation2 + $0x1b0] sm:$0xff]
      %v559 = vld [vmem:[#allocation2 + $0x1c8] sm:$0xff]
      %v560 = vld [vmem:[#allocation2 + $0x1d0] sm:$0xff]
      %v561 = vld [vmem:[#allocation2 + $0x1e8] sm:$0xff]
      %v562 = vld [vmem:[#allocation2 + $0x1f0] sm:$0xff]
      %s563 = scalar_lea.vmem %s2, 8
      %v564 = vld [vmem:[%s563] sm:$0x1f]
      %v566 = vsel %vm392, %v531, 0
      %v569 = vsel %vm392, %v532, 0
      %v572 = vsel %vm392, %v533, 0
      %v575 = vsel %vm392, %v534, 0
      %v578 = vsel %vm392, %v535, 0
      %v581 = vsel %vm392, %v536, 0
      %v584 = vsel %vm392, %v537, 0
      %v587 = vsel %vm392, %v538, 0
      %v590 = vsel %vm392, %v539, 0
      %v593 = vsel %vm392, %v540, 0
      %v596 = vsel %vm392, %v541, 0
      %v599 = vsel %vm392, %v542, 0
      %v602 = vsel %vm392, %v543, 0
      %v605 = vsel %vm392, %v544, 0
      %v608 = vsel %vm392, %v545, 0
      %v611 = vsel %vm392, %v546, 0
      %v614 = vsel %vm392, %v547, 0
      %v617 = vsel %vm392, %v548, 0
      %v620 = vsel %vm392, %v549, 0
      %v623 = vsel %vm392, %v550, 0
      %v626 = vsel %vm392, %v551, 0
      %v629 = vsel %vm392, %v552, 0
      %v632 = vsel %vm392, %v553, 0
      %v635 = vsel %vm392, %v554, 0
      %v638 = vsel %vm392, %v555, 0
      %v641 = vsel %vm392, %v556, 0
      %v644 = vsel %vm392, %v557, 0
      %v647 = vsel %vm392, %v558, 0
      %v650 = vsel %vm392, %v559, 0
      %v653 = vsel %vm392, %v560, 0
      %v656 = vsel %vm392, %v561, 0
      %v659 = vsel %vm392, %v562, 0
      %vm661 = vcmask 1044480
      %v663 = vsel %vm661, %v564, 0
      %665 = vmatpush.msra.mxu0 0.0
      %666 = vmatpush.msra.mxu0 0.0
      %667 = vmatpush.msra.mxu0 0.0
      %668 = vmatpush.msra.mxu0 0.0
      %669 = vmatpush.msra.mxu0 0.0
      %670 = vmatpush.msra.mxu0 0.0
      %671 = vmatpush.msra.mxu0 0.0
      %672 = vmatpush.msra.mxu0 0.0
      %673 = vmatpush.msra.mxu0 0.0
      %674 = vmatpush.msra.mxu0 0.0
      %675 = vmatpush.msra.mxu0 0.0
      %676 = vmatpush.msra.mxu0 0.0
      %677 = vmatpush.msra.mxu0 0.0
      %678 = vmatpush.msra.mxu0 0.0
      %679 = vmatpush.msra.mxu0 0.0
      %680 = vmatpush.msra.mxu0 %v663
      %681 = vmatmul.f32.gmra.mxu0 %v566
      %v682 = vpop.f32.mrf.mxu0
      %v683 = vadd.f32 0.0, %v682
      %684 = vmatmul.f32.gmra.mxu0 %v569
      %v685 = vpop.f32.mrf.mxu0
      %v686 = vadd.f32 0.0, %v685
      %687 = vmatmul.f32.gmra.mxu0 %v572
      %v688 = vpop.f32.mrf.mxu0
      %v689 = vadd.f32 0.0, %v688
      %690 = vmatmul.f32.gmra.mxu0 %v575
      %v691 = vpop.f32.mrf.mxu0
      %v692 = vadd.f32 0.0, %v691
      %693 = vmatmul.f32.gmra.mxu0 %v578
      %v694 = vpop.f32.mrf.mxu0
      %v695 = vadd.f32 0.0, %v694
      %696 = vmatmul.f32.gmra.mxu0 %v581
      %v697 = vpop.f32.mrf.mxu0
      %v698 = vadd.f32 0.0, %v697
      %699 = vmatmul.f32.gmra.mxu0 %v584
      %v700 = vpop.f32.mrf.mxu0
      %v701 = vadd.f32 0.0, %v700
      %702 = vmatmul.f32.gmra.mxu0 %v587
      %v703 = vpop.f32.mrf.mxu0
      %v704 = vadd.f32 0.0, %v703
      %705 = vmatmul.f32.gmra.mxu0 %v590
      %v706 = vpop.f32.mrf.mxu0
      %v707 = vadd.f32 0.0, %v706
      %708 = vmatmul.f32.gmra.mxu0 %v593
      %v709 = vpop.f32.mrf.mxu0
      %v710 = vadd.f32 0.0, %v709
      %711 = vmatmul.f32.gmra.mxu0 %v596
      %v712 = vpop.f32.mrf.mxu0
      %v713 = vadd.f32 0.0, %v712
      %714 = vmatmul.f32.gmra.mxu0 %v599
      %v715 = vpop.f32.mrf.mxu0
      %v716 = vadd.f32 0.0, %v715
      %717 = vmatmul.f32.gmra.mxu0 %v602
      %v718 = vpop.f32.mrf.mxu0
      %v719 = vadd.f32 0.0, %v718
      %720 = vmatmul.f32.gmra.mxu0 %v605
      %v721 = vpop.f32.mrf.mxu0
      %v722 = vadd.f32 0.0, %v721
      %723 = vmatmul.f32.gmra.mxu0 %v608
      %v724 = vpop.f32.mrf.mxu0
      %v725 = vadd.f32 0.0, %v724
      %726 = vmatmul.f32.gmra.mxu0 %v611
      %v727 = vpop.f32.mrf.mxu0
      %v728 = vadd.f32 0.0, %v727
      %729 = vmatmul.f32.gmra.mxu0 %v614
      %v730 = vpop.f32.mrf.mxu0
      %v731 = vadd.f32 0.0, %v730
      %732 = vmatmul.f32.gmra.mxu0 %v617
      %v733 = vpop.f32.mrf.mxu0
      %v734 = vadd.f32 0.0, %v733
      %735 = vmatmul.f32.gmra.mxu0 %v620
      %v736 = vpop.f32.mrf.mxu0
      %v737 = vadd.f32 0.0, %v736
      %738 = vmatmul.f32.gmra.mxu0 %v623
      %v739 = vpop.f32.mrf.mxu0
      %v740 = vadd.f32 0.0, %v739
      %741 = vmatmul.f32.gmra.mxu0 %v626
      %v742 = vpop.f32.mrf.mxu0
      %v743 = vadd.f32 0.0, %v742
      %744 = vmatmul.f32.gmra.mxu0 %v629
      %v745 = vpop.f32.mrf.mxu0
      %v746 = vadd.f32 0.0, %v745
      %747 = vmatmul.f32.gmra.mxu0 %v632
      %v748 = vpop.f32.mrf.mxu0
      %v749 = vadd.f32 0.0, %v748
      %750 = vmatmul.f32.gmra.mxu0 %v635
      %v751 = vpop.f32.mrf.mxu0
      %v752 = vadd.f32 0.0, %v751
      %753 = vmatmul.f32.gmra.mxu0 %v638
      %v754 = vpop.f32.mrf.mxu0
      %v755 = vadd.f32 0.0, %v754
      %756 = vmatmul.f32.gmra.mxu0 %v641
      %v757 = vpop.f32.mrf.mxu0
      %v758 = vadd.f32 0.0, %v757
      %759 = vmatmul.f32.gmra.mxu0 %v644
      %v760 = vpop.f32.mrf.mxu0
      %v761 = vadd.f32 0.0, %v760
      %762 = vmatmul.f32.gmra.mxu0 %v647
      %v763 = vpop.f32.mrf.mxu0
      %v764 = vadd.f32 0.0, %v763
      %765 = vmatmul.f32.gmra.mxu0 %v650
      %v766 = vpop.f32.mrf.mxu0
      %v767 = vadd.f32 0.0, %v766
      %768 = vmatmul.f32.gmra.mxu0 %v653
      %v769 = vpop.f32.mrf.mxu0
      %v770 = vadd.f32 0.0, %v769
      %771 = vmatmul.f32.gmra.mxu0 %v656
      %v772 = vpop.f32.mrf.mxu0
      %v773 = vadd.f32 0.0, %v772
      %774 = vmatmul.f32.gmra.mxu0 %v659
      %v775 = vpop.f32.mrf.mxu0
      %v776 = vadd.f32 0.0, %v775
      %777 = vdwg.mxu0
      %v779 = vsel %vm392, %v498, 0
      %v782 = vsel %vm392, %v499, 0
      %v785 = vsel %vm392, %v500, 0
      %v788 = vsel %vm392, %v501, 0
      %v791 = vsel %vm392, %v502, 0
      %v794 = vsel %vm392, %v503, 0
      %v797 = vsel %vm392, %v504, 0
      %v800 = vsel %vm392, %v505, 0
      %v803 = vsel %vm392, %v506, 0
      %v806 = vsel %vm392, %v507, 0
      %v809 = vsel %vm392, %v508, 0
      %v812 = vsel %vm392, %v509, 0
      %v815 = vsel %vm392, %v510, 0
      %v818 = vsel %vm392, %v511, 0
      %v821 = vsel %vm392, %v512, 0
      %v824 = vsel %vm392, %v513, 0
      %v827 = vsel %vm392, %v514, 0
      %v830 = vsel %vm392, %v515, 0
      %v833 = vsel %vm392, %v516, 0
      %v836 = vsel %vm392, %v517, 0
      %v839 = vsel %vm392, %v518, 0
      %v842 = vsel %vm392, %v519, 0
      %v845 = vsel %vm392, %v520, 0
      %v848 = vsel %vm392, %v521, 0
      %v851 = vsel %vm392, %v522, 0
      %v854 = vsel %vm392, %v523, 0
      %v857 = vsel %vm392, %v524, 0
      %v860 = vsel %vm392, %v525, 0
      %v863 = vsel %vm392, %v526, 0
      %v866 = vsel %vm392, %v527, 0
      %v869 = vsel %vm392, %v528, 0
      %v872 = vsel %vm392, %v529, 0
      %v875 = vsel %vm661, %v530, 0
      %877 = vmatpush.msra.mxu0 0.0
      %878 = vmatpush.msra.mxu0 0.0
      %879 = vmatpush.msra.mxu0 0.0
      %880 = vmatpush.msra.mxu0 0.0
      %881 = vmatpush.msra.mxu0 0.0
      %882 = vmatpush.msra.mxu0 0.0
      %883 = vmatpush.msra.mxu0 0.0
      %884 = vmatpush.msra.mxu0 0.0
      %885 = vmatpush.msra.mxu0 0.0
      %886 = vmatpush.msra.mxu0 0.0
      %887 = vmatpush.msra.mxu0 0.0
      %888 = vmatpush.msra.mxu0 0.0
      %889 = vmatpush.msra.mxu0 0.0
      %890 = vmatpush.msra.mxu0 0.0
      %891 = vmatpush.msra.mxu0 0.0
      %892 = vmatpush.msra.mxu0 %v875
      %893 = vmatmul.f32.gmra.mxu0 %v779
      %v894 = vpop.f32.mrf.mxu0
      %v895 = vadd.f32 %v683, %v894
      %896 = vmatmul.f32.gmra.mxu0 %v782
      %v897 = vpop.f32.mrf.mxu0
      %v898 = vadd.f32 %v686, %v897
      %899 = vmatmul.f32.gmra.mxu0 %v785
      %v900 = vpop.f32.mrf.mxu0
      %v901 = vadd.f32 %v689, %v900
      %902 = vmatmul.f32.gmra.mxu0 %v788
      %v903 = vpop.f32.mrf.mxu0
      %v904 = vadd.f32 %v692, %v903
      %905 = vmatmul.f32.gmra.mxu0 %v791
      %v906 = vpop.f32.mrf.mxu0
      %v907 = vadd.f32 %v695, %v906
      %908 = vmatmul.f32.gmra.mxu0 %v794
      %v909 = vpop.f32.mrf.mxu0
      %v910 = vadd.f32 %v698, %v909
      %911 = vmatmul.f32.gmra.mxu0 %v797
      %v912 = vpop.f32.mrf.mxu0
      %v913 = vadd.f32 %v701, %v912
      %914 = vmatmul.f32.gmra.mxu0 %v800
      %v915 = vpop.f32.mrf.mxu0
      %v916 = vadd.f32 %v704, %v915
      %917 = vmatmul.f32.gmra.mxu0 %v803
      %v918 = vpop.f32.mrf.mxu0
      %v919 = vadd.f32 %v707, %v918
      %920 = vmatmul.f32.gmra.mxu0 %v806
      %v921 = vpop.f32.mrf.mxu0
      %v922 = vadd.f32 %v710, %v921
      %923 = vmatmul.f32.gmra.mxu0 %v809
      %v924 = vpop.f32.mrf.mxu0
      %v925 = vadd.f32 %v713, %v924
      %926 = vmatmul.f32.gmra.mxu0 %v812
      %v927 = vpop.f32.mrf.mxu0
      %v928 = vadd.f32 %v716, %v927
      %929 = vmatmul.f32.gmra.mxu0 %v815
      %v930 = vpop.f32.mrf.mxu0
      %v931 = vadd.f32 %v719, %v930
      %932 = vmatmul.f32.gmra.mxu0 %v818
      %v933 = vpop.f32.mrf.mxu0
      %v934 = vadd.f32 %v722, %v933
      %935 = vmatmul.f32.gmra.mxu0 %v821
      %v936 = vpop.f32.mrf.mxu0
      %v937 = vadd.f32 %v725, %v936
      %938 = vmatmul.f32.gmra.mxu0 %v824
      %v939 = vpop.f32.mrf.mxu0
      %v940 = vadd.f32 %v728, %v939
      %941 = vmatmul.f32.gmra.mxu0 %v827
      %v942 = vpop.f32.mrf.mxu0
      %v943 = vadd.f32 %v731, %v942
      %944 = vmatmul.f32.gmra.mxu0 %v830
      %v945 = vpop.f32.mrf.mxu0
      %v946 = vadd.f32 %v734, %v945
      %947 = vmatmul.f32.gmra.mxu0 %v833
      %v948 = vpop.f32.mrf.mxu0
      %v949 = vadd.f32 %v737, %v948
      %950 = vmatmul.f32.gmra.mxu0 %v836
      %v951 = vpop.f32.mrf.mxu0
      %v952 = vadd.f32 %v740, %v951
      %953 = vmatmul.f32.gmra.mxu0 %v839
      %v954 = vpop.f32.mrf.mxu0
      %v955 = vadd.f32 %v743, %v954
      %956 = vmatmul.f32.gmra.mxu0 %v842
      %v957 = vpop.f32.mrf.mxu0
      %v958 = vadd.f32 %v746, %v957
      %959 = vmatmul.f32.gmra.mxu0 %v845
      %v960 = vpop.f32.mrf.mxu0
      %v961 = vadd.f32 %v749, %v960
      %962 = vmatmul.f32.gmra.mxu0 %v848
      %v963 = vpop.f32.mrf.mxu0
      %v964 = vadd.f32 %v752, %v963
      %965 = vmatmul.f32.gmra.mxu0 %v851
      %v966 = vpop.f32.mrf.mxu0
      %v967 = vadd.f32 %v755, %v966
      %968 = vmatmul.f32.gmra.mxu0 %v854
      %v969 = vpop.f32.mrf.mxu0
      %v970 = vadd.f32 %v758, %v969
      %971 = vmatmul.f32.gmra.mxu0 %v857
      %v972 = vpop.f32.mrf.mxu0
      %v973 = vadd.f32 %v761, %v972
      %974 = vmatmul.f32.gmra.mxu0 %v860
      %v975 = vpop.f32.mrf.mxu0
      %v976 = vadd.f32 %v764, %v975
      %977 = vmatmul.f32.gmra.mxu0 %v863
      %v978 = vpop.f32.mrf.mxu0
      %v979 = vadd.f32 %v767, %v978
      %980 = vmatmul.f32.gmra.mxu0 %v866
      %v981 = vpop.f32.mrf.mxu0
      %v982 = vadd.f32 %v770, %v981
      %983 = vmatmul.f32.gmra.mxu0 %v869
      %v984 = vpop.f32.mrf.mxu0
      %v985 = vadd.f32 %v773, %v984
      %986 = vmatmul.f32.gmra.mxu0 %v872
      %v987 = vpop.f32.mrf.mxu0
      %v988 = vadd.f32 %v776, %v987
      %989 = vdwg.mxu0
      %v990 = vld [vmem:[#allocation2 + $0x9] sm:$0xff]
      %v991 = vld [vmem:[#allocation2 + $0x11] sm:$0xff]
      %v992 = vld [vmem:[#allocation2 + $0x29] sm:$0xff]
      %v993 = vld [vmem:[#allocation2 + $0x31] sm:$0xff]
      %v994 = vld [vmem:[#allocation2 + $0x49] sm:$0xff]
      %v995 = vld [vmem:[#allocation2 + $0x51] sm:$0xff]
      %v996 = vld [vmem:[#allocation2 + $0x69] sm:$0xff]
      %v997 = vld [vmem:[#allocation2 + $0x71] sm:$0xff]
      %v998 = vld [vmem:[#allocation2 + $0x89] sm:$0xff]
      %v999 = vld [vmem:[#allocation2 + $0x91] sm:$0xff]
      %v1000 = vld [vmem:[#allocation2 + $0xa9] sm:$0xff]
      %v1001 = vld [vmem:[#allocation2 + $0xb1] sm:$0xff]
      %v1002 = vld [vmem:[#allocation2 + $0xc9] sm:$0xff]
      %v1003 = vld [vmem:[#allocation2 + $0xd1] sm:$0xff]
      %v1004 = vld [vmem:[#allocation2 + $0xe9] sm:$0xff]
      %v1005 = vld [vmem:[#allocation2 + $0xf1] sm:$0xff]
      %v1006 = vld [vmem:[#allocation2 + $0x109] sm:$0xff]
      %v1007 = vld [vmem:[#allocation2 + $0x111] sm:$0xff]
      %v1008 = vld [vmem:[#allocation2 + $0x129] sm:$0xff]
      %v1009 = vld [vmem:[#allocation2 + $0x131] sm:$0xff]
      %v1010 = vld [vmem:[#allocation2 + $0x149] sm:$0xff]
      %v1011 = vld [vmem:[#allocation2 + $0x151] sm:$0xff]
      %v1012 = vld [vmem:[#allocation2 + $0x169] sm:$0xff]
      %v1013 = vld [vmem:[#allocation2 + $0x171] sm:$0xff]
      %v1014 = vld [vmem:[#allocation2 + $0x189] sm:$0xff]
      %v1015 = vld [vmem:[#allocation2 + $0x191] sm:$0xff]
      %v1016 = vld [vmem:[#allocation2 + $0x1a9] sm:$0xff]
      %v1017 = vld [vmem:[#allocation2 + $0x1b1] sm:$0xff]
      %v1018 = vld [vmem:[#allocation2 + $0x1c9] sm:$0xff]
      %v1019 = vld [vmem:[#allocation2 + $0x1d1] sm:$0xff]
      %v1020 = vld [vmem:[#allocation2 + $0x1e9] sm:$0xff]
      %v1021 = vld [vmem:[#allocation2 + $0x1f1] sm:$0xff]
      %s1022 = scalar_lea.vmem %s2, 16
      %v1023 = vld [vmem:[%s1022] sm:$0x1f]
      %v1025 = vsel %vm392, %v990, 0
      %v1028 = vsel %vm392, %v991, 0
      %v1031 = vsel %vm392, %v992, 0
      %v1034 = vsel %vm392, %v993, 0
      %v1037 = vsel %vm392, %v994, 0
      %v1040 = vsel %vm392, %v995, 0
      %v1043 = vsel %vm392, %v996, 0
      %v1046 = vsel %vm392, %v997, 0
      %v1049 = vsel %vm392, %v998, 0
      %v1052 = vsel %vm392, %v999, 0
      %v1055 = vsel %vm392, %v1000, 0
      %v1058 = vsel %vm392, %v1001, 0
      %v1061 = vsel %vm392, %v1002, 0
      %v1064 = vsel %vm392, %v1003, 0
      %v1067 = vsel %vm392, %v1004, 0
      %v1070 = vsel %vm392, %v1005, 0
      %v1073 = vsel %vm392, %v1006, 0
      %v1076 = vsel %vm392, %v1007, 0
      %v1079 = vsel %vm392, %v1008, 0
      %v1082 = vsel %vm392, %v1009, 0
      %v1085 = vsel %vm392, %v1010, 0
      %v1088 = vsel %vm392, %v1011, 0
      %v1091 = vsel %vm392, %v1012, 0
      %v1094 = vsel %vm392, %v1013, 0
      %v1097 = vsel %vm392, %v1014, 0
      %v1100 = vsel %vm392, %v1015, 0
      %v1103 = vsel %vm392, %v1016, 0
      %v1106 = vsel %vm392, %v1017, 0
      %v1109 = vsel %vm392, %v1018, 0
      %v1112 = vsel %vm392, %v1019, 0
      %v1115 = vsel %vm392, %v1020, 0
      %v1118 = vsel %vm392, %v1021, 0
      %v1121 = vsel %vm661, %v1023, 0
      %1123 = vmatpush.msra.mxu0 0.0
      %1124 = vmatpush.msra.mxu0 0.0
      %1125 = vmatpush.msra.mxu0 0.0
      %1126 = vmatpush.msra.mxu0 0.0
      %1127 = vmatpush.msra.mxu0 0.0
      %1128 = vmatpush.msra.mxu0 0.0
      %1129 = vmatpush.msra.mxu0 0.0
      %1130 = vmatpush.msra.mxu0 0.0
      %1131 = vmatpush.msra.mxu0 0.0
      %1132 = vmatpush.msra.mxu0 0.0
      %1133 = vmatpush.msra.mxu0 0.0
      %1134 = vmatpush.msra.mxu0 0.0
      %1135 = vmatpush.msra.mxu0 0.0
      %1136 = vmatpush.msra.mxu0 0.0
      %1137 = vmatpush.msra.mxu0 0.0
      %1138 = vmatpush.msra.mxu0 %v1121
      %1139 = vmatmul.f32.gmra.mxu0 %v1025
      %v1140 = vpop.f32.mrf.mxu0
      %v1141 = vadd.f32 0.0, %v1140
      %1142 = vmatmul.f32.gmra.mxu0 %v1028
      %v1143 = vpop.f32.mrf.mxu0
      %v1144 = vadd.f32 0.0, %v1143
      %1145 = vmatmul.f32.gmra.mxu0 %v1031
      %v1146 = vpop.f32.mrf.mxu0
      %v1147 = vadd.f32 0.0, %v1146
      %1148 = vmatmul.f32.gmra.mxu0 %v1034
      %v1149 = vpop.f32.mrf.mxu0
      %v1150 = vadd.f32 0.0, %v1149
      %1151 = vmatmul.f32.gmra.mxu0 %v1037
      %v1152 = vpop.f32.mrf.mxu0
      %v1153 = vadd.f32 0.0, %v1152
      %1154 = vmatmul.f32.gmra.mxu0 %v1040
      %v1155 = vpop.f32.mrf.mxu0
      %v1156 = vadd.f32 0.0, %v1155
      %1157 = vmatmul.f32.gmra.mxu0 %v1043
      %v1158 = vpop.f32.mrf.mxu0
      %v1159 = vadd.f32 0.0, %v1158
      %1160 = vmatmul.f32.gmra.mxu0 %v1046
      %v1161 = vpop.f32.mrf.mxu0
      %v1162 = vadd.f32 0.0, %v1161
      %1163 = vmatmul.f32.gmra.mxu0 %v1049
      %v1164 = vpop.f32.mrf.mxu0
      %v1165 = vadd.f32 0.0, %v1164
      %1166 = vmatmul.f32.gmra.mxu0 %v1052
      %v1167 = vpop.f32.mrf.mxu0
      %v1168 = vadd.f32 0.0, %v1167
      %1169 = vmatmul.f32.gmra.mxu0 %v1055
      %v1170 = vpop.f32.mrf.mxu0
      %v1171 = vadd.f32 0.0, %v1170
      %1172 = vmatmul.f32.gmra.mxu0 %v1058
      %v1173 = vpop.f32.mrf.mxu0
      %v1174 = vadd.f32 0.0, %v1173
      %1175 = vmatmul.f32.gmra.mxu0 %v1061
      %v1176 = vpop.f32.mrf.mxu0
      %v1177 = vadd.f32 0.0, %v1176
      %1178 = vmatmul.f32.gmra.mxu0 %v1064
      %v1179 = vpop.f32.mrf.mxu0
      %v1180 = vadd.f32 0.0, %v1179
      %1181 = vmatmul.f32.gmra.mxu0 %v1067
      %v1182 = vpop.f32.mrf.mxu0
      %v1183 = vadd.f32 0.0, %v1182
      %1184 = vmatmul.f32.gmra.mxu0 %v1070
      %v1185 = vpop.f32.mrf.mxu0
      %v1186 = vadd.f32 0.0, %v1185
      %1187 = vmatmul.f32.gmra.mxu0 %v1073
      %v1188 = vpop.f32.mrf.mxu0
      %v1189 = vadd.f32 0.0, %v1188
      %1190 = vmatmul.f32.gmra.mxu0 %v1076
      %v1191 = vpop.f32.mrf.mxu0
      %v1192 = vadd.f32 0.0, %v1191
      %1193 = vmatmul.f32.gmra.mxu0 %v1079
      %v1194 = vpop.f32.mrf.mxu0
      %v1195 = vadd.f32 0.0, %v1194
      %1196 = vmatmul.f32.gmra.mxu0 %v1082
      %v1197 = vpop.f32.mrf.mxu0
      %v1198 = vadd.f32 0.0, %v1197
      %1199 = vmatmul.f32.gmra.mxu0 %v1085
      %v1200 = vpop.f32.mrf.mxu0
      %v1201 = vadd.f32 0.0, %v1200
      %1202 = vmatmul.f32.gmra.mxu0 %v1088
      %v1203 = vpop.f32.mrf.mxu0
      %v1204 = vadd.f32 0.0, %v1203
      %1205 = vmatmul.f32.gmra.mxu0 %v1091
      %v1206 = vpop.f32.mrf.mxu0
      %v1207 = vadd.f32 0.0, %v1206
      %1208 = vmatmul.f32.gmra.mxu0 %v1094
      %v1209 = vpop.f32.mrf.mxu0
      %v1210 = vadd.f32 0.0, %v1209
      %1211 = vmatmul.f32.gmra.mxu0 %v1097
      %v1212 = vpop.f32.mrf.mxu0
      %v1213 = vadd.f32 0.0, %v1212
      %1214 = vmatmul.f32.gmra.mxu0 %v1100
      %v1215 = vpop.f32.mrf.mxu0
      %v1216 = vadd.f32 0.0, %v1215
      %1217 = vmatmul.f32.gmra.mxu0 %v1103
      %v1218 = vpop.f32.mrf.mxu0
      %v1219 = vadd.f32 0.0, %v1218
      %1220 = vmatmul.f32.gmra.mxu0 %v1106
      %v1221 = vpop.f32.mrf.mxu0
      %v1222 = vadd.f32 0.0, %v1221
      %1223 = vmatmul.f32.gmra.mxu0 %v1109
      %v1224 = vpop.f32.mrf.mxu0
      %v1225 = vadd.f32 0.0, %v1224
      %1226 = vmatmul.f32.gmra.mxu0 %v1112
      %v1227 = vpop.f32.mrf.mxu0
      %v1228 = vadd.f32 0.0, %v1227
      %1229 = vmatmul.f32.gmra.mxu0 %v1115
      %v1230 = vpop.f32.mrf.mxu0
      %v1231 = vadd.f32 0.0, %v1230
      %1232 = vmatmul.f32.gmra.mxu0 %v1118
      %v1233 = vpop.f32.mrf.mxu0
      %v1234 = vadd.f32 0.0, %v1233
      %1235 = vdwg.mxu0
      %v1236 = vadd.f32 %v895, %v1141
      %v1237 = vadd.f32 %v898, %v1144
      %v1238 = vadd.f32 %v901, %v1147
      %v1239 = vadd.f32 %v904, %v1150
      %v1240 = vadd.f32 %v907, %v1153
      %v1241 = vadd.f32 %v910, %v1156
      %v1242 = vadd.f32 %v913, %v1159
      %v1243 = vadd.f32 %v916, %v1162
      %v1244 = vadd.f32 %v919, %v1165
      %v1245 = vadd.f32 %v922, %v1168
      %v1246 = vadd.f32 %v925, %v1171
      %v1247 = vadd.f32 %v928, %v1174
      %v1248 = vadd.f32 %v931, %v1177
      %v1249 = vadd.f32 %v934, %v1180
      %v1250 = vadd.f32 %v937, %v1183
      %v1251 = vadd.f32 %v940, %v1186
      %v1252 = vadd.f32 %v943, %v1189
      %v1253 = vadd.f32 %v946, %v1192
      %v1254 = vadd.f32 %v949, %v1195
      %v1255 = vadd.f32 %v952, %v1198
      %v1256 = vadd.f32 %v955, %v1201
      %v1257 = vadd.f32 %v958, %v1204
      %v1258 = vadd.f32 %v961, %v1207
      %v1259 = vadd.f32 %v964, %v1210
      %v1260 = vadd.f32 %v967, %v1213
      %v1261 = vadd.f32 %v970, %v1216
      %v1262 = vadd.f32 %v973, %v1219
      %v1263 = vadd.f32 %v976, %v1222
      %v1264 = vadd.f32 %v979, %v1225
      %v1265 = vadd.f32 %v982, %v1228
      %v1266 = vadd.f32 %v985, %v1231
      %v1267 = vadd.f32 %v988, %v1234
      %v1268 = vld [vmem:[%s465 + $0x7] sm:$0xff]
      %v1269 = vld [vmem:[%s465 + $0xf] sm:$0xff]
      %v1270 = vld [vmem:[%s465 + $0x27] sm:$0xff]
      %v1271 = vld [vmem:[%s465 + $0x2f] sm:$0xff]
      %v1272 = vld [vmem:[%s465 + $0x47] sm:$0xff]
      %v1273 = vld [vmem:[%s465 + $0x4f] sm:$0xff]
      %v1274 = vld [vmem:[%s465 + $0x67] sm:$0xff]
      %v1275 = vld [vmem:[%s465 + $0x6f] sm:$0xff]
      %v1276 = vld [vmem:[%s465 + $0x87] sm:$0xff]
      %v1277 = vld [vmem:[%s465 + $0x8f] sm:$0xff]
      %v1278 = vld [vmem:[%s465 + $0xa7] sm:$0xff]
      %v1279 = vld [vmem:[%s465 + $0xaf] sm:$0xff]
      %v1280 = vld [vmem:[%s465 + $0xc7] sm:$0xff]
      %v1281 = vld [vmem:[%s465 + $0xcf] sm:$0xff]
      %v1282 = vld [vmem:[%s465 + $0xe7] sm:$0xff]
      %v1283 = vld [vmem:[%s465 + $0xef] sm:$0xff]
      %v1284 = vld [vmem:[%s465 + $0x107] sm:$0xff]
      %v1285 = vld [vmem:[%s465 + $0x10f] sm:$0xff]
      %v1286 = vld [vmem:[%s465 + $0x127] sm:$0xff]
      %v1287 = vld [vmem:[%s465 + $0x12f] sm:$0xff]
      %v1288 = vld [vmem:[%s465 + $0x147] sm:$0xff]
      %v1289 = vld [vmem:[%s465 + $0x14f] sm:$0xff]
      %v1290 = vld [vmem:[%s465 + $0x167] sm:$0xff]
      %v1291 = vld [vmem:[%s465 + $0x16f] sm:$0xff]
      %v1292 = vld [vmem:[%s465 + $0x187] sm:$0xff]
      %v1293 = vld [vmem:[%s465 + $0x18f] sm:$0xff]
      %v1294 = vld [vmem:[%s465 + $0x1a7] sm:$0xff]
      %v1295 = vld [vmem:[%s465 + $0x1af] sm:$0xff]
      %v1296 = vld [vmem:[%s465 + $0x1c7] sm:$0xff]
      %v1297 = vld [vmem:[%s465 + $0x1cf] sm:$0xff]
      %v1298 = vld [vmem:[%s465 + $0x1e7] sm:$0xff]
      %v1299 = vld [vmem:[%s465 + $0x1ef] sm:$0xff]
      %s1300 = scalar_lea.vmem %s2, 24
      %v1301 = vld [vmem:[%s1300] sm:$0x1f]
      %v1303 = vsel %vm392, %v1268, 0
      %v1306 = vsel %vm392, %v1269, 0
      %v1309 = vsel %vm392, %v1270, 0
      %v1312 = vsel %vm392, %v1271, 0
      %v1315 = vsel %vm392, %v1272, 0
      %v1318 = vsel %vm392, %v1273, 0
      %v1321 = vsel %vm392, %v1274, 0
      %v1324 = vsel %vm392, %v1275, 0
      %v1327 = vsel %vm392, %v1276, 0
      %v1330 = vsel %vm392, %v1277, 0
      %v1333 = vsel %vm392, %v1278, 0
      %v1336 = vsel %vm392, %v1279, 0
      %v1339 = vsel %vm392, %v1280, 0
      %v1342 = vsel %vm392, %v1281, 0
      %v1345 = vsel %vm392, %v1282, 0
      %v1348 = vsel %vm392, %v1283, 0
      %v1351 = vsel %vm392, %v1284, 0
      %v1354 = vsel %vm392, %v1285, 0
      %v1357 = vsel %vm392, %v1286, 0
      %v1360 = vsel %vm392, %v1287, 0
      %v1363 = vsel %vm392, %v1288, 0
      %v1366 = vsel %vm392, %v1289, 0
      %v1369 = vsel %vm392, %v1290, 0
      %v1372 = vsel %vm392, %v1291, 0
      %v1375 = vsel %vm392, %v1292, 0
      %v1378 = vsel %vm392, %v1293, 0
      %v1381 = vsel %vm392, %v1294, 0
      %v1384 = vsel %vm392, %v1295, 0
      %v1387 = vsel %vm392, %v1296, 0
      %v1390 = vsel %vm392, %v1297, 0
      %v1393 = vsel %vm392, %v1298, 0
      %v1396 = vsel %vm392, %v1299, 0
      %v1399 = vsel %vm661, %v1301, 0
      %1401 = vmatpush.msra.mxu0 0.0
      %1402 = vmatpush.msra.mxu0 0.0
      %1403 = vmatpush.msra.mxu0 0.0
      %1404 = vmatpush.msra.mxu0 0.0
      %1405 = vmatpush.msra.mxu0 0.0
      %1406 = vmatpush.msra.mxu0 0.0
      %1407 = vmatpush.msra.mxu0 0.0
      %1408 = vmatpush.msra.mxu0 0.0
      %1409 = vmatpush.msra.mxu0 0.0
      %1410 = vmatpush.msra.mxu0 0.0
      %1411 = vmatpush.msra.mxu0 0.0
      %1412 = vmatpush.msra.mxu0 0.0
      %1413 = vmatpush.msra.mxu0 0.0
      %1414 = vmatpush.msra.mxu0 0.0
      %1415 = vmatpush.msra.mxu0 0.0
      %1416 = vmatpush.msra.mxu0 %v1399
      %1417 = vmatmul.f32.gmra.mxu0 %v1303
      %v1418 = vpop.f32.mrf.mxu0
      %v1419 = vadd.f32 0.0, %v1418
      %1420 = vmatmul.f32.gmra.mxu0 %v1306
      %v1421 = vpop.f32.mrf.mxu0
      %v1422 = vadd.f32 0.0, %v1421
      %1423 = vmatmul.f32.gmra.mxu0 %v1309
      %v1424 = vpop.f32.mrf.mxu0
      %v1425 = vadd.f32 0.0, %v1424
      %1426 = vmatmul.f32.gmra.mxu0 %v1312
      %v1427 = vpop.f32.mrf.mxu0
      %v1428 = vadd.f32 0.0, %v1427
      %1429 = vmatmul.f32.gmra.mxu0 %v1315
      %v1430 = vpop.f32.mrf.mxu0
      %v1431 = vadd.f32 0.0, %v1430
      %1432 = vmatmul.f32.gmra.mxu0 %v1318
      %v1433 = vpop.f32.mrf.mxu0
      %v1434 = vadd.f32 0.0, %v1433
      %1435 = vmatmul.f32.gmra.mxu0 %v1321
      %v1436 = vpop.f32.mrf.mxu0
      %v1437 = vadd.f32 0.0, %v1436
      %1438 = vmatmul.f32.gmra.mxu0 %v1324
      %v1439 = vpop.f32.mrf.mxu0
      %v1440 = vadd.f32 0.0, %v1439
      %1441 = vmatmul.f32.gmra.mxu0 %v1327
      %v1442 = vpop.f32.mrf.mxu0
      %v1443 = vadd.f32 0.0, %v1442
      %1444 = vmatmul.f32.gmra.mxu0 %v1330
      %v1445 = vpop.f32.mrf.mxu0
      %v1446 = vadd.f32 0.0, %v1445
      %1447 = vmatmul.f32.gmra.mxu0 %v1333
      %v1448 = vpop.f32.mrf.mxu0
      %v1449 = vadd.f32 0.0, %v1448
      %1450 = vmatmul.f32.gmra.mxu0 %v1336
      %v1451 = vpop.f32.mrf.mxu0
      %v1452 = vadd.f32 0.0, %v1451
      %1453 = vmatmul.f32.gmra.mxu0 %v1339
      %v1454 = vpop.f32.mrf.mxu0
      %v1455 = vadd.f32 0.0, %v1454
      %1456 = vmatmul.f32.gmra.mxu0 %v1342
      %v1457 = vpop.f32.mrf.mxu0
      %v1458 = vadd.f32 0.0, %v1457
      %1459 = vmatmul.f32.gmra.mxu0 %v1345
      %v1460 = vpop.f32.mrf.mxu0
      %v1461 = vadd.f32 0.0, %v1460
      %1462 = vmatmul.f32.gmra.mxu0 %v1348
      %v1463 = vpop.f32.mrf.mxu0
      %v1464 = vadd.f32 0.0, %v1463
      %1465 = vmatmul.f32.gmra.mxu0 %v1351
      %v1466 = vpop.f32.mrf.mxu0
      %v1467 = vadd.f32 0.0, %v1466
      %1468 = vmatmul.f32.gmra.mxu0 %v1354
      %v1469 = vpop.f32.mrf.mxu0
      %v1470 = vadd.f32 0.0, %v1469
      %1471 = vmatmul.f32.gmra.mxu0 %v1357
      %v1472 = vpop.f32.mrf.mxu0
      %v1473 = vadd.f32 0.0, %v1472
      %1474 = vmatmul.f32.gmra.mxu0 %v1360
      %v1475 = vpop.f32.mrf.mxu0
      %v1476 = vadd.f32 0.0, %v1475
      %1477 = vmatmul.f32.gmra.mxu0 %v1363
      %v1478 = vpop.f32.mrf.mxu0
      %v1479 = vadd.f32 0.0, %v1478
      %1480 = vmatmul.f32.gmra.mxu0 %v1366
      %v1481 = vpop.f32.mrf.mxu0
      %v1482 = vadd.f32 0.0, %v1481
      %1483 = vmatmul.f32.gmra.mxu0 %v1369
      %v1484 = vpop.f32.mrf.mxu0
      %v1485 = vadd.f32 0.0, %v1484
      %1486 = vmatmul.f32.gmra.mxu0 %v1372
      %v1487 = vpop.f32.mrf.mxu0
      %v1488 = vadd.f32 0.0, %v1487
      %1489 = vmatmul.f32.gmra.mxu0 %v1375
      %v1490 = vpop.f32.mrf.mxu0
      %v1491 = vadd.f32 0.0, %v1490
      %1492 = vmatmul.f32.gmra.mxu0 %v1378
      %v1493 = vpop.f32.mrf.mxu0
      %v1494 = vadd.f32 0.0, %v1493
      %1495 = vmatmul.f32.gmra.mxu0 %v1381
      %v1496 = vpop.f32.mrf.mxu0
      %v1497 = vadd.f32 0.0, %v1496
      %1498 = vmatmul.f32.gmra.mxu0 %v1384
      %v1499 = vpop.f32.mrf.mxu0
      %v1500 = vadd.f32 0.0, %v1499
      %1501 = vmatmul.f32.gmra.mxu0 %v1387
      %v1502 = vpop.f32.mrf.mxu0
      %v1503 = vadd.f32 0.0, %v1502
      %1504 = vmatmul.f32.gmra.mxu0 %v1390
      %v1505 = vpop.f32.mrf.mxu0
      %v1506 = vadd.f32 0.0, %v1505
      %1507 = vmatmul.f32.gmra.mxu0 %v1393
      %v1508 = vpop.f32.mrf.mxu0
      %v1509 = vadd.f32 0.0, %v1508
      %1510 = vmatmul.f32.gmra.mxu0 %v1396
      %v1511 = vpop.f32.mrf.mxu0
      %v1512 = vadd.f32 0.0, %v1511
      %1513 = vdwg.mxu0
      %v1514 = vadd.f32 %v1236, %v1419
      %v1515 = vadd.f32 %v1237, %v1422
      %v1516 = vadd.f32 %v1238, %v1425
      %v1517 = vadd.f32 %v1239, %v1428
      %v1518 = vadd.f32 %v1240, %v1431
      %v1519 = vadd.f32 %v1241, %v1434
      %v1520 = vadd.f32 %v1242, %v1437
      %v1521 = vadd.f32 %v1243, %v1440
      %v1522 = vadd.f32 %v1244, %v1443
      %v1523 = vadd.f32 %v1245, %v1446
      %v1524 = vadd.f32 %v1246, %v1449
      %v1525 = vadd.f32 %v1247, %v1452
      %v1526 = vadd.f32 %v1248, %v1455
      %v1527 = vadd.f32 %v1249, %v1458
      %v1528 = vadd.f32 %v1250, %v1461
      %v1529 = vadd.f32 %v1251, %v1464
      %v1530 = vadd.f32 %v1252, %v1467
      %v1531 = vadd.f32 %v1253, %v1470
      %v1532 = vadd.f32 %v1254, %v1473
      %v1533 = vadd.f32 %v1255, %v1476
      %v1534 = vadd.f32 %v1256, %v1479
      %v1535 = vadd.f32 %v1257, %v1482
      %v1536 = vadd.f32 %v1258, %v1485
      %v1537 = vadd.f32 %v1259, %v1488
      %v1538 = vadd.f32 %v1260, %v1491
      %v1539 = vadd.f32 %v1261, %v1494
      %v1540 = vadd.f32 %v1262, %v1497
      %v1541 = vadd.f32 %v1263, %v1500
      %v1542 = vadd.f32 %v1264, %v1503
      %v1543 = vadd.f32 %v1265, %v1506
      %v1544 = vadd.f32 %v1266, %v1509
      %v1545 = vadd.f32 %v1267, %v1512
      %v1546 = vld [vmem:[%s465 + $0x8] sm:$0xff]
      %v1547 = vld [vmem:[%s465 + $0x10] sm:$0xff]
      %v1548 = vld [vmem:[%s465 + $0x28] sm:$0xff]
      %v1549 = vld [vmem:[%s465 + $0x30] sm:$0xff]
      %v1550 = vld [vmem:[%s465 + $0x48] sm:$0xff]
      %v1551 = vld [vmem:[%s465 + $0x50] sm:$0xff]
      %v1552 = vld [vmem:[%s465 + $0x68] sm:$0xff]
      %v1553 = vld [vmem:[%s465 + $0x70] sm:$0xff]
      %v1554 = vld [vmem:[%s465 + $0x88] sm:$0xff]
      %v1555 = vld [vmem:[%s465 + $0x90] sm:$0xff]
      %v1556 = vld [vmem:[%s465 + $0xa8] sm:$0xff]
      %v1557 = vld [vmem:[%s465 + $0xb0] sm:$0xff]
      %v1558 = vld [vmem:[%s465 + $0xc8] sm:$0xff]
      %v1559 = vld [vmem:[%s465 + $0xd0] sm:$0xff]
      %v1560 = vld [vmem:[%s465 + $0xe8] sm:$0xff]
      %v1561 = vld [vmem:[%s465 + $0xf0] sm:$0xff]
      %v1562 = vld [vmem:[%s465 + $0x108] sm:$0xff]
      %v1563 = vld [vmem:[%s465 + $0x110] sm:$0xff]
      %v1564 = vld [vmem:[%s465 + $0x128] sm:$0xff]
      %v1565 = vld [vmem:[%s465 + $0x130] sm:$0xff]
      %v1566 = vld [vmem:[%s465 + $0x148] sm:$0xff]
      %v1567 = vld [vmem:[%s465 + $0x150] sm:$0xff]
      %v1568 = vld [vmem:[%s465 + $0x168] sm:$0xff]
      %v1569 = vld [vmem:[%s465 + $0x170] sm:$0xff]
      %v1570 = vld [vmem:[%s465 + $0x188] sm:$0xff]
      %v1571 = vld [vmem:[%s465 + $0x190] sm:$0xff]
      %v1572 = vld [vmem:[%s465 + $0x1a8] sm:$0xff]
      %v1573 = vld [vmem:[%s465 + $0x1b0] sm:$0xff]
      %v1574 = vld [vmem:[%s465 + $0x1c8] sm:$0xff]
      %v1575 = vld [vmem:[%s465 + $0x1d0] sm:$0xff]
      %v1576 = vld [vmem:[%s465 + $0x1e8] sm:$0xff]
      %v1577 = vld [vmem:[%s465 + $0x1f0] sm:$0xff]
      %s1578 = scalar_lea.vmem %s2, 32
      %v1579 = vld [vmem:[%s1578] sm:$0x1f]
      %v1581 = vsel %vm392, %v1546, 0
      %v1584 = vsel %vm392, %v1547, 0
      %v1587 = vsel %vm392, %v1548, 0
      %v1590 = vsel %vm392, %v1549, 0
      %v1593 = vsel %vm392, %v1550, 0
      %v1596 = vsel %vm392, %v1551, 0
      %v1599 = vsel %vm392, %v1552, 0
      %v1602 = vsel %vm392, %v1553, 0
      %v1605 = vsel %vm392, %v1554, 0
      %v1608 = vsel %vm392, %v1555, 0
      %v1611 = vsel %vm392, %v1556, 0
      %v1614 = vsel %vm392, %v1557, 0
      %v1617 = vsel %vm392, %v1558, 0
      %v1620 = vsel %vm392, %v1559, 0
      %v1623 = vsel %vm392, %v1560, 0
      %v1626 = vsel %vm392, %v1561, 0
      %v1629 = vsel %vm392, %v1562, 0
      %v1632 = vsel %vm392, %v1563, 0
      %v1635 = vsel %vm392, %v1564, 0
      %v1638 = vsel %vm392, %v1565, 0
      %v1641 = vsel %vm392, %v1566, 0
      %v1644 = vsel %vm392, %v1567, 0
      %v1647 = vsel %vm392, %v1568, 0
      %v1650 = vsel %vm392, %v1569, 0
      %v1653 = vsel %vm392, %v1570, 0
      %v1656 = vsel %vm392, %v1571, 0
      %v1659 = vsel %vm392, %v1572, 0
      %v1662 = vsel %vm392, %v1573, 0
      %v1665 = vsel %vm392, %v1574, 0
      %v1668 = vsel %vm392, %v1575, 0
      %v1671 = vsel %vm392, %v1576, 0
      %v1674 = vsel %vm392, %v1577, 0
      %v1677 = vsel %vm661, %v1579, 0
      %1679 = vmatpush.msra.mxu0 0.0
      %1680 = vmatpush.msra.mxu0 0.0
      %1681 = vmatpush.msra.mxu0 0.0
      %1682 = vmatpush.msra.mxu0 0.0
      %1683 = vmatpush.msra.mxu0 0.0
      %1684 = vmatpush.msra.mxu0 0.0
      %1685 = vmatpush.msra.mxu0 0.0
      %1686 = vmatpush.msra.mxu0 0.0
      %1687 = vmatpush.msra.mxu0 0.0
      %1688 = vmatpush.msra.mxu0 0.0
      %1689 = vmatpush.msra.mxu0 0.0
      %1690 = vmatpush.msra.mxu0 0.0
      %1691 = vmatpush.msra.mxu0 0.0
      %1692 = vmatpush.msra.mxu0 0.0
      %1693 = vmatpush.msra.mxu0 0.0
      %1694 = vmatpush.msra.mxu0 %v1677
      %1695 = vmatmul.f32.gmra.mxu0 %v1581
      %v1696 = vpop.f32.mrf.mxu0
      %v1697 = vadd.f32 0.0, %v1696
      %1698 = vmatmul.f32.gmra.mxu0 %v1584
      %v1699 = vpop.f32.mrf.mxu0
      %v1700 = vadd.f32 0.0, %v1699
      %1701 = vmatmul.f32.gmra.mxu0 %v1587
      %v1702 = vpop.f32.mrf.mxu0
      %v1703 = vadd.f32 0.0, %v1702
      %1704 = vmatmul.f32.gmra.mxu0 %v1590
      %v1705 = vpop.f32.mrf.mxu0
      %v1706 = vadd.f32 0.0, %v1705
      %1707 = vmatmul.f32.gmra.mxu0 %v1593
      %v1708 = vpop.f32.mrf.mxu0
      %v1709 = vadd.f32 0.0, %v1708
      %1710 = vmatmul.f32.gmra.mxu0 %v1596
      %v1711 = vpop.f32.mrf.mxu0
      %v1712 = vadd.f32 0.0, %v1711
      %1713 = vmatmul.f32.gmra.mxu0 %v1599
      %v1714 = vpop.f32.mrf.mxu0
      %v1715 = vadd.f32 0.0, %v1714
      %1716 = vmatmul.f32.gmra.mxu0 %v1602
      %v1717 = vpop.f32.mrf.mxu0
      %v1718 = vadd.f32 0.0, %v1717
      %1719 = vmatmul.f32.gmra.mxu0 %v1605
      %v1720 = vpop.f32.mrf.mxu0
      %v1721 = vadd.f32 0.0, %v1720
      %1722 = vmatmul.f32.gmra.mxu0 %v1608
      %v1723 = vpop.f32.mrf.mxu0
      %v1724 = vadd.f32 0.0, %v1723
      %1725 = vmatmul.f32.gmra.mxu0 %v1611
      %v1726 = vpop.f32.mrf.mxu0
      %v1727 = vadd.f32 0.0, %v1726
      %1728 = vmatmul.f32.gmra.mxu0 %v1614
      %v1729 = vpop.f32.mrf.mxu0
      %v1730 = vadd.f32 0.0, %v1729
      %1731 = vmatmul.f32.gmra.mxu0 %v1617
      %v1732 = vpop.f32.mrf.mxu0
      %v1733 = vadd.f32 0.0, %v1732
      %1734 = vmatmul.f32.gmra.mxu0 %v1620
      %v1735 = vpop.f32.mrf.mxu0
      %v1736 = vadd.f32 0.0, %v1735
      %1737 = vmatmul.f32.gmra.mxu0 %v1623
      %v1738 = vpop.f32.mrf.mxu0
      %v1739 = vadd.f32 0.0, %v1738
      %1740 = vmatmul.f32.gmra.mxu0 %v1626
      %v1741 = vpop.f32.mrf.mxu0
      %v1742 = vadd.f32 0.0, %v1741
      %1743 = vmatmul.f32.gmra.mxu0 %v1629
      %v1744 = vpop.f32.mrf.mxu0
      %v1745 = vadd.f32 0.0, %v1744
      %1746 = vmatmul.f32.gmra.mxu0 %v1632
      %v1747 = vpop.f32.mrf.mxu0
      %v1748 = vadd.f32 0.0, %v1747
      %1749 = vmatmul.f32.gmra.mxu0 %v1635
      %v1750 = vpop.f32.mrf.mxu0
      %v1751 = vadd.f32 0.0, %v1750
      %1752 = vmatmul.f32.gmra.mxu0 %v1638
      %v1753 = vpop.f32.mrf.mxu0
      %v1754 = vadd.f32 0.0, %v1753
      %1755 = vmatmul.f32.gmra.mxu0 %v1641
      %v1756 = vpop.f32.mrf.mxu0
      %v1757 = vadd.f32 0.0, %v1756
      %1758 = vmatmul.f32.gmra.mxu0 %v1644
      %v1759 = vpop.f32.mrf.mxu0
      %v1760 = vadd.f32 0.0, %v1759
      %1761 = vmatmul.f32.gmra.mxu0 %v1647
      %v1762 = vpop.f32.mrf.mxu0
      %v1763 = vadd.f32 0.0, %v1762
      %1764 = vmatmul.f32.gmra.mxu0 %v1650
      %v1765 = vpop.f32.mrf.mxu0
      %v1766 = vadd.f32 0.0, %v1765
      %1767 = vmatmul.f32.gmra.mxu0 %v1653
      %v1768 = vpop.f32.mrf.mxu0
      %v1769 = vadd.f32 0.0, %v1768
      %1770 = vmatmul.f32.gmra.mxu0 %v1656
      %v1771 = vpop.f32.mrf.mxu0
      %v1772 = vadd.f32 0.0, %v1771
      %1773 = vmatmul.f32.gmra.mxu0 %v1659
      %v1774 = vpop.f32.mrf.mxu0
      %v1775 = vadd.f32 0.0, %v1774
      %1776 = vmatmul.f32.gmra.mxu0 %v1662
      %v1777 = vpop.f32.mrf.mxu0
      %v1778 = vadd.f32 0.0, %v1777
      %1779 = vmatmul.f32.gmra.mxu0 %v1665
      %v1780 = vpop.f32.mrf.mxu0
      %v1781 = vadd.f32 0.0, %v1780
      %1782 = vmatmul.f32.gmra.mxu0 %v1668
      %v1783 = vpop.f32.mrf.mxu0
      %v1784 = vadd.f32 0.0, %v1783
      %1785 = vmatmul.f32.gmra.mxu0 %v1671
      %v1786 = vpop.f32.mrf.mxu0
      %v1787 = vadd.f32 0.0, %v1786
      %1788 = vmatmul.f32.gmra.mxu0 %v1674
      %v1789 = vpop.f32.mrf.mxu0
      %v1790 = vadd.f32 0.0, %v1789
      %1791 = vdwg.mxu0
      %v1792 = vadd.f32 %v1514, %v1697
      %v1793 = vadd.f32 %v1515, %v1700
      %v1794 = vadd.f32 %v1516, %v1703
      %v1795 = vadd.f32 %v1517, %v1706
      %v1796 = vadd.f32 %v1518, %v1709
      %v1797 = vadd.f32 %v1519, %v1712
      %v1798 = vadd.f32 %v1520, %v1715
      %v1799 = vadd.f32 %v1521, %v1718
      %v1800 = vadd.f32 %v1522, %v1721
      %v1801 = vadd.f32 %v1523, %v1724
      %v1802 = vadd.f32 %v1524, %v1727
      %v1803 = vadd.f32 %v1525, %v1730
      %v1804 = vadd.f32 %v1526, %v1733
      %v1805 = vadd.f32 %v1527, %v1736
      %v1806 = vadd.f32 %v1528, %v1739
      %v1807 = vadd.f32 %v1529, %v1742
      %v1808 = vadd.f32 %v1530, %v1745
      %v1809 = vadd.f32 %v1531, %v1748
      %v1810 = vadd.f32 %v1532, %v1751
      %v1811 = vadd.f32 %v1533, %v1754
      %v1812 = vadd.f32 %v1534, %v1757
      %v1813 = vadd.f32 %v1535, %v1760
      %v1814 = vadd.f32 %v1536, %v1763
      %v1815 = vadd.f32 %v1537, %v1766
      %v1816 = vadd.f32 %v1538, %v1769
      %v1817 = vadd.f32 %v1539, %v1772
      %v1818 = vadd.f32 %v1540, %v1775
      %v1819 = vadd.f32 %v1541, %v1778
      %v1820 = vadd.f32 %v1542, %v1781
      %v1821 = vadd.f32 %v1543, %v1784
      %v1822 = vadd.f32 %v1544, %v1787
      %v1823 = vadd.f32 %v1545, %v1790
      %v1824 = vld [vmem:[%s465 + $0x9] sm:$0xff]
      %v1825 = vld [vmem:[%s465 + $0x11] sm:$0xff]
      %v1826 = vld [vmem:[%s465 + $0x29] sm:$0xff]
      %v1827 = vld [vmem:[%s465 + $0x31] sm:$0xff]
      %v1828 = vld [vmem:[%s465 + $0x49] sm:$0xff]
      %v1829 = vld [vmem:[%s465 + $0x51] sm:$0xff]
      %v1830 = vld [vmem:[%s465 + $0x69] sm:$0xff]
      %v1831 = vld [vmem:[%s465 + $0x71] sm:$0xff]
      %v1832 = vld [vmem:[%s465 + $0x89] sm:$0xff]
      %v1833 = vld [vmem:[%s465 + $0x91] sm:$0xff]
      %v1834 = vld [vmem:[%s465 + $0xa9] sm:$0xff]
      %v1835 = vld [vmem:[%s465 + $0xb1] sm:$0xff]
      %v1836 = vld [vmem:[%s465 + $0xc9] sm:$0xff]
      %v1837 = vld [vmem:[%s465 + $0xd1] sm:$0xff]
      %v1838 = vld [vmem:[%s465 + $0xe9] sm:$0xff]
      %v1839 = vld [vmem:[%s465 + $0xf1] sm:$0xff]
      %v1840 = vld [vmem:[%s465 + $0x109] sm:$0xff]
      %v1841 = vld [vmem:[%s465 + $0x111] sm:$0xff]
      %v1842 = vld [vmem:[%s465 + $0x129] sm:$0xff]
      %v1843 = vld [vmem:[%s465 + $0x131] sm:$0xff]
      %v1844 = vld [vmem:[%s465 + $0x149] sm:$0xff]
      %v1845 = vld [vmem:[%s465 + $0x151] sm:$0xff]
      %v1846 = vld [vmem:[%s465 + $0x169] sm:$0xff]
      %v1847 = vld [vmem:[%s465 + $0x171] sm:$0xff]
      %v1848 = vld [vmem:[%s465 + $0x189] sm:$0xff]
      %v1849 = vld [vmem:[%s465 + $0x191] sm:$0xff]
      %v1850 = vld [vmem:[%s465 + $0x1a9] sm:$0xff]
      %v1851 = vld [vmem:[%s465 + $0x1b1] sm:$0xff]
      %v1852 = vld [vmem:[%s465 + $0x1c9] sm:$0xff]
      %v1853 = vld [vmem:[%s465 + $0x1d1] sm:$0xff]
      %v1854 = vld [vmem:[%s465 + $0x1e9] sm:$0xff]
      %v1855 = vld [vmem:[%s465 + $0x1f1] sm:$0xff]
      %s1856 = scalar_lea.vmem %s2, 40
      %v1857 = vld [vmem:[%s1856] sm:$0x1f]
      %v1859 = vsel %vm392, %v1824, 0
      %v1862 = vsel %vm392, %v1825, 0
      %v1865 = vsel %vm392, %v1826, 0
      %v1868 = vsel %vm392, %v1827, 0
      %v1871 = vsel %vm392, %v1828, 0
      %v1874 = vsel %vm392, %v1829, 0
      %v1877 = vsel %vm392, %v1830, 0
      %v1880 = vsel %vm392, %v1831, 0
      %v1883 = vsel %vm392, %v1832, 0
      %v1886 = vsel %vm392, %v1833, 0
      %v1889 = vsel %vm392, %v1834, 0
      %v1892 = vsel %vm392, %v1835, 0
      %v1895 = vsel %vm392, %v1836, 0
      %v1898 = vsel %vm392, %v1837, 0
      %v1901 = vsel %vm392, %v1838, 0
      %v1904 = vsel %vm392, %v1839, 0
      %v1907 = vsel %vm392, %v1840, 0
      %v1910 = vsel %vm392, %v1841, 0
      %v1913 = vsel %vm392, %v1842, 0
      %v1916 = vsel %vm392, %v1843, 0
      %v1919 = vsel %vm392, %v1844, 0
      %v1922 = vsel %vm392, %v1845, 0
      %v1925 = vsel %vm392, %v1846, 0
      %v1928 = vsel %vm392, %v1847, 0
      %v1931 = vsel %vm392, %v1848, 0
      %v1934 = vsel %vm392, %v1849, 0
      %v1937 = vsel %vm392, %v1850, 0
      %v1940 = vsel %vm392, %v1851, 0
      %v1943 = vsel %vm392, %v1852, 0
      %v1946 = vsel %vm392, %v1853, 0
      %v1949 = vsel %vm392, %v1854, 0
      %v1952 = vsel %vm392, %v1855, 0
      %v1955 = vsel %vm661, %v1857, 0
      %1957 = vmatpush.msra.mxu0 0.0
      %1958 = vmatpush.msra.mxu0 0.0
      %1959 = vmatpush.msra.mxu0 0.0
      %1960 = vmatpush.msra.mxu0 0.0
      %1961 = vmatpush.msra.mxu0 0.0
      %1962 = vmatpush.msra.mxu0 0.0
      %1963 = vmatpush.msra.mxu0 0.0
      %1964 = vmatpush.msra.mxu0 0.0
      %1965 = vmatpush.msra.mxu0 0.0
      %1966 = vmatpush.msra.mxu0 0.0
      %1967 = vmatpush.msra.mxu0 0.0
      %1968 = vmatpush.msra.mxu0 0.0
      %1969 = vmatpush.msra.mxu0 0.0
      %1970 = vmatpush.msra.mxu0 0.0
      %1971 = vmatpush.msra.mxu0 0.0
      %1972 = vmatpush.msra.mxu0 %v1955
      %1973 = vmatmul.f32.gmra.mxu0 %v1859
      %v1974 = vpop.f32.mrf.mxu0
      %v1975 = vadd.f32 0.0, %v1974
      %1976 = vmatmul.f32.gmra.mxu0 %v1862
      %v1977 = vpop.f32.mrf.mxu0
      %v1978 = vadd.f32 0.0, %v1977
      %1979 = vmatmul.f32.gmra.mxu0 %v1865
      %v1980 = vpop.f32.mrf.mxu0
      %v1981 = vadd.f32 0.0, %v1980
      %1982 = vmatmul.f32.gmra.mxu0 %v1868
      %v1983 = vpop.f32.mrf.mxu0
      %v1984 = vadd.f32 0.0, %v1983
      %1985 = vmatmul.f32.gmra.mxu0 %v1871
      %v1986 = vpop.f32.mrf.mxu0
      %v1987 = vadd.f32 0.0, %v1986
      %1988 = vmatmul.f32.gmra.mxu0 %v1874
      %v1989 = vpop.f32.mrf.mxu0
      %v1990 = vadd.f32 0.0, %v1989
      %1991 = vmatmul.f32.gmra.mxu0 %v1877
      %v1992 = vpop.f32.mrf.mxu0
      %v1993 = vadd.f32 0.0, %v1992
      %1994 = vmatmul.f32.gmra.mxu0 %v1880
      %v1995 = vpop.f32.mrf.mxu0
      %v1996 = vadd.f32 0.0, %v1995
      %1997 = vmatmul.f32.gmra.mxu0 %v1883
      %v1998 = vpop.f32.mrf.mxu0
      %v1999 = vadd.f32 0.0, %v1998
      %2000 = vmatmul.f32.gmra.mxu0 %v1886
      %v2001 = vpop.f32.mrf.mxu0
      %v2002 = vadd.f32 0.0, %v2001
      %2003 = vmatmul.f32.gmra.mxu0 %v1889
      %v2004 = vpop.f32.mrf.mxu0
      %v2005 = vadd.f32 0.0, %v2004
      %2006 = vmatmul.f32.gmra.mxu0 %v1892
      %v2007 = vpop.f32.mrf.mxu0
      %v2008 = vadd.f32 0.0, %v2007
      %2009 = vmatmul.f32.gmra.mxu0 %v1895
      %v2010 = vpop.f32.mrf.mxu0
      %v2011 = vadd.f32 0.0, %v2010
      %2012 = vmatmul.f32.gmra.mxu0 %v1898
      %v2013 = vpop.f32.mrf.mxu0
      %v2014 = vadd.f32 0.0, %v2013
      %2015 = vmatmul.f32.gmra.mxu0 %v1901
      %v2016 = vpop.f32.mrf.mxu0
      %v2017 = vadd.f32 0.0, %v2016
      %2018 = vmatmul.f32.gmra.mxu0 %v1904
      %v2019 = vpop.f32.mrf.mxu0
      %v2020 = vadd.f32 0.0, %v2019
      %2021 = vmatmul.f32.gmra.mxu0 %v1907
      %v2022 = vpop.f32.mrf.mxu0
      %v2023 = vadd.f32 0.0, %v2022
      %2024 = vmatmul.f32.gmra.mxu0 %v1910
      %v2025 = vpop.f32.mrf.mxu0
      %v2026 = vadd.f32 0.0, %v2025
      %2027 = vmatmul.f32.gmra.mxu0 %v1913
      %v2028 = vpop.f32.mrf.mxu0
      %v2029 = vadd.f32 0.0, %v2028
      %2030 = vmatmul.f32.gmra.mxu0 %v1916
      %v2031 = vpop.f32.mrf.mxu0
      %v2032 = vadd.f32 0.0, %v2031
      %2033 = vmatmul.f32.gmra.mxu0 %v1919
      %v2034 = vpop.f32.mrf.mxu0
      %v2035 = vadd.f32 0.0, %v2034
      %2036 = vmatmul.f32.gmra.mxu0 %v1922
      %v2037 = vpop.f32.mrf.mxu0
      %v2038 = vadd.f32 0.0, %v2037
      %2039 = vmatmul.f32.gmra.mxu0 %v1925
      %v2040 = vpop.f32.mrf.mxu0
      %v2041 = vadd.f32 0.0, %v2040
      %2042 = vmatmul.f32.gmra.mxu0 %v1928
      %v2043 = vpop.f32.mrf.mxu0
      %v2044 = vadd.f32 0.0, %v2043
      %2045 = vmatmul.f32.gmra.mxu0 %v1931
      %v2046 = vpop.f32.mrf.mxu0
      %v2047 = vadd.f32 0.0, %v2046
      %2048 = vmatmul.f32.gmra.mxu0 %v1934
      %v2049 = vpop.f32.mrf.mxu0
      %v2050 = vadd.f32 0.0, %v2049
      %2051 = vmatmul.f32.gmra.mxu0 %v1937
      %v2052 = vpop.f32.mrf.mxu0
      %v2053 = vadd.f32 0.0, %v2052
      %2054 = vmatmul.f32.gmra.mxu0 %v1940
      %v2055 = vpop.f32.mrf.mxu0
      %v2056 = vadd.f32 0.0, %v2055
      %2057 = vmatmul.f32.gmra.mxu0 %v1943
      %v2058 = vpop.f32.mrf.mxu0
      %v2059 = vadd.f32 0.0, %v2058
      %2060 = vmatmul.f32.gmra.mxu0 %v1946
      %v2061 = vpop.f32.mrf.mxu0
      %v2062 = vadd.f32 0.0, %v2061
      %2063 = vmatmul.f32.gmra.mxu0 %v1949
      %v2064 = vpop.f32.mrf.mxu0
      %v2065 = vadd.f32 0.0, %v2064
      %2066 = vmatmul.f32.gmra.mxu0 %v1952
      %v2067 = vpop.f32.mrf.mxu0
      %v2068 = vadd.f32 0.0, %v2067
      %2069 = vdwg.mxu0
      %v2070 = vadd.f32 %v1792, %v1975
      %v2071 = vadd.f32 %v1793, %v1978
      %v2072 = vadd.f32 %v1794, %v1981
      %v2073 = vadd.f32 %v1795, %v1984
      %v2074 = vadd.f32 %v1796, %v1987
      %v2075 = vadd.f32 %v1797, %v1990
      %v2076 = vadd.f32 %v1798, %v1993
      %v2077 = vadd.f32 %v1799, %v1996
      %v2078 = vadd.f32 %v1800, %v1999
      %v2079 = vadd.f32 %v1801, %v2002
      %v2080 = vadd.f32 %v1802, %v2005
      %v2081 = vadd.f32 %v1803, %v2008
      %v2082 = vadd.f32 %v1804, %v2011
      %v2083 = vadd.f32 %v1805, %v2014
      %v2084 = vadd.f32 %v1806, %v2017
      %v2085 = vadd.f32 %v1807, %v2020
      %v2086 = vadd.f32 %v1808, %v2023
      %v2087 = vadd.f32 %v1809, %v2026
      %v2088 = vadd.f32 %v1810, %v2029
      %v2089 = vadd.f32 %v1811, %v2032
      %v2090 = vadd.f32 %v1812, %v2035
      %v2091 = vadd.f32 %v1813, %v2038
      %v2092 = vadd.f32 %v1814, %v2041
      %v2093 = vadd.f32 %v1815, %v2044
      %v2094 = vadd.f32 %v1816, %v2047
      %v2095 = vadd.f32 %v1817, %v2050
      %v2096 = vadd.f32 %v1818, %v2053
      %v2097 = vadd.f32 %v1819, %v2056
      %v2098 = vadd.f32 %v1820, %v2059
      %v2099 = vadd.f32 %v1821, %v2062
      %v2100 = vadd.f32 %v1822, %v2065
      %v2101 = vadd.f32 %v1823, %v2068
      %s2102 = scalar_lea.vmem [#allocation2], 64
      %v2103 = vld [vmem:[%s2102 + $0x7] sm:$0xff]
      %v2104 = vld [vmem:[%s2102 + $0xf] sm:$0xff]
      %v2105 = vld [vmem:[%s2102 + $0x27] sm:$0xff]
      %v2106 = vld [vmem:[%s2102 + $0x2f] sm:$0xff]
      %v2107 = vld [vmem:[%s2102 + $0x47] sm:$0xff]
      %v2108 = vld [vmem:[%s2102 + $0x4f] sm:$0xff]
      %v2109 = vld [vmem:[%s2102 + $0x67] sm:$0xff]
      %v2110 = vld [vmem:[%s2102 + $0x6f] sm:$0xff]
      %v2111 = vld [vmem:[%s2102 + $0x87] sm:$0xff]
      %v2112 = vld [vmem:[%s2102 + $0x8f] sm:$0xff]
      %v2113 = vld [vmem:[%s2102 + $0xa7] sm:$0xff]
      %v2114 = vld [vmem:[%s2102 + $0xaf] sm:$0xff]
      %v2115 = vld [vmem:[%s2102 + $0xc7] sm:$0xff]
      %v2116 = vld [vmem:[%s2102 + $0xcf] sm:$0xff]
      %v2117 = vld [vmem:[%s2102 + $0xe7] sm:$0xff]
      %v2118 = vld [vmem:[%s2102 + $0xef] sm:$0xff]
      %v2119 = vld [vmem:[%s2102 + $0x107] sm:$0xff]
      %v2120 = vld [vmem:[%s2102 + $0x10f] sm:$0xff]
      %v2121 = vld [vmem:[%s2102 + $0x127] sm:$0xff]
      %v2122 = vld [vmem:[%s2102 + $0x12f] sm:$0xff]
      %v2123 = vld [vmem:[%s2102 + $0x147] sm:$0xff]
      %v2124 = vld [vmem:[%s2102 + $0x14f] sm:$0xff]
      %v2125 = vld [vmem:[%s2102 + $0x167] sm:$0xff]
      %v2126 = vld [vmem:[%s2102 + $0x16f] sm:$0xff]
      %v2127 = vld [vmem:[%s2102 + $0x187] sm:$0xff]
      %v2128 = vld [vmem:[%s2102 + $0x18f] sm:$0xff]
      %v2129 = vld [vmem:[%s2102 + $0x1a7] sm:$0xff]
      %v2130 = vld [vmem:[%s2102 + $0x1af] sm:$0xff]
      %v2131 = vld [vmem:[%s2102 + $0x1c7] sm:$0xff]
      %v2132 = vld [vmem:[%s2102 + $0x1cf] sm:$0xff]
      %v2133 = vld [vmem:[%s2102 + $0x1e7] sm:$0xff]
      %v2134 = vld [vmem:[%s2102 + $0x1ef] sm:$0xff]
      %s2135 = scalar_lea.vmem %s2, 48
      %v2136 = vld [vmem:[%s2135] sm:$0x1f]
      %v2138 = vsel %vm392, %v2103, 0
      %v2141 = vsel %vm392, %v2104, 0
      %v2144 = vsel %vm392, %v2105, 0
      %v2147 = vsel %vm392, %v2106, 0
      %v2150 = vsel %vm392, %v2107, 0
      %v2153 = vsel %vm392, %v2108, 0
      %v2156 = vsel %vm392, %v2109, 0
      %v2159 = vsel %vm392, %v2110, 0
      %v2162 = vsel %vm392, %v2111, 0
      %v2165 = vsel %vm392, %v2112, 0
      %v2168 = vsel %vm392, %v2113, 0
      %v2171 = vsel %vm392, %v2114, 0
      %v2174 = vsel %vm392, %v2115, 0
      %v2177 = vsel %vm392, %v2116, 0
      %v2180 = vsel %vm392, %v2117, 0
      %v2183 = vsel %vm392, %v2118, 0
      %v2186 = vsel %vm392, %v2119, 0
      %v2189 = vsel %vm392, %v2120, 0
      %v2192 = vsel %vm392, %v2121, 0
      %v2195 = vsel %vm392, %v2122, 0
      %v2198 = vsel %vm392, %v2123, 0
      %v2201 = vsel %vm392, %v2124, 0
      %v2204 = vsel %vm392, %v2125, 0
      %v2207 = vsel %vm392, %v2126, 0
      %v2210 = vsel %vm392, %v2127, 0
      %v2213 = vsel %vm392, %v2128, 0
      %v2216 = vsel %vm392, %v2129, 0
      %v2219 = vsel %vm392, %v2130, 0
      %v2222 = vsel %vm392, %v2131, 0
      %v2225 = vsel %vm392, %v2132, 0
      %v2228 = vsel %vm392, %v2133, 0
      %v2231 = vsel %vm392, %v2134, 0
      %v2234 = vsel %vm661, %v2136, 0
      %2236 = vmatpush.msra.mxu0 0.0
      %2237 = vmatpush.msra.mxu0 0.0
      %2238 = vmatpush.msra.mxu0 0.0
      %2239 = vmatpush.msra.mxu0 0.0
      %2240 = vmatpush.msra.mxu0 0.0
      %2241 = vmatpush.msra.mxu0 0.0
      %2242 = vmatpush.msra.mxu0 0.0
      %2243 = vmatpush.msra.mxu0 0.0
      %2244 = vmatpush.msra.mxu0 0.0
      %2245 = vmatpush.msra.mxu0 0.0
      %2246 = vmatpush.msra.mxu0 0.0
      %2247 = vmatpush.msra.mxu0 0.0
      %2248 = vmatpush.msra.mxu0 0.0
      %2249 = vmatpush.msra.mxu0 0.0
      %2250 = vmatpush.msra.mxu0 0.0
      %2251 = vmatpush.msra.mxu0 %v2234
      %2252 = vmatmul.f32.gmra.mxu0 %v2138
      %v2253 = vpop.f32.mrf.mxu0
      %v2254 = vadd.f32 0.0, %v2253
      %2255 = vmatmul.f32.gmra.mxu0 %v2141
      %v2256 = vpop.f32.mrf.mxu0
      %v2257 = vadd.f32 0.0, %v2256
      %2258 = vmatmul.f32.gmra.mxu0 %v2144
      %v2259 = vpop.f32.mrf.mxu0
      %v2260 = vadd.f32 0.0, %v2259
      %2261 = vmatmul.f32.gmra.mxu0 %v2147
      %v2262 = vpop.f32.mrf.mxu0
      %v2263 = vadd.f32 0.0, %v2262
      %2264 = vmatmul.f32.gmra.mxu0 %v2150
      %v2265 = vpop.f32.mrf.mxu0
      %v2266 = vadd.f32 0.0, %v2265
      %2267 = vmatmul.f32.gmra.mxu0 %v2153
      %v2268 = vpop.f32.mrf.mxu0
      %v2269 = vadd.f32 0.0, %v2268
      %2270 = vmatmul.f32.gmra.mxu0 %v2156
      %v2271 = vpop.f32.mrf.mxu0
      %v2272 = vadd.f32 0.0, %v2271
      %2273 = vmatmul.f32.gmra.mxu0 %v2159
      %v2274 = vpop.f32.mrf.mxu0
      %v2275 = vadd.f32 0.0, %v2274
      %2276 = vmatmul.f32.gmra.mxu0 %v2162
      %v2277 = vpop.f32.mrf.mxu0
      %v2278 = vadd.f32 0.0, %v2277
      %2279 = vmatmul.f32.gmra.mxu0 %v2165
      %v2280 = vpop.f32.mrf.mxu0
      %v2281 = vadd.f32 0.0, %v2280
      %2282 = vmatmul.f32.gmra.mxu0 %v2168
      %v2283 = vpop.f32.mrf.mxu0
      %v2284 = vadd.f32 0.0, %v2283
      %2285 = vmatmul.f32.gmra.mxu0 %v2171
      %v2286 = vpop.f32.mrf.mxu0
      %v2287 = vadd.f32 0.0, %v2286
      %2288 = vmatmul.f32.gmra.mxu0 %v2174
      %v2289 = vpop.f32.mrf.mxu0
      %v2290 = vadd.f32 0.0, %v2289
      %2291 = vmatmul.f32.gmra.mxu0 %v2177
      %v2292 = vpop.f32.mrf.mxu0
      %v2293 = vadd.f32 0.0, %v2292
      %2294 = vmatmul.f32.gmra.mxu0 %v2180
      %v2295 = vpop.f32.mrf.mxu0
      %v2296 = vadd.f32 0.0, %v2295
      %2297 = vmatmul.f32.gmra.mxu0 %v2183
      %v2298 = vpop.f32.mrf.mxu0
      %v2299 = vadd.f32 0.0, %v2298
      %2300 = vmatmul.f32.gmra.mxu0 %v2186
      %v2301 = vpop.f32.mrf.mxu0
      %v2302 = vadd.f32 0.0, %v2301
      %2303 = vmatmul.f32.gmra.mxu0 %v2189
      %v2304 = vpop.f32.mrf.mxu0
      %v2305 = vadd.f32 0.0, %v2304
      %2306 = vmatmul.f32.gmra.mxu0 %v2192
      %v2307 = vpop.f32.mrf.mxu0
      %v2308 = vadd.f32 0.0, %v2307
      %2309 = vmatmul.f32.gmra.mxu0 %v2195
      %v2310 = vpop.f32.mrf.mxu0
      %v2311 = vadd.f32 0.0, %v2310
      %2312 = vmatmul.f32.gmra.mxu0 %v2198
      %v2313 = vpop.f32.mrf.mxu0
      %v2314 = vadd.f32 0.0, %v2313
      %2315 = vmatmul.f32.gmra.mxu0 %v2201
      %v2316 = vpop.f32.mrf.mxu0
      %v2317 = vadd.f32 0.0, %v2316
      %2318 = vmatmul.f32.gmra.mxu0 %v2204
      %v2319 = vpop.f32.mrf.mxu0
      %v2320 = vadd.f32 0.0, %v2319
      %2321 = vmatmul.f32.gmra.mxu0 %v2207
      %v2322 = vpop.f32.mrf.mxu0
      %v2323 = vadd.f32 0.0, %v2322
      %2324 = vmatmul.f32.gmra.mxu0 %v2210
      %v2325 = vpop.f32.mrf.mxu0
      %v2326 = vadd.f32 0.0, %v2325
      %2327 = vmatmul.f32.gmra.mxu0 %v2213
      %v2328 = vpop.f32.mrf.mxu0
      %v2329 = vadd.f32 0.0, %v2328
      %2330 = vmatmul.f32.gmra.mxu0 %v2216
      %v2331 = vpop.f32.mrf.mxu0
      %v2332 = vadd.f32 0.0, %v2331
      %2333 = vmatmul.f32.gmra.mxu0 %v2219
      %v2334 = vpop.f32.mrf.mxu0
      %v2335 = vadd.f32 0.0, %v2334
      %2336 = vmatmul.f32.gmra.mxu0 %v2222
      %v2337 = vpop.f32.mrf.mxu0
      %v2338 = vadd.f32 0.0, %v2337
      %2339 = vmatmul.f32.gmra.mxu0 %v2225
      %v2340 = vpop.f32.mrf.mxu0
      %v2341 = vadd.f32 0.0, %v2340
      %2342 = vmatmul.f32.gmra.mxu0 %v2228
      %v2343 = vpop.f32.mrf.mxu0
      %v2344 = vadd.f32 0.0, %v2343
      %2345 = vmatmul.f32.gmra.mxu0 %v2231
      %v2346 = vpop.f32.mrf.mxu0
      %v2347 = vadd.f32 0.0, %v2346
      %2348 = vdwg.mxu0
      %v2349 = vadd.f32 %v2070, %v2254
      %v2350 = vadd.f32 %v2071, %v2257
      %v2351 = vadd.f32 %v2072, %v2260
      %v2352 = vadd.f32 %v2073, %v2263
      %v2353 = vadd.f32 %v2074, %v2266
      %v2354 = vadd.f32 %v2075, %v2269
      %v2355 = vadd.f32 %v2076, %v2272
      %v2356 = vadd.f32 %v2077, %v2275
      %v2357 = vadd.f32 %v2078, %v2278
      %v2358 = vadd.f32 %v2079, %v2281
      %v2359 = vadd.f32 %v2080, %v2284
      %v2360 = vadd.f32 %v2081, %v2287
      %v2361 = vadd.f32 %v2082, %v2290
      %v2362 = vadd.f32 %v2083, %v2293
      %v2363 = vadd.f32 %v2084, %v2296
      %v2364 = vadd.f32 %v2085, %v2299
      %v2365 = vadd.f32 %v2086, %v2302
      %v2366 = vadd.f32 %v2087, %v2305
      %v2367 = vadd.f32 %v2088, %v2308
      %v2368 = vadd.f32 %v2089, %v2311
      %v2369 = vadd.f32 %v2090, %v2314
      %v2370 = vadd.f32 %v2091, %v2317
      %v2371 = vadd.f32 %v2092, %v2320
      %v2372 = vadd.f32 %v2093, %v2323
      %v2373 = vadd.f32 %v2094, %v2326
      %v2374 = vadd.f32 %v2095, %v2329
      %v2375 = vadd.f32 %v2096, %v2332
      %v2376 = vadd.f32 %v2097, %v2335
      %v2377 = vadd.f32 %v2098, %v2338
      %v2378 = vadd.f32 %v2099, %v2341
      %v2379 = vadd.f32 %v2100, %v2344
      %v2380 = vadd.f32 %v2101, %v2347
      %v2381 = vld [vmem:[%s2102 + $0x8] sm:$0xff]
      %v2382 = vld [vmem:[%s2102 + $0x10] sm:$0xff]
      %v2383 = vld [vmem:[%s2102 + $0x28] sm:$0xff]
      %v2384 = vld [vmem:[%s2102 + $0x30] sm:$0xff]
      %v2385 = vld [vmem:[%s2102 + $0x48] sm:$0xff]
      %v2386 = vld [vmem:[%s2102 + $0x50] sm:$0xff]
      %v2387 = vld [vmem:[%s2102 + $0x68] sm:$0xff]
      %v2388 = vld [vmem:[%s2102 + $0x70] sm:$0xff]
      %v2389 = vld [vmem:[%s2102 + $0x88] sm:$0xff]
      %v2390 = vld [vmem:[%s2102 + $0x90] sm:$0xff]
      %v2391 = vld [vmem:[%s2102 + $0xa8] sm:$0xff]
      %v2392 = vld [vmem:[%s2102 + $0xb0] sm:$0xff]
      %v2393 = vld [vmem:[%s2102 + $0xc8] sm:$0xff]
      %v2394 = vld [vmem:[%s2102 + $0xd0] sm:$0xff]
      %v2395 = vld [vmem:[%s2102 + $0xe8] sm:$0xff]
      %v2396 = vld [vmem:[%s2102 + $0xf0] sm:$0xff]
      %v2397 = vld [vmem:[%s2102 + $0x108] sm:$0xff]
      %v2398 = vld [vmem:[%s2102 + $0x110] sm:$0xff]
      %v2399 = vld [vmem:[%s2102 + $0x128] sm:$0xff]
      %v2400 = vld [vmem:[%s2102 + $0x130] sm:$0xff]
      %v2401 = vld [vmem:[%s2102 + $0x148] sm:$0xff]
      %v2402 = vld [vmem:[%s2102 + $0x150] sm:$0xff]
      %v2403 = vld [vmem:[%s2102 + $0x168] sm:$0xff]
      %v2404 = vld [vmem:[%s2102 + $0x170] sm:$0xff]
      %v2405 = vld [vmem:[%s2102 + $0x188] sm:$0xff]
      %v2406 = vld [vmem:[%s2102 + $0x190] sm:$0xff]
      %v2407 = vld [vmem:[%s2102 + $0x1a8] sm:$0xff]
      %v2408 = vld [vmem:[%s2102 + $0x1b0] sm:$0xff]
      %v2409 = vld [vmem:[%s2102 + $0x1c8] sm:$0xff]
      %v2410 = vld [vmem:[%s2102 + $0x1d0] sm:$0xff]
      %v2411 = vld [vmem:[%s2102 + $0x1e8] sm:$0xff]
      %v2412 = vld [vmem:[%s2102 + $0x1f0] sm:$0xff]
      %s2413 = scalar_lea.vmem %s2, 56
      %v2414 = vld [vmem:[%s2413] sm:$0x1f]
      %v2416 = vsel %vm392, %v2381, 0
      %v2419 = vsel %vm392, %v2382, 0
      %v2422 = vsel %vm392, %v2383, 0
      %v2425 = vsel %vm392, %v2384, 0
      %v2428 = vsel %vm392, %v2385, 0
      %v2431 = vsel %vm392, %v2386, 0
      %v2434 = vsel %vm392, %v2387, 0
      %v2437 = vsel %vm392, %v2388, 0
      %v2440 = vsel %vm392, %v2389, 0
      %v2443 = vsel %vm392, %v2390, 0
      %v2446 = vsel %vm392, %v2391, 0
      %v2449 = vsel %vm392, %v2392, 0
      %v2452 = vsel %vm392, %v2393, 0
      %v2455 = vsel %vm392, %v2394, 0
      %v2458 = vsel %vm392, %v2395, 0
      %v2461 = vsel %vm392, %v2396, 0
      %v2464 = vsel %vm392, %v2397, 0
      %v2467 = vsel %vm392, %v2398, 0
      %v2470 = vsel %vm392, %v2399, 0
      %v2473 = vsel %vm392, %v2400, 0
      %v2476 = vsel %vm392, %v2401, 0
      %v2479 = vsel %vm392, %v2402, 0
      %v2482 = vsel %vm392, %v2403, 0
      %v2485 = vsel %vm392, %v2404, 0
      %v2488 = vsel %vm392, %v2405, 0
      %v2491 = vsel %vm392, %v2406, 0
      %v2494 = vsel %vm392, %v2407, 0
      %v2497 = vsel %vm392, %v2408, 0
      %v2500 = vsel %vm392, %v2409, 0
      %v2503 = vsel %vm392, %v2410, 0
      %v2506 = vsel %vm392, %v2411, 0
      %v2509 = vsel %vm392, %v2412, 0
      %v2512 = vsel %vm661, %v2414, 0
      %2514 = vmatpush.msra.mxu0 0.0
      %2515 = vmatpush.msra.mxu0 0.0
      %2516 = vmatpush.msra.mxu0 0.0
      %2517 = vmatpush.msra.mxu0 0.0
      %2518 = vmatpush.msra.mxu0 0.0
      %2519 = vmatpush.msra.mxu0 0.0
      %2520 = vmatpush.msra.mxu0 0.0
      %2521 = vmatpush.msra.mxu0 0.0
      %2522 = vmatpush.msra.mxu0 0.0
      %2523 = vmatpush.msra.mxu0 0.0
      %2524 = vmatpush.msra.mxu0 0.0
      %2525 = vmatpush.msra.mxu0 0.0
      %2526 = vmatpush.msra.mxu0 0.0
      %2527 = vmatpush.msra.mxu0 0.0
      %2528 = vmatpush.msra.mxu0 0.0
      %2529 = vmatpush.msra.mxu0 %v2512
      %2530 = vmatmul.f32.gmra.mxu0 %v2416
      %v2531 = vpop.f32.mrf.mxu0
      %v2532 = vadd.f32 0.0, %v2531
      %2533 = vmatmul.f32.gmra.mxu0 %v2419
      %v2534 = vpop.f32.mrf.mxu0
      %v2535 = vadd.f32 0.0, %v2534
      %2536 = vmatmul.f32.gmra.mxu0 %v2422
      %v2537 = vpop.f32.mrf.mxu0
      %v2538 = vadd.f32 0.0, %v2537
      %2539 = vmatmul.f32.gmra.mxu0 %v2425
      %v2540 = vpop.f32.mrf.mxu0
      %v2541 = vadd.f32 0.0, %v2540
      %2542 = vmatmul.f32.gmra.mxu0 %v2428
      %v2543 = vpop.f32.mrf.mxu0
      %v2544 = vadd.f32 0.0, %v2543
      %2545 = vmatmul.f32.gmra.mxu0 %v2431
      %v2546 = vpop.f32.mrf.mxu0
      %v2547 = vadd.f32 0.0, %v2546
      %2548 = vmatmul.f32.gmra.mxu0 %v2434
      %v2549 = vpop.f32.mrf.mxu0
      %v2550 = vadd.f32 0.0, %v2549
      %2551 = vmatmul.f32.gmra.mxu0 %v2437
      %v2552 = vpop.f32.mrf.mxu0
      %v2553 = vadd.f32 0.0, %v2552
      %2554 = vmatmul.f32.gmra.mxu0 %v2440
      %v2555 = vpop.f32.mrf.mxu0
      %v2556 = vadd.f32 0.0, %v2555
      %2557 = vmatmul.f32.gmra.mxu0 %v2443
      %v2558 = vpop.f32.mrf.mxu0
      %v2559 = vadd.f32 0.0, %v2558
      %2560 = vmatmul.f32.gmra.mxu0 %v2446
      %v2561 = vpop.f32.mrf.mxu0
      %v2562 = vadd.f32 0.0, %v2561
      %2563 = vmatmul.f32.gmra.mxu0 %v2449
      %v2564 = vpop.f32.mrf.mxu0
      %v2565 = vadd.f32 0.0, %v2564
      %2566 = vmatmul.f32.gmra.mxu0 %v2452
      %v2567 = vpop.f32.mrf.mxu0
      %v2568 = vadd.f32 0.0, %v2567
      %2569 = vmatmul.f32.gmra.mxu0 %v2455
      %v2570 = vpop.f32.mrf.mxu0
      %v2571 = vadd.f32 0.0, %v2570
      %2572 = vmatmul.f32.gmra.mxu0 %v2458
      %v2573 = vpop.f32.mrf.mxu0
      %v2574 = vadd.f32 0.0, %v2573
      %2575 = vmatmul.f32.gmra.mxu0 %v2461
      %v2576 = vpop.f32.mrf.mxu0
      %v2577 = vadd.f32 0.0, %v2576
      %2578 = vmatmul.f32.gmra.mxu0 %v2464
      %v2579 = vpop.f32.mrf.mxu0
      %v2580 = vadd.f32 0.0, %v2579
      %2581 = vmatmul.f32.gmra.mxu0 %v2467
      %v2582 = vpop.f32.mrf.mxu0
      %v2583 = vadd.f32 0.0, %v2582
      %2584 = vmatmul.f32.gmra.mxu0 %v2470
      %v2585 = vpop.f32.mrf.mxu0
      %v2586 = vadd.f32 0.0, %v2585
      %2587 = vmatmul.f32.gmra.mxu0 %v2473
      %v2588 = vpop.f32.mrf.mxu0
      %v2589 = vadd.f32 0.0, %v2588
      %2590 = vmatmul.f32.gmra.mxu0 %v2476
      %v2591 = vpop.f32.mrf.mxu0
      %v2592 = vadd.f32 0.0, %v2591
      %2593 = vmatmul.f32.gmra.mxu0 %v2479
      %v2594 = vpop.f32.mrf.mxu0
      %v2595 = vadd.f32 0.0, %v2594
      %2596 = vmatmul.f32.gmra.mxu0 %v2482
      %v2597 = vpop.f32.mrf.mxu0
      %v2598 = vadd.f32 0.0, %v2597
      %2599 = vmatmul.f32.gmra.mxu0 %v2485
      %v2600 = vpop.f32.mrf.mxu0
      %v2601 = vadd.f32 0.0, %v2600
      %2602 = vmatmul.f32.gmra.mxu0 %v2488
      %v2603 = vpop.f32.mrf.mxu0
      %v2604 = vadd.f32 0.0, %v2603
      %2605 = vmatmul.f32.gmra.mxu0 %v2491
      %v2606 = vpop.f32.mrf.mxu0
      %v2607 = vadd.f32 0.0, %v2606
      %2608 = vmatmul.f32.gmra.mxu0 %v2494
      %v2609 = vpop.f32.mrf.mxu0
      %v2610 = vadd.f32 0.0, %v2609
      %2611 = vmatmul.f32.gmra.mxu0 %v2497
      %v2612 = vpop.f32.mrf.mxu0
      %v2613 = vadd.f32 0.0, %v2612
      %2614 = vmatmul.f32.gmra.mxu0 %v2500
      %v2615 = vpop.f32.mrf.mxu0
      %v2616 = vadd.f32 0.0, %v2615
      %2617 = vmatmul.f32.gmra.mxu0 %v2503
      %v2618 = vpop.f32.mrf.mxu0
      %v2619 = vadd.f32 0.0, %v2618
      %2620 = vmatmul.f32.gmra.mxu0 %v2506
      %v2621 = vpop.f32.mrf.mxu0
      %v2622 = vadd.f32 0.0, %v2621
      %2623 = vmatmul.f32.gmra.mxu0 %v2509
      %v2624 = vpop.f32.mrf.mxu0
      %v2625 = vadd.f32 0.0, %v2624
      %2626 = vdwg.mxu0
      %v2627 = vadd.f32 %v2349, %v2532
      %v2628 = vadd.f32 %v2350, %v2535
      %v2629 = vadd.f32 %v2351, %v2538
      %v2630 = vadd.f32 %v2352, %v2541
      %v2631 = vadd.f32 %v2353, %v2544
      %v2632 = vadd.f32 %v2354, %v2547
      %v2633 = vadd.f32 %v2355, %v2550
      %v2634 = vadd.f32 %v2356, %v2553
      %v2635 = vadd.f32 %v2357, %v2556
      %v2636 = vadd.f32 %v2358, %v2559
      %v2637 = vadd.f32 %v2359, %v2562
      %v2638 = vadd.f32 %v2360, %v2565
      %v2639 = vadd.f32 %v2361, %v2568
      %v2640 = vadd.f32 %v2362, %v2571
      %v2641 = vadd.f32 %v2363, %v2574
      %v2642 = vadd.f32 %v2364, %v2577
      %v2643 = vadd.f32 %v2365, %v2580
      %v2644 = vadd.f32 %v2366, %v2583
      %v2645 = vadd.f32 %v2367, %v2586
      %v2646 = vadd.f32 %v2368, %v2589
      %v2647 = vadd.f32 %v2369, %v2592
      %v2648 = vadd.f32 %v2370, %v2595
      %v2649 = vadd.f32 %v2371, %v2598
      %v2650 = vadd.f32 %v2372, %v2601
      %v2651 = vadd.f32 %v2373, %v2604
      %v2652 = vadd.f32 %v2374, %v2607
      %v2653 = vadd.f32 %v2375, %v2610
      %v2654 = vadd.f32 %v2376, %v2613
      %v2655 = vadd.f32 %v2377, %v2616
      %v2656 = vadd.f32 %v2378, %v2619
      %v2657 = vadd.f32 %v2379, %v2622
      %v2658 = vadd.f32 %v2380, %v2625
      %v2659 = vld [vmem:[%s2102 + $0x9] sm:$0xff]
      %v2660 = vld [vmem:[%s2102 + $0x11] sm:$0xff]
      %v2661 = vld [vmem:[%s2102 + $0x29] sm:$0xff]
      %v2662 = vld [vmem:[%s2102 + $0x31] sm:$0xff]
      %v2663 = vld [vmem:[%s2102 + $0x49] sm:$0xff]
      %v2664 = vld [vmem:[%s2102 + $0x51] sm:$0xff]
      %v2665 = vld [vmem:[%s2102 + $0x69] sm:$0xff]
      %v2666 = vld [vmem:[%s2102 + $0x71] sm:$0xff]
      %v2667 = vld [vmem:[%s2102 + $0x89] sm:$0xff]
      %v2668 = vld [vmem:[%s2102 + $0x91] sm:$0xff]
      %v2669 = vld [vmem:[%s2102 + $0xa9] sm:$0xff]
      %v2670 = vld [vmem:[%s2102 + $0xb1] sm:$0xff]
      %v2671 = vld [vmem:[%s2102 + $0xc9] sm:$0xff]
      %v2672 = vld [vmem:[%s2102 + $0xd1] sm:$0xff]
      %v2673 = vld [vmem:[%s2102 + $0xe9] sm:$0xff]
      %v2674 = vld [vmem:[%s2102 + $0xf1] sm:$0xff]
      %v2675 = vld [vmem:[%s2102 + $0x109] sm:$0xff]
      %v2676 = vld [vmem:[%s2102 + $0x111] sm:$0xff]
      %v2677 = vld [vmem:[%s2102 + $0x129] sm:$0xff]
      %v2678 = vld [vmem:[%s2102 + $0x131] sm:$0xff]
      %v2679 = vld [vmem:[%s2102 + $0x149] sm:$0xff]
      %v2680 = vld [vmem:[%s2102 + $0x151] sm:$0xff]
      %v2681 = vld [vmem:[%s2102 + $0x169] sm:$0xff]
      %v2682 = vld [vmem:[%s2102 + $0x171] sm:$0xff]
      %v2683 = vld [vmem:[%s2102 + $0x189] sm:$0xff]
      %v2684 = vld [vmem:[%s2102 + $0x191] sm:$0xff]
      %v2685 = vld [vmem:[%s2102 + $0x1a9] sm:$0xff]
      %v2686 = vld [vmem:[%s2102 + $0x1b1] sm:$0xff]
      %v2687 = vld [vmem:[%s2102 + $0x1c9] sm:$0xff]
      %v2688 = vld [vmem:[%s2102 + $0x1d1] sm:$0xff]
      %v2689 = vld [vmem:[%s2102 + $0x1e9] sm:$0xff]
      %v2690 = vld [vmem:[%s2102 + $0x1f1] sm:$0xff]
      %s2691 = scalar_lea.vmem %s2, 64
      %v2692 = vld [vmem:[%s2691] sm:$0x1f]
      %v2694 = vsel %vm392, %v2659, 0
      %v2697 = vsel %vm392, %v2660, 0
      %v2700 = vsel %vm392, %v2661, 0
      %v2703 = vsel %vm392, %v2662, 0
      %v2706 = vsel %vm392, %v2663, 0
      %v2709 = vsel %vm392, %v2664, 0
      %v2712 = vsel %vm392, %v2665, 0
      %v2715 = vsel %vm392, %v2666, 0
      %v2718 = vsel %vm392, %v2667, 0
      %v2721 = vsel %vm392, %v2668, 0
      %v2724 = vsel %vm392, %v2669, 0
      %v2727 = vsel %vm392, %v2670, 0
      %v2730 = vsel %vm392, %v2671, 0
      %v2733 = vsel %vm392, %v2672, 0
      %v2736 = vsel %vm392, %v2673, 0
      %v2739 = vsel %vm392, %v2674, 0
      %v2742 = vsel %vm392, %v2675, 0
      %v2745 = vsel %vm392, %v2676, 0
      %v2748 = vsel %vm392, %v2677, 0
      %v2751 = vsel %vm392, %v2678, 0
      %v2754 = vsel %vm392, %v2679, 0
      %v2757 = vsel %vm392, %v2680, 0
      %v2760 = vsel %vm392, %v2681, 0
      %v2763 = vsel %vm392, %v2682, 0
      %v2766 = vsel %vm392, %v2683, 0
      %v2769 = vsel %vm392, %v2684, 0
      %v2772 = vsel %vm392, %v2685, 0
      %v2775 = vsel %vm392, %v2686, 0
      %v2778 = vsel %vm392, %v2687, 0
      %v2781 = vsel %vm392, %v2688, 0
      %v2784 = vsel %vm392, %v2689, 0
      %v2787 = vsel %vm392, %v2690, 0
      %v2790 = vsel %vm661, %v2692, 0
      %2792 = vmatpush.msra.mxu0 0.0
      %2793 = vmatpush.msra.mxu0 0.0
      %2794 = vmatpush.msra.mxu0 0.0
      %2795 = vmatpush.msra.mxu0 0.0
      %2796 = vmatpush.msra.mxu0 0.0
      %2797 = vmatpush.msra.mxu0 0.0
      %2798 = vmatpush.msra.mxu0 0.0
      %2799 = vmatpush.msra.mxu0 0.0
      %2800 = vmatpush.msra.mxu0 0.0
      %2801 = vmatpush.msra.mxu0 0.0
      %2802 = vmatpush.msra.mxu0 0.0
      %2803 = vmatpush.msra.mxu0 0.0
      %2804 = vmatpush.msra.mxu0 0.0
      %2805 = vmatpush.msra.mxu0 0.0
      %2806 = vmatpush.msra.mxu0 0.0
      %2807 = vmatpush.msra.mxu0 %v2790
      %2808 = vmatmul.f32.gmra.mxu0 %v2694
      %v2809 = vpop.f32.mrf.mxu0
      %v2810 = vadd.f32 0.0, %v2809
      %2811 = vmatmul.f32.gmra.mxu0 %v2697
      %v2812 = vpop.f32.mrf.mxu0
      %v2813 = vadd.f32 0.0, %v2812
      %2814 = vmatmul.f32.gmra.mxu0 %v2700
      %v2815 = vpop.f32.mrf.mxu0
      %v2816 = vadd.f32 0.0, %v2815
      %2817 = vmatmul.f32.gmra.mxu0 %v2703
      %v2818 = vpop.f32.mrf.mxu0
      %v2819 = vadd.f32 0.0, %v2818
      %2820 = vmatmul.f32.gmra.mxu0 %v2706
      %v2821 = vpop.f32.mrf.mxu0
      %v2822 = vadd.f32 0.0, %v2821
      %2823 = vmatmul.f32.gmra.mxu0 %v2709
      %v2824 = vpop.f32.mrf.mxu0
      %v2825 = vadd.f32 0.0, %v2824
      %2826 = vmatmul.f32.gmra.mxu0 %v2712
      %v2827 = vpop.f32.mrf.mxu0
      %v2828 = vadd.f32 0.0, %v2827
      %2829 = vmatmul.f32.gmra.mxu0 %v2715
      %v2830 = vpop.f32.mrf.mxu0
      %v2831 = vadd.f32 0.0, %v2830
      %2832 = vmatmul.f32.gmra.mxu0 %v2718
      %v2833 = vpop.f32.mrf.mxu0
      %v2834 = vadd.f32 0.0, %v2833
      %2835 = vmatmul.f32.gmra.mxu0 %v2721
      %v2836 = vpop.f32.mrf.mxu0
      %v2837 = vadd.f32 0.0, %v2836
      %2838 = vmatmul.f32.gmra.mxu0 %v2724
      %v2839 = vpop.f32.mrf.mxu0
      %v2840 = vadd.f32 0.0, %v2839
      %2841 = vmatmul.f32.gmra.mxu0 %v2727
      %v2842 = vpop.f32.mrf.mxu0
      %v2843 = vadd.f32 0.0, %v2842
      %2844 = vmatmul.f32.gmra.mxu0 %v2730
      %v2845 = vpop.f32.mrf.mxu0
      %v2846 = vadd.f32 0.0, %v2845
      %2847 = vmatmul.f32.gmra.mxu0 %v2733
      %v2848 = vpop.f32.mrf.mxu0
      %v2849 = vadd.f32 0.0, %v2848
      %2850 = vmatmul.f32.gmra.mxu0 %v2736
      %v2851 = vpop.f32.mrf.mxu0
      %v2852 = vadd.f32 0.0, %v2851
      %2853 = vmatmul.f32.gmra.mxu0 %v2739
      %v2854 = vpop.f32.mrf.mxu0
      %v2855 = vadd.f32 0.0, %v2854
      %2856 = vmatmul.f32.gmra.mxu0 %v2742
      %v2857 = vpop.f32.mrf.mxu0
      %v2858 = vadd.f32 0.0, %v2857
      %2859 = vmatmul.f32.gmra.mxu0 %v2745
      %v2860 = vpop.f32.mrf.mxu0
      %v2861 = vadd.f32 0.0, %v2860
      %2862 = vmatmul.f32.gmra.mxu0 %v2748
      %v2863 = vpop.f32.mrf.mxu0
      %v2864 = vadd.f32 0.0, %v2863
      %2865 = vmatmul.f32.gmra.mxu0 %v2751
      %v2866 = vpop.f32.mrf.mxu0
      %v2867 = vadd.f32 0.0, %v2866
      %2868 = vmatmul.f32.gmra.mxu0 %v2754
      %v2869 = vpop.f32.mrf.mxu0
      %v2870 = vadd.f32 0.0, %v2869
      %2871 = vmatmul.f32.gmra.mxu0 %v2757
      %v2872 = vpop.f32.mrf.mxu0
      %v2873 = vadd.f32 0.0, %v2872
      %2874 = vmatmul.f32.gmra.mxu0 %v2760
      %v2875 = vpop.f32.mrf.mxu0
      %v2876 = vadd.f32 0.0, %v2875
      %2877 = vmatmul.f32.gmra.mxu0 %v2763
      %v2878 = vpop.f32.mrf.mxu0
      %v2879 = vadd.f32 0.0, %v2878
      %2880 = vmatmul.f32.gmra.mxu0 %v2766
      %v2881 = vpop.f32.mrf.mxu0
      %v2882 = vadd.f32 0.0, %v2881
      %2883 = vmatmul.f32.gmra.mxu0 %v2769
      %v2884 = vpop.f32.mrf.mxu0
      %v2885 = vadd.f32 0.0, %v2884
      %2886 = vmatmul.f32.gmra.mxu0 %v2772
      %v2887 = vpop.f32.mrf.mxu0
      %v2888 = vadd.f32 0.0, %v2887
      %2889 = vmatmul.f32.gmra.mxu0 %v2775
      %v2890 = vpop.f32.mrf.mxu0
      %v2891 = vadd.f32 0.0, %v2890
      %2892 = vmatmul.f32.gmra.mxu0 %v2778
      %v2893 = vpop.f32.mrf.mxu0
      %v2894 = vadd.f32 0.0, %v2893
      %2895 = vmatmul.f32.gmra.mxu0 %v2781
      %v2896 = vpop.f32.mrf.mxu0
      %v2897 = vadd.f32 0.0, %v2896
      %2898 = vmatmul.f32.gmra.mxu0 %v2784
      %v2899 = vpop.f32.mrf.mxu0
      %v2900 = vadd.f32 0.0, %v2899
      %2901 = vmatmul.f32.gmra.mxu0 %v2787
      %v2902 = vpop.f32.mrf.mxu0
      %v2903 = vadd.f32 0.0, %v2902
      %2904 = vdwg.mxu0
      %v2905 = vadd.f32 %v2627, %v2810
      %v2906 = vadd.f32 %v2628, %v2813
      %v2907 = vadd.f32 %v2629, %v2816
      %v2908 = vadd.f32 %v2630, %v2819
      %v2909 = vadd.f32 %v2631, %v2822
      %v2910 = vadd.f32 %v2632, %v2825
      %v2911 = vadd.f32 %v2633, %v2828
      %v2912 = vadd.f32 %v2634, %v2831
      %v2913 = vadd.f32 %v2635, %v2834
      %v2914 = vadd.f32 %v2636, %v2837
      %v2915 = vadd.f32 %v2637, %v2840
      %v2916 = vadd.f32 %v2638, %v2843
      %v2917 = vadd.f32 %v2639, %v2846
      %v2918 = vadd.f32 %v2640, %v2849
      %v2919 = vadd.f32 %v2641, %v2852
      %v2920 = vadd.f32 %v2642, %v2855
      %v2921 = vadd.f32 %v2643, %v2858
      %v2922 = vadd.f32 %v2644, %v2861
      %v2923 = vadd.f32 %v2645, %v2864
      %v2924 = vadd.f32 %v2646, %v2867
      %v2925 = vadd.f32 %v2647, %v2870
      %v2926 = vadd.f32 %v2648, %v2873
      %v2927 = vadd.f32 %v2649, %v2876
      %v2928 = vadd.f32 %v2650, %v2879
      %v2929 = vadd.f32 %v2651, %v2882
      %v2930 = vadd.f32 %v2652, %v2885
      %v2931 = vadd.f32 %v2653, %v2888
      %v2932 = vadd.f32 %v2654, %v2891
      %v2933 = vadd.f32 %v2655, %v2894
      %v2934 = vadd.f32 %v2656, %v2897
      %v2935 = vadd.f32 %v2657, %v2900
      %v2936 = vadd.f32 %v2658, %v2903
      %v2937 = vld [vmem:[%s3] sm:$0x1]
      %v2939 = vperm.slane %v2937, 0
      %v2941 = vadd.f32 %v2905, %v2939
      %v2942 = vadd.f32 %v2906, %v2939
      %v2943 = vadd.f32 %v2907, %v2939
      %v2944 = vadd.f32 %v2908, %v2939
      %v2945 = vadd.f32 %v2909, %v2939
      %v2946 = vadd.f32 %v2910, %v2939
      %v2947 = vadd.f32 %v2911, %v2939
      %v2948 = vadd.f32 %v2912, %v2939
      %v2949 = vadd.f32 %v2913, %v2939
      %v2950 = vadd.f32 %v2914, %v2939
      %v2951 = vadd.f32 %v2915, %v2939
      %v2952 = vadd.f32 %v2916, %v2939
      %v2953 = vadd.f32 %v2917, %v2939
      %v2954 = vadd.f32 %v2918, %v2939
      %v2955 = vadd.f32 %v2919, %v2939
      %v2956 = vadd.f32 %v2920, %v2939
      %v2957 = vadd.f32 %v2921, %v2939
      %v2958 = vadd.f32 %v2922, %v2939
      %v2959 = vadd.f32 %v2923, %v2939
      %v2960 = vadd.f32 %v2924, %v2939
      %v2961 = vadd.f32 %v2925, %v2939
      %v2962 = vadd.f32 %v2926, %v2939
      %v2963 = vadd.f32 %v2927, %v2939
      %v2964 = vadd.f32 %v2928, %v2939
      %v2965 = vadd.f32 %v2929, %v2939
      %v2966 = vadd.f32 %v2930, %v2939
      %v2967 = vadd.f32 %v2931, %v2939
      %v2968 = vadd.f32 %v2932, %v2939
      %v2969 = vadd.f32 %v2933, %v2939
      %v2970 = vadd.f32 %v2934, %v2939
      %v2971 = vadd.f32 %v2935, %v2939
      %v2972 = vadd.f32 %v2936, %v2939
      %v2973 = vld [vmem:[%s1] sm:$0x1]
      %vm2974 = vcmask 523264
      %v2975 = vsel %vm2974, %v2941, 0.0
      %v2976 = vsel %vm2974, %v2942, 0.0
      %v2977 = vadd.f32 %v2975, %v2976
      %v2978 = vsel %vm2974, %v2943, 0.0
      %v2979 = vadd.f32 %v2977, %v2978
      %v2980 = vsel %vm2974, %v2944, 0.0
      %v2981 = vadd.f32 %v2979, %v2980
      %v2982 = vsel %vm2974, %v2945, 0.0
      %v2983 = vadd.f32 %v2981, %v2982
      %v2984 = vsel %vm2974, %v2946, 0.0
      %v2985 = vadd.f32 %v2983, %v2984
      %v2986 = vsel %vm2974, %v2947, 0.0
      %v2987 = vadd.f32 %v2985, %v2986
      %v2988 = vsel %vm2974, %v2948, 0.0
      %v2989 = vadd.f32 %v2987, %v2988
      %v2990 = vsel %vm2974, %v2949, 0.0
      %v2991 = vadd.f32 %v2989, %v2990
      %v2992 = vsel %vm2974, %v2950, 0.0
      %v2993 = vadd.f32 %v2991, %v2992
      %v2994 = vsel %vm2974, %v2951, 0.0
      %v2995 = vadd.f32 %v2993, %v2994
      %v2996 = vsel %vm2974, %v2952, 0.0
      %v2997 = vadd.f32 %v2995, %v2996
      %v2998 = vsel %vm2974, %v2953, 0.0
      %v2999 = vadd.f32 %v2997, %v2998
      %v3000 = vsel %vm2974, %v2954, 0.0
      %v3001 = vadd.f32 %v2999, %v3000
      %v3002 = vsel %vm2974, %v2955, 0.0
      %v3003 = vadd.f32 %v3001, %v3002
      %v3004 = vsel %vm2974, %v2956, 0.0
      %v3005 = vadd.f32 %v3003, %v3004
      %v3006 = vsel %vm2974, %v2957, 0.0
      %v3007 = vadd.f32 %v3005, %v3006
      %v3008 = vsel %vm2974, %v2958, 0.0
      %v3009 = vadd.f32 %v3007, %v3008
      %v3010 = vsel %vm2974, %v2959, 0.0
      %v3011 = vadd.f32 %v3009, %v3010
      %v3012 = vsel %vm2974, %v2960, 0.0
      %v3013 = vadd.f32 %v3011, %v3012
      %v3014 = vsel %vm2974, %v2961, 0.0
      %v3015 = vadd.f32 %v3013, %v3014
      %v3016 = vsel %vm2974, %v2962, 0.0
      %v3017 = vadd.f32 %v3015, %v3016
      %v3018 = vsel %vm2974, %v2963, 0.0
      %v3019 = vadd.f32 %v3017, %v3018
      %v3020 = vsel %vm2974, %v2964, 0.0
      %v3021 = vadd.f32 %v3019, %v3020
      %v3022 = vsel %vm2974, %v2965, 0.0
      %v3023 = vadd.f32 %v3021, %v3022
      %v3024 = vsel %vm2974, %v2966, 0.0
      %v3025 = vadd.f32 %v3023, %v3024
      %v3026 = vsel %vm2974, %v2967, 0.0
      %v3027 = vadd.f32 %v3025, %v3026
      %v3028 = vsel %vm2974, %v2968, 0.0
      %v3029 = vadd.f32 %v3027, %v3028
      %v3030 = vsel %vm2974, %v2969, 0.0
      %v3031 = vadd.f32 %v3029, %v3030
      %v3032 = vsel %vm2974, %v2970, 0.0
      %v3033 = vadd.f32 %v3031, %v3032
      %v3034 = vsel %vm2974, %v2971, 0.0
      %v3035 = vadd.f32 %v3033, %v3034
      %v3036 = vsel %vm2974, %v2972, 0.0
      %v3037 = vadd.f32 %v3035, %v3036
      %v3038 = vrot.slane %v3037, 4
      %v3039 = vadd.f32 %v3037, %v3038
      %v3040 = vrot.slane %v3039, 2
      %v3041 = vadd.f32 %v3039, %v3040
      %v3042 = vrot.slane %v3041, 1
      %v3043 = vadd.f32 %v3041, %v3042
      %v3044 = vrcp.pop 256.0
      %v3045 = vmul.f32 256.0, %v3044
      %v3046 = vsub.f32 1.0, %v3045
      %v3047 = vmul.f32 %v3044, %v3046
      %v3048 = vadd.f32 %v3044, %v3047
      %vm3049 = vweird.f32 %v3044
      %v3050 = vsel %vm3049, %v3044, %v3048
      %v3051 = vmul.f32 %v3043, %v3050
      %v3052 = vsub.f32 %v2941, %v3051
      %v3053 = vsub.f32 %v2942, %v3051
      %v3054 = vsub.f32 %v2943, %v3051
      %v3055 = vsub.f32 %v2944, %v3051
      %v3056 = vsub.f32 %v2945, %v3051
      %v3057 = vsub.f32 %v2946, %v3051
      %v3058 = vsub.f32 %v2947, %v3051
      %v3059 = vsub.f32 %v2948, %v3051
      %v3060 = vsub.f32 %v2949, %v3051
      %v3061 = vsub.f32 %v2950, %v3051
      %v3062 = vsub.f32 %v2951, %v3051
      %v3063 = vsub.f32 %v2952, %v3051
      %v3064 = vsub.f32 %v2953, %v3051
      %v3065 = vsub.f32 %v2954, %v3051
      %v3066 = vsub.f32 %v2955, %v3051
      %v3067 = vsub.f32 %v2956, %v3051
      %v3068 = vsub.f32 %v2957, %v3051
      %v3069 = vsub.f32 %v2958, %v3051
      %v3070 = vsub.f32 %v2959, %v3051
      %v3071 = vsub.f32 %v2960, %v3051
      %v3072 = vsub.f32 %v2961, %v3051
      %v3073 = vsub.f32 %v2962, %v3051
      %v3074 = vsub.f32 %v2963, %v3051
      %v3075 = vsub.f32 %v2964, %v3051
      %v3076 = vsub.f32 %v2965, %v3051
      %v3077 = vsub.f32 %v2966, %v3051
      %v3078 = vsub.f32 %v2967, %v3051
      %v3079 = vsub.f32 %v2968, %v3051
      %v3080 = vsub.f32 %v2969, %v3051
      %v3081 = vsub.f32 %v2970, %v3051
      %v3082 = vsub.f32 %v2971, %v3051
      %v3083 = vsub.f32 %v2972, %v3051
      %v3084 = vmul.f32 %v3052, %v3052
      %v3085 = vmul.f32 %v3053, %v3053
      %v3086 = vmul.f32 %v3054, %v3054
      %v3087 = vmul.f32 %v3055, %v3055
      %v3088 = vmul.f32 %v3056, %v3056
      %v3089 = vmul.f32 %v3057, %v3057
      %v3090 = vmul.f32 %v3058, %v3058
      %v3091 = vmul.f32 %v3059, %v3059
      %v3092 = vmul.f32 %v3060, %v3060
      %v3093 = vmul.f32 %v3061, %v3061
      %v3094 = vmul.f32 %v3062, %v3062
      %v3095 = vmul.f32 %v3063, %v3063
      %v3096 = vmul.f32 %v3064, %v3064
      %v3097 = vmul.f32 %v3065, %v3065
      %v3098 = vmul.f32 %v3066, %v3066
      %v3099 = vmul.f32 %v3067, %v3067
      %v3100 = vmul.f32 %v3068, %v3068
      %v3101 = vmul.f32 %v3069, %v3069
      %v3102 = vmul.f32 %v3070, %v3070
      %v3103 = vmul.f32 %v3071, %v3071
      %v3104 = vmul.f32 %v3072, %v3072
      %v3105 = vmul.f32 %v3073, %v3073
      %v3106 = vmul.f32 %v3074, %v3074
      %v3107 = vmul.f32 %v3075, %v3075
      %v3108 = vmul.f32 %v3076, %v3076
      %v3109 = vmul.f32 %v3077, %v3077
      %v3110 = vmul.f32 %v3078, %v3078
      %v3111 = vmul.f32 %v3079, %v3079
      %v3112 = vmul.f32 %v3080, %v3080
      %v3113 = vmul.f32 %v3081, %v3081
      %v3114 = vmul.f32 %v3082, %v3082
      %v3115 = vmul.f32 %v3083, %v3083
      %v3116 = vsel %vm2974, %v3084, 0.0
      %v3117 = vsel %vm2974, %v3085, 0.0
      %v3118 = vadd.f32 %v3116, %v3117
      %v3119 = vsel %vm2974, %v3086, 0.0
      %v3120 = vadd.f32 %v3118, %v3119
      %v3121 = vsel %vm2974, %v3087, 0.0
      %v3122 = vadd.f32 %v3120, %v3121
      %v3123 = vsel %vm2974, %v3088, 0.0
      %v3124 = vadd.f32 %v3122, %v3123
      %v3125 = vsel %vm2974, %v3089, 0.0
      %v3126 = vadd.f32 %v3124, %v3125
      %v3127 = vsel %vm2974, %v3090, 0.0
      %v3128 = vadd.f32 %v3126, %v3127
      %v3129 = vsel %vm2974, %v3091, 0.0
      %v3130 = vadd.f32 %v3128, %v3129
      %v3131 = vsel %vm2974, %v3092, 0.0
      %v3132 = vadd.f32 %v3130, %v3131
      %v3133 = vsel %vm2974, %v3093, 0.0
      %v3134 = vadd.f32 %v3132, %v3133
      %v3135 = vsel %vm2974, %v3094, 0.0
      %v3136 = vadd.f32 %v3134, %v3135
      %v3137 = vsel %vm2974, %v3095, 0.0
      %v3138 = vadd.f32 %v3136, %v3137
      %v3139 = vsel %vm2974, %v3096, 0.0
      %v3140 = vadd.f32 %v3138, %v3139
      %v3141 = vsel %vm2974, %v3097, 0.0
      %v3142 = vadd.f32 %v3140, %v3141
      %v3143 = vsel %vm2974, %v3098, 0.0
      %v3144 = vadd.f32 %v3142, %v3143
      %v3145 = vsel %vm2974, %v3099, 0.0
      %v3146 = vadd.f32 %v3144, %v3145
      %v3147 = vsel %vm2974, %v3100, 0.0
      %v3148 = vadd.f32 %v3146, %v3147
      %v3149 = vsel %vm2974, %v3101, 0.0
      %v3150 = vadd.f32 %v3148, %v3149
      %v3151 = vsel %vm2974, %v3102, 0.0
      %v3152 = vadd.f32 %v3150, %v3151
      %v3153 = vsel %vm2974, %v3103, 0.0
      %v3154 = vadd.f32 %v3152, %v3153
      %v3155 = vsel %vm2974, %v3104, 0.0
      %v3156 = vadd.f32 %v3154, %v3155
      %v3157 = vsel %vm2974, %v3105, 0.0
      %v3158 = vadd.f32 %v3156, %v3157
      %v3159 = vsel %vm2974, %v3106, 0.0
      %v3160 = vadd.f32 %v3158, %v3159
      %v3161 = vsel %vm2974, %v3107, 0.0
      %v3162 = vadd.f32 %v3160, %v3161
      %v3163 = vsel %vm2974, %v3108, 0.0
      %v3164 = vadd.f32 %v3162, %v3163
      %v3165 = vsel %vm2974, %v3109, 0.0
      %v3166 = vadd.f32 %v3164, %v3165
      %v3167 = vsel %vm2974, %v3110, 0.0
      %v3168 = vadd.f32 %v3166, %v3167
      %v3169 = vsel %vm2974, %v3111, 0.0
      %v3170 = vadd.f32 %v3168, %v3169
      %v3171 = vsel %vm2974, %v3112, 0.0
      %v3172 = vadd.f32 %v3170, %v3171
      %v3173 = vsel %vm2974, %v3113, 0.0
      %v3174 = vadd.f32 %v3172, %v3173
      %v3175 = vsel %vm2974, %v3114, 0.0
      %v3176 = vadd.f32 %v3174, %v3175
      %v3177 = vsel %vm2974, %v3115, 0.0
      %v3178 = vadd.f32 %v3176, %v3177
      %v3179 = vrot.slane %v3178, 4
      %v3180 = vadd.f32 %v3178, %v3179
      %v3181 = vrot.slane %v3180, 2
      %v3182 = vadd.f32 %v3180, %v3181
      %v3183 = vrot.slane %v3182, 1
      %v3184 = vadd.f32 %v3182, %v3183
      %v3185 = vmul.f32 %v3184, %v3050
      %3187 = vset.pattern.permute.xlu0 0
      %3188 = vperm.xlu0 %3187, %v2973
      %v3189 = vpop.permute.xlu0 %3188
      %v3191 = vperm.slane %v3189, 0
      %v3192 = vmul.f32 %v3191, %v3051
      %3193 = vset.pattern.permute.xlu0 1
      %3194 = vperm.xlu0 %3193, %v2973
      %v3195 = vpop.permute.xlu0 %3194
      %v3197 = vperm.slane %v3195, 0
      %v3198 = vadd.f32 %v3192, %v3197
      %v3199 = vsub.f32 0.0, %v3198
      %v3200 = vmul.f32 %v3199, 1.442695
      %v3201 = vpow.pop %v3200
      %v3202 = vadd.f32 %v3201, 1.0
      %v3203 = vrcp.pop %v3202
      %v3204 = vmul.f32 %v3202, %v3203
      %v3205 = vsub.f32 1.0, %v3204
      %v3206 = vmul.f32 %v3203, %v3205
      %v3207 = vadd.f32 %v3203, %v3206
      %vm3208 = vweird.f32 %v3202
      %vm3209 = vweird.f32 %v3203
      %vm3210 = vmor %vm3208, %vm3209
      %v3211 = vsel %vm3210, %v3203, %v3207
      %v3212 = vand.u32 2147483647, %v3202
      %vm3213 = vcmp.eq.f32.partialorder %v3212, 8.507059e+37
      %v3214 = vand.u32 %v3202, 2147483648
      %v3215 = vor.u32 1.1754944e-38, %v3214
      %v3216 = vsel %vm3213, %v3215, %v3211
      %v3217 = vmul.f32 1.0, %v3216
      %v3218 = vadd.f32 %v3185, 1e-05
      %v3219 = vrsqrt.pop %v3218
      %v3220 = vmul.f32 %v3219, %v3218
      %v3221 = vmul.f32 %v3220, %v3219
      %v3222 = vmul.f32 0.5, %v3221
      %v3223 = vsub.f32 1.5, %v3222
      %v3224 = vmul.f32 %v3219, %v3223
      %vm3225 = vweird.f32 %v3218
      %vm3226 = vweird.f32 %v3219
      %vm3227 = vmor %vm3225, %vm3226
      %v3228 = vsel %vm3227, %v3219, %v3224
      %v3229 = vmul.f32 %v3052, %v3228
      %v3230 = vmul.f32 %v3053, %v3228
      %v3231 = vmul.f32 %v3054, %v3228
      %v3232 = vmul.f32 %v3055, %v3228
      %v3233 = vmul.f32 %v3056, %v3228
      %v3234 = vmul.f32 %v3057, %v3228
      %v3235 = vmul.f32 %v3058, %v3228
      %v3236 = vmul.f32 %v3059, %v3228
      %v3237 = vmul.f32 %v3060, %v3228
      %v3238 = vmul.f32 %v3061, %v3228
      %v3239 = vmul.f32 %v3062, %v3228
      %v3240 = vmul.f32 %v3063, %v3228
      %v3241 = vmul.f32 %v3064, %v3228
      %v3242 = vmul.f32 %v3065, %v3228
      %v3243 = vmul.f32 %v3066, %v3228
      %v3244 = vmul.f32 %v3067, %v3228
      %v3245 = vmul.f32 %v3068, %v3228
      %v3246 = vmul.f32 %v3069, %v3228
      %v3247 = vmul.f32 %v3070, %v3228
      %v3248 = vmul.f32 %v3071, %v3228
      %v3249 = vmul.f32 %v3072, %v3228
      %v3250 = vmul.f32 %v3073, %v3228
      %v3251 = vmul.f32 %v3074, %v3228
      %v3252 = vmul.f32 %v3075, %v3228
      %v3253 = vmul.f32 %v3076, %v3228
      %v3254 = vmul.f32 %v3077, %v3228
      %v3255 = vmul.f32 %v3078, %v3228
      %v3256 = vmul.f32 %v3079, %v3228
      %v3257 = vmul.f32 %v3080, %v3228
      %v3258 = vmul.f32 %v3081, %v3228
      %v3259 = vmul.f32 %v3082, %v3228
      %v3260 = vmul.f32 %v3083, %v3228
      %v3261 = vperm.slane %v2973, 0
      %3262 = vset.pattern.permute.xlu0 2
      %3263 = vperm.xlu0 %3262, %v3261
      %v3264 = vpop.permute.xlu0 %3263
      %v3266 = vmul.f32 %v3264, %v3229
      %v3267 = vmul.f32 %v3264, %v3230
      %v3268 = vmul.f32 %v3264, %v3231
      %v3269 = vmul.f32 %v3264, %v3232
      %v3270 = vmul.f32 %v3264, %v3233
      %v3271 = vmul.f32 %v3264, %v3234
      %v3272 = vmul.f32 %v3264, %v3235
      %v3273 = vmul.f32 %v3264, %v3236
      %v3274 = vmul.f32 %v3264, %v3237
      %v3275 = vmul.f32 %v3264, %v3238
      %v3276 = vmul.f32 %v3264, %v3239
      %v3277 = vmul.f32 %v3264, %v3240
      %v3278 = vmul.f32 %v3264, %v3241
      %v3279 = vmul.f32 %v3264, %v3242
      %v3280 = vmul.f32 %v3264, %v3243
      %v3281 = vmul.f32 %v3264, %v3244
      %v3282 = vmul.f32 %v3264, %v3245
      %v3283 = vmul.f32 %v3264, %v3246
      %v3284 = vmul.f32 %v3264, %v3247
      %v3285 = vmul.f32 %v3264, %v3248
      %v3286 = vmul.f32 %v3264, %v3249
      %v3287 = vmul.f32 %v3264, %v3250
      %v3288 = vmul.f32 %v3264, %v3251
      %v3289 = vmul.f32 %v3264, %v3252
      %v3290 = vmul.f32 %v3264, %v3253
      %v3291 = vmul.f32 %v3264, %v3254
      %v3292 = vmul.f32 %v3264, %v3255
      %v3293 = vmul.f32 %v3264, %v3256
      %v3294 = vmul.f32 %v3264, %v3257
      %v3295 = vmul.f32 %v3264, %v3258
      %v3296 = vmul.f32 %v3264, %v3259
      %v3297 = vmul.f32 %v3264, %v3260
      %3298 = vset.pattern.permute.xlu0 3
      %3299 = vperm.xlu0 %3298, %v3261
      %v3300 = vpop.permute.xlu0 %3299
      %v3302 = vadd.f32 %v3266, %v3300
      %v3303 = vadd.f32 %v3267, %v3300
      %v3304 = vadd.f32 %v3268, %v3300
      %v3305 = vadd.f32 %v3269, %v3300
      %v3306 = vadd.f32 %v3270, %v3300
      %v3307 = vadd.f32 %v3271, %v3300
      %v3308 = vadd.f32 %v3272, %v3300
      %v3309 = vadd.f32 %v3273, %v3300
      %v3310 = vadd.f32 %v3274, %v3300
      %v3311 = vadd.f32 %v3275, %v3300
      %v3312 = vadd.f32 %v3276, %v3300
      %v3313 = vadd.f32 %v3277, %v3300
      %v3314 = vadd.f32 %v3278, %v3300
      %v3315 = vadd.f32 %v3279, %v3300
      %v3316 = vadd.f32 %v3280, %v3300
      %v3317 = vadd.f32 %v3281, %v3300
      %v3318 = vadd.f32 %v3282, %v3300
      %v3319 = vadd.f32 %v3283, %v3300
      %v3320 = vadd.f32 %v3284, %v3300
      %v3321 = vadd.f32 %v3285, %v3300
      %v3322 = vadd.f32 %v3286, %v3300
      %v3323 = vadd.f32 %v3287, %v3300
      %v3324 = vadd.f32 %v3288, %v3300
      %v3325 = vadd.f32 %v3289, %v3300
      %v3326 = vadd.f32 %v3290, %v3300
      %v3327 = vadd.f32 %v3291, %v3300
      %v3328 = vadd.f32 %v3292, %v3300
      %v3329 = vadd.f32 %v3293, %v3300
      %v3330 = vadd.f32 %v3294, %v3300
      %v3331 = vadd.f32 %v3295, %v3300
      %v3332 = vadd.f32 %v3296, %v3300
      %v3333 = vadd.f32 %v3297, %v3300
      %v3334 = vsub.f32 0.0, %v3302
      %v3335 = vsub.f32 0.0, %v3303
      %v3336 = vsub.f32 0.0, %v3304
      %v3337 = vsub.f32 0.0, %v3305
      %v3338 = vsub.f32 0.0, %v3306
      %v3339 = vsub.f32 0.0, %v3307
      %v3340 = vsub.f32 0.0, %v3308
      %v3341 = vsub.f32 0.0, %v3309
      %v3342 = vsub.f32 0.0, %v3310
      %v3343 = vsub.f32 0.0, %v3311
      %v3344 = vsub.f32 0.0, %v3312
      %v3345 = vsub.f32 0.0, %v3313
      %v3346 = vsub.f32 0.0, %v3314
      %v3347 = vsub.f32 0.0, %v3315
      %v3348 = vsub.f32 0.0, %v3316
      %v3349 = vsub.f32 0.0, %v3317
      %v3350 = vsub.f32 0.0, %v3318
      %v3351 = vsub.f32 0.0, %v3319
      %v3352 = vsub.f32 0.0, %v3320
      %v3353 = vsub.f32 0.0, %v3321
      %v3354 = vsub.f32 0.0, %v3322
      %v3355 = vsub.f32 0.0, %v3323
      %v3356 = vsub.f32 0.0, %v3324
      %v3357 = vsub.f32 0.0, %v3325
      %v3358 = vsub.f32 0.0, %v3326
      %v3359 = vsub.f32 0.0, %v3327
      %v3360 = vsub.f32 0.0, %v3328
      %v3361 = vsub.f32 0.0, %v3329
      %v3362 = vsub.f32 0.0, %v3330
      %v3363 = vsub.f32 0.0, %v3331
      %v3364 = vsub.f32 0.0, %v3332
      %v3365 = vsub.f32 0.0, %v3333
      %v3366 = vmul.f32 %v3334, 1.442695
      %v3367 = vpow.pop %v3366
      %v3368 = vmul.f32 %v3335, 1.442695
      %v3369 = vpow.pop %v3368
      %v3370 = vmul.f32 %v3336, 1.442695
      %v3371 = vpow.pop %v3370
      %v3372 = vmul.f32 %v3337, 1.442695
      %v3373 = vpow.pop %v3372
      %v3374 = vmul.f32 %v3338, 1.442695
      %v3375 = vpow.pop %v3374
      %v3376 = vmul.f32 %v3339, 1.442695
      %v3377 = vpow.pop %v3376
      %v3378 = vmul.f32 %v3340, 1.442695
      %v3379 = vpow.pop %v3378
      %v3380 = vmul.f32 %v3341, 1.442695
      %v3381 = vpow.pop %v3380
      %v3382 = vmul.f32 %v3342, 1.442695
      %v3383 = vpow.pop %v3382
      %v3384 = vmul.f32 %v3343, 1.442695
      %v3385 = vpow.pop %v3384
      %v3386 = vmul.f32 %v3344, 1.442695
      %v3387 = vpow.pop %v3386
      %v3388 = vmul.f32 %v3345, 1.442695
      %v3389 = vpow.pop %v3388
      %v3390 = vmul.f32 %v3346, 1.442695
      %v3391 = vpow.pop %v3390
      %v3392 = vmul.f32 %v3347, 1.442695
      %v3393 = vpow.pop %v3392
      %v3394 = vmul.f32 %v3348, 1.442695
      %v3395 = vpow.pop %v3394
      %v3396 = vmul.f32 %v3349, 1.442695
      %v3397 = vpow.pop %v3396
      %v3398 = vmul.f32 %v3350, 1.442695
      %v3399 = vpow.pop %v3398
      %v3400 = vmul.f32 %v3351, 1.442695
      %v3401 = vpow.pop %v3400
      %v3402 = vmul.f32 %v3352, 1.442695
      %v3403 = vpow.pop %v3402
      %v3404 = vmul.f32 %v3353, 1.442695
      %v3405 = vpow.pop %v3404
      %v3406 = vmul.f32 %v3354, 1.442695
      %v3407 = vpow.pop %v3406
      %v3408 = vmul.f32 %v3355, 1.442695
      %v3409 = vpow.pop %v3408
      %v3410 = vmul.f32 %v3356, 1.442695
      %v3411 = vpow.pop %v3410
      %v3412 = vmul.f32 %v3357, 1.442695
      %v3413 = vpow.pop %v3412
      %v3414 = vmul.f32 %v3358, 1.442695
      %v3415 = vpow.pop %v3414
      %v3416 = vmul.f32 %v3359, 1.442695
      %v3417 = vpow.pop %v3416
      %v3418 = vmul.f32 %v3360, 1.442695
      %v3419 = vpow.pop %v3418
      %v3420 = vmul.f32 %v3361, 1.442695
      %v3421 = vpow.pop %v3420
      %v3422 = vmul.f32 %v3362, 1.442695
      %v3423 = vpow.pop %v3422
      %v3424 = vmul.f32 %v3363, 1.442695
      %v3425 = vpow.pop %v3424
      %v3426 = vmul.f32 %v3364, 1.442695
      %v3427 = vpow.pop %v3426
      %v3428 = vmul.f32 %v3365, 1.442695
      %v3429 = vpow.pop %v3428
      %v3430 = vadd.f32 %v3367, 1.0
      %v3431 = vadd.f32 %v3369, 1.0
      %v3432 = vadd.f32 %v3371, 1.0
      %v3433 = vadd.f32 %v3373, 1.0
      %v3434 = vadd.f32 %v3375, 1.0
      %v3435 = vadd.f32 %v3377, 1.0
      %v3436 = vadd.f32 %v3379, 1.0
      %v3437 = vadd.f32 %v3381, 1.0
      %v3438 = vadd.f32 %v3383, 1.0
      %v3439 = vadd.f32 %v3385, 1.0
      %v3440 = vadd.f32 %v3387, 1.0
      %v3441 = vadd.f32 %v3389, 1.0
      %v3442 = vadd.f32 %v3391, 1.0
      %v3443 = vadd.f32 %v3393, 1.0
      %v3444 = vadd.f32 %v3395, 1.0
      %v3445 = vadd.f32 %v3397, 1.0
      %v3446 = vadd.f32 %v3399, 1.0
      %v3447 = vadd.f32 %v3401, 1.0
      %v3448 = vadd.f32 %v3403, 1.0
      %v3449 = vadd.f32 %v3405, 1.0
      %v3450 = vadd.f32 %v3407, 1.0
      %v3451 = vadd.f32 %v3409, 1.0
      %v3452 = vadd.f32 %v3411, 1.0
      %v3453 = vadd.f32 %v3413, 1.0
      %v3454 = vadd.f32 %v3415, 1.0
      %v3455 = vadd.f32 %v3417, 1.0
      %v3456 = vadd.f32 %v3419, 1.0
      %v3457 = vadd.f32 %v3421, 1.0
      %v3458 = vadd.f32 %v3423, 1.0
      %v3459 = vadd.f32 %v3425, 1.0
      %v3460 = vadd.f32 %v3427, 1.0
      %v3461 = vadd.f32 %v3429, 1.0
      %v3462 = vrcp.pop %v3430
      %v3463 = vmul.f32 %v3430, %v3462
      %v3464 = vsub.f32 1.0, %v3463
      %v3465 = vmul.f32 %v3462, %v3464
      %v3466 = vadd.f32 %v3462, %v3465
      %vm3467 = vweird.f32 %v3430
      %vm3468 = vweird.f32 %v3462
      %vm3469 = vmor %vm3467, %vm3468
      %v3470 = vsel %vm3469, %v3462, %v3466
      %v3471 = vand.u32 2147483647, %v3430
      %vm3472 = vcmp.eq.f32.partialorder %v3471, 8.507059e+37
      %v3473 = vand.u32 %v3430, 2147483648
      %v3474 = vor.u32 1.1754944e-38, %v3473
      %v3475 = vsel %vm3472, %v3474, %v3470
      %v3476 = vmul.f32 1.0, %v3475
      %v3477 = vrcp.pop %v3431
      %v3478 = vmul.f32 %v3431, %v3477
      %v3479 = vsub.f32 1.0, %v3478
      %v3480 = vmul.f32 %v3477, %v3479
      %v3481 = vadd.f32 %v3477, %v3480
      %vm3482 = vweird.f32 %v3431
      %vm3483 = vweird.f32 %v3477
      %vm3484 = vmor %vm3482, %vm3483
      %v3485 = vsel %vm3484, %v3477, %v3481
      %v3486 = vand.u32 2147483647, %v3431
      %vm3487 = vcmp.eq.f32.partialorder %v3486, 8.507059e+37
      %v3488 = vand.u32 %v3431, 2147483648
      %v3489 = vor.u32 1.1754944e-38, %v3488
      %v3490 = vsel %vm3487, %v3489, %v3485
      %v3491 = vmul.f32 1.0, %v3490
      %v3492 = vrcp.pop %v3432
      %v3493 = vmul.f32 %v3432, %v3492
      %v3494 = vsub.f32 1.0, %v3493
      %v3495 = vmul.f32 %v3492, %v3494
      %v3496 = vadd.f32 %v3492, %v3495
      %vm3497 = vweird.f32 %v3432
      %vm3498 = vweird.f32 %v3492
      %vm3499 = vmor %vm3497, %vm3498
      %v3500 = vsel %vm3499, %v3492, %v3496
      %v3501 = vand.u32 2147483647, %v3432
      %vm3502 = vcmp.eq.f32.partialorder %v3501, 8.507059e+37
      %v3503 = vand.u32 %v3432, 2147483648
      %v3504 = vor.u32 1.1754944e-38, %v3503
      %v3505 = vsel %vm3502, %v3504, %v3500
      %v3506 = vmul.f32 1.0, %v3505
      %v3507 = vrcp.pop %v3433
      %v3508 = vmul.f32 %v3433, %v3507
      %v3509 = vsub.f32 1.0, %v3508
      %v3510 = vmul.f32 %v3507, %v3509
      %v3511 = vadd.f32 %v3507, %v3510
      %vm3512 = vweird.f32 %v3433
      %vm3513 = vweird.f32 %v3507
      %vm3514 = vmor %vm3512, %vm3513
      %v3515 = vsel %vm3514, %v3507, %v3511
      %v3516 = vand.u32 2147483647, %v3433
      %vm3517 = vcmp.eq.f32.partialorder %v3516, 8.507059e+37
      %v3518 = vand.u32 %v3433, 2147483648
      %v3519 = vor.u32 1.1754944e-38, %v3518
      %v3520 = vsel %vm3517, %v3519, %v3515
      %v3521 = vmul.f32 1.0, %v3520
      %v3522 = vrcp.pop %v3434
      %v3523 = vmul.f32 %v3434, %v3522
      %v3524 = vsub.f32 1.0, %v3523
      %v3525 = vmul.f32 %v3522, %v3524
      %v3526 = vadd.f32 %v3522, %v3525
      %vm3527 = vweird.f32 %v3434
      %vm3528 = vweird.f32 %v3522
      %vm3529 = vmor %vm3527, %vm3528
      %v3530 = vsel %vm3529, %v3522, %v3526
      %v3531 = vand.u32 2147483647, %v3434
      %vm3532 = vcmp.eq.f32.partialorder %v3531, 8.507059e+37
      %v3533 = vand.u32 %v3434, 2147483648
      %v3534 = vor.u32 1.1754944e-38, %v3533
      %v3535 = vsel %vm3532, %v3534, %v3530
      %v3536 = vmul.f32 1.0, %v3535
      %v3537 = vrcp.pop %v3435
      %v3538 = vmul.f32 %v3435, %v3537
      %v3539 = vsub.f32 1.0, %v3538
      %v3540 = vmul.f32 %v3537, %v3539
      %v3541 = vadd.f32 %v3537, %v3540
      %vm3542 = vweird.f32 %v3435
      %vm3543 = vweird.f32 %v3537
      %vm3544 = vmor %vm3542, %vm3543
      %v3545 = vsel %vm3544, %v3537, %v3541
      %v3546 = vand.u32 2147483647, %v3435
      %vm3547 = vcmp.eq.f32.partialorder %v3546, 8.507059e+37
      %v3548 = vand.u32 %v3435, 2147483648
      %v3549 = vor.u32 1.1754944e-38, %v3548
      %v3550 = vsel %vm3547, %v3549, %v3545
      %v3551 = vmul.f32 1.0, %v3550
      %v3552 = vrcp.pop %v3436
      %v3553 = vmul.f32 %v3436, %v3552
      %v3554 = vsub.f32 1.0, %v3553
      %v3555 = vmul.f32 %v3552, %v3554
      %v3556 = vadd.f32 %v3552, %v3555
      %vm3557 = vweird.f32 %v3436
      %vm3558 = vweird.f32 %v3552
      %vm3559 = vmor %vm3557, %vm3558
      %v3560 = vsel %vm3559, %v3552, %v3556
      %v3561 = vand.u32 2147483647, %v3436
      %vm3562 = vcmp.eq.f32.partialorder %v3561, 8.507059e+37
      %v3563 = vand.u32 %v3436, 2147483648
      %v3564 = vor.u32 1.1754944e-38, %v3563
      %v3565 = vsel %vm3562, %v3564, %v3560
      %v3566 = vmul.f32 1.0, %v3565
      %v3567 = vrcp.pop %v3437
      %v3568 = vmul.f32 %v3437, %v3567
      %v3569 = vsub.f32 1.0, %v3568
      %v3570 = vmul.f32 %v3567, %v3569
      %v3571 = vadd.f32 %v3567, %v3570
      %vm3572 = vweird.f32 %v3437
      %vm3573 = vweird.f32 %v3567
      %vm3574 = vmor %vm3572, %vm3573
      %v3575 = vsel %vm3574, %v3567, %v3571
      %v3576 = vand.u32 2147483647, %v3437
      %vm3577 = vcmp.eq.f32.partialorder %v3576, 8.507059e+37
      %v3578 = vand.u32 %v3437, 2147483648
      %v3579 = vor.u32 1.1754944e-38, %v3578
      %v3580 = vsel %vm3577, %v3579, %v3575
      %v3581 = vmul.f32 1.0, %v3580
      %v3582 = vrcp.pop %v3438
      %v3583 = vmul.f32 %v3438, %v3582
      %v3584 = vsub.f32 1.0, %v3583
      %v3585 = vmul.f32 %v3582, %v3584
      %v3586 = vadd.f32 %v3582, %v3585
      %vm3587 = vweird.f32 %v3438
      %vm3588 = vweird.f32 %v3582
      %vm3589 = vmor %vm3587, %vm3588
      %v3590 = vsel %vm3589, %v3582, %v3586
      %v3591 = vand.u32 2147483647, %v3438
      %vm3592 = vcmp.eq.f32.partialorder %v3591, 8.507059e+37
      %v3593 = vand.u32 %v3438, 2147483648
      %v3594 = vor.u32 1.1754944e-38, %v3593
      %v3595 = vsel %vm3592, %v3594, %v3590
      %v3596 = vmul.f32 1.0, %v3595
      %v3597 = vrcp.pop %v3439
      %v3598 = vmul.f32 %v3439, %v3597
      %v3599 = vsub.f32 1.0, %v3598
      %v3600 = vmul.f32 %v3597, %v3599
      %v3601 = vadd.f32 %v3597, %v3600
      %vm3602 = vweird.f32 %v3439
      %vm3603 = vweird.f32 %v3597
      %vm3604 = vmor %vm3602, %vm3603
      %v3605 = vsel %vm3604, %v3597, %v3601
      %v3606 = vand.u32 2147483647, %v3439
      %vm3607 = vcmp.eq.f32.partialorder %v3606, 8.507059e+37
      %v3608 = vand.u32 %v3439, 2147483648
      %v3609 = vor.u32 1.1754944e-38, %v3608
      %v3610 = vsel %vm3607, %v3609, %v3605
      %v3611 = vmul.f32 1.0, %v3610
      %v3612 = vrcp.pop %v3440
      %v3613 = vmul.f32 %v3440, %v3612
      %v3614 = vsub.f32 1.0, %v3613
      %v3615 = vmul.f32 %v3612, %v3614
      %v3616 = vadd.f32 %v3612, %v3615
      %vm3617 = vweird.f32 %v3440
      %vm3618 = vweird.f32 %v3612
      %vm3619 = vmor %vm3617, %vm3618
      %v3620 = vsel %vm3619, %v3612, %v3616
      %v3621 = vand.u32 2147483647, %v3440
      %vm3622 = vcmp.eq.f32.partialorder %v3621, 8.507059e+37
      %v3623 = vand.u32 %v3440, 2147483648
      %v3624 = vor.u32 1.1754944e-38, %v3623
      %v3625 = vsel %vm3622, %v3624, %v3620
      %v3626 = vmul.f32 1.0, %v3625
      %v3627 = vrcp.pop %v3441
      %v3628 = vmul.f32 %v3441, %v3627
      %v3629 = vsub.f32 1.0, %v3628
      %v3630 = vmul.f32 %v3627, %v3629
      %v3631 = vadd.f32 %v3627, %v3630
      %vm3632 = vweird.f32 %v3441
      %vm3633 = vweird.f32 %v3627
      %vm3634 = vmor %vm3632, %vm3633
      %v3635 = vsel %vm3634, %v3627, %v3631
      %v3636 = vand.u32 2147483647, %v3441
      %vm3637 = vcmp.eq.f32.partialorder %v3636, 8.507059e+37
      %v3638 = vand.u32 %v3441, 2147483648
      %v3639 = vor.u32 1.1754944e-38, %v3638
      %v3640 = vsel %vm3637, %v3639, %v3635
      %v3641 = vmul.f32 1.0, %v3640
      %v3642 = vrcp.pop %v3442
      %v3643 = vmul.f32 %v3442, %v3642
      %v3644 = vsub.f32 1.0, %v3643
      %v3645 = vmul.f32 %v3642, %v3644
      %v3646 = vadd.f32 %v3642, %v3645
      %vm3647 = vweird.f32 %v3442
      %vm3648 = vweird.f32 %v3642
      %vm3649 = vmor %vm3647, %vm3648
      %v3650 = vsel %vm3649, %v3642, %v3646
      %v3651 = vand.u32 2147483647, %v3442
      %vm3652 = vcmp.eq.f32.partialorder %v3651, 8.507059e+37
      %v3653 = vand.u32 %v3442, 2147483648
      %v3654 = vor.u32 1.1754944e-38, %v3653
      %v3655 = vsel %vm3652, %v3654, %v3650
      %v3656 = vmul.f32 1.0, %v3655
      %v3657 = vrcp.pop %v3443
      %v3658 = vmul.f32 %v3443, %v3657
      %v3659 = vsub.f32 1.0, %v3658
      %v3660 = vmul.f32 %v3657, %v3659
      %v3661 = vadd.f32 %v3657, %v3660
      %vm3662 = vweird.f32 %v3443
      %vm3663 = vweird.f32 %v3657
      %vm3664 = vmor %vm3662, %vm3663
      %v3665 = vsel %vm3664, %v3657, %v3661
      %v3666 = vand.u32 2147483647, %v3443
      %vm3667 = vcmp.eq.f32.partialorder %v3666, 8.507059e+37
      %v3668 = vand.u32 %v3443, 2147483648
      %v3669 = vor.u32 1.1754944e-38, %v3668
      %v3670 = vsel %vm3667, %v3669, %v3665
      %v3671 = vmul.f32 1.0, %v3670
      %v3672 = vrcp.pop %v3444
      %v3673 = vmul.f32 %v3444, %v3672
      %v3674 = vsub.f32 1.0, %v3673
      %v3675 = vmul.f32 %v3672, %v3674
      %v3676 = vadd.f32 %v3672, %v3675
      %vm3677 = vweird.f32 %v3444
      %vm3678 = vweird.f32 %v3672
      %vm3679 = vmor %vm3677, %vm3678
      %v3680 = vsel %vm3679, %v3672, %v3676
      %v3681 = vand.u32 2147483647, %v3444
      %vm3682 = vcmp.eq.f32.partialorder %v3681, 8.507059e+37
      %v3683 = vand.u32 %v3444, 2147483648
      %v3684 = vor.u32 1.1754944e-38, %v3683
      %v3685 = vsel %vm3682, %v3684, %v3680
      %v3686 = vmul.f32 1.0, %v3685
      %v3687 = vrcp.pop %v3445
      %v3688 = vmul.f32 %v3445, %v3687
      %v3689 = vsub.f32 1.0, %v3688
      %v3690 = vmul.f32 %v3687, %v3689
      %v3691 = vadd.f32 %v3687, %v3690
      %vm3692 = vweird.f32 %v3445
      %vm3693 = vweird.f32 %v3687
      %vm3694 = vmor %vm3692, %vm3693
      %v3695 = vsel %vm3694, %v3687, %v3691
      %v3696 = vand.u32 2147483647, %v3445
      %vm3697 = vcmp.eq.f32.partialorder %v3696, 8.507059e+37
      %v3698 = vand.u32 %v3445, 2147483648
      %v3699 = vor.u32 1.1754944e-38, %v3698
      %v3700 = vsel %vm3697, %v3699, %v3695
      %v3701 = vmul.f32 1.0, %v3700
      %v3702 = vrcp.pop %v3446
      %v3703 = vmul.f32 %v3446, %v3702
      %v3704 = vsub.f32 1.0, %v3703
      %v3705 = vmul.f32 %v3702, %v3704
      %v3706 = vadd.f32 %v3702, %v3705
      %vm3707 = vweird.f32 %v3446
      %vm3708 = vweird.f32 %v3702
      %vm3709 = vmor %vm3707, %vm3708
      %v3710 = vsel %vm3709, %v3702, %v3706
      %v3711 = vand.u32 2147483647, %v3446
      %vm3712 = vcmp.eq.f32.partialorder %v3711, 8.507059e+37
      %v3713 = vand.u32 %v3446, 2147483648
      %v3714 = vor.u32 1.1754944e-38, %v3713
      %v3715 = vsel %vm3712, %v3714, %v3710
      %v3716 = vmul.f32 1.0, %v3715
      %v3717 = vrcp.pop %v3447
      %v3718 = vmul.f32 %v3447, %v3717
      %v3719 = vsub.f32 1.0, %v3718
      %v3720 = vmul.f32 %v3717, %v3719
      %v3721 = vadd.f32 %v3717, %v3720
      %vm3722 = vweird.f32 %v3447
      %vm3723 = vweird.f32 %v3717
      %vm3724 = vmor %vm3722, %vm3723
      %v3725 = vsel %vm3724, %v3717, %v3721
      %v3726 = vand.u32 2147483647, %v3447
      %vm3727 = vcmp.eq.f32.partialorder %v3726, 8.507059e+37
      %v3728 = vand.u32 %v3447, 2147483648
      %v3729 = vor.u32 1.1754944e-38, %v3728
      %v3730 = vsel %vm3727, %v3729, %v3725
      %v3731 = vmul.f32 1.0, %v3730
      %v3732 = vrcp.pop %v3448
      %v3733 = vmul.f32 %v3448, %v3732
      %v3734 = vsub.f32 1.0, %v3733
      %v3735 = vmul.f32 %v3732, %v3734
      %v3736 = vadd.f32 %v3732, %v3735
      %vm3737 = vweird.f32 %v3448
      %vm3738 = vweird.f32 %v3732
      %vm3739 = vmor %vm3737, %vm3738
      %v3740 = vsel %vm3739, %v3732, %v3736
      %v3741 = vand.u32 2147483647, %v3448
      %vm3742 = vcmp.eq.f32.partialorder %v3741, 8.507059e+37
      %v3743 = vand.u32 %v3448, 2147483648
      %v3744 = vor.u32 1.1754944e-38, %v3743
      %v3745 = vsel %vm3742, %v3744, %v3740
      %v3746 = vmul.f32 1.0, %v3745
      %v3747 = vrcp.pop %v3449
      %v3748 = vmul.f32 %v3449, %v3747
      %v3749 = vsub.f32 1.0, %v3748
      %v3750 = vmul.f32 %v3747, %v3749
      %v3751 = vadd.f32 %v3747, %v3750
      %vm3752 = vweird.f32 %v3449
      %vm3753 = vweird.f32 %v3747
      %vm3754 = vmor %vm3752, %vm3753
      %v3755 = vsel %vm3754, %v3747, %v3751
      %v3756 = vand.u32 2147483647, %v3449
      %vm3757 = vcmp.eq.f32.partialorder %v3756, 8.507059e+37
      %v3758 = vand.u32 %v3449, 2147483648
      %v3759 = vor.u32 1.1754944e-38, %v3758
      %v3760 = vsel %vm3757, %v3759, %v3755
      %v3761 = vmul.f32 1.0, %v3760
      %v3762 = vrcp.pop %v3450
      %v3763 = vmul.f32 %v3450, %v3762
      %v3764 = vsub.f32 1.0, %v3763
      %v3765 = vmul.f32 %v3762, %v3764
      %v3766 = vadd.f32 %v3762, %v3765
      %vm3767 = vweird.f32 %v3450
      %vm3768 = vweird.f32 %v3762
      %vm3769 = vmor %vm3767, %vm3768
      %v3770 = vsel %vm3769, %v3762, %v3766
      %v3771 = vand.u32 2147483647, %v3450
      %vm3772 = vcmp.eq.f32.partialorder %v3771, 8.507059e+37
      %v3773 = vand.u32 %v3450, 2147483648
      %v3774 = vor.u32 1.1754944e-38, %v3773
      %v3775 = vsel %vm3772, %v3774, %v3770
      %v3776 = vmul.f32 1.0, %v3775
      %v3777 = vrcp.pop %v3451
      %v3778 = vmul.f32 %v3451, %v3777
      %v3779 = vsub.f32 1.0, %v3778
      %v3780 = vmul.f32 %v3777, %v3779
      %v3781 = vadd.f32 %v3777, %v3780
      %vm3782 = vweird.f32 %v3451
      %vm3783 = vweird.f32 %v3777
      %vm3784 = vmor %vm3782, %vm3783
      %v3785 = vsel %vm3784, %v3777, %v3781
      %v3786 = vand.u32 2147483647, %v3451
      %vm3787 = vcmp.eq.f32.partialorder %v3786, 8.507059e+37
      %v3788 = vand.u32 %v3451, 2147483648
      %v3789 = vor.u32 1.1754944e-38, %v3788
      %v3790 = vsel %vm3787, %v3789, %v3785
      %v3791 = vmul.f32 1.0, %v3790
      %v3792 = vrcp.pop %v3452
      %v3793 = vmul.f32 %v3452, %v3792
      %v3794 = vsub.f32 1.0, %v3793
      %v3795 = vmul.f32 %v3792, %v3794
      %v3796 = vadd.f32 %v3792, %v3795
      %vm3797 = vweird.f32 %v3452
      %vm3798 = vweird.f32 %v3792
      %vm3799 = vmor %vm3797, %vm3798
      %v3800 = vsel %vm3799, %v3792, %v3796
      %v3801 = vand.u32 2147483647, %v3452
      %vm3802 = vcmp.eq.f32.partialorder %v3801, 8.507059e+37
      %v3803 = vand.u32 %v3452, 2147483648
      %v3804 = vor.u32 1.1754944e-38, %v3803
      %v3805 = vsel %vm3802, %v3804, %v3800
      %v3806 = vmul.f32 1.0, %v3805
      %v3807 = vrcp.pop %v3453
      %v3808 = vmul.f32 %v3453, %v3807
      %v3809 = vsub.f32 1.0, %v3808
      %v3810 = vmul.f32 %v3807, %v3809
      %v3811 = vadd.f32 %v3807, %v3810
      %vm3812 = vweird.f32 %v3453
      %vm3813 = vweird.f32 %v3807
      %vm3814 = vmor %vm3812, %vm3813
      %v3815 = vsel %vm3814, %v3807, %v3811
      %v3816 = vand.u32 2147483647, %v3453
      %vm3817 = vcmp.eq.f32.partialorder %v3816, 8.507059e+37
      %v3818 = vand.u32 %v3453, 2147483648
      %v3819 = vor.u32 1.1754944e-38, %v3818
      %v3820 = vsel %vm3817, %v3819, %v3815
      %v3821 = vmul.f32 1.0, %v3820
      %v3822 = vrcp.pop %v3454
      %v3823 = vmul.f32 %v3454, %v3822
      %v3824 = vsub.f32 1.0, %v3823
      %v3825 = vmul.f32 %v3822, %v3824
      %v3826 = vadd.f32 %v3822, %v3825
      %vm3827 = vweird.f32 %v3454
      %vm3828 = vweird.f32 %v3822
      %vm3829 = vmor %vm3827, %vm3828
      %v3830 = vsel %vm3829, %v3822, %v3826
      %v3831 = vand.u32 2147483647, %v3454
      %vm3832 = vcmp.eq.f32.partialorder %v3831, 8.507059e+37
      %v3833 = vand.u32 %v3454, 2147483648
      %v3834 = vor.u32 1.1754944e-38, %v3833
      %v3835 = vsel %vm3832, %v3834, %v3830
      %v3836 = vmul.f32 1.0, %v3835
      %v3837 = vrcp.pop %v3455
      %v3838 = vmul.f32 %v3455, %v3837
      %v3839 = vsub.f32 1.0, %v3838
      %v3840 = vmul.f32 %v3837, %v3839
      %v3841 = vadd.f32 %v3837, %v3840
      %vm3842 = vweird.f32 %v3455
      %vm3843 = vweird.f32 %v3837
      %vm3844 = vmor %vm3842, %vm3843
      %v3845 = vsel %vm3844, %v3837, %v3841
      %v3846 = vand.u32 2147483647, %v3455
      %vm3847 = vcmp.eq.f32.partialorder %v3846, 8.507059e+37
      %v3848 = vand.u32 %v3455, 2147483648
      %v3849 = vor.u32 1.1754944e-38, %v3848
      %v3850 = vsel %vm3847, %v3849, %v3845
      %v3851 = vmul.f32 1.0, %v3850
      %v3852 = vrcp.pop %v3456
      %v3853 = vmul.f32 %v3456, %v3852
      %v3854 = vsub.f32 1.0, %v3853
      %v3855 = vmul.f32 %v3852, %v3854
      %v3856 = vadd.f32 %v3852, %v3855
      %vm3857 = vweird.f32 %v3456
      %vm3858 = vweird.f32 %v3852
      %vm3859 = vmor %vm3857, %vm3858
      %v3860 = vsel %vm3859, %v3852, %v3856
      %v3861 = vand.u32 2147483647, %v3456
      %vm3862 = vcmp.eq.f32.partialorder %v3861, 8.507059e+37
      %v3863 = vand.u32 %v3456, 2147483648
      %v3864 = vor.u32 1.1754944e-38, %v3863
      %v3865 = vsel %vm3862, %v3864, %v3860
      %v3866 = vmul.f32 1.0, %v3865
      %v3867 = vrcp.pop %v3457
      %v3868 = vmul.f32 %v3457, %v3867
      %v3869 = vsub.f32 1.0, %v3868
      %v3870 = vmul.f32 %v3867, %v3869
      %v3871 = vadd.f32 %v3867, %v3870
      %vm3872 = vweird.f32 %v3457
      %vm3873 = vweird.f32 %v3867
      %vm3874 = vmor %vm3872, %vm3873
      %v3875 = vsel %vm3874, %v3867, %v3871
      %v3876 = vand.u32 2147483647, %v3457
      %vm3877 = vcmp.eq.f32.partialorder %v3876, 8.507059e+37
      %v3878 = vand.u32 %v3457, 2147483648
      %v3879 = vor.u32 1.1754944e-38, %v3878
      %v3880 = vsel %vm3877, %v3879, %v3875
      %v3881 = vmul.f32 1.0, %v3880
      %v3882 = vrcp.pop %v3458
      %v3883 = vmul.f32 %v3458, %v3882
      %v3884 = vsub.f32 1.0, %v3883
      %v3885 = vmul.f32 %v3882, %v3884
      %v3886 = vadd.f32 %v3882, %v3885
      %vm3887 = vweird.f32 %v3458
      %vm3888 = vweird.f32 %v3882
      %vm3889 = vmor %vm3887, %vm3888
      %v3890 = vsel %vm3889, %v3882, %v3886
      %v3891 = vand.u32 2147483647, %v3458
      %vm3892 = vcmp.eq.f32.partialorder %v3891, 8.507059e+37
      %v3893 = vand.u32 %v3458, 2147483648
      %v3894 = vor.u32 1.1754944e-38, %v3893
      %v3895 = vsel %vm3892, %v3894, %v3890
      %v3896 = vmul.f32 1.0, %v3895
      %v3897 = vrcp.pop %v3459
      %v3898 = vmul.f32 %v3459, %v3897
      %v3899 = vsub.f32 1.0, %v3898
      %v3900 = vmul.f32 %v3897, %v3899
      %v3901 = vadd.f32 %v3897, %v3900
      %vm3902 = vweird.f32 %v3459
      %vm3903 = vweird.f32 %v3897
      %vm3904 = vmor %vm3902, %vm3903
      %v3905 = vsel %vm3904, %v3897, %v3901
      %v3906 = vand.u32 2147483647, %v3459
      %vm3907 = vcmp.eq.f32.partialorder %v3906, 8.507059e+37
      %v3908 = vand.u32 %v3459, 2147483648
      %v3909 = vor.u32 1.1754944e-38, %v3908
      %v3910 = vsel %vm3907, %v3909, %v3905
      %v3911 = vmul.f32 1.0, %v3910
      %v3912 = vrcp.pop %v3460
      %v3913 = vmul.f32 %v3460, %v3912
      %v3914 = vsub.f32 1.0, %v3913
      %v3915 = vmul.f32 %v3912, %v3914
      %v3916 = vadd.f32 %v3912, %v3915
      %vm3917 = vweird.f32 %v3460
      %vm3918 = vweird.f32 %v3912
      %vm3919 = vmor %vm3917, %vm3918
      %v3920 = vsel %vm3919, %v3912, %v3916
      %v3921 = vand.u32 2147483647, %v3460
      %vm3922 = vcmp.eq.f32.partialorder %v3921, 8.507059e+37
      %v3923 = vand.u32 %v3460, 2147483648
      %v3924 = vor.u32 1.1754944e-38, %v3923
      %v3925 = vsel %vm3922, %v3924, %v3920
      %v3926 = vmul.f32 1.0, %v3925
      %v3927 = vrcp.pop %v3461
      %v3928 = vmul.f32 %v3461, %v3927
      %v3929 = vsub.f32 1.0, %v3928
      %v3930 = vmul.f32 %v3927, %v3929
      %v3931 = vadd.f32 %v3927, %v3930
      %vm3932 = vweird.f32 %v3461
      %vm3933 = vweird.f32 %v3927
      %vm3934 = vmor %vm3932, %vm3933
      %v3935 = vsel %vm3934, %v3927, %v3931
      %v3936 = vand.u32 2147483647, %v3461
      %vm3937 = vcmp.eq.f32.partialorder %v3936, 8.507059e+37
      %v3938 = vand.u32 %v3461, 2147483648
      %v3939 = vor.u32 1.1754944e-38, %v3938
      %v3940 = vsel %vm3937, %v3939, %v3935
      %v3941 = vmul.f32 1.0, %v3940
      %v3942 = vlaneseq
      %v3943 = vand.u32 %v3942, 127
      %vm3944 = vcmp.lt.s32.totalorder %v3943, 0
      %v3945 = vsub.s32 0, %v3943
      %v3946 = vsel %vm3944, %v3945, %v3943
      %v3947 = vshrl.u32 %v3946, 1
      %v3948 = vand.u32 %v3946, 1
      %v3949 = vsub.s32 0, %v3948
      %v3950 = vsel %vm3944, %v3949, %v3948
      %vm3951 = vcmp.ne.s32.totalorder %v3950, 0
      %vm3952 = vcmp.lt.s32.totalorder %v3950, 0
      %vm3953 = vmand %vm3952, %vm3951
      %v3954 = vadd.s32 %v3950, 2
      %v3955 = vsel %vm3953, %v3954, %v3950
      %vm3956 = vcmp.eq.s32.totalorder %v3955, 0
      %v3957 = vmul.f32 %v2941, %v3217
      %v3958 = vmul.f32 %v2942, %v3217
      %v3959 = vmul.f32 %v2943, %v3217
      %v3960 = vmul.f32 %v2944, %v3217
      %v3961 = vmul.f32 %v2945, %v3217
      %v3962 = vmul.f32 %v2946, %v3217
      %v3963 = vmul.f32 %v2947, %v3217
      %v3964 = vmul.f32 %v2948, %v3217
      %v3965 = vmul.f32 %v2949, %v3217
      %v3966 = vmul.f32 %v2950, %v3217
      %v3967 = vmul.f32 %v2951, %v3217
      %v3968 = vmul.f32 %v2952, %v3217
      %v3969 = vmul.f32 %v2953, %v3217
      %v3970 = vmul.f32 %v2954, %v3217
      %v3971 = vmul.f32 %v2955, %v3217
      %v3972 = vmul.f32 %v2956, %v3217
      %v3973 = vmul.f32 %v2957, %v3217
      %v3974 = vmul.f32 %v2958, %v3217
      %v3975 = vmul.f32 %v2959, %v3217
      %v3976 = vmul.f32 %v2960, %v3217
      %v3977 = vmul.f32 %v2961, %v3217
      %v3978 = vmul.f32 %v2962, %v3217
      %v3979 = vmul.f32 %v2963, %v3217
      %v3980 = vmul.f32 %v2964, %v3217
      %v3981 = vmul.f32 %v2965, %v3217
      %v3982 = vmul.f32 %v2966, %v3217
      %v3983 = vmul.f32 %v2967, %v3217
      %v3984 = vmul.f32 %v2968, %v3217
      %v3985 = vmul.f32 %v2969, %v3217
      %v3986 = vmul.f32 %v2970, %v3217
      %v3987 = vmul.f32 %v2971, %v3217
      %v3988 = vmul.f32 %v2972, %v3217
      %v3989 = vmul.f32 %v2941, %v3476
      %v3990 = vmul.f32 %v2942, %v3491
      %v3991 = vmul.f32 %v2943, %v3506
      %v3992 = vmul.f32 %v2944, %v3521
      %v3993 = vmul.f32 %v2945, %v3536
      %v3994 = vmul.f32 %v2946, %v3551
      %v3995 = vmul.f32 %v2947, %v3566
      %v3996 = vmul.f32 %v2948, %v3581
      %v3997 = vmul.f32 %v2949, %v3596
      %v3998 = vmul.f32 %v2950, %v3611
      %v3999 = vmul.f32 %v2951, %v3626
      %v4000 = vmul.f32 %v2952, %v3641
      %v4001 = vmul.f32 %v2953, %v3656
      %v4002 = vmul.f32 %v2954, %v3671
      %v4003 = vmul.f32 %v2955, %v3686
      %v4004 = vmul.f32 %v2956, %v3701
      %v4005 = vmul.f32 %v2957, %v3716
      %v4006 = vmul.f32 %v2958, %v3731
      %v4007 = vmul.f32 %v2959, %v3746
      %v4008 = vmul.f32 %v2960, %v3761
      %v4009 = vmul.f32 %v2961, %v3776
      %v4010 = vmul.f32 %v2962, %v3791
      %v4011 = vmul.f32 %v2963, %v3806
      %v4012 = vmul.f32 %v2964, %v3821
      %v4013 = vmul.f32 %v2965, %v3836
      %v4014 = vmul.f32 %v2966, %v3851
      %v4015 = vmul.f32 %v2967, %v3866
      %v4016 = vmul.f32 %v2968, %v3881
      %v4017 = vmul.f32 %v2969, %v3896
      %v4018 = vmul.f32 %v2970, %v3911
      %v4019 = vmul.f32 %v2971, %v3926
      %v4020 = vmul.f32 %v2972, %v3941
      %v4021 = vsel %vm3956, %v3957, %v3989
      %v4022 = vsel %vm3956, %v3958, %v3990
      %v4023 = vsel %vm3956, %v3959, %v3991
      %v4024 = vsel %vm3956, %v3960, %v3992
      %v4025 = vsel %vm3956, %v3961, %v3993
      %v4026 = vsel %vm3956, %v3962, %v3994
      %v4027 = vsel %vm3956, %v3963, %v3995
      %v4028 = vsel %vm3956, %v3964, %v3996
      %v4029 = vsel %vm3956, %v3965, %v3997
      %v4030 = vsel %vm3956, %v3966, %v3998
      %v4031 = vsel %vm3956, %v3967, %v3999
      %v4032 = vsel %vm3956, %v3968, %v4000
      %v4033 = vsel %vm3956, %v3969, %v4001
      %v4034 = vsel %vm3956, %v3970, %v4002
      %v4035 = vsel %vm3956, %v3971, %v4003
      %v4036 = vsel %vm3956, %v3972, %v4004
      %v4037 = vsel %vm3956, %v3973, %v4005
      %v4038 = vsel %vm3956, %v3974, %v4006
      %v4039 = vsel %vm3956, %v3975, %v4007
      %v4040 = vsel %vm3956, %v3976, %v4008
      %v4041 = vsel %vm3956, %v3977, %v4009
      %v4042 = vsel %vm3956, %v3978, %v4010
      %v4043 = vsel %vm3956, %v3979, %v4011
      %v4044 = vsel %vm3956, %v3980, %v4012
      %v4045 = vsel %vm3956, %v3981, %v4013
      %v4046 = vsel %vm3956, %v3982, %v4014
      %v4047 = vsel %vm3956, %v3983, %v4015
      %v4048 = vsel %vm3956, %v3984, %v4016
      %v4049 = vsel %vm3956, %v3985, %v4017
      %v4050 = vsel %vm3956, %v3986, %v4018
      %v4051 = vsel %vm3956, %v3987, %v4019
      %v4052 = vsel %vm3956, %v3988, %v4020
      %4053 = vst.msk [vmem:[#allocation3] sm:$0xff] %vm2974, 0.0
      %4054 = vst.msk [vmem:[#allocation3 + $0x8] sm:$0xff] %vm2974, 0.0
      %4055 = vst.msk [vmem:[#allocation3 + $0x10] sm:$0xff] %vm2974, 0.0
      %4056 = vst.msk [vmem:[#allocation3 + $0x18] sm:$0xff] %vm2974, 0.0
      %4057 = vst.msk [vmem:[#allocation3 + $0x20] sm:$0xff] %vm2974, 0.0
      %4058 = vst.msk [vmem:[#allocation3 + $0x28] sm:$0xff] %vm2974, 0.0
      %4059 = vst.msk [vmem:[#allocation3 + $0x30] sm:$0xff] %vm2974, 0.0
      %4060 = vst.msk [vmem:[#allocation3 + $0x38] sm:$0xff] %vm2974, 0.0
      %4061 = vst.msk [vmem:[#allocation3 + $0x40] sm:$0xff] %vm2974, 0.0
      %4062 = vst.msk [vmem:[#allocation3 + $0x48] sm:$0xff] %vm2974, 0.0
      %4063 = vst.msk [vmem:[#allocation3 + $0x50] sm:$0xff] %vm2974, 0.0
      %4064 = vst.msk [vmem:[#allocation3 + $0x58] sm:$0xff] %vm2974, 0.0
      %4065 = vst.msk [vmem:[#allocation3 + $0x60] sm:$0xff] %vm2974, 0.0
      %4066 = vst.msk [vmem:[#allocation3 + $0x68] sm:$0xff] %vm2974, 0.0
      %4067 = vst.msk [vmem:[#allocation3 + $0x70] sm:$0xff] %vm2974, 0.0
      %4068 = vst.msk [vmem:[#allocation3 + $0x78] sm:$0xff] %vm2974, 0.0
      %4069 = vst.msk [vmem:[#allocation3 + $0x80] sm:$0xff] %vm2974, 0.0
      %4070 = vst.msk [vmem:[#allocation3 + $0x88] sm:$0xff] %vm2974, 0.0
      %4071 = vst.msk [vmem:[#allocation3 + $0x90] sm:$0xff] %vm2974, 0.0
      %4072 = vst.msk [vmem:[#allocation3 + $0x98] sm:$0xff] %vm2974, 0.0
      %4073 = vst.msk [vmem:[#allocation3 + $0xa0] sm:$0xff] %vm2974, 0.0
      %4074 = vst.msk [vmem:[#allocation3 + $0xa8] sm:$0xff] %vm2974, 0.0
      %4075 = vst.msk [vmem:[#allocation3 + $0xb0] sm:$0xff] %vm2974, 0.0
      %4076 = vst.msk [vmem:[#allocation3 + $0xb8] sm:$0xff] %vm2974, 0.0
      %4077 = vst.msk [vmem:[#allocation3 + $0xc0] sm:$0xff] %vm2974, 0.0
      %4078 = vst.msk [vmem:[#allocation3 + $0xc8] sm:$0xff] %vm2974, 0.0
      %4079 = vst.msk [vmem:[#allocation3 + $0xd0] sm:$0xff] %vm2974, 0.0
      %4080 = vst.msk [vmem:[#allocation3 + $0xd8] sm:$0xff] %vm2974, 0.0
      %4081 = vst.msk [vmem:[#allocation3 + $0xe0] sm:$0xff] %vm2974, 0.0
      %4082 = vst.msk [vmem:[#allocation3 + $0xe8] sm:$0xff] %vm2974, 0.0
      %4083 = vst.msk [vmem:[#allocation3 + $0xf0] sm:$0xff] %vm2974, 0.0
      %4084 = vst.msk [vmem:[#allocation3 + $0xf8] sm:$0xff] %vm2974, 0.0
      %4085 = vst.msk [vmem:[#allocation3 + $0x100] sm:$0xff] %vm2974, 0.0
      %4086 = vst.msk [vmem:[#allocation3 + $0x108] sm:$0xff] %vm2974, 0.0
      %4087 = vst.msk [vmem:[#allocation3 + $0x110] sm:$0xff] %vm2974, 0.0
      %4088 = vst.msk [vmem:[#allocation3 + $0x118] sm:$0xff] %vm2974, 0.0
      %4089 = vst.msk [vmem:[#allocation3 + $0x120] sm:$0xff] %vm2974, 0.0
      %4090 = vst.msk [vmem:[#allocation3 + $0x128] sm:$0xff] %vm2974, 0.0
      %4091 = vst.msk [vmem:[#allocation3 + $0x130] sm:$0xff] %vm2974, 0.0
      %4092 = vst.msk [vmem:[#allocation3 + $0x138] sm:$0xff] %vm2974, 0.0
      %4093 = vst.msk [vmem:[#allocation3 + $0x140] sm:$0xff] %vm2974, 0.0
      %4094 = vst.msk [vmem:[#allocation3 + $0x148] sm:$0xff] %vm2974, 0.0
      %4095 = vst.msk [vmem:[#allocation3 + $0x150] sm:$0xff] %vm2974, 0.0
      %4096 = vst.msk [vmem:[#allocation3 + $0x158] sm:$0xff] %vm2974, 0.0
      %4097 = vst.msk [vmem:[#allocation3 + $0x160] sm:$0xff] %vm2974, 0.0
      %4098 = vst.msk [vmem:[#allocation3 + $0x168] sm:$0xff] %vm2974, 0.0
      %4099 = vst.msk [vmem:[#allocation3 + $0x170] sm:$0xff] %vm2974, 0.0
      %4100 = vst.msk [vmem:[#allocation3 + $0x178] sm:$0xff] %vm2974, 0.0
      %4101 = vst.msk [vmem:[#allocation3 + $0x180] sm:$0xff] %vm2974, 0.0
      %4102 = vst.msk [vmem:[#allocation3 + $0x188] sm:$0xff] %vm2974, 0.0
      %4103 = vst.msk [vmem:[#allocation3 + $0x190] sm:$0xff] %vm2974, 0.0
      %4104 = vst.msk [vmem:[#allocation3 + $0x198] sm:$0xff] %vm2974, 0.0
      %4105 = vst.msk [vmem:[#allocation3 + $0x1a0] sm:$0xff] %vm2974, 0.0
      %4106 = vst.msk [vmem:[#allocation3 + $0x1a8] sm:$0xff] %vm2974, 0.0
      %4107 = vst.msk [vmem:[#allocation3 + $0x1b0] sm:$0xff] %vm2974, 0.0
      %4108 = vst.msk [vmem:[#allocation3 + $0x1b8] sm:$0xff] %vm2974, 0.0
      %4109 = vst.msk [vmem:[#allocation3 + $0x1c0] sm:$0xff] %vm2974, 0.0
      %4110 = vst.msk [vmem:[#allocation3 + $0x1c8] sm:$0xff] %vm2974, 0.0
      %4111 = vst.msk [vmem:[#allocation3 + $0x1d0] sm:$0xff] %vm2974, 0.0
      %4112 = vst.msk [vmem:[#allocation3 + $0x1d8] sm:$0xff] %vm2974, 0.0
      %4113 = vst.msk [vmem:[#allocation3 + $0x1e0] sm:$0xff] %vm2974, 0.0
      %4114 = vst.msk [vmem:[#allocation3 + $0x1e8] sm:$0xff] %vm2974, 0.0
      %4115 = vst.msk [vmem:[#allocation3 + $0x1f0] sm:$0xff] %vm2974, 0.0
      %4116 = vst.msk [vmem:[#allocation3 + $0x1f8] sm:$0xff] %vm2974, 0.0
      %4117 = vst.msk [vmem:[#allocation3 + $0x200] sm:$0xff] %vm2974, 0.0
      %4118 = vst.msk [vmem:[#allocation3 + $0x208] sm:$0xff] %vm2974, 0.0
      %4119 = vst.msk [vmem:[#allocation3 + $0x210] sm:$0xff] %vm2974, 0.0
      %4120 = vst.msk [vmem:[#allocation3 + $0x218] sm:$0xff] %vm2974, 0.0
      %4121 = vst.msk [vmem:[#allocation3 + $0x220] sm:$0xff] %vm2974, 0.0
      %4122 = vst.msk [vmem:[#allocation3 + $0x228] sm:$0xff] %vm2974, 0.0
      %4123 = vst.msk [vmem:[#allocation3 + $0x230] sm:$0xff] %vm2974, 0.0
      %4124 = vst.msk [vmem:[#allocation3 + $0x238] sm:$0xff] %vm2974, 0.0
      %s4125 = scalar_lea.vmem [#allocation3], 32
      %4126 = vst.msk [vmem:[%s4125 + $0x8] sm:$0xff] %vm2974, %v4021
      %4127 = vst.msk [vmem:[%s4125 + $0x10] sm:$0xff] %vm2974, %v4022
      %4128 = vst.msk [vmem:[%s4125 + $0x28] sm:$0xff] %vm2974, %v4023
      %4129 = vst.msk [vmem:[%s4125 + $0x30] sm:$0xff] %vm2974, %v4024
      %4130 = vst.msk [vmem:[%s4125 + $0x48] sm:$0xff] %vm2974, %v4025
      %4131 = vst.msk [vmem:[%s4125 + $0x50] sm:$0xff] %vm2974, %v4026
      %4132 = vst.msk [vmem:[%s4125 + $0x68] sm:$0xff] %vm2974, %v4027
      %4133 = vst.msk [vmem:[%s4125 + $0x70] sm:$0xff] %vm2974, %v4028
      %4134 = vst.msk [vmem:[%s4125 + $0x88] sm:$0xff] %vm2974, %v4029
      %4135 = vst.msk [vmem:[%s4125 + $0x90] sm:$0xff] %vm2974, %v4030
      %4136 = vst.msk [vmem:[%s4125 + $0xa8] sm:$0xff] %vm2974, %v4031
      %4137 = vst.msk [vmem:[%s4125 + $0xb0] sm:$0xff] %vm2974, %v4032
      %4138 = vst.msk [vmem:[%s4125 + $0xc8] sm:$0xff] %vm2974, %v4033
      %4139 = vst.msk [vmem:[%s4125 + $0xd0] sm:$0xff] %vm2974, %v4034
      %4140 = vst.msk [vmem:[%s4125 + $0xe8] sm:$0xff] %vm2974, %v4035
      %4141 = vst.msk [vmem:[%s4125 + $0xf0] sm:$0xff] %vm2974, %v4036
      %4142 = vst.msk [vmem:[%s4125 + $0x108] sm:$0xff] %vm2974, %v4037
      %4143 = vst.msk [vmem:[%s4125 + $0x110] sm:$0xff] %vm2974, %v4038
      %4144 = vst.msk [vmem:[%s4125 + $0x128] sm:$0xff] %vm2974, %v4039
      %4145 = vst.msk [vmem:[%s4125 + $0x130] sm:$0xff] %vm2974, %v4040
      %4146 = vst.msk [vmem:[%s4125 + $0x148] sm:$0xff] %vm2974, %v4041
      %4147 = vst.msk [vmem:[%s4125 + $0x150] sm:$0xff] %vm2974, %v4042
      %4148 = vst.msk [vmem:[%s4125 + $0x168] sm:$0xff] %vm2974, %v4043
      %4149 = vst.msk [vmem:[%s4125 + $0x170] sm:$0xff] %vm2974, %v4044
      %4150 = vst.msk [vmem:[%s4125 + $0x188] sm:$0xff] %vm2974, %v4045
      %4151 = vst.msk [vmem:[%s4125 + $0x190] sm:$0xff] %vm2974, %v4046
      %4152 = vst.msk [vmem:[%s4125 + $0x1a8] sm:$0xff] %vm2974, %v4047
      %4153 = vst.msk [vmem:[%s4125 + $0x1b0] sm:$0xff] %vm2974, %v4048
      %4154 = vst.msk [vmem:[%s4125 + $0x1c8] sm:$0xff] %vm2974, %v4049
      %4155 = vst.msk [vmem:[%s4125 + $0x1d0] sm:$0xff] %vm2974, %v4050
      %4156 = vst.msk [vmem:[%s4125 + $0x1e8] sm:$0xff] %vm2974, %v4051
      %4157 = vst.msk [vmem:[%s4125 + $0x1f0] sm:$0xff] %vm2974, %v4052
      %v4158 = vld [vmem:[#allocation3 + $0x7] sm:$0xff]
      %v4159 = vld [vmem:[#allocation3 + $0xf] sm:$0xff]
      %v4160 = vld [vmem:[#allocation3 + $0x27] sm:$0xff]
      %v4161 = vld [vmem:[#allocation3 + $0x2f] sm:$0xff]
      %v4162 = vld [vmem:[#allocation3 + $0x47] sm:$0xff]
      %v4163 = vld [vmem:[#allocation3 + $0x4f] sm:$0xff]
      %v4164 = vld [vmem:[#allocation3 + $0x67] sm:$0xff]
      %v4165 = vld [vmem:[#allocation3 + $0x6f] sm:$0xff]
      %v4166 = vld [vmem:[#allocation3 + $0x87] sm:$0xff]
      %v4167 = vld [vmem:[#allocation3 + $0x8f] sm:$0xff]
      %v4168 = vld [vmem:[#allocation3 + $0xa7] sm:$0xff]
      %v4169 = vld [vmem:[#allocation3 + $0xaf] sm:$0xff]
      %v4170 = vld [vmem:[#allocation3 + $0xc7] sm:$0xff]
      %v4171 = vld [vmem:[#allocation3 + $0xcf] sm:$0xff]
      %v4172 = vld [vmem:[#allocation3 + $0xe7] sm:$0xff]
      %v4173 = vld [vmem:[#allocation3 + $0xef] sm:$0xff]
      %v4174 = vld [vmem:[#allocation3 + $0x107] sm:$0xff]
      %v4175 = vld [vmem:[#allocation3 + $0x10f] sm:$0xff]
      %v4176 = vld [vmem:[#allocation3 + $0x127] sm:$0xff]
      %v4177 = vld [vmem:[#allocation3 + $0x12f] sm:$0xff]
      %v4178 = vld [vmem:[#allocation3 + $0x147] sm:$0xff]
      %v4179 = vld [vmem:[#allocation3 + $0x14f] sm:$0xff]
      %v4180 = vld [vmem:[#allocation3 + $0x167] sm:$0xff]
      %v4181 = vld [vmem:[#allocation3 + $0x16f] sm:$0xff]
      %v4182 = vld [vmem:[#allocation3 + $0x187] sm:$0xff]
      %v4183 = vld [vmem:[#allocation3 + $0x18f] sm:$0xff]
      %v4184 = vld [vmem:[#allocation3 + $0x1a7] sm:$0xff]
      %v4185 = vld [vmem:[#allocation3 + $0x1af] sm:$0xff]
      %v4186 = vld [vmem:[#allocation3 + $0x1c7] sm:$0xff]
      %v4187 = vld [vmem:[#allocation3 + $0x1cf] sm:$0xff]
      %v4188 = vld [vmem:[#allocation3 + $0x1e7] sm:$0xff]
      %v4189 = vld [vmem:[#allocation3 + $0x1ef] sm:$0xff]
      %v4190 = vld [vmem:[%s4] sm:$0xff]
      %v4191 = vld [vmem:[%s4 + $0x8] sm:$0xff]
      %v4192 = vld [vmem:[%s4 + $0x10] sm:$0xff]
      %v4193 = vld [vmem:[%s4 + $0x18] sm:$0xff]
      %v4194 = vld [vmem:[%s4 + $0x20] sm:$0xff]
      %v4195 = vld [vmem:[%s4 + $0x28] sm:$0xff]
      %v4196 = vld [vmem:[%s4 + $0x30] sm:$0xff]
      %v4197 = vld [vmem:[%s4 + $0x38] sm:$0xff]
      %v4198 = vld [vmem:[#allocation3 + $0x8] sm:$0xff]
      %v4199 = vld [vmem:[#allocation3 + $0x10] sm:$0xff]
      %v4200 = vld [vmem:[#allocation3 + $0x28] sm:$0xff]
      %v4201 = vld [vmem:[#allocation3 + $0x30] sm:$0xff]
      %v4202 = vld [vmem:[#allocation3 + $0x48] sm:$0xff]
      %v4203 = vld [vmem:[#allocation3 + $0x50] sm:$0xff]
      %v4204 = vld [vmem:[#allocation3 + $0x68] sm:$0xff]
      %v4205 = vld [vmem:[#allocation3 + $0x70] sm:$0xff]
      %v4206 = vld [vmem:[#allocation3 + $0x88] sm:$0xff]
      %v4207 = vld [vmem:[#allocation3 + $0x90] sm:$0xff]
      %v4208 = vld [vmem:[#allocation3 + $0xa8] sm:$0xff]
      %v4209 = vld [vmem:[#allocation3 + $0xb0] sm:$0xff]
      %v4210 = vld [vmem:[#allocation3 + $0xc8] sm:$0xff]
      %v4211 = vld [vmem:[#allocation3 + $0xd0] sm:$0xff]
      %v4212 = vld [vmem:[#allocation3 + $0xe8] sm:$0xff]
      %v4213 = vld [vmem:[#allocation3 + $0xf0] sm:$0xff]
      %v4214 = vld [vmem:[#allocation3 + $0x108] sm:$0xff]
      %v4215 = vld [vmem:[#allocation3 + $0x110] sm:$0xff]
      %v4216 = vld [vmem:[#allocation3 + $0x128] sm:$0xff]
      %v4217 = vld [vmem:[#allocation3 + $0x130] sm:$0xff]
      %v4218 = vld [vmem:[#allocation3 + $0x148] sm:$0xff]
      %v4219 = vld [vmem:[#allocation3 + $0x150] sm:$0xff]
      %v4220 = vld [vmem:[#allocation3 + $0x168] sm:$0xff]
      %v4221 = vld [vmem:[#allocation3 + $0x170] sm:$0xff]
      %v4222 = vld [vmem:[#allocation3 + $0x188] sm:$0xff]
      %v4223 = vld [vmem:[#allocation3 + $0x190] sm:$0xff]
      %v4224 = vld [vmem:[#allocation3 + $0x1a8] sm:$0xff]
      %v4225 = vld [vmem:[#allocation3 + $0x1b0] sm:$0xff]
      %v4226 = vld [vmem:[#allocation3 + $0x1c8] sm:$0xff]
      %v4227 = vld [vmem:[#allocation3 + $0x1d0] sm:$0xff]
      %v4228 = vld [vmem:[#allocation3 + $0x1e8] sm:$0xff]
      %v4229 = vld [vmem:[#allocation3 + $0x1f0] sm:$0xff]
      %s4230 = scalar_lea.vmem %s4, 64
      %v4231 = vld [vmem:[%s4230] sm:$0xff]
      %v4232 = vld [vmem:[%s4230 + $0x8] sm:$0xff]
      %v4233 = vld [vmem:[%s4230 + $0x10] sm:$0xff]
      %v4234 = vld [vmem:[%s4230 + $0x18] sm:$0xff]
      %v4235 = vld [vmem:[%s4230 + $0x20] sm:$0xff]
      %v4236 = vld [vmem:[%s4230 + $0x28] sm:$0xff]
      %v4237 = vld [vmem:[%s4230 + $0x30] sm:$0xff]
      %v4238 = vld [vmem:[%s4230 + $0x38] sm:$0xff]
      %v4240 = vsel %vm2974, %v4198, 0
      %v4243 = vsel %vm2974, %v4199, 0
      %v4246 = vsel %vm2974, %v4200, 0
      %v4249 = vsel %vm2974, %v4201, 0
      %v4252 = vsel %vm2974, %v4202, 0
      %v4255 = vsel %vm2974, %v4203, 0
      %v4258 = vsel %vm2974, %v4204, 0
      %v4261 = vsel %vm2974, %v4205, 0
      %v4264 = vsel %vm2974, %v4206, 0
      %v4267 = vsel %vm2974, %v4207, 0
      %v4270 = vsel %vm2974, %v4208, 0
      %v4273 = vsel %vm2974, %v4209, 0
      %v4276 = vsel %vm2974, %v4210, 0
      %v4279 = vsel %vm2974, %v4211, 0
      %v4282 = vsel %vm2974, %v4212, 0
      %v4285 = vsel %vm2974, %v4213, 0
      %v4288 = vsel %vm2974, %v4214, 0
      %v4291 = vsel %vm2974, %v4215, 0
      %v4294 = vsel %vm2974, %v4216, 0
      %v4297 = vsel %vm2974, %v4217, 0
      %v4300 = vsel %vm2974, %v4218, 0
      %v4303 = vsel %vm2974, %v4219, 0
      %v4306 = vsel %vm2974, %v4220, 0
      %v4309 = vsel %vm2974, %v4221, 0
      %v4312 = vsel %vm2974, %v4222, 0
      %v4315 = vsel %vm2974, %v4223, 0
      %v4318 = vsel %vm2974, %v4224, 0
      %v4321 = vsel %vm2974, %v4225, 0
      %v4324 = vsel %vm2974, %v4226, 0
      %v4327 = vsel %vm2974, %v4227, 0
      %v4330 = vsel %vm2974, %v4228, 0
      %v4333 = vsel %vm2974, %v4229, 0
      %4335 = vmatpush.msra.mxu0 0.0
      %4336 = vmatpush.msra.mxu0 0.0
      %4337 = vmatpush.msra.mxu0 0.0
      %4338 = vmatpush.msra.mxu0 0.0
      %4339 = vmatpush.msra.mxu0 0.0
      %4340 = vmatpush.msra.mxu0 0.0
      %4341 = vmatpush.msra.mxu0 0.0
      %4342 = vmatpush.msra.mxu0 0.0
      %4343 = vmatpush.msra.mxu0 %v4238
      %4344 = vmatpush.msra.mxu0 %v4237
      %4345 = vmatpush.msra.mxu0 %v4236
      %4346 = vmatpush.msra.mxu0 %v4235
      %4347 = vmatpush.msra.mxu0 %v4234
      %4348 = vmatpush.msra.mxu0 %v4233
      %4349 = vmatpush.msra.mxu0 %v4232
      %4350 = vmatpush.msra.mxu0 %v4231
      %4351 = vmatmul.f32.gmra.mxu0 %v4240
      %v4352 = vpop.f32.mrf.mxu0
      %v4353 = vadd.f32 0.0, %v4352
      %4354 = vmatmul.f32.gmra.mxu0 %v4243
      %v4355 = vpop.f32.mrf.mxu0
      %v4356 = vadd.f32 0.0, %v4355
      %4357 = vmatmul.f32.gmra.mxu0 %v4246
      %v4358 = vpop.f32.mrf.mxu0
      %v4359 = vadd.f32 0.0, %v4358
      %4360 = vmatmul.f32.gmra.mxu0 %v4249
      %v4361 = vpop.f32.mrf.mxu0
      %v4362 = vadd.f32 0.0, %v4361
      %4363 = vmatmul.f32.gmra.mxu0 %v4252
      %v4364 = vpop.f32.mrf.mxu0
      %v4365 = vadd.f32 0.0, %v4364
      %4366 = vmatmul.f32.gmra.mxu0 %v4255
      %v4367 = vpop.f32.mrf.mxu0
      %v4368 = vadd.f32 0.0, %v4367
      %4369 = vmatmul.f32.gmra.mxu0 %v4258
      %v4370 = vpop.f32.mrf.mxu0
      %v4371 = vadd.f32 0.0, %v4370
      %4372 = vmatmul.f32.gmra.mxu0 %v4261
      %v4373 = vpop.f32.mrf.mxu0
      %v4374 = vadd.f32 0.0, %v4373
      %4375 = vmatmul.f32.gmra.mxu0 %v4264
      %v4376 = vpop.f32.mrf.mxu0
      %v4377 = vadd.f32 0.0, %v4376
      %4378 = vmatmul.f32.gmra.mxu0 %v4267
      %v4379 = vpop.f32.mrf.mxu0
      %v4380 = vadd.f32 0.0, %v4379
      %4381 = vmatmul.f32.gmra.mxu0 %v4270
      %v4382 = vpop.f32.mrf.mxu0
      %v4383 = vadd.f32 0.0, %v4382
      %4384 = vmatmul.f32.gmra.mxu0 %v4273
      %v4385 = vpop.f32.mrf.mxu0
      %v4386 = vadd.f32 0.0, %v4385
      %4387 = vmatmul.f32.gmra.mxu0 %v4276
      %v4388 = vpop.f32.mrf.mxu0
      %v4389 = vadd.f32 0.0, %v4388
      %4390 = vmatmul.f32.gmra.mxu0 %v4279
      %v4391 = vpop.f32.mrf.mxu0
      %v4392 = vadd.f32 0.0, %v4391
      %4393 = vmatmul.f32.gmra.mxu0 %v4282
      %v4394 = vpop.f32.mrf.mxu0
      %v4395 = vadd.f32 0.0, %v4394
      %4396 = vmatmul.f32.gmra.mxu0 %v4285
      %v4397 = vpop.f32.mrf.mxu0
      %v4398 = vadd.f32 0.0, %v4397
      %4399 = vmatmul.f32.gmra.mxu0 %v4288
      %v4400 = vpop.f32.mrf.mxu0
      %v4401 = vadd.f32 0.0, %v4400
      %4402 = vmatmul.f32.gmra.mxu0 %v4291
      %v4403 = vpop.f32.mrf.mxu0
      %v4404 = vadd.f32 0.0, %v4403
      %4405 = vmatmul.f32.gmra.mxu0 %v4294
      %v4406 = vpop.f32.mrf.mxu0
      %v4407 = vadd.f32 0.0, %v4406
      %4408 = vmatmul.f32.gmra.mxu0 %v4297
      %v4409 = vpop.f32.mrf.mxu0
      %v4410 = vadd.f32 0.0, %v4409
      %4411 = vmatmul.f32.gmra.mxu0 %v4300
      %v4412 = vpop.f32.mrf.mxu0
      %v4413 = vadd.f32 0.0, %v4412
      %4414 = vmatmul.f32.gmra.mxu0 %v4303
      %v4415 = vpop.f32.mrf.mxu0
      %v4416 = vadd.f32 0.0, %v4415
      %4417 = vmatmul.f32.gmra.mxu0 %v4306
      %v4418 = vpop.f32.mrf.mxu0
      %v4419 = vadd.f32 0.0, %v4418
      %4420 = vmatmul.f32.gmra.mxu0 %v4309
      %v4421 = vpop.f32.mrf.mxu0
      %v4422 = vadd.f32 0.0, %v4421
      %4423 = vmatmul.f32.gmra.mxu0 %v4312
      %v4424 = vpop.f32.mrf.mxu0
      %v4425 = vadd.f32 0.0, %v4424
      %4426 = vmatmul.f32.gmra.mxu0 %v4315
      %v4427 = vpop.f32.mrf.mxu0
      %v4428 = vadd.f32 0.0, %v4427
      %4429 = vmatmul.f32.gmra.mxu0 %v4318
      %v4430 = vpop.f32.mrf.mxu0
      %v4431 = vadd.f32 0.0, %v4430
      %4432 = vmatmul.f32.gmra.mxu0 %v4321
      %v4433 = vpop.f32.mrf.mxu0
      %v4434 = vadd.f32 0.0, %v4433
      %4435 = vmatmul.f32.gmra.mxu0 %v4324
      %v4436 = vpop.f32.mrf.mxu0
      %v4437 = vadd.f32 0.0, %v4436
      %4438 = vmatmul.f32.gmra.mxu0 %v4327
      %v4439 = vpop.f32.mrf.mxu0
      %v4440 = vadd.f32 0.0, %v4439
      %4441 = vmatmul.f32.gmra.mxu0 %v4330
      %v4442 = vpop.f32.mrf.mxu0
      %v4443 = vadd.f32 0.0, %v4442
      %4444 = vmatmul.f32.gmra.mxu0 %v4333
      %v4445 = vpop.f32.mrf.mxu0
      %v4446 = vadd.f32 0.0, %v4445
      %4447 = vdwg.mxu0
      %v4449 = vsel %vm2974, %v4158, 0
      %v4452 = vsel %vm2974, %v4159, 0
      %v4455 = vsel %vm2974, %v4160, 0
      %v4458 = vsel %vm2974, %v4161, 0
      %v4461 = vsel %vm2974, %v4162, 0
      %v4464 = vsel %vm2974, %v4163, 0
      %v4467 = vsel %vm2974, %v4164, 0
      %v4470 = vsel %vm2974, %v4165, 0
      %v4473 = vsel %vm2974, %v4166, 0
      %v4476 = vsel %vm2974, %v4167, 0
      %v4479 = vsel %vm2974, %v4168, 0
      %v4482 = vsel %vm2974, %v4169, 0
      %v4485 = vsel %vm2974, %v4170, 0
      %v4488 = vsel %vm2974, %v4171, 0
      %v4491 = vsel %vm2974, %v4172, 0
      %v4494 = vsel %vm2974, %v4173, 0
      %v4497 = vsel %vm2974, %v4174, 0
      %v4500 = vsel %vm2974, %v4175, 0
      %v4503 = vsel %vm2974, %v4176, 0
      %v4506 = vsel %vm2974, %v4177, 0
      %v4509 = vsel %vm2974, %v4178, 0
      %v4512 = vsel %vm2974, %v4179, 0
      %v4515 = vsel %vm2974, %v4180, 0
      %v4518 = vsel %vm2974, %v4181, 0
      %v4521 = vsel %vm2974, %v4182, 0
      %v4524 = vsel %vm2974, %v4183, 0
      %v4527 = vsel %vm2974, %v4184, 0
      %v4530 = vsel %vm2974, %v4185, 0
      %v4533 = vsel %vm2974, %v4186, 0
      %v4536 = vsel %vm2974, %v4187, 0
      %v4539 = vsel %vm2974, %v4188, 0
      %v4542 = vsel %vm2974, %v4189, 0
      %4544 = vmatpush.msra.mxu0 0.0
      %4545 = vmatpush.msra.mxu0 0.0
      %4546 = vmatpush.msra.mxu0 0.0
      %4547 = vmatpush.msra.mxu0 0.0
      %4548 = vmatpush.msra.mxu0 0.0
      %4549 = vmatpush.msra.mxu0 0.0
      %4550 = vmatpush.msra.mxu0 0.0
      %4551 = vmatpush.msra.mxu0 0.0
      %4552 = vmatpush.msra.mxu0 %v4197
      %4553 = vmatpush.msra.mxu0 %v4196
      %4554 = vmatpush.msra.mxu0 %v4195
      %4555 = vmatpush.msra.mxu0 %v4194
      %4556 = vmatpush.msra.mxu0 %v4193
      %4557 = vmatpush.msra.mxu0 %v4192
      %4558 = vmatpush.msra.mxu0 %v4191
      %4559 = vmatpush.msra.mxu0 %v4190
      %4560 = vmatmul.f32.gmra.mxu0 %v4449
      %v4561 = vpop.f32.mrf.mxu0
      %v4562 = vadd.f32 %v4353, %v4561
      %4563 = vmatmul.f32.gmra.mxu0 %v4452
      %v4564 = vpop.f32.mrf.mxu0
      %v4565 = vadd.f32 %v4356, %v4564
      %4566 = vmatmul.f32.gmra.mxu0 %v4455
      %v4567 = vpop.f32.mrf.mxu0
      %v4568 = vadd.f32 %v4359, %v4567
      %4569 = vmatmul.f32.gmra.mxu0 %v4458
      %v4570 = vpop.f32.mrf.mxu0
      %v4571 = vadd.f32 %v4362, %v4570
      %4572 = vmatmul.f32.gmra.mxu0 %v4461
      %v4573 = vpop.f32.mrf.mxu0
      %v4574 = vadd.f32 %v4365, %v4573
      %4575 = vmatmul.f32.gmra.mxu0 %v4464
      %v4576 = vpop.f32.mrf.mxu0
      %v4577 = vadd.f32 %v4368, %v4576
      %4578 = vmatmul.f32.gmra.mxu0 %v4467
      %v4579 = vpop.f32.mrf.mxu0
      %v4580 = vadd.f32 %v4371, %v4579
      %4581 = vmatmul.f32.gmra.mxu0 %v4470
      %v4582 = vpop.f32.mrf.mxu0
      %v4583 = vadd.f32 %v4374, %v4582
      %4584 = vmatmul.f32.gmra.mxu0 %v4473
      %v4585 = vpop.f32.mrf.mxu0
      %v4586 = vadd.f32 %v4377, %v4585
      %4587 = vmatmul.f32.gmra.mxu0 %v4476
      %v4588 = vpop.f32.mrf.mxu0
      %v4589 = vadd.f32 %v4380, %v4588
      %4590 = vmatmul.f32.gmra.mxu0 %v4479
      %v4591 = vpop.f32.mrf.mxu0
      %v4592 = vadd.f32 %v4383, %v4591
      %4593 = vmatmul.f32.gmra.mxu0 %v4482
      %v4594 = vpop.f32.mrf.mxu0
      %v4595 = vadd.f32 %v4386, %v4594
      %4596 = vmatmul.f32.gmra.mxu0 %v4485
      %v4597 = vpop.f32.mrf.mxu0
      %v4598 = vadd.f32 %v4389, %v4597
      %4599 = vmatmul.f32.gmra.mxu0 %v4488
      %v4600 = vpop.f32.mrf.mxu0
      %v4601 = vadd.f32 %v4392, %v4600
      %4602 = vmatmul.f32.gmra.mxu0 %v4491
      %v4603 = vpop.f32.mrf.mxu0
      %v4604 = vadd.f32 %v4395, %v4603
      %4605 = vmatmul.f32.gmra.mxu0 %v4494
      %v4606 = vpop.f32.mrf.mxu0
      %v4607 = vadd.f32 %v4398, %v4606
      %4608 = vmatmul.f32.gmra.mxu0 %v4497
      %v4609 = vpop.f32.mrf.mxu0
      %v4610 = vadd.f32 %v4401, %v4609
      %4611 = vmatmul.f32.gmra.mxu0 %v4500
      %v4612 = vpop.f32.mrf.mxu0
      %v4613 = vadd.f32 %v4404, %v4612
      %4614 = vmatmul.f32.gmra.mxu0 %v4503
      %v4615 = vpop.f32.mrf.mxu0
      %v4616 = vadd.f32 %v4407, %v4615
      %4617 = vmatmul.f32.gmra.mxu0 %v4506
      %v4618 = vpop.f32.mrf.mxu0
      %v4619 = vadd.f32 %v4410, %v4618
      %4620 = vmatmul.f32.gmra.mxu0 %v4509
      %v4621 = vpop.f32.mrf.mxu0
      %v4622 = vadd.f32 %v4413, %v4621
      %4623 = vmatmul.f32.gmra.mxu0 %v4512
      %v4624 = vpop.f32.mrf.mxu0
      %v4625 = vadd.f32 %v4416, %v4624
      %4626 = vmatmul.f32.gmra.mxu0 %v4515
      %v4627 = vpop.f32.mrf.mxu0
      %v4628 = vadd.f32 %v4419, %v4627
      %4629 = vmatmul.f32.gmra.mxu0 %v4518
      %v4630 = vpop.f32.mrf.mxu0
      %v4631 = vadd.f32 %v4422, %v4630
      %4632 = vmatmul.f32.gmra.mxu0 %v4521
      %v4633 = vpop.f32.mrf.mxu0
      %v4634 = vadd.f32 %v4425, %v4633
      %4635 = vmatmul.f32.gmra.mxu0 %v4524
      %v4636 = vpop.f32.mrf.mxu0
      %v4637 = vadd.f32 %v4428, %v4636
      %4638 = vmatmul.f32.gmra.mxu0 %v4527
      %v4639 = vpop.f32.mrf.mxu0
      %v4640 = vadd.f32 %v4431, %v4639
      %4641 = vmatmul.f32.gmra.mxu0 %v4530
      %v4642 = vpop.f32.mrf.mxu0
      %v4643 = vadd.f32 %v4434, %v4642
      %4644 = vmatmul.f32.gmra.mxu0 %v4533
      %v4645 = vpop.f32.mrf.mxu0
      %v4646 = vadd.f32 %v4437, %v4645
      %4647 = vmatmul.f32.gmra.mxu0 %v4536
      %v4648 = vpop.f32.mrf.mxu0
      %v4649 = vadd.f32 %v4440, %v4648
      %4650 = vmatmul.f32.gmra.mxu0 %v4539
      %v4651 = vpop.f32.mrf.mxu0
      %v4652 = vadd.f32 %v4443, %v4651
      %4653 = vmatmul.f32.gmra.mxu0 %v4542
      %v4654 = vpop.f32.mrf.mxu0
      %v4655 = vadd.f32 %v4446, %v4654
      %4656 = vdwg.mxu0
      %v4657 = vld [vmem:[#allocation3 + $0x9] sm:$0xff]
      %v4658 = vld [vmem:[#allocation3 + $0x11] sm:$0xff]
      %v4659 = vld [vmem:[#allocation3 + $0x29] sm:$0xff]
      %v4660 = vld [vmem:[#allocation3 + $0x31] sm:$0xff]
      %v4661 = vld [vmem:[#allocation3 + $0x49] sm:$0xff]
      %v4662 = vld [vmem:[#allocation3 + $0x51] sm:$0xff]
      %v4663 = vld [vmem:[#allocation3 + $0x69] sm:$0xff]
      %v4664 = vld [vmem:[#allocation3 + $0x71] sm:$0xff]
      %v4665 = vld [vmem:[#allocation3 + $0x89] sm:$0xff]
      %v4666 = vld [vmem:[#allocation3 + $0x91] sm:$0xff]
      %v4667 = vld [vmem:[#allocation3 + $0xa9] sm:$0xff]
      %v4668 = vld [vmem:[#allocation3 + $0xb1] sm:$0xff]
      %v4669 = vld [vmem:[#allocation3 + $0xc9] sm:$0xff]
      %v4670 = vld [vmem:[#allocation3 + $0xd1] sm:$0xff]
      %v4671 = vld [vmem:[#allocation3 + $0xe9] sm:$0xff]
      %v4672 = vld [vmem:[#allocation3 + $0xf1] sm:$0xff]
      %v4673 = vld [vmem:[#allocation3 + $0x109] sm:$0xff]
      %v4674 = vld [vmem:[#allocation3 + $0x111] sm:$0xff]
      %v4675 = vld [vmem:[#allocation3 + $0x129] sm:$0xff]
      %v4676 = vld [vmem:[#allocation3 + $0x131] sm:$0xff]
      %v4677 = vld [vmem:[#allocation3 + $0x149] sm:$0xff]
      %v4678 = vld [vmem:[#allocation3 + $0x151] sm:$0xff]
      %v4679 = vld [vmem:[#allocation3 + $0x169] sm:$0xff]
      %v4680 = vld [vmem:[#allocation3 + $0x171] sm:$0xff]
      %v4681 = vld [vmem:[#allocation3 + $0x189] sm:$0xff]
      %v4682 = vld [vmem:[#allocation3 + $0x191] sm:$0xff]
      %v4683 = vld [vmem:[#allocation3 + $0x1a9] sm:$0xff]
      %v4684 = vld [vmem:[#allocation3 + $0x1b1] sm:$0xff]
      %v4685 = vld [vmem:[#allocation3 + $0x1c9] sm:$0xff]
      %v4686 = vld [vmem:[#allocation3 + $0x1d1] sm:$0xff]
      %v4687 = vld [vmem:[#allocation3 + $0x1e9] sm:$0xff]
      %v4688 = vld [vmem:[#allocation3 + $0x1f1] sm:$0xff]
      %s4689 = scalar_lea.vmem %s4, 128
      %v4690 = vld [vmem:[%s4689] sm:$0xff]
      %v4691 = vld [vmem:[%s4689 + $0x8] sm:$0xff]
      %v4692 = vld [vmem:[%s4689 + $0x10] sm:$0xff]
      %v4693 = vld [vmem:[%s4689 + $0x18] sm:$0xff]
      %v4694 = vld [vmem:[%s4689 + $0x20] sm:$0xff]
      %v4695 = vld [vmem:[%s4689 + $0x28] sm:$0xff]
      %v4696 = vld [vmem:[%s4689 + $0x30] sm:$0xff]
      %v4697 = vld [vmem:[%s4689 + $0x38] sm:$0xff]
      %v4699 = vsel %vm2974, %v4657, 0
      %v4702 = vsel %vm2974, %v4658, 0
      %v4705 = vsel %vm2974, %v4659, 0
      %v4708 = vsel %vm2974, %v4660, 0
      %v4711 = vsel %vm2974, %v4661, 0
      %v4714 = vsel %vm2974, %v4662, 0
      %v4717 = vsel %vm2974, %v4663, 0
      %v4720 = vsel %vm2974, %v4664, 0
      %v4723 = vsel %vm2974, %v4665, 0
      %v4726 = vsel %vm2974, %v4666, 0
      %v4729 = vsel %vm2974, %v4667, 0
      %v4732 = vsel %vm2974, %v4668, 0
      %v4735 = vsel %vm2974, %v4669, 0
      %v4738 = vsel %vm2974, %v4670, 0
      %v4741 = vsel %vm2974, %v4671, 0
      %v4744 = vsel %vm2974, %v4672, 0
      %v4747 = vsel %vm2974, %v4673, 0
      %v4750 = vsel %vm2974, %v4674, 0
      %v4753 = vsel %vm2974, %v4675, 0
      %v4756 = vsel %vm2974, %v4676, 0
      %v4759 = vsel %vm2974, %v4677, 0
      %v4762 = vsel %vm2974, %v4678, 0
      %v4765 = vsel %vm2974, %v4679, 0
      %v4768 = vsel %vm2974, %v4680, 0
      %v4771 = vsel %vm2974, %v4681, 0
      %v4774 = vsel %vm2974, %v4682, 0
      %v4777 = vsel %vm2974, %v4683, 0
      %v4780 = vsel %vm2974, %v4684, 0
      %v4783 = vsel %vm2974, %v4685, 0
      %v4786 = vsel %vm2974, %v4686, 0
      %v4789 = vsel %vm2974, %v4687, 0
      %v4792 = vsel %vm2974, %v4688, 0
      %4794 = vmatpush.msra.mxu0 0.0
      %4795 = vmatpush.msra.mxu0 0.0
      %4796 = vmatpush.msra.mxu0 0.0
      %4797 = vmatpush.msra.mxu0 0.0
      %4798 = vmatpush.msra.mxu0 0.0
      %4799 = vmatpush.msra.mxu0 0.0
      %4800 = vmatpush.msra.mxu0 0.0
      %4801 = vmatpush.msra.mxu0 0.0
      %4802 = vmatpush.msra.mxu0 %v4697
      %4803 = vmatpush.msra.mxu0 %v4696
      %4804 = vmatpush.msra.mxu0 %v4695
      %4805 = vmatpush.msra.mxu0 %v4694
      %4806 = vmatpush.msra.mxu0 %v4693
      %4807 = vmatpush.msra.mxu0 %v4692
      %4808 = vmatpush.msra.mxu0 %v4691
      %4809 = vmatpush.msra.mxu0 %v4690
      %4810 = vmatmul.f32.gmra.mxu0 %v4699
      %v4811 = vpop.f32.mrf.mxu0
      %v4812 = vadd.f32 0.0, %v4811
      %4813 = vmatmul.f32.gmra.mxu0 %v4702
      %v4814 = vpop.f32.mrf.mxu0
      %v4815 = vadd.f32 0.0, %v4814
      %4816 = vmatmul.f32.gmra.mxu0 %v4705
      %v4817 = vpop.f32.mrf.mxu0
      %v4818 = vadd.f32 0.0, %v4817
      %4819 = vmatmul.f32.gmra.mxu0 %v4708
      %v4820 = vpop.f32.mrf.mxu0
      %v4821 = vadd.f32 0.0, %v4820
      %4822 = vmatmul.f32.gmra.mxu0 %v4711
      %v4823 = vpop.f32.mrf.mxu0
      %v4824 = vadd.f32 0.0, %v4823
      %4825 = vmatmul.f32.gmra.mxu0 %v4714
      %v4826 = vpop.f32.mrf.mxu0
      %v4827 = vadd.f32 0.0, %v4826
      %4828 = vmatmul.f32.gmra.mxu0 %v4717
      %v4829 = vpop.f32.mrf.mxu0
      %v4830 = vadd.f32 0.0, %v4829
      %4831 = vmatmul.f32.gmra.mxu0 %v4720
      %v4832 = vpop.f32.mrf.mxu0
      %v4833 = vadd.f32 0.0, %v4832
      %4834 = vmatmul.f32.gmra.mxu0 %v4723
      %v4835 = vpop.f32.mrf.mxu0
      %v4836 = vadd.f32 0.0, %v4835
      %4837 = vmatmul.f32.gmra.mxu0 %v4726
      %v4838 = vpop.f32.mrf.mxu0
      %v4839 = vadd.f32 0.0, %v4838
      %4840 = vmatmul.f32.gmra.mxu0 %v4729
      %v4841 = vpop.f32.mrf.mxu0
      %v4842 = vadd.f32 0.0, %v4841
      %4843 = vmatmul.f32.gmra.mxu0 %v4732
      %v4844 = vpop.f32.mrf.mxu0
      %v4845 = vadd.f32 0.0, %v4844
      %4846 = vmatmul.f32.gmra.mxu0 %v4735
      %v4847 = vpop.f32.mrf.mxu0
      %v4848 = vadd.f32 0.0, %v4847
      %4849 = vmatmul.f32.gmra.mxu0 %v4738
      %v4850 = vpop.f32.mrf.mxu0
      %v4851 = vadd.f32 0.0, %v4850
      %4852 = vmatmul.f32.gmra.mxu0 %v4741
      %v4853 = vpop.f32.mrf.mxu0
      %v4854 = vadd.f32 0.0, %v4853
      %4855 = vmatmul.f32.gmra.mxu0 %v4744
      %v4856 = vpop.f32.mrf.mxu0
      %v4857 = vadd.f32 0.0, %v4856
      %4858 = vmatmul.f32.gmra.mxu0 %v4747
      %v4859 = vpop.f32.mrf.mxu0
      %v4860 = vadd.f32 0.0, %v4859
      %4861 = vmatmul.f32.gmra.mxu0 %v4750
      %v4862 = vpop.f32.mrf.mxu0
      %v4863 = vadd.f32 0.0, %v4862
      %4864 = vmatmul.f32.gmra.mxu0 %v4753
      %v4865 = vpop.f32.mrf.mxu0
      %v4866 = vadd.f32 0.0, %v4865
      %4867 = vmatmul.f32.gmra.mxu0 %v4756
      %v4868 = vpop.f32.mrf.mxu0
      %v4869 = vadd.f32 0.0, %v4868
      %4870 = vmatmul.f32.gmra.mxu0 %v4759
      %v4871 = vpop.f32.mrf.mxu0
      %v4872 = vadd.f32 0.0, %v4871
      %4873 = vmatmul.f32.gmra.mxu0 %v4762
      %v4874 = vpop.f32.mrf.mxu0
      %v4875 = vadd.f32 0.0, %v4874
      %4876 = vmatmul.f32.gmra.mxu0 %v4765
      %v4877 = vpop.f32.mrf.mxu0
      %v4878 = vadd.f32 0.0, %v4877
      %4879 = vmatmul.f32.gmra.mxu0 %v4768
      %v4880 = vpop.f32.mrf.mxu0
      %v4881 = vadd.f32 0.0, %v4880
      %4882 = vmatmul.f32.gmra.mxu0 %v4771
      %v4883 = vpop.f32.mrf.mxu0
      %v4884 = vadd.f32 0.0, %v4883
      %4885 = vmatmul.f32.gmra.mxu0 %v4774
      %v4886 = vpop.f32.mrf.mxu0
      %v4887 = vadd.f32 0.0, %v4886
      %4888 = vmatmul.f32.gmra.mxu0 %v4777
      %v4889 = vpop.f32.mrf.mxu0
      %v4890 = vadd.f32 0.0, %v4889
      %4891 = vmatmul.f32.gmra.mxu0 %v4780
      %v4892 = vpop.f32.mrf.mxu0
      %v4893 = vadd.f32 0.0, %v4892
      %4894 = vmatmul.f32.gmra.mxu0 %v4783
      %v4895 = vpop.f32.mrf.mxu0
      %v4896 = vadd.f32 0.0, %v4895
      %4897 = vmatmul.f32.gmra.mxu0 %v4786
      %v4898 = vpop.f32.mrf.mxu0
      %v4899 = vadd.f32 0.0, %v4898
      %4900 = vmatmul.f32.gmra.mxu0 %v4789
      %v4901 = vpop.f32.mrf.mxu0
      %v4902 = vadd.f32 0.0, %v4901
      %4903 = vmatmul.f32.gmra.mxu0 %v4792
      %v4904 = vpop.f32.mrf.mxu0
      %v4905 = vadd.f32 0.0, %v4904
      %4906 = vdwg.mxu0
      %v4907 = vadd.f32 %v4562, %v4812
      %v4908 = vadd.f32 %v4565, %v4815
      %v4909 = vadd.f32 %v4568, %v4818
      %v4910 = vadd.f32 %v4571, %v4821
      %v4911 = vadd.f32 %v4574, %v4824
      %v4912 = vadd.f32 %v4577, %v4827
      %v4913 = vadd.f32 %v4580, %v4830
      %v4914 = vadd.f32 %v4583, %v4833
      %v4915 = vadd.f32 %v4586, %v4836
      %v4916 = vadd.f32 %v4589, %v4839
      %v4917 = vadd.f32 %v4592, %v4842
      %v4918 = vadd.f32 %v4595, %v4845
      %v4919 = vadd.f32 %v4598, %v4848
      %v4920 = vadd.f32 %v4601, %v4851
      %v4921 = vadd.f32 %v4604, %v4854
      %v4922 = vadd.f32 %v4607, %v4857
      %v4923 = vadd.f32 %v4610, %v4860
      %v4924 = vadd.f32 %v4613, %v4863
      %v4925 = vadd.f32 %v4616, %v4866
      %v4926 = vadd.f32 %v4619, %v4869
      %v4927 = vadd.f32 %v4622, %v4872
      %v4928 = vadd.f32 %v4625, %v4875
      %v4929 = vadd.f32 %v4628, %v4878
      %v4930 = vadd.f32 %v4631, %v4881
      %v4931 = vadd.f32 %v4634, %v4884
      %v4932 = vadd.f32 %v4637, %v4887
      %v4933 = vadd.f32 %v4640, %v4890
      %v4934 = vadd.f32 %v4643, %v4893
      %v4935 = vadd.f32 %v4646, %v4896
      %v4936 = vadd.f32 %v4649, %v4899
      %v4937 = vadd.f32 %v4652, %v4902
      %v4938 = vadd.f32 %v4655, %v4905
      %v4939 = vld [vmem:[%s4125 + $0x7] sm:$0xff]
      %v4940 = vld [vmem:[%s4125 + $0xf] sm:$0xff]
      %v4941 = vld [vmem:[%s4125 + $0x27] sm:$0xff]
      %v4942 = vld [vmem:[%s4125 + $0x2f] sm:$0xff]
      %v4943 = vld [vmem:[%s4125 + $0x47] sm:$0xff]
      %v4944 = vld [vmem:[%s4125 + $0x4f] sm:$0xff]
      %v4945 = vld [vmem:[%s4125 + $0x67] sm:$0xff]
      %v4946 = vld [vmem:[%s4125 + $0x6f] sm:$0xff]
      %v4947 = vld [vmem:[%s4125 + $0x87] sm:$0xff]
      %v4948 = vld [vmem:[%s4125 + $0x8f] sm:$0xff]
      %v4949 = vld [vmem:[%s4125 + $0xa7] sm:$0xff]
      %v4950 = vld [vmem:[%s4125 + $0xaf] sm:$0xff]
      %v4951 = vld [vmem:[%s4125 + $0xc7] sm:$0xff]
      %v4952 = vld [vmem:[%s4125 + $0xcf] sm:$0xff]
      %v4953 = vld [vmem:[%s4125 + $0xe7] sm:$0xff]
      %v4954 = vld [vmem:[%s4125 + $0xef] sm:$0xff]
      %v4955 = vld [vmem:[%s4125 + $0x107] sm:$0xff]
      %v4956 = vld [vmem:[%s4125 + $0x10f] sm:$0xff]
      %v4957 = vld [vmem:[%s4125 + $0x127] sm:$0xff]
      %v4958 = vld [vmem:[%s4125 + $0x12f] sm:$0xff]
      %v4959 = vld [vmem:[%s4125 + $0x147] sm:$0xff]
      %v4960 = vld [vmem:[%s4125 + $0x14f] sm:$0xff]
      %v4961 = vld [vmem:[%s4125 + $0x167] sm:$0xff]
      %v4962 = vld [vmem:[%s4125 + $0x16f] sm:$0xff]
      %v4963 = vld [vmem:[%s4125 + $0x187] sm:$0xff]
      %v4964 = vld [vmem:[%s4125 + $0x18f] sm:$0xff]
      %v4965 = vld [vmem:[%s4125 + $0x1a7] sm:$0xff]
      %v4966 = vld [vmem:[%s4125 + $0x1af] sm:$0xff]
      %v4967 = vld [vmem:[%s4125 + $0x1c7] sm:$0xff]
      %v4968 = vld [vmem:[%s4125 + $0x1cf] sm:$0xff]
      %v4969 = vld [vmem:[%s4125 + $0x1e7] sm:$0xff]
      %v4970 = vld [vmem:[%s4125 + $0x1ef] sm:$0xff]
      %s4971 = scalar_lea.vmem %s4, 192
      %v4972 = vld [vmem:[%s4971] sm:$0xff]
      %v4973 = vld [vmem:[%s4971 + $0x8] sm:$0xff]
      %v4974 = vld [vmem:[%s4971 + $0x10] sm:$0xff]
      %v4975 = vld [vmem:[%s4971 + $0x18] sm:$0xff]
      %v4976 = vld [vmem:[%s4971 + $0x20] sm:$0xff]
      %v4977 = vld [vmem:[%s4971 + $0x28] sm:$0xff]
      %v4978 = vld [vmem:[%s4971 + $0x30] sm:$0xff]
      %v4979 = vld [vmem:[%s4971 + $0x38] sm:$0xff]
      %v4981 = vsel %vm2974, %v4939, 0
      %v4984 = vsel %vm2974, %v4940, 0
      %v4987 = vsel %vm2974, %v4941, 0
      %v4990 = vsel %vm2974, %v4942, 0
      %v4993 = vsel %vm2974, %v4943, 0
      %v4996 = vsel %vm2974, %v4944, 0
      %v4999 = vsel %vm2974, %v4945, 0
      %v5002 = vsel %vm2974, %v4946, 0
      %v5005 = vsel %vm2974, %v4947, 0
      %v5008 = vsel %vm2974, %v4948, 0
      %v5011 = vsel %vm2974, %v4949, 0
      %v5014 = vsel %vm2974, %v4950, 0
      %v5017 = vsel %vm2974, %v4951, 0
      %v5020 = vsel %vm2974, %v4952, 0
      %v5023 = vsel %vm2974, %v4953, 0
      %v5026 = vsel %vm2974, %v4954, 0
      %v5029 = vsel %vm2974, %v4955, 0
      %v5032 = vsel %vm2974, %v4956, 0
      %v5035 = vsel %vm2974, %v4957, 0
      %v5038 = vsel %vm2974, %v4958, 0
      %v5041 = vsel %vm2974, %v4959, 0
      %v5044 = vsel %vm2974, %v4960, 0
      %v5047 = vsel %vm2974, %v4961, 0
      %v5050 = vsel %vm2974, %v4962, 0
      %v5053 = vsel %vm2974, %v4963, 0
      %v5056 = vsel %vm2974, %v4964, 0
      %v5059 = vsel %vm2974, %v4965, 0
      %v5062 = vsel %vm2974, %v4966, 0
      %v5065 = vsel %vm2974, %v4967, 0
      %v5068 = vsel %vm2974, %v4968, 0
      %v5071 = vsel %vm2974, %v4969, 0
      %v5074 = vsel %vm2974, %v4970, 0
      %5076 = vmatpush.msra.mxu0 0.0
      %5077 = vmatpush.msra.mxu0 0.0
      %5078 = vmatpush.msra.mxu0 0.0
      %5079 = vmatpush.msra.mxu0 0.0
      %5080 = vmatpush.msra.mxu0 0.0
      %5081 = vmatpush.msra.mxu0 0.0
      %5082 = vmatpush.msra.mxu0 0.0
      %5083 = vmatpush.msra.mxu0 0.0
      %5084 = vmatpush.msra.mxu0 %v4979
      %5085 = vmatpush.msra.mxu0 %v4978
      %5086 = vmatpush.msra.mxu0 %v4977
      %5087 = vmatpush.msra.mxu0 %v4976
      %5088 = vmatpush.msra.mxu0 %v4975
      %5089 = vmatpush.msra.mxu0 %v4974
      %5090 = vmatpush.msra.mxu0 %v4973
      %5091 = vmatpush.msra.mxu0 %v4972
      %5092 = vmatmul.f32.gmra.mxu0 %v4981
      %v5093 = vpop.f32.mrf.mxu0
      %v5094 = vadd.f32 0.0, %v5093
      %5095 = vmatmul.f32.gmra.mxu0 %v4984
      %v5096 = vpop.f32.mrf.mxu0
      %v5097 = vadd.f32 0.0, %v5096
      %5098 = vmatmul.f32.gmra.mxu0 %v4987
      %v5099 = vpop.f32.mrf.mxu0
      %v5100 = vadd.f32 0.0, %v5099
      %5101 = vmatmul.f32.gmra.mxu0 %v4990
      %v5102 = vpop.f32.mrf.mxu0
      %v5103 = vadd.f32 0.0, %v5102
      %5104 = vmatmul.f32.gmra.mxu0 %v4993
      %v5105 = vpop.f32.mrf.mxu0
      %v5106 = vadd.f32 0.0, %v5105
      %5107 = vmatmul.f32.gmra.mxu0 %v4996
      %v5108 = vpop.f32.mrf.mxu0
      %v5109 = vadd.f32 0.0, %v5108
      %5110 = vmatmul.f32.gmra.mxu0 %v4999
      %v5111 = vpop.f32.mrf.mxu0
      %v5112 = vadd.f32 0.0, %v5111
      %5113 = vmatmul.f32.gmra.mxu0 %v5002
      %v5114 = vpop.f32.mrf.mxu0
      %v5115 = vadd.f32 0.0, %v5114
      %5116 = vmatmul.f32.gmra.mxu0 %v5005
      %v5117 = vpop.f32.mrf.mxu0
      %v5118 = vadd.f32 0.0, %v5117
      %5119 = vmatmul.f32.gmra.mxu0 %v5008
      %v5120 = vpop.f32.mrf.mxu0
      %v5121 = vadd.f32 0.0, %v5120
      %5122 = vmatmul.f32.gmra.mxu0 %v5011
      %v5123 = vpop.f32.mrf.mxu0
      %v5124 = vadd.f32 0.0, %v5123
      %5125 = vmatmul.f32.gmra.mxu0 %v5014
      %v5126 = vpop.f32.mrf.mxu0
      %v5127 = vadd.f32 0.0, %v5126
      %5128 = vmatmul.f32.gmra.mxu0 %v5017
      %v5129 = vpop.f32.mrf.mxu0
      %v5130 = vadd.f32 0.0, %v5129
      %5131 = vmatmul.f32.gmra.mxu0 %v5020
      %v5132 = vpop.f32.mrf.mxu0
      %v5133 = vadd.f32 0.0, %v5132
      %5134 = vmatmul.f32.gmra.mxu0 %v5023
      %v5135 = vpop.f32.mrf.mxu0
      %v5136 = vadd.f32 0.0, %v5135
      %5137 = vmatmul.f32.gmra.mxu0 %v5026
      %v5138 = vpop.f32.mrf.mxu0
      %v5139 = vadd.f32 0.0, %v5138
      %5140 = vmatmul.f32.gmra.mxu0 %v5029
      %v5141 = vpop.f32.mrf.mxu0
      %v5142 = vadd.f32 0.0, %v5141
      %5143 = vmatmul.f32.gmra.mxu0 %v5032
      %v5144 = vpop.f32.mrf.mxu0
      %v5145 = vadd.f32 0.0, %v5144
      %5146 = vmatmul.f32.gmra.mxu0 %v5035
      %v5147 = vpop.f32.mrf.mxu0
      %v5148 = vadd.f32 0.0, %v5147
      %5149 = vmatmul.f32.gmra.mxu0 %v5038
      %v5150 = vpop.f32.mrf.mxu0
      %v5151 = vadd.f32 0.0, %v5150
      %5152 = vmatmul.f32.gmra.mxu0 %v5041
      %v5153 = vpop.f32.mrf.mxu0
      %v5154 = vadd.f32 0.0, %v5153
      %5155 = vmatmul.f32.gmra.mxu0 %v5044
      %v5156 = vpop.f32.mrf.mxu0
      %v5157 = vadd.f32 0.0, %v5156
      %5158 = vmatmul.f32.gmra.mxu0 %v5047
      %v5159 = vpop.f32.mrf.mxu0
      %v5160 = vadd.f32 0.0, %v5159
      %5161 = vmatmul.f32.gmra.mxu0 %v5050
      %v5162 = vpop.f32.mrf.mxu0
      %v5163 = vadd.f32 0.0, %v5162
      %5164 = vmatmul.f32.gmra.mxu0 %v5053
      %v5165 = vpop.f32.mrf.mxu0
      %v5166 = vadd.f32 0.0, %v5165
      %5167 = vmatmul.f32.gmra.mxu0 %v5056
      %v5168 = vpop.f32.mrf.mxu0
      %v5169 = vadd.f32 0.0, %v5168
      %5170 = vmatmul.f32.gmra.mxu0 %v5059
      %v5171 = vpop.f32.mrf.mxu0
      %v5172 = vadd.f32 0.0, %v5171
      %5173 = vmatmul.f32.gmra.mxu0 %v5062
      %v5174 = vpop.f32.mrf.mxu0
      %v5175 = vadd.f32 0.0, %v5174
      %5176 = vmatmul.f32.gmra.mxu0 %v5065
      %v5177 = vpop.f32.mrf.mxu0
      %v5178 = vadd.f32 0.0, %v5177
      %5179 = vmatmul.f32.gmra.mxu0 %v5068
      %v5180 = vpop.f32.mrf.mxu0
      %v5181 = vadd.f32 0.0, %v5180
      %5182 = vmatmul.f32.gmra.mxu0 %v5071
      %v5183 = vpop.f32.mrf.mxu0
      %v5184 = vadd.f32 0.0, %v5183
      %5185 = vmatmul.f32.gmra.mxu0 %v5074
      %v5186 = vpop.f32.mrf.mxu0
      %v5187 = vadd.f32 0.0, %v5186
      %5188 = vdwg.mxu0
      %v5189 = vadd.f32 %v4907, %v5094
      %v5190 = vadd.f32 %v4908, %v5097
      %v5191 = vadd.f32 %v4909, %v5100
      %v5192 = vadd.f32 %v4910, %v5103
      %v5193 = vadd.f32 %v4911, %v5106
      %v5194 = vadd.f32 %v4912, %v5109
      %v5195 = vadd.f32 %v4913, %v5112
      %v5196 = vadd.f32 %v4914, %v5115
      %v5197 = vadd.f32 %v4915, %v5118
      %v5198 = vadd.f32 %v4916, %v5121
      %v5199 = vadd.f32 %v4917, %v5124
      %v5200 = vadd.f32 %v4918, %v5127
      %v5201 = vadd.f32 %v4919, %v5130
      %v5202 = vadd.f32 %v4920, %v5133
      %v5203 = vadd.f32 %v4921, %v5136
      %v5204 = vadd.f32 %v4922, %v5139
      %v5205 = vadd.f32 %v4923, %v5142
      %v5206 = vadd.f32 %v4924, %v5145
      %v5207 = vadd.f32 %v4925, %v5148
      %v5208 = vadd.f32 %v4926, %v5151
      %v5209 = vadd.f32 %v4927, %v5154
      %v5210 = vadd.f32 %v4928, %v5157
      %v5211 = vadd.f32 %v4929, %v5160
      %v5212 = vadd.f32 %v4930, %v5163
      %v5213 = vadd.f32 %v4931, %v5166
      %v5214 = vadd.f32 %v4932, %v5169
      %v5215 = vadd.f32 %v4933, %v5172
      %v5216 = vadd.f32 %v4934, %v5175
      %v5217 = vadd.f32 %v4935, %v5178
      %v5218 = vadd.f32 %v4936, %v5181
      %v5219 = vadd.f32 %v4937, %v5184
      %v5220 = vadd.f32 %v4938, %v5187
      %v5221 = vld [vmem:[%s4125 + $0x8] sm:$0xff]
      %v5222 = vld [vmem:[%s4125 + $0x10] sm:$0xff]
      %v5223 = vld [vmem:[%s4125 + $0x28] sm:$0xff]
      %v5224 = vld [vmem:[%s4125 + $0x30] sm:$0xff]
      %v5225 = vld [vmem:[%s4125 + $0x48] sm:$0xff]
      %v5226 = vld [vmem:[%s4125 + $0x50] sm:$0xff]
      %v5227 = vld [vmem:[%s4125 + $0x68] sm:$0xff]
      %v5228 = vld [vmem:[%s4125 + $0x70] sm:$0xff]
      %v5229 = vld [vmem:[%s4125 + $0x88] sm:$0xff]
      %v5230 = vld [vmem:[%s4125 + $0x90] sm:$0xff]
      %v5231 = vld [vmem:[%s4125 + $0xa8] sm:$0xff]
      %v5232 = vld [vmem:[%s4125 + $0xb0] sm:$0xff]
      %v5233 = vld [vmem:[%s4125 + $0xc8] sm:$0xff]
      %v5234 = vld [vmem:[%s4125 + $0xd0] sm:$0xff]
      %v5235 = vld [vmem:[%s4125 + $0xe8] sm:$0xff]
      %v5236 = vld [vmem:[%s4125 + $0xf0] sm:$0xff]
      %v5237 = vld [vmem:[%s4125 + $0x108] sm:$0xff]
      %v5238 = vld [vmem:[%s4125 + $0x110] sm:$0xff]
      %v5239 = vld [vmem:[%s4125 + $0x128] sm:$0xff]
      %v5240 = vld [vmem:[%s4125 + $0x130] sm:$0xff]
      %v5241 = vld [vmem:[%s4125 + $0x148] sm:$0xff]
      %v5242 = vld [vmem:[%s4125 + $0x150] sm:$0xff]
      %v5243 = vld [vmem:[%s4125 + $0x168] sm:$0xff]
      %v5244 = vld [vmem:[%s4125 + $0x170] sm:$0xff]
      %v5245 = vld [vmem:[%s4125 + $0x188] sm:$0xff]
      %v5246 = vld [vmem:[%s4125 + $0x190] sm:$0xff]
      %v5247 = vld [vmem:[%s4125 + $0x1a8] sm:$0xff]
      %v5248 = vld [vmem:[%s4125 + $0x1b0] sm:$0xff]
      %v5249 = vld [vmem:[%s4125 + $0x1c8] sm:$0xff]
      %v5250 = vld [vmem:[%s4125 + $0x1d0] sm:$0xff]
      %v5251 = vld [vmem:[%s4125 + $0x1e8] sm:$0xff]
      %v5252 = vld [vmem:[%s4125 + $0x1f0] sm:$0xff]
      %s5253 = scalar_lea.vmem %s4, 256
      %v5254 = vld [vmem:[%s5253] sm:$0xff]
      %v5255 = vld [vmem:[%s5253 + $0x8] sm:$0xff]
      %v5256 = vld [vmem:[%s5253 + $0x10] sm:$0xff]
      %v5257 = vld [vmem:[%s5253 + $0x18] sm:$0xff]
      %v5258 = vld [vmem:[%s5253 + $0x20] sm:$0xff]
      %v5259 = vld [vmem:[%s5253 + $0x28] sm:$0xff]
      %v5260 = vld [vmem:[%s5253 + $0x30] sm:$0xff]
      %v5261 = vld [vmem:[%s5253 + $0x38] sm:$0xff]
      %v5263 = vsel %vm2974, %v5221, 0
      %v5266 = vsel %vm2974, %v5222, 0
      %v5269 = vsel %vm2974, %v5223, 0
      %v5272 = vsel %vm2974, %v5224, 0
      %v5275 = vsel %vm2974, %v5225, 0
      %v5278 = vsel %vm2974, %v5226, 0
      %v5281 = vsel %vm2974, %v5227, 0
      %v5284 = vsel %vm2974, %v5228, 0
      %v5287 = vsel %vm2974, %v5229, 0
      %v5290 = vsel %vm2974, %v5230, 0
      %v5293 = vsel %vm2974, %v5231, 0
      %v5296 = vsel %vm2974, %v5232, 0
      %v5299 = vsel %vm2974, %v5233, 0
      %v5302 = vsel %vm2974, %v5234, 0
      %v5305 = vsel %vm2974, %v5235, 0
      %v5308 = vsel %vm2974, %v5236, 0
      %v5311 = vsel %vm2974, %v5237, 0
      %v5314 = vsel %vm2974, %v5238, 0
      %v5317 = vsel %vm2974, %v5239, 0
      %v5320 = vsel %vm2974, %v5240, 0
      %v5323 = vsel %vm2974, %v5241, 0
      %v5326 = vsel %vm2974, %v5242, 0
      %v5329 = vsel %vm2974, %v5243, 0
      %v5332 = vsel %vm2974, %v5244, 0
      %v5335 = vsel %vm2974, %v5245, 0
      %v5338 = vsel %vm2974, %v5246, 0
      %v5341 = vsel %vm2974, %v5247, 0
      %v5344 = vsel %vm2974, %v5248, 0
      %v5347 = vsel %vm2974, %v5249, 0
      %v5350 = vsel %vm2974, %v5250, 0
      %v5353 = vsel %vm2974, %v5251, 0
      %v5356 = vsel %vm2974, %v5252, 0
      %5358 = vmatpush.msra.mxu0 0.0
      %5359 = vmatpush.msra.mxu0 0.0
      %5360 = vmatpush.msra.mxu0 0.0
      %5361 = vmatpush.msra.mxu0 0.0
      %5362 = vmatpush.msra.mxu0 0.0
      %5363 = vmatpush.msra.mxu0 0.0
      %5364 = vmatpush.msra.mxu0 0.0
      %5365 = vmatpush.msra.mxu0 0.0
      %5366 = vmatpush.msra.mxu0 %v5261
      %5367 = vmatpush.msra.mxu0 %v5260
      %5368 = vmatpush.msra.mxu0 %v5259
      %5369 = vmatpush.msra.mxu0 %v5258
      %5370 = vmatpush.msra.mxu0 %v5257
      %5371 = vmatpush.msra.mxu0 %v5256
      %5372 = vmatpush.msra.mxu0 %v5255
      %5373 = vmatpush.msra.mxu0 %v5254
      %5374 = vmatmul.f32.gmra.mxu0 %v5263
      %v5375 = vpop.f32.mrf.mxu0
      %v5376 = vadd.f32 0.0, %v5375
      %5377 = vmatmul.f32.gmra.mxu0 %v5266
      %v5378 = vpop.f32.mrf.mxu0
      %v5379 = vadd.f32 0.0, %v5378
      %5380 = vmatmul.f32.gmra.mxu0 %v5269
      %v5381 = vpop.f32.mrf.mxu0
      %v5382 = vadd.f32 0.0, %v5381
      %5383 = vmatmul.f32.gmra.mxu0 %v5272
      %v5384 = vpop.f32.mrf.mxu0
      %v5385 = vadd.f32 0.0, %v5384
      %5386 = vmatmul.f32.gmra.mxu0 %v5275
      %v5387 = vpop.f32.mrf.mxu0
      %v5388 = vadd.f32 0.0, %v5387
      %5389 = vmatmul.f32.gmra.mxu0 %v5278
      %v5390 = vpop.f32.mrf.mxu0
      %v5391 = vadd.f32 0.0, %v5390
      %5392 = vmatmul.f32.gmra.mxu0 %v5281
      %v5393 = vpop.f32.mrf.mxu0
      %v5394 = vadd.f32 0.0, %v5393
      %5395 = vmatmul.f32.gmra.mxu0 %v5284
      %v5396 = vpop.f32.mrf.mxu0
      %v5397 = vadd.f32 0.0, %v5396
      %5398 = vmatmul.f32.gmra.mxu0 %v5287
      %v5399 = vpop.f32.mrf.mxu0
      %v5400 = vadd.f32 0.0, %v5399
      %5401 = vmatmul.f32.gmra.mxu0 %v5290
      %v5402 = vpop.f32.mrf.mxu0
      %v5403 = vadd.f32 0.0, %v5402
      %5404 = vmatmul.f32.gmra.mxu0 %v5293
      %v5405 = vpop.f32.mrf.mxu0
      %v5406 = vadd.f32 0.0, %v5405
      %5407 = vmatmul.f32.gmra.mxu0 %v5296
      %v5408 = vpop.f32.mrf.mxu0
      %v5409 = vadd.f32 0.0, %v5408
      %5410 = vmatmul.f32.gmra.mxu0 %v5299
      %v5411 = vpop.f32.mrf.mxu0
      %v5412 = vadd.f32 0.0, %v5411
      %5413 = vmatmul.f32.gmra.mxu0 %v5302
      %v5414 = vpop.f32.mrf.mxu0
      %v5415 = vadd.f32 0.0, %v5414
      %5416 = vmatmul.f32.gmra.mxu0 %v5305
      %v5417 = vpop.f32.mrf.mxu0
      %v5418 = vadd.f32 0.0, %v5417
      %5419 = vmatmul.f32.gmra.mxu0 %v5308
      %v5420 = vpop.f32.mrf.mxu0
      %v5421 = vadd.f32 0.0, %v5420
      %5422 = vmatmul.f32.gmra.mxu0 %v5311
      %v5423 = vpop.f32.mrf.mxu0
      %v5424 = vadd.f32 0.0, %v5423
      %5425 = vmatmul.f32.gmra.mxu0 %v5314
      %v5426 = vpop.f32.mrf.mxu0
      %v5427 = vadd.f32 0.0, %v5426
      %5428 = vmatmul.f32.gmra.mxu0 %v5317
      %v5429 = vpop.f32.mrf.mxu0
      %v5430 = vadd.f32 0.0, %v5429
      %5431 = vmatmul.f32.gmra.mxu0 %v5320
      %v5432 = vpop.f32.mrf.mxu0
      %v5433 = vadd.f32 0.0, %v5432
      %5434 = vmatmul.f32.gmra.mxu0 %v5323
      %v5435 = vpop.f32.mrf.mxu0
      %v5436 = vadd.f32 0.0, %v5435
      %5437 = vmatmul.f32.gmra.mxu0 %v5326
      %v5438 = vpop.f32.mrf.mxu0
      %v5439 = vadd.f32 0.0, %v5438
      %5440 = vmatmul.f32.gmra.mxu0 %v5329
      %v5441 = vpop.f32.mrf.mxu0
      %v5442 = vadd.f32 0.0, %v5441
      %5443 = vmatmul.f32.gmra.mxu0 %v5332
      %v5444 = vpop.f32.mrf.mxu0
      %v5445 = vadd.f32 0.0, %v5444
      %5446 = vmatmul.f32.gmra.mxu0 %v5335
      %v5447 = vpop.f32.mrf.mxu0
      %v5448 = vadd.f32 0.0, %v5447
      %5449 = vmatmul.f32.gmra.mxu0 %v5338
      %v5450 = vpop.f32.mrf.mxu0
      %v5451 = vadd.f32 0.0, %v5450
      %5452 = vmatmul.f32.gmra.mxu0 %v5341
      %v5453 = vpop.f32.mrf.mxu0
      %v5454 = vadd.f32 0.0, %v5453
      %5455 = vmatmul.f32.gmra.mxu0 %v5344
      %v5456 = vpop.f32.mrf.mxu0
      %v5457 = vadd.f32 0.0, %v5456
      %5458 = vmatmul.f32.gmra.mxu0 %v5347
      %v5459 = vpop.f32.mrf.mxu0
      %v5460 = vadd.f32 0.0, %v5459
      %5461 = vmatmul.f32.gmra.mxu0 %v5350
      %v5462 = vpop.f32.mrf.mxu0
      %v5463 = vadd.f32 0.0, %v5462
      %5464 = vmatmul.f32.gmra.mxu0 %v5353
      %v5465 = vpop.f32.mrf.mxu0
      %v5466 = vadd.f32 0.0, %v5465
      %5467 = vmatmul.f32.gmra.mxu0 %v5356
      %v5468 = vpop.f32.mrf.mxu0
      %v5469 = vadd.f32 0.0, %v5468
      %5470 = vdwg.mxu0
      %v5471 = vadd.f32 %v5189, %v5376
      %v5472 = vadd.f32 %v5190, %v5379
      %v5473 = vadd.f32 %v5191, %v5382
      %v5474 = vadd.f32 %v5192, %v5385
      %v5475 = vadd.f32 %v5193, %v5388
      %v5476 = vadd.f32 %v5194, %v5391
      %v5477 = vadd.f32 %v5195, %v5394
      %v5478 = vadd.f32 %v5196, %v5397
      %v5479 = vadd.f32 %v5197, %v5400
      %v5480 = vadd.f32 %v5198, %v5403
      %v5481 = vadd.f32 %v5199, %v5406
      %v5482 = vadd.f32 %v5200, %v5409
      %v5483 = vadd.f32 %v5201, %v5412
      %v5484 = vadd.f32 %v5202, %v5415
      %v5485 = vadd.f32 %v5203, %v5418
      %v5486 = vadd.f32 %v5204, %v5421
      %v5487 = vadd.f32 %v5205, %v5424
      %v5488 = vadd.f32 %v5206, %v5427
      %v5489 = vadd.f32 %v5207, %v5430
      %v5490 = vadd.f32 %v5208, %v5433
      %v5491 = vadd.f32 %v5209, %v5436
      %v5492 = vadd.f32 %v5210, %v5439
      %v5493 = vadd.f32 %v5211, %v5442
      %v5494 = vadd.f32 %v5212, %v5445
      %v5495 = vadd.f32 %v5213, %v5448
      %v5496 = vadd.f32 %v5214, %v5451
      %v5497 = vadd.f32 %v5215, %v5454
      %v5498 = vadd.f32 %v5216, %v5457
      %v5499 = vadd.f32 %v5217, %v5460
      %v5500 = vadd.f32 %v5218, %v5463
      %v5501 = vadd.f32 %v5219, %v5466
      %v5502 = vadd.f32 %v5220, %v5469
      %v5503 = vld [vmem:[%s4125 + $0x9] sm:$0xff]
      %v5504 = vld [vmem:[%s4125 + $0x11] sm:$0xff]
      %v5505 = vld [vmem:[%s4125 + $0x29] sm:$0xff]
      %v5506 = vld [vmem:[%s4125 + $0x31] sm:$0xff]
      %v5507 = vld [vmem:[%s4125 + $0x49] sm:$0xff]
      %v5508 = vld [vmem:[%s4125 + $0x51] sm:$0xff]
      %v5509 = vld [vmem:[%s4125 + $0x69] sm:$0xff]
      %v5510 = vld [vmem:[%s4125 + $0x71] sm:$0xff]
      %v5511 = vld [vmem:[%s4125 + $0x89] sm:$0xff]
      %v5512 = vld [vmem:[%s4125 + $0x91] sm:$0xff]
      %v5513 = vld [vmem:[%s4125 + $0xa9] sm:$0xff]
      %v5514 = vld [vmem:[%s4125 + $0xb1] sm:$0xff]
      %v5515 = vld [vmem:[%s4125 + $0xc9] sm:$0xff]
      %v5516 = vld [vmem:[%s4125 + $0xd1] sm:$0xff]
      %v5517 = vld [vmem:[%s4125 + $0xe9] sm:$0xff]
      %v5518 = vld [vmem:[%s4125 + $0xf1] sm:$0xff]
      %v5519 = vld [vmem:[%s4125 + $0x109] sm:$0xff]
      %v5520 = vld [vmem:[%s4125 + $0x111] sm:$0xff]
      %v5521 = vld [vmem:[%s4125 + $0x129] sm:$0xff]
      %v5522 = vld [vmem:[%s4125 + $0x131] sm:$0xff]
      %v5523 = vld [vmem:[%s4125 + $0x149] sm:$0xff]
      %v5524 = vld [vmem:[%s4125 + $0x151] sm:$0xff]
      %v5525 = vld [vmem:[%s4125 + $0x169] sm:$0xff]
      %v5526 = vld [vmem:[%s4125 + $0x171] sm:$0xff]
      %v5527 = vld [vmem:[%s4125 + $0x189] sm:$0xff]
      %v5528 = vld [vmem:[%s4125 + $0x191] sm:$0xff]
      %v5529 = vld [vmem:[%s4125 + $0x1a9] sm:$0xff]
      %v5530 = vld [vmem:[%s4125 + $0x1b1] sm:$0xff]
      %v5531 = vld [vmem:[%s4125 + $0x1c9] sm:$0xff]
      %v5532 = vld [vmem:[%s4125 + $0x1d1] sm:$0xff]
      %v5533 = vld [vmem:[%s4125 + $0x1e9] sm:$0xff]
      %v5534 = vld [vmem:[%s4125 + $0x1f1] sm:$0xff]
      %s5535 = scalar_lea.vmem %s4, 320
      %v5536 = vld [vmem:[%s5535] sm:$0xff]
      %v5537 = vld [vmem:[%s5535 + $0x8] sm:$0xff]
      %v5538 = vld [vmem:[%s5535 + $0x10] sm:$0xff]
      %v5539 = vld [vmem:[%s5535 + $0x18] sm:$0xff]
      %v5540 = vld [vmem:[%s5535 + $0x20] sm:$0xff]
      %v5541 = vld [vmem:[%s5535 + $0x28] sm:$0xff]
      %v5542 = vld [vmem:[%s5535 + $0x30] sm:$0xff]
      %v5543 = vld [vmem:[%s5535 + $0x38] sm:$0xff]
      %v5545 = vsel %vm2974, %v5503, 0
      %v5548 = vsel %vm2974, %v5504, 0
      %v5551 = vsel %vm2974, %v5505, 0
      %v5554 = vsel %vm2974, %v5506, 0
      %v5557 = vsel %vm2974, %v5507, 0
      %v5560 = vsel %vm2974, %v5508, 0
      %v5563 = vsel %vm2974, %v5509, 0
      %v5566 = vsel %vm2974, %v5510, 0
      %v5569 = vsel %vm2974, %v5511, 0
      %v5572 = vsel %vm2974, %v5512, 0
      %v5575 = vsel %vm2974, %v5513, 0
      %v5578 = vsel %vm2974, %v5514, 0
      %v5581 = vsel %vm2974, %v5515, 0
      %v5584 = vsel %vm2974, %v5516, 0
      %v5587 = vsel %vm2974, %v5517, 0
      %v5590 = vsel %vm2974, %v5518, 0
      %v5593 = vsel %vm2974, %v5519, 0
      %v5596 = vsel %vm2974, %v5520, 0
      %v5599 = vsel %vm2974, %v5521, 0
      %v5602 = vsel %vm2974, %v5522, 0
      %v5605 = vsel %vm2974, %v5523, 0
      %v5608 = vsel %vm2974, %v5524, 0
      %v5611 = vsel %vm2974, %v5525, 0
      %v5614 = vsel %vm2974, %v5526, 0
      %v5617 = vsel %vm2974, %v5527, 0
      %v5620 = vsel %vm2974, %v5528, 0
      %v5623 = vsel %vm2974, %v5529, 0
      %v5626 = vsel %vm2974, %v5530, 0
      %v5629 = vsel %vm2974, %v5531, 0
      %v5632 = vsel %vm2974, %v5532, 0
      %v5635 = vsel %vm2974, %v5533, 0
      %v5638 = vsel %vm2974, %v5534, 0
      %5640 = vmatpush.msra.mxu0 0.0
      %5641 = vmatpush.msra.mxu0 0.0
      %5642 = vmatpush.msra.mxu0 0.0
      %5643 = vmatpush.msra.mxu0 0.0
      %5644 = vmatpush.msra.mxu0 0.0
      %5645 = vmatpush.msra.mxu0 0.0
      %5646 = vmatpush.msra.mxu0 0.0
      %5647 = vmatpush.msra.mxu0 0.0
      %5648 = vmatpush.msra.mxu0 %v5543
      %5649 = vmatpush.msra.mxu0 %v5542
      %5650 = vmatpush.msra.mxu0 %v5541
      %5651 = vmatpush.msra.mxu0 %v5540
      %5652 = vmatpush.msra.mxu0 %v5539
      %5653 = vmatpush.msra.mxu0 %v5538
      %5654 = vmatpush.msra.mxu0 %v5537
      %5655 = vmatpush.msra.mxu0 %v5536
      %5656 = vmatmul.f32.gmra.mxu0 %v5545
      %v5657 = vpop.f32.mrf.mxu0
      %v5658 = vadd.f32 0.0, %v5657
      %5659 = vmatmul.f32.gmra.mxu0 %v5548
      %v5660 = vpop.f32.mrf.mxu0
      %v5661 = vadd.f32 0.0, %v5660
      %5662 = vmatmul.f32.gmra.mxu0 %v5551
      %v5663 = vpop.f32.mrf.mxu0
      %v5664 = vadd.f32 0.0, %v5663
      %5665 = vmatmul.f32.gmra.mxu0 %v5554
      %v5666 = vpop.f32.mrf.mxu0
      %v5667 = vadd.f32 0.0, %v5666
      %5668 = vmatmul.f32.gmra.mxu0 %v5557
      %v5669 = vpop.f32.mrf.mxu0
      %v5670 = vadd.f32 0.0, %v5669
      %5671 = vmatmul.f32.gmra.mxu0 %v5560
      %v5672 = vpop.f32.mrf.mxu0
      %v5673 = vadd.f32 0.0, %v5672
      %5674 = vmatmul.f32.gmra.mxu0 %v5563
      %v5675 = vpop.f32.mrf.mxu0
      %v5676 = vadd.f32 0.0, %v5675
      %5677 = vmatmul.f32.gmra.mxu0 %v5566
      %v5678 = vpop.f32.mrf.mxu0
      %v5679 = vadd.f32 0.0, %v5678
      %5680 = vmatmul.f32.gmra.mxu0 %v5569
      %v5681 = vpop.f32.mrf.mxu0
      %v5682 = vadd.f32 0.0, %v5681
      %5683 = vmatmul.f32.gmra.mxu0 %v5572
      %v5684 = vpop.f32.mrf.mxu0
      %v5685 = vadd.f32 0.0, %v5684
      %5686 = vmatmul.f32.gmra.mxu0 %v5575
      %v5687 = vpop.f32.mrf.mxu0
      %v5688 = vadd.f32 0.0, %v5687
      %5689 = vmatmul.f32.gmra.mxu0 %v5578
      %v5690 = vpop.f32.mrf.mxu0
      %v5691 = vadd.f32 0.0, %v5690
      %5692 = vmatmul.f32.gmra.mxu0 %v5581
      %v5693 = vpop.f32.mrf.mxu0
      %v5694 = vadd.f32 0.0, %v5693
      %5695 = vmatmul.f32.gmra.mxu0 %v5584
      %v5696 = vpop.f32.mrf.mxu0
      %v5697 = vadd.f32 0.0, %v5696
      %5698 = vmatmul.f32.gmra.mxu0 %v5587
      %v5699 = vpop.f32.mrf.mxu0
      %v5700 = vadd.f32 0.0, %v5699
      %5701 = vmatmul.f32.gmra.mxu0 %v5590
      %v5702 = vpop.f32.mrf.mxu0
      %v5703 = vadd.f32 0.0, %v5702
      %5704 = vmatmul.f32.gmra.mxu0 %v5593
      %v5705 = vpop.f32.mrf.mxu0
      %v5706 = vadd.f32 0.0, %v5705
      %5707 = vmatmul.f32.gmra.mxu0 %v5596
      %v5708 = vpop.f32.mrf.mxu0
      %v5709 = vadd.f32 0.0, %v5708
      %5710 = vmatmul.f32.gmra.mxu0 %v5599
      %v5711 = vpop.f32.mrf.mxu0
      %v5712 = vadd.f32 0.0, %v5711
      %5713 = vmatmul.f32.gmra.mxu0 %v5602
      %v5714 = vpop.f32.mrf.mxu0
      %v5715 = vadd.f32 0.0, %v5714
      %5716 = vmatmul.f32.gmra.mxu0 %v5605
      %v5717 = vpop.f32.mrf.mxu0
      %v5718 = vadd.f32 0.0, %v5717
      %5719 = vmatmul.f32.gmra.mxu0 %v5608
      %v5720 = vpop.f32.mrf.mxu0
      %v5721 = vadd.f32 0.0, %v5720
      %5722 = vmatmul.f32.gmra.mxu0 %v5611
      %v5723 = vpop.f32.mrf.mxu0
      %v5724 = vadd.f32 0.0, %v5723
      %5725 = vmatmul.f32.gmra.mxu0 %v5614
      %v5726 = vpop.f32.mrf.mxu0
      %v5727 = vadd.f32 0.0, %v5726
      %5728 = vmatmul.f32.gmra.mxu0 %v5617
      %v5729 = vpop.f32.mrf.mxu0
      %v5730 = vadd.f32 0.0, %v5729
      %5731 = vmatmul.f32.gmra.mxu0 %v5620
      %v5732 = vpop.f32.mrf.mxu0
      %v5733 = vadd.f32 0.0, %v5732
      %5734 = vmatmul.f32.gmra.mxu0 %v5623
      %v5735 = vpop.f32.mrf.mxu0
      %v5736 = vadd.f32 0.0, %v5735
      %5737 = vmatmul.f32.gmra.mxu0 %v5626
      %v5738 = vpop.f32.mrf.mxu0
      %v5739 = vadd.f32 0.0, %v5738
      %5740 = vmatmul.f32.gmra.mxu0 %v5629
      %v5741 = vpop.f32.mrf.mxu0
      %v5742 = vadd.f32 0.0, %v5741
      %5743 = vmatmul.f32.gmra.mxu0 %v5632
      %v5744 = vpop.f32.mrf.mxu0
      %v5745 = vadd.f32 0.0, %v5744
      %5746 = vmatmul.f32.gmra.mxu0 %v5635
      %v5747 = vpop.f32.mrf.mxu0
      %v5748 = vadd.f32 0.0, %v5747
      %5749 = vmatmul.f32.gmra.mxu0 %v5638
      %v5750 = vpop.f32.mrf.mxu0
      %v5751 = vadd.f32 0.0, %v5750
      %5752 = vdwg.mxu0
      %v5753 = vadd.f32 %v5471, %v5658
      %v5754 = vadd.f32 %v5472, %v5661
      %v5755 = vadd.f32 %v5473, %v5664
      %v5756 = vadd.f32 %v5474, %v5667
      %v5757 = vadd.f32 %v5475, %v5670
      %v5758 = vadd.f32 %v5476, %v5673
      %v5759 = vadd.f32 %v5477, %v5676
      %v5760 = vadd.f32 %v5478, %v5679
      %v5761 = vadd.f32 %v5479, %v5682
      %v5762 = vadd.f32 %v5480, %v5685
      %v5763 = vadd.f32 %v5481, %v5688
      %v5764 = vadd.f32 %v5482, %v5691
      %v5765 = vadd.f32 %v5483, %v5694
      %v5766 = vadd.f32 %v5484, %v5697
      %v5767 = vadd.f32 %v5485, %v5700
      %v5768 = vadd.f32 %v5486, %v5703
      %v5769 = vadd.f32 %v5487, %v5706
      %v5770 = vadd.f32 %v5488, %v5709
      %v5771 = vadd.f32 %v5489, %v5712
      %v5772 = vadd.f32 %v5490, %v5715
      %v5773 = vadd.f32 %v5491, %v5718
      %v5774 = vadd.f32 %v5492, %v5721
      %v5775 = vadd.f32 %v5493, %v5724
      %v5776 = vadd.f32 %v5494, %v5727
      %v5777 = vadd.f32 %v5495, %v5730
      %v5778 = vadd.f32 %v5496, %v5733
      %v5779 = vadd.f32 %v5497, %v5736
      %v5780 = vadd.f32 %v5498, %v5739
      %v5781 = vadd.f32 %v5499, %v5742
      %v5782 = vadd.f32 %v5500, %v5745
      %v5783 = vadd.f32 %v5501, %v5748
      %v5784 = vadd.f32 %v5502, %v5751
      %s5785 = scalar_lea.vmem [#allocation3], 64
      %v5786 = vld [vmem:[%s5785 + $0x7] sm:$0xff]
      %v5787 = vld [vmem:[%s5785 + $0xf] sm:$0xff]
      %v5788 = vld [vmem:[%s5785 + $0x27] sm:$0xff]
      %v5789 = vld [vmem:[%s5785 + $0x2f] sm:$0xff]
      %v5790 = vld [vmem:[%s5785 + $0x47] sm:$0xff]
      %v5791 = vld [vmem:[%s5785 + $0x4f] sm:$0xff]
      %v5792 = vld [vmem:[%s5785 + $0x67] sm:$0xff]
      %v5793 = vld [vmem:[%s5785 + $0x6f] sm:$0xff]
      %v5794 = vld [vmem:[%s5785 + $0x87] sm:$0xff]
      %v5795 = vld [vmem:[%s5785 + $0x8f] sm:$0xff]
      %v5796 = vld [vmem:[%s5785 + $0xa7] sm:$0xff]
      %v5797 = vld [vmem:[%s5785 + $0xaf] sm:$0xff]
      %v5798 = vld [vmem:[%s5785 + $0xc7] sm:$0xff]
      %v5799 = vld [vmem:[%s5785 + $0xcf] sm:$0xff]
      %v5800 = vld [vmem:[%s5785 + $0xe7] sm:$0xff]
      %v5801 = vld [vmem:[%s5785 + $0xef] sm:$0xff]
      %v5802 = vld [vmem:[%s5785 + $0x107] sm:$0xff]
      %v5803 = vld [vmem:[%s5785 + $0x10f] sm:$0xff]
      %v5804 = vld [vmem:[%s5785 + $0x127] sm:$0xff]
      %v5805 = vld [vmem:[%s5785 + $0x12f] sm:$0xff]
      %v5806 = vld [vmem:[%s5785 + $0x147] sm:$0xff]
      %v5807 = vld [vmem:[%s5785 + $0x14f] sm:$0xff]
      %v5808 = vld [vmem:[%s5785 + $0x167] sm:$0xff]
      %v5809 = vld [vmem:[%s5785 + $0x16f] sm:$0xff]
      %v5810 = vld [vmem:[%s5785 + $0x187] sm:$0xff]
      %v5811 = vld [vmem:[%s5785 + $0x18f] sm:$0xff]
      %v5812 = vld [vmem:[%s5785 + $0x1a7] sm:$0xff]
      %v5813 = vld [vmem:[%s5785 + $0x1af] sm:$0xff]
      %v5814 = vld [vmem:[%s5785 + $0x1c7] sm:$0xff]
      %v5815 = vld [vmem:[%s5785 + $0x1cf] sm:$0xff]
      %v5816 = vld [vmem:[%s5785 + $0x1e7] sm:$0xff]
      %v5817 = vld [vmem:[%s5785 + $0x1ef] sm:$0xff]
      %s5818 = scalar_lea.vmem %s4, 384
      %v5819 = vld [vmem:[%s5818] sm:$0xff]
      %v5820 = vld [vmem:[%s5818 + $0x8] sm:$0xff]
      %v5821 = vld [vmem:[%s5818 + $0x10] sm:$0xff]
      %v5822 = vld [vmem:[%s5818 + $0x18] sm:$0xff]
      %v5823 = vld [vmem:[%s5818 + $0x20] sm:$0xff]
      %v5824 = vld [vmem:[%s5818 + $0x28] sm:$0xff]
      %v5825 = vld [vmem:[%s5818 + $0x30] sm:$0xff]
      %v5826 = vld [vmem:[%s5818 + $0x38] sm:$0xff]
      %v5828 = vsel %vm2974, %v5786, 0
      %v5831 = vsel %vm2974, %v5787, 0
      %v5834 = vsel %vm2974, %v5788, 0
      %v5837 = vsel %vm2974, %v5789, 0
      %v5840 = vsel %vm2974, %v5790, 0
      %v5843 = vsel %vm2974, %v5791, 0
      %v5846 = vsel %vm2974, %v5792, 0
      %v5849 = vsel %vm2974, %v5793, 0
      %v5852 = vsel %vm2974, %v5794, 0
      %v5855 = vsel %vm2974, %v5795, 0
      %v5858 = vsel %vm2974, %v5796, 0
      %v5861 = vsel %vm2974, %v5797, 0
      %v5864 = vsel %vm2974, %v5798, 0
      %v5867 = vsel %vm2974, %v5799, 0
      %v5870 = vsel %vm2974, %v5800, 0
      %v5873 = vsel %vm2974, %v5801, 0
      %v5876 = vsel %vm2974, %v5802, 0
      %v5879 = vsel %vm2974, %v5803, 0
      %v5882 = vsel %vm2974, %v5804, 0
      %v5885 = vsel %vm2974, %v5805, 0
      %v5888 = vsel %vm2974, %v5806, 0
      %v5891 = vsel %vm2974, %v5807, 0
      %v5894 = vsel %vm2974, %v5808, 0
      %v5897 = vsel %vm2974, %v5809, 0
      %v5900 = vsel %vm2974, %v5810, 0
      %v5903 = vsel %vm2974, %v5811, 0
      %v5906 = vsel %vm2974, %v5812, 0
      %v5909 = vsel %vm2974, %v5813, 0
      %v5912 = vsel %vm2974, %v5814, 0
      %v5915 = vsel %vm2974, %v5815, 0
      %v5918 = vsel %vm2974, %v5816, 0
      %v5921 = vsel %vm2974, %v5817, 0
      %5923 = vmatpush.msra.mxu0 0.0
      %5924 = vmatpush.msra.mxu0 0.0
      %5925 = vmatpush.msra.mxu0 0.0
      %5926 = vmatpush.msra.mxu0 0.0
      %5927 = vmatpush.msra.mxu0 0.0
      %5928 = vmatpush.msra.mxu0 0.0
      %5929 = vmatpush.msra.mxu0 0.0
      %5930 = vmatpush.msra.mxu0 0.0
      %5931 = vmatpush.msra.mxu0 %v5826
      %5932 = vmatpush.msra.mxu0 %v5825
      %5933 = vmatpush.msra.mxu0 %v5824
      %5934 = vmatpush.msra.mxu0 %v5823
      %5935 = vmatpush.msra.mxu0 %v5822
      %5936 = vmatpush.msra.mxu0 %v5821
      %5937 = vmatpush.msra.mxu0 %v5820
      %5938 = vmatpush.msra.mxu0 %v5819
      %5939 = vmatmul.f32.gmra.mxu0 %v5828
      %v5940 = vpop.f32.mrf.mxu0
      %v5941 = vadd.f32 0.0, %v5940
      %5942 = vmatmul.f32.gmra.mxu0 %v5831
      %v5943 = vpop.f32.mrf.mxu0
      %v5944 = vadd.f32 0.0, %v5943
      %5945 = vmatmul.f32.gmra.mxu0 %v5834
      %v5946 = vpop.f32.mrf.mxu0
      %v5947 = vadd.f32 0.0, %v5946
      %5948 = vmatmul.f32.gmra.mxu0 %v5837
      %v5949 = vpop.f32.mrf.mxu0
      %v5950 = vadd.f32 0.0, %v5949
      %5951 = vmatmul.f32.gmra.mxu0 %v5840
      %v5952 = vpop.f32.mrf.mxu0
      %v5953 = vadd.f32 0.0, %v5952
      %5954 = vmatmul.f32.gmra.mxu0 %v5843
      %v5955 = vpop.f32.mrf.mxu0
      %v5956 = vadd.f32 0.0, %v5955
      %5957 = vmatmul.f32.gmra.mxu0 %v5846
      %v5958 = vpop.f32.mrf.mxu0
      %v5959 = vadd.f32 0.0, %v5958
      %5960 = vmatmul.f32.gmra.mxu0 %v5849
      %v5961 = vpop.f32.mrf.mxu0
      %v5962 = vadd.f32 0.0, %v5961
      %5963 = vmatmul.f32.gmra.mxu0 %v5852
      %v5964 = vpop.f32.mrf.mxu0
      %v5965 = vadd.f32 0.0, %v5964
      %5966 = vmatmul.f32.gmra.mxu0 %v5855
      %v5967 = vpop.f32.mrf.mxu0
      %v5968 = vadd.f32 0.0, %v5967
      %5969 = vmatmul.f32.gmra.mxu0 %v5858
      %v5970 = vpop.f32.mrf.mxu0
      %v5971 = vadd.f32 0.0, %v5970
      %5972 = vmatmul.f32.gmra.mxu0 %v5861
      %v5973 = vpop.f32.mrf.mxu0
      %v5974 = vadd.f32 0.0, %v5973
      %5975 = vmatmul.f32.gmra.mxu0 %v5864
      %v5976 = vpop.f32.mrf.mxu0
      %v5977 = vadd.f32 0.0, %v5976
      %5978 = vmatmul.f32.gmra.mxu0 %v5867
      %v5979 = vpop.f32.mrf.mxu0
      %v5980 = vadd.f32 0.0, %v5979
      %5981 = vmatmul.f32.gmra.mxu0 %v5870
      %v5982 = vpop.f32.mrf.mxu0
      %v5983 = vadd.f32 0.0, %v5982
      %5984 = vmatmul.f32.gmra.mxu0 %v5873
      %v5985 = vpop.f32.mrf.mxu0
      %v5986 = vadd.f32 0.0, %v5985
      %5987 = vmatmul.f32.gmra.mxu0 %v5876
      %v5988 = vpop.f32.mrf.mxu0
      %v5989 = vadd.f32 0.0, %v5988
      %5990 = vmatmul.f32.gmra.mxu0 %v5879
      %v5991 = vpop.f32.mrf.mxu0
      %v5992 = vadd.f32 0.0, %v5991
      %5993 = vmatmul.f32.gmra.mxu0 %v5882
      %v5994 = vpop.f32.mrf.mxu0
      %v5995 = vadd.f32 0.0, %v5994
      %5996 = vmatmul.f32.gmra.mxu0 %v5885
      %v5997 = vpop.f32.mrf.mxu0
      %v5998 = vadd.f32 0.0, %v5997
      %5999 = vmatmul.f32.gmra.mxu0 %v5888
      %v6000 = vpop.f32.mrf.mxu0
      %v6001 = vadd.f32 0.0, %v6000
      %6002 = vmatmul.f32.gmra.mxu0 %v5891
      %v6003 = vpop.f32.mrf.mxu0
      %v6004 = vadd.f32 0.0, %v6003
      %6005 = vmatmul.f32.gmra.mxu0 %v5894
      %v6006 = vpop.f32.mrf.mxu0
      %v6007 = vadd.f32 0.0, %v6006
      %6008 = vmatmul.f32.gmra.mxu0 %v5897
      %v6009 = vpop.f32.mrf.mxu0
      %v6010 = vadd.f32 0.0, %v6009
      %6011 = vmatmul.f32.gmra.mxu0 %v5900
      %v6012 = vpop.f32.mrf.mxu0
      %v6013 = vadd.f32 0.0, %v6012
      %6014 = vmatmul.f32.gmra.mxu0 %v5903
      %v6015 = vpop.f32.mrf.mxu0
      %v6016 = vadd.f32 0.0, %v6015
      %6017 = vmatmul.f32.gmra.mxu0 %v5906
      %v6018 = vpop.f32.mrf.mxu0
      %v6019 = vadd.f32 0.0, %v6018
      %6020 = vmatmul.f32.gmra.mxu0 %v5909
      %v6021 = vpop.f32.mrf.mxu0
      %v6022 = vadd.f32 0.0, %v6021
      %6023 = vmatmul.f32.gmra.mxu0 %v5912
      %v6024 = vpop.f32.mrf.mxu0
      %v6025 = vadd.f32 0.0, %v6024
      %6026 = vmatmul.f32.gmra.mxu0 %v5915
      %v6027 = vpop.f32.mrf.mxu0
      %v6028 = vadd.f32 0.0, %v6027
      %6029 = vmatmul.f32.gmra.mxu0 %v5918
      %v6030 = vpop.f32.mrf.mxu0
      %v6031 = vadd.f32 0.0, %v6030
      %6032 = vmatmul.f32.gmra.mxu0 %v5921
      %v6033 = vpop.f32.mrf.mxu0
      %v6034 = vadd.f32 0.0, %v6033
      %6035 = vdwg.mxu0
      %v6036 = vadd.f32 %v5753, %v5941
      %v6037 = vadd.f32 %v5754, %v5944
      %v6038 = vadd.f32 %v5755, %v5947
      %v6039 = vadd.f32 %v5756, %v5950
      %v6040 = vadd.f32 %v5757, %v5953
      %v6041 = vadd.f32 %v5758, %v5956
      %v6042 = vadd.f32 %v5759, %v5959
      %v6043 = vadd.f32 %v5760, %v5962
      %v6044 = vadd.f32 %v5761, %v5965
      %v6045 = vadd.f32 %v5762, %v5968
      %v6046 = vadd.f32 %v5763, %v5971
      %v6047 = vadd.f32 %v5764, %v5974
      %v6048 = vadd.f32 %v5765, %v5977
      %v6049 = vadd.f32 %v5766, %v5980
      %v6050 = vadd.f32 %v5767, %v5983
      %v6051 = vadd.f32 %v5768, %v5986
      %v6052 = vadd.f32 %v5769, %v5989
      %v6053 = vadd.f32 %v5770, %v5992
      %v6054 = vadd.f32 %v5771, %v5995
      %v6055 = vadd.f32 %v5772, %v5998
      %v6056 = vadd.f32 %v5773, %v6001
      %v6057 = vadd.f32 %v5774, %v6004
      %v6058 = vadd.f32 %v5775, %v6007
      %v6059 = vadd.f32 %v5776, %v6010
      %v6060 = vadd.f32 %v5777, %v6013
      %v6061 = vadd.f32 %v5778, %v6016
      %v6062 = vadd.f32 %v5779, %v6019
      %v6063 = vadd.f32 %v5780, %v6022
      %v6064 = vadd.f32 %v5781, %v6025
      %v6065 = vadd.f32 %v5782, %v6028
      %v6066 = vadd.f32 %v5783, %v6031
      %v6067 = vadd.f32 %v5784, %v6034
      %v6068 = vld [vmem:[%s5785 + $0x8] sm:$0xff]
      %v6069 = vld [vmem:[%s5785 + $0x10] sm:$0xff]
      %v6070 = vld [vmem:[%s5785 + $0x28] sm:$0xff]
      %v6071 = vld [vmem:[%s5785 + $0x30] sm:$0xff]
      %v6072 = vld [vmem:[%s5785 + $0x48] sm:$0xff]
      %v6073 = vld [vmem:[%s5785 + $0x50] sm:$0xff]
      %v6074 = vld [vmem:[%s5785 + $0x68] sm:$0xff]
      %v6075 = vld [vmem:[%s5785 + $0x70] sm:$0xff]
      %v6076 = vld [vmem:[%s5785 + $0x88] sm:$0xff]
      %v6077 = vld [vmem:[%s5785 + $0x90] sm:$0xff]
      %v6078 = vld [vmem:[%s5785 + $0xa8] sm:$0xff]
      %v6079 = vld [vmem:[%s5785 + $0xb0] sm:$0xff]
      %v6080 = vld [vmem:[%s5785 + $0xc8] sm:$0xff]
      %v6081 = vld [vmem:[%s5785 + $0xd0] sm:$0xff]
      %v6082 = vld [vmem:[%s5785 + $0xe8] sm:$0xff]
      %v6083 = vld [vmem:[%s5785 + $0xf0] sm:$0xff]
      %v6084 = vld [vmem:[%s5785 + $0x108] sm:$0xff]
      %v6085 = vld [vmem:[%s5785 + $0x110] sm:$0xff]
      %v6086 = vld [vmem:[%s5785 + $0x128] sm:$0xff]
      %v6087 = vld [vmem:[%s5785 + $0x130] sm:$0xff]
      %v6088 = vld [vmem:[%s5785 + $0x148] sm:$0xff]
      %v6089 = vld [vmem:[%s5785 + $0x150] sm:$0xff]
      %v6090 = vld [vmem:[%s5785 + $0x168] sm:$0xff]
      %v6091 = vld [vmem:[%s5785 + $0x170] sm:$0xff]
      %v6092 = vld [vmem:[%s5785 + $0x188] sm:$0xff]
      %v6093 = vld [vmem:[%s5785 + $0x190] sm:$0xff]
      %v6094 = vld [vmem:[%s5785 + $0x1a8] sm:$0xff]
      %v6095 = vld [vmem:[%s5785 + $0x1b0] sm:$0xff]
      %v6096 = vld [vmem:[%s5785 + $0x1c8] sm:$0xff]
      %v6097 = vld [vmem:[%s5785 + $0x1d0] sm:$0xff]
      %v6098 = vld [vmem:[%s5785 + $0x1e8] sm:$0xff]
      %v6099 = vld [vmem:[%s5785 + $0x1f0] sm:$0xff]
      %s6100 = scalar_lea.vmem %s4, 448
      %v6101 = vld [vmem:[%s6100] sm:$0xff]
      %v6102 = vld [vmem:[%s6100 + $0x8] sm:$0xff]
      %v6103 = vld [vmem:[%s6100 + $0x10] sm:$0xff]
      %v6104 = vld [vmem:[%s6100 + $0x18] sm:$0xff]
      %v6105 = vld [vmem:[%s6100 + $0x20] sm:$0xff]
      %v6106 = vld [vmem:[%s6100 + $0x28] sm:$0xff]
      %v6107 = vld [vmem:[%s6100 + $0x30] sm:$0xff]
      %v6108 = vld [vmem:[%s6100 + $0x38] sm:$0xff]
      %v6110 = vsel %vm2974, %v6068, 0
      %v6113 = vsel %vm2974, %v6069, 0
      %v6116 = vsel %vm2974, %v6070, 0
      %v6119 = vsel %vm2974, %v6071, 0
      %v6122 = vsel %vm2974, %v6072, 0
      %v6125 = vsel %vm2974, %v6073, 0
      %v6128 = vsel %vm2974, %v6074, 0
      %v6131 = vsel %vm2974, %v6075, 0
      %v6134 = vsel %vm2974, %v6076, 0
      %v6137 = vsel %vm2974, %v6077, 0
      %v6140 = vsel %vm2974, %v6078, 0
      %v6143 = vsel %vm2974, %v6079, 0
      %v6146 = vsel %vm2974, %v6080, 0
      %v6149 = vsel %vm2974, %v6081, 0
      %v6152 = vsel %vm2974, %v6082, 0
      %v6155 = vsel %vm2974, %v6083, 0
      %v6158 = vsel %vm2974, %v6084, 0
      %v6161 = vsel %vm2974, %v6085, 0
      %v6164 = vsel %vm2974, %v6086, 0
      %v6167 = vsel %vm2974, %v6087, 0
      %v6170 = vsel %vm2974, %v6088, 0
      %v6173 = vsel %vm2974, %v6089, 0
      %v6176 = vsel %vm2974, %v6090, 0
      %v6179 = vsel %vm2974, %v6091, 0
      %v6182 = vsel %vm2974, %v6092, 0
      %v6185 = vsel %vm2974, %v6093, 0
      %v6188 = vsel %vm2974, %v6094, 0
      %v6191 = vsel %vm2974, %v6095, 0
      %v6194 = vsel %vm2974, %v6096, 0
      %v6197 = vsel %vm2974, %v6097, 0
      %v6200 = vsel %vm2974, %v6098, 0
      %v6203 = vsel %vm2974, %v6099, 0
      %6205 = vmatpush.msra.mxu0 0.0
      %6206 = vmatpush.msra.mxu0 0.0
      %6207 = vmatpush.msra.mxu0 0.0
      %6208 = vmatpush.msra.mxu0 0.0
      %6209 = vmatpush.msra.mxu0 0.0
      %6210 = vmatpush.msra.mxu0 0.0
      %6211 = vmatpush.msra.mxu0 0.0
      %6212 = vmatpush.msra.mxu0 0.0
      %6213 = vmatpush.msra.mxu0 %v6108
      %6214 = vmatpush.msra.mxu0 %v6107
      %6215 = vmatpush.msra.mxu0 %v6106
      %6216 = vmatpush.msra.mxu0 %v6105
      %6217 = vmatpush.msra.mxu0 %v6104
      %6218 = vmatpush.msra.mxu0 %v6103
      %6219 = vmatpush.msra.mxu0 %v6102
      %6220 = vmatpush.msra.mxu0 %v6101
      %6221 = vmatmul.f32.gmra.mxu0 %v6110
      %v6222 = vpop.f32.mrf.mxu0
      %v6223 = vadd.f32 0.0, %v6222
      %6224 = vmatmul.f32.gmra.mxu0 %v6113
      %v6225 = vpop.f32.mrf.mxu0
      %v6226 = vadd.f32 0.0, %v6225
      %6227 = vmatmul.f32.gmra.mxu0 %v6116
      %v6228 = vpop.f32.mrf.mxu0
      %v6229 = vadd.f32 0.0, %v6228
      %6230 = vmatmul.f32.gmra.mxu0 %v6119
      %v6231 = vpop.f32.mrf.mxu0
      %v6232 = vadd.f32 0.0, %v6231
      %6233 = vmatmul.f32.gmra.mxu0 %v6122
      %v6234 = vpop.f32.mrf.mxu0
      %v6235 = vadd.f32 0.0, %v6234
      %6236 = vmatmul.f32.gmra.mxu0 %v6125
      %v6237 = vpop.f32.mrf.mxu0
      %v6238 = vadd.f32 0.0, %v6237
      %6239 = vmatmul.f32.gmra.mxu0 %v6128
      %v6240 = vpop.f32.mrf.mxu0
      %v6241 = vadd.f32 0.0, %v6240
      %6242 = vmatmul.f32.gmra.mxu0 %v6131
      %v6243 = vpop.f32.mrf.mxu0
      %v6244 = vadd.f32 0.0, %v6243
      %6245 = vmatmul.f32.gmra.mxu0 %v6134
      %v6246 = vpop.f32.mrf.mxu0
      %v6247 = vadd.f32 0.0, %v6246
      %6248 = vmatmul.f32.gmra.mxu0 %v6137
      %v6249 = vpop.f32.mrf.mxu0
      %v6250 = vadd.f32 0.0, %v6249
      %6251 = vmatmul.f32.gmra.mxu0 %v6140
      %v6252 = vpop.f32.mrf.mxu0
      %v6253 = vadd.f32 0.0, %v6252
      %6254 = vmatmul.f32.gmra.mxu0 %v6143
      %v6255 = vpop.f32.mrf.mxu0
      %v6256 = vadd.f32 0.0, %v6255
      %6257 = vmatmul.f32.gmra.mxu0 %v6146
      %v6258 = vpop.f32.mrf.mxu0
      %v6259 = vadd.f32 0.0, %v6258
      %6260 = vmatmul.f32.gmra.mxu0 %v6149
      %v6261 = vpop.f32.mrf.mxu0
      %v6262 = vadd.f32 0.0, %v6261
      %6263 = vmatmul.f32.gmra.mxu0 %v6152
      %v6264 = vpop.f32.mrf.mxu0
      %v6265 = vadd.f32 0.0, %v6264
      %6266 = vmatmul.f32.gmra.mxu0 %v6155
      %v6267 = vpop.f32.mrf.mxu0
      %v6268 = vadd.f32 0.0, %v6267
      %6269 = vmatmul.f32.gmra.mxu0 %v6158
      %v6270 = vpop.f32.mrf.mxu0
      %v6271 = vadd.f32 0.0, %v6270
      %6272 = vmatmul.f32.gmra.mxu0 %v6161
      %v6273 = vpop.f32.mrf.mxu0
      %v6274 = vadd.f32 0.0, %v6273
      %6275 = vmatmul.f32.gmra.mxu0 %v6164
      %v6276 = vpop.f32.mrf.mxu0
      %v6277 = vadd.f32 0.0, %v6276
      %6278 = vmatmul.f32.gmra.mxu0 %v6167
      %v6279 = vpop.f32.mrf.mxu0
      %v6280 = vadd.f32 0.0, %v6279
      %6281 = vmatmul.f32.gmra.mxu0 %v6170
      %v6282 = vpop.f32.mrf.mxu0
      %v6283 = vadd.f32 0.0, %v6282
      %6284 = vmatmul.f32.gmra.mxu0 %v6173
      %v6285 = vpop.f32.mrf.mxu0
      %v6286 = vadd.f32 0.0, %v6285
      %6287 = vmatmul.f32.gmra.mxu0 %v6176
      %v6288 = vpop.f32.mrf.mxu0
      %v6289 = vadd.f32 0.0, %v6288
      %6290 = vmatmul.f32.gmra.mxu0 %v6179
      %v6291 = vpop.f32.mrf.mxu0
      %v6292 = vadd.f32 0.0, %v6291
      %6293 = vmatmul.f32.gmra.mxu0 %v6182
      %v6294 = vpop.f32.mrf.mxu0
      %v6295 = vadd.f32 0.0, %v6294
      %6296 = vmatmul.f32.gmra.mxu0 %v6185
      %v6297 = vpop.f32.mrf.mxu0
      %v6298 = vadd.f32 0.0, %v6297
      %6299 = vmatmul.f32.gmra.mxu0 %v6188
      %v6300 = vpop.f32.mrf.mxu0
      %v6301 = vadd.f32 0.0, %v6300
      %6302 = vmatmul.f32.gmra.mxu0 %v6191
      %v6303 = vpop.f32.mrf.mxu0
      %v6304 = vadd.f32 0.0, %v6303
      %6305 = vmatmul.f32.gmra.mxu0 %v6194
      %v6306 = vpop.f32.mrf.mxu0
      %v6307 = vadd.f32 0.0, %v6306
      %6308 = vmatmul.f32.gmra.mxu0 %v6197
      %v6309 = vpop.f32.mrf.mxu0
      %v6310 = vadd.f32 0.0, %v6309
      %6311 = vmatmul.f32.gmra.mxu0 %v6200
      %v6312 = vpop.f32.mrf.mxu0
      %v6313 = vadd.f32 0.0, %v6312
      %6314 = vmatmul.f32.gmra.mxu0 %v6203
      %v6315 = vpop.f32.mrf.mxu0
      %v6316 = vadd.f32 0.0, %v6315
      %6317 = vdwg.mxu0
      %v6318 = vadd.f32 %v6036, %v6223
      %v6319 = vadd.f32 %v6037, %v6226
      %v6320 = vadd.f32 %v6038, %v6229
      %v6321 = vadd.f32 %v6039, %v6232
      %v6322 = vadd.f32 %v6040, %v6235
      %v6323 = vadd.f32 %v6041, %v6238
      %v6324 = vadd.f32 %v6042, %v6241
      %v6325 = vadd.f32 %v6043, %v6244
      %v6326 = vadd.f32 %v6044, %v6247
      %v6327 = vadd.f32 %v6045, %v6250
      %v6328 = vadd.f32 %v6046, %v6253
      %v6329 = vadd.f32 %v6047, %v6256
      %v6330 = vadd.f32 %v6048, %v6259
      %v6331 = vadd.f32 %v6049, %v6262
      %v6332 = vadd.f32 %v6050, %v6265
      %v6333 = vadd.f32 %v6051, %v6268
      %v6334 = vadd.f32 %v6052, %v6271
      %v6335 = vadd.f32 %v6053, %v6274
      %v6336 = vadd.f32 %v6054, %v6277
      %v6337 = vadd.f32 %v6055, %v6280
      %v6338 = vadd.f32 %v6056, %v6283
      %v6339 = vadd.f32 %v6057, %v6286
      %v6340 = vadd.f32 %v6058, %v6289
      %v6341 = vadd.f32 %v6059, %v6292
      %v6342 = vadd.f32 %v6060, %v6295
      %v6343 = vadd.f32 %v6061, %v6298
      %v6344 = vadd.f32 %v6062, %v6301
      %v6345 = vadd.f32 %v6063, %v6304
      %v6346 = vadd.f32 %v6064, %v6307
      %v6347 = vadd.f32 %v6065, %v6310
      %v6348 = vadd.f32 %v6066, %v6313
      %v6349 = vadd.f32 %v6067, %v6316
      %v6350 = vld [vmem:[%s5785 + $0x9] sm:$0xff]
      %v6351 = vld [vmem:[%s5785 + $0x11] sm:$0xff]
      %v6352 = vld [vmem:[%s5785 + $0x29] sm:$0xff]
      %v6353 = vld [vmem:[%s5785 + $0x31] sm:$0xff]
      %v6354 = vld [vmem:[%s5785 + $0x49] sm:$0xff]
      %v6355 = vld [vmem:[%s5785 + $0x51] sm:$0xff]
      %v6356 = vld [vmem:[%s5785 + $0x69] sm:$0xff]
      %v6357 = vld [vmem:[%s5785 + $0x71] sm:$0xff]
      %v6358 = vld [vmem:[%s5785 + $0x89] sm:$0xff]
      %v6359 = vld [vmem:[%s5785 + $0x91] sm:$0xff]
      %v6360 = vld [vmem:[%s5785 + $0xa9] sm:$0xff]
      %v6361 = vld [vmem:[%s5785 + $0xb1] sm:$0xff]
      %v6362 = vld [vmem:[%s5785 + $0xc9] sm:$0xff]
      %v6363 = vld [vmem:[%s5785 + $0xd1] sm:$0xff]
      %v6364 = vld [vmem:[%s5785 + $0xe9] sm:$0xff]
      %v6365 = vld [vmem:[%s5785 + $0xf1] sm:$0xff]
      %v6366 = vld [vmem:[%s5785 + $0x109] sm:$0xff]
      %v6367 = vld [vmem:[%s5785 + $0x111] sm:$0xff]
      %v6368 = vld [vmem:[%s5785 + $0x129] sm:$0xff]
      %v6369 = vld [vmem:[%s5785 + $0x131] sm:$0xff]
      %v6370 = vld [vmem:[%s5785 + $0x149] sm:$0xff]
      %v6371 = vld [vmem:[%s5785 + $0x151] sm:$0xff]
      %v6372 = vld [vmem:[%s5785 + $0x169] sm:$0xff]
      %v6373 = vld [vmem:[%s5785 + $0x171] sm:$0xff]
      %v6374 = vld [vmem:[%s5785 + $0x189] sm:$0xff]
      %v6375 = vld [vmem:[%s5785 + $0x191] sm:$0xff]
      %v6376 = vld [vmem:[%s5785 + $0x1a9] sm:$0xff]
      %v6377 = vld [vmem:[%s5785 + $0x1b1] sm:$0xff]
      %v6378 = vld [vmem:[%s5785 + $0x1c9] sm:$0xff]
      %v6379 = vld [vmem:[%s5785 + $0x1d1] sm:$0xff]
      %v6380 = vld [vmem:[%s5785 + $0x1e9] sm:$0xff]
      %v6381 = vld [vmem:[%s5785 + $0x1f1] sm:$0xff]
      %s6382 = scalar_lea.vmem %s4, 512
      %v6383 = vld [vmem:[%s6382] sm:$0xff]
      %v6384 = vld [vmem:[%s6382 + $0x8] sm:$0xff]
      %v6385 = vld [vmem:[%s6382 + $0x10] sm:$0xff]
      %v6386 = vld [vmem:[%s6382 + $0x18] sm:$0xff]
      %v6387 = vld [vmem:[%s6382 + $0x20] sm:$0xff]
      %v6388 = vld [vmem:[%s6382 + $0x28] sm:$0xff]
      %v6389 = vld [vmem:[%s6382 + $0x30] sm:$0xff]
      %v6390 = vld [vmem:[%s6382 + $0x38] sm:$0xff]
      %v6392 = vsel %vm2974, %v6350, 0
      %v6395 = vsel %vm2974, %v6351, 0
      %v6398 = vsel %vm2974, %v6352, 0
      %v6401 = vsel %vm2974, %v6353, 0
      %v6404 = vsel %vm2974, %v6354, 0
      %v6407 = vsel %vm2974, %v6355, 0
      %v6410 = vsel %vm2974, %v6356, 0
      %v6413 = vsel %vm2974, %v6357, 0
      %v6416 = vsel %vm2974, %v6358, 0
      %v6419 = vsel %vm2974, %v6359, 0
      %v6422 = vsel %vm2974, %v6360, 0
      %v6425 = vsel %vm2974, %v6361, 0
      %v6428 = vsel %vm2974, %v6362, 0
      %v6431 = vsel %vm2974, %v6363, 0
      %v6434 = vsel %vm2974, %v6364, 0
      %v6437 = vsel %vm2974, %v6365, 0
      %v6440 = vsel %vm2974, %v6366, 0
      %v6443 = vsel %vm2974, %v6367, 0
      %v6446 = vsel %vm2974, %v6368, 0
      %v6449 = vsel %vm2974, %v6369, 0
      %v6452 = vsel %vm2974, %v6370, 0
      %v6455 = vsel %vm2974, %v6371, 0
      %v6458 = vsel %vm2974, %v6372, 0
      %v6461 = vsel %vm2974, %v6373, 0
      %v6464 = vsel %vm2974, %v6374, 0
      %v6467 = vsel %vm2974, %v6375, 0
      %v6470 = vsel %vm2974, %v6376, 0
      %v6473 = vsel %vm2974, %v6377, 0
      %v6476 = vsel %vm2974, %v6378, 0
      %v6479 = vsel %vm2974, %v6379, 0
      %v6482 = vsel %vm2974, %v6380, 0
      %v6485 = vsel %vm2974, %v6381, 0
      %6487 = vmatpush.msra.mxu0 0.0
      %6488 = vmatpush.msra.mxu0 0.0
      %6489 = vmatpush.msra.mxu0 0.0
      %6490 = vmatpush.msra.mxu0 0.0
      %6491 = vmatpush.msra.mxu0 0.0
      %6492 = vmatpush.msra.mxu0 0.0
      %6493 = vmatpush.msra.mxu0 0.0
      %6494 = vmatpush.msra.mxu0 0.0
      %6495 = vmatpush.msra.mxu0 %v6390
      %6496 = vmatpush.msra.mxu0 %v6389
      %6497 = vmatpush.msra.mxu0 %v6388
      %6498 = vmatpush.msra.mxu0 %v6387
      %6499 = vmatpush.msra.mxu0 %v6386
      %6500 = vmatpush.msra.mxu0 %v6385
      %6501 = vmatpush.msra.mxu0 %v6384
      %6502 = vmatpush.msra.mxu0 %v6383
      %6503 = vmatmul.f32.gmra.mxu0 %v6392
      %v6504 = vpop.f32.mrf.mxu0
      %v6505 = vadd.f32 0.0, %v6504
      %6506 = vmatmul.f32.gmra.mxu0 %v6395
      %v6507 = vpop.f32.mrf.mxu0
      %v6508 = vadd.f32 0.0, %v6507
      %6509 = vmatmul.f32.gmra.mxu0 %v6398
      %v6510 = vpop.f32.mrf.mxu0
      %v6511 = vadd.f32 0.0, %v6510
      %6512 = vmatmul.f32.gmra.mxu0 %v6401
      %v6513 = vpop.f32.mrf.mxu0
      %v6514 = vadd.f32 0.0, %v6513
      %6515 = vmatmul.f32.gmra.mxu0 %v6404
      %v6516 = vpop.f32.mrf.mxu0
      %v6517 = vadd.f32 0.0, %v6516
      %6518 = vmatmul.f32.gmra.mxu0 %v6407
      %v6519 = vpop.f32.mrf.mxu0
      %v6520 = vadd.f32 0.0, %v6519
      %6521 = vmatmul.f32.gmra.mxu0 %v6410
      %v6522 = vpop.f32.mrf.mxu0
      %v6523 = vadd.f32 0.0, %v6522
      %6524 = vmatmul.f32.gmra.mxu0 %v6413
      %v6525 = vpop.f32.mrf.mxu0
      %v6526 = vadd.f32 0.0, %v6525
      %6527 = vmatmul.f32.gmra.mxu0 %v6416
      %v6528 = vpop.f32.mrf.mxu0
      %v6529 = vadd.f32 0.0, %v6528
      %6530 = vmatmul.f32.gmra.mxu0 %v6419
      %v6531 = vpop.f32.mrf.mxu0
      %v6532 = vadd.f32 0.0, %v6531
      %6533 = vmatmul.f32.gmra.mxu0 %v6422
      %v6534 = vpop.f32.mrf.mxu0
      %v6535 = vadd.f32 0.0, %v6534
      %6536 = vmatmul.f32.gmra.mxu0 %v6425
      %v6537 = vpop.f32.mrf.mxu0
      %v6538 = vadd.f32 0.0, %v6537
      %6539 = vmatmul.f32.gmra.mxu0 %v6428
      %v6540 = vpop.f32.mrf.mxu0
      %v6541 = vadd.f32 0.0, %v6540
      %6542 = vmatmul.f32.gmra.mxu0 %v6431
      %v6543 = vpop.f32.mrf.mxu0
      %v6544 = vadd.f32 0.0, %v6543
      %6545 = vmatmul.f32.gmra.mxu0 %v6434
      %v6546 = vpop.f32.mrf.mxu0
      %v6547 = vadd.f32 0.0, %v6546
      %6548 = vmatmul.f32.gmra.mxu0 %v6437
      %v6549 = vpop.f32.mrf.mxu0
      %v6550 = vadd.f32 0.0, %v6549
      %6551 = vmatmul.f32.gmra.mxu0 %v6440
      %v6552 = vpop.f32.mrf.mxu0
      %v6553 = vadd.f32 0.0, %v6552
      %6554 = vmatmul.f32.gmra.mxu0 %v6443
      %v6555 = vpop.f32.mrf.mxu0
      %v6556 = vadd.f32 0.0, %v6555
      %6557 = vmatmul.f32.gmra.mxu0 %v6446
      %v6558 = vpop.f32.mrf.mxu0
      %v6559 = vadd.f32 0.0, %v6558
      %6560 = vmatmul.f32.gmra.mxu0 %v6449
      %v6561 = vpop.f32.mrf.mxu0
      %v6562 = vadd.f32 0.0, %v6561
      %6563 = vmatmul.f32.gmra.mxu0 %v6452
      %v6564 = vpop.f32.mrf.mxu0
      %v6565 = vadd.f32 0.0, %v6564
      %6566 = vmatmul.f32.gmra.mxu0 %v6455
      %v6567 = vpop.f32.mrf.mxu0
      %v6568 = vadd.f32 0.0, %v6567
      %6569 = vmatmul.f32.gmra.mxu0 %v6458
      %v6570 = vpop.f32.mrf.mxu0
      %v6571 = vadd.f32 0.0, %v6570
      %6572 = vmatmul.f32.gmra.mxu0 %v6461
      %v6573 = vpop.f32.mrf.mxu0
      %v6574 = vadd.f32 0.0, %v6573
      %6575 = vmatmul.f32.gmra.mxu0 %v6464
      %v6576 = vpop.f32.mrf.mxu0
      %v6577 = vadd.f32 0.0, %v6576
      %6578 = vmatmul.f32.gmra.mxu0 %v6467
      %v6579 = vpop.f32.mrf.mxu0
      %v6580 = vadd.f32 0.0, %v6579
      %6581 = vmatmul.f32.gmra.mxu0 %v6470
      %v6582 = vpop.f32.mrf.mxu0
      %v6583 = vadd.f32 0.0, %v6582
      %6584 = vmatmul.f32.gmra.mxu0 %v6473
      %v6585 = vpop.f32.mrf.mxu0
      %v6586 = vadd.f32 0.0, %v6585
      %6587 = vmatmul.f32.gmra.mxu0 %v6476
      %v6588 = vpop.f32.mrf.mxu0
      %v6589 = vadd.f32 0.0, %v6588
      %6590 = vmatmul.f32.gmra.mxu0 %v6479
      %v6591 = vpop.f32.mrf.mxu0
      %v6592 = vadd.f32 0.0, %v6591
      %6593 = vmatmul.f32.gmra.mxu0 %v6482
      %v6594 = vpop.f32.mrf.mxu0
      %v6595 = vadd.f32 0.0, %v6594
      %6596 = vmatmul.f32.gmra.mxu0 %v6485
      %v6597 = vpop.f32.mrf.mxu0
      %v6598 = vadd.f32 0.0, %v6597
      %6599 = vdwg.mxu0
      %v6600 = vadd.f32 %v6318, %v6505
      %v6601 = vadd.f32 %v6319, %v6508
      %v6602 = vadd.f32 %v6320, %v6511
      %v6603 = vadd.f32 %v6321, %v6514
      %v6604 = vadd.f32 %v6322, %v6517
      %v6605 = vadd.f32 %v6323, %v6520
      %v6606 = vadd.f32 %v6324, %v6523
      %v6607 = vadd.f32 %v6325, %v6526
      %v6608 = vadd.f32 %v6326, %v6529
      %v6609 = vadd.f32 %v6327, %v6532
      %v6610 = vadd.f32 %v6328, %v6535
      %v6611 = vadd.f32 %v6329, %v6538
      %v6612 = vadd.f32 %v6330, %v6541
      %v6613 = vadd.f32 %v6331, %v6544
      %v6614 = vadd.f32 %v6332, %v6547
      %v6615 = vadd.f32 %v6333, %v6550
      %v6616 = vadd.f32 %v6334, %v6553
      %v6617 = vadd.f32 %v6335, %v6556
      %v6618 = vadd.f32 %v6336, %v6559
      %v6619 = vadd.f32 %v6337, %v6562
      %v6620 = vadd.f32 %v6338, %v6565
      %v6621 = vadd.f32 %v6339, %v6568
      %v6622 = vadd.f32 %v6340, %v6571
      %v6623 = vadd.f32 %v6341, %v6574
      %v6624 = vadd.f32 %v6342, %v6577
      %v6625 = vadd.f32 %v6343, %v6580
      %v6626 = vadd.f32 %v6344, %v6583
      %v6627 = vadd.f32 %v6345, %v6586
      %v6628 = vadd.f32 %v6346, %v6589
      %v6629 = vadd.f32 %v6347, %v6592
      %v6630 = vadd.f32 %v6348, %v6595
      %v6631 = vadd.f32 %v6349, %v6598
      %v6632 = vld [vmem:[%s5] sm:$0x1]
      %v6634 = vperm.slane %v6632, 0
      %v6636 = vadd.f32 %v6600, %v6634
      %v6637 = vadd.f32 %v6601, %v6634
      %v6638 = vadd.f32 %v6602, %v6634
      %v6639 = vadd.f32 %v6603, %v6634
      %v6640 = vadd.f32 %v6604, %v6634
      %v6641 = vadd.f32 %v6605, %v6634
      %v6642 = vadd.f32 %v6606, %v6634
      %v6643 = vadd.f32 %v6607, %v6634
      %v6644 = vadd.f32 %v6608, %v6634
      %v6645 = vadd.f32 %v6609, %v6634
      %v6646 = vadd.f32 %v6610, %v6634
      %v6647 = vadd.f32 %v6611, %v6634
      %v6648 = vadd.f32 %v6612, %v6634
      %v6649 = vadd.f32 %v6613, %v6634
      %v6650 = vadd.f32 %v6614, %v6634
      %v6651 = vadd.f32 %v6615, %v6634
      %v6652 = vadd.f32 %v6616, %v6634
      %v6653 = vadd.f32 %v6617, %v6634
      %v6654 = vadd.f32 %v6618, %v6634
      %v6655 = vadd.f32 %v6619, %v6634
      %v6656 = vadd.f32 %v6620, %v6634
      %v6657 = vadd.f32 %v6621, %v6634
      %v6658 = vadd.f32 %v6622, %v6634
      %v6659 = vadd.f32 %v6623, %v6634
      %v6660 = vadd.f32 %v6624, %v6634
      %v6661 = vadd.f32 %v6625, %v6634
      %v6662 = vadd.f32 %v6626, %v6634
      %v6663 = vadd.f32 %v6627, %v6634
      %v6664 = vadd.f32 %v6628, %v6634
      %v6665 = vadd.f32 %v6629, %v6634
      %v6666 = vadd.f32 %v6630, %v6634
      %v6667 = vadd.f32 %v6631, %v6634
      %v6668 = vsel %vm2974, %v6636, 0.0
      %v6669 = vsel %vm2974, %v6637, 0.0
      %v6670 = vadd.f32 %v6668, %v6669
      %v6671 = vsel %vm2974, %v6638, 0.0
      %v6672 = vadd.f32 %v6670, %v6671
      %v6673 = vsel %vm2974, %v6639, 0.0
      %v6674 = vadd.f32 %v6672, %v6673
      %v6675 = vsel %vm2974, %v6640, 0.0
      %v6676 = vadd.f32 %v6674, %v6675
      %v6677 = vsel %vm2974, %v6641, 0.0
      %v6678 = vadd.f32 %v6676, %v6677
      %v6679 = vsel %vm2974, %v6642, 0.0
      %v6680 = vadd.f32 %v6678, %v6679
      %v6681 = vsel %vm2974, %v6643, 0.0
      %v6682 = vadd.f32 %v6680, %v6681
      %v6683 = vsel %vm2974, %v6644, 0.0
      %v6684 = vadd.f32 %v6682, %v6683
      %v6685 = vsel %vm2974, %v6645, 0.0
      %v6686 = vadd.f32 %v6684, %v6685
      %v6687 = vsel %vm2974, %v6646, 0.0
      %v6688 = vadd.f32 %v6686, %v6687
      %v6689 = vsel %vm2974, %v6647, 0.0
      %v6690 = vadd.f32 %v6688, %v6689
      %v6691 = vsel %vm2974, %v6648, 0.0
      %v6692 = vadd.f32 %v6690, %v6691
      %v6693 = vsel %vm2974, %v6649, 0.0
      %v6694 = vadd.f32 %v6692, %v6693
      %v6695 = vsel %vm2974, %v6650, 0.0
      %v6696 = vadd.f32 %v6694, %v6695
      %v6697 = vsel %vm2974, %v6651, 0.0
      %v6698 = vadd.f32 %v6696, %v6697
      %v6699 = vsel %vm2974, %v6652, 0.0
      %v6700 = vadd.f32 %v6698, %v6699
      %v6701 = vsel %vm2974, %v6653, 0.0
      %v6702 = vadd.f32 %v6700, %v6701
      %v6703 = vsel %vm2974, %v6654, 0.0
      %v6704 = vadd.f32 %v6702, %v6703
      %v6705 = vsel %vm2974, %v6655, 0.0
      %v6706 = vadd.f32 %v6704, %v6705
      %v6707 = vsel %vm2974, %v6656, 0.0
      %v6708 = vadd.f32 %v6706, %v6707
      %v6709 = vsel %vm2974, %v6657, 0.0
      %v6710 = vadd.f32 %v6708, %v6709
      %v6711 = vsel %vm2974, %v6658, 0.0
      %v6712 = vadd.f32 %v6710, %v6711
      %v6713 = vsel %vm2974, %v6659, 0.0
      %v6714 = vadd.f32 %v6712, %v6713
      %v6715 = vsel %vm2974, %v6660, 0.0
      %v6716 = vadd.f32 %v6714, %v6715
      %v6717 = vsel %vm2974, %v6661, 0.0
      %v6718 = vadd.f32 %v6716, %v6717
      %v6719 = vsel %vm2974, %v6662, 0.0
      %v6720 = vadd.f32 %v6718, %v6719
      %v6721 = vsel %vm2974, %v6663, 0.0
      %v6722 = vadd.f32 %v6720, %v6721
      %v6723 = vsel %vm2974, %v6664, 0.0
      %v6724 = vadd.f32 %v6722, %v6723
      %v6725 = vsel %vm2974, %v6665, 0.0
      %v6726 = vadd.f32 %v6724, %v6725
      %v6727 = vsel %vm2974, %v6666, 0.0
      %v6728 = vadd.f32 %v6726, %v6727
      %v6729 = vsel %vm2974, %v6667, 0.0
      %v6730 = vadd.f32 %v6728, %v6729
      %v6731 = vrot.slane %v6730, 4
      %v6732 = vadd.f32 %v6730, %v6731
      %v6733 = vrot.slane %v6732, 2
      %v6734 = vadd.f32 %v6732, %v6733
      %v6735 = vrot.slane %v6734, 1
      %v6736 = vadd.f32 %v6734, %v6735
      %v6737 = vmul.f32 %v6736, %v3050
      %6738 = vxpose.xlu0.b32.start [1/16] %v6737, 128
      %6739 = vxpose.xlu0.b32.cont [2/16] 0.0, 128
      %6740 = vxpose.xlu0.b32.cont [3/16] 0.0, 128
      %6741 = vxpose.xlu0.b32.cont [4/16] 0.0, 128
      %6742 = vxpose.xlu0.b32.cont [5/16] 0.0, 128
      %6743 = vxpose.xlu0.b32.cont [6/16] 0.0, 128
      %6744 = vxpose.xlu0.b32.cont [7/16] 0.0, 128
      %6745 = vxpose.xlu0.b32.cont [8/16] 0.0, 128
      %6746 = vxpose.xlu0.b32.cont [9/16] 0.0, 128
      %6747 = vxpose.xlu0.b32.cont [10/16] 0.0, 128
      %6748 = vxpose.xlu0.b32.cont [11/16] 0.0, 128
      %6749 = vxpose.xlu0.b32.cont [12/16] 0.0, 128
      %6750 = vxpose.xlu0.b32.cont [13/16] 0.0, 128
      %6751 = vxpose.xlu0.b32.cont [14/16] 0.0, 128
      %6752 = vxpose.xlu0.b32.cont [15/16] 0.0, 128
      %6753 = vxpose.xlu0.b32.end [16/16] 0.0, 128
      %v6754 = vpop.trf.xlu0
      %v6755 = vpop.trf.xlu0
      %v6756 = vpop.trf.xlu0
      %v6757 = vpop.trf.xlu0
      %v6758 = vpop.trf.xlu0
      %v6759 = vpop.trf.xlu0
      %v6760 = vpop.trf.xlu0
      %v6761 = vpop.trf.xlu0
      %v6762 = vpop.trf.xlu0
      %v6763 = vpop.trf.xlu0
      %v6764 = vpop.trf.xlu0
      %v6765 = vpop.trf.xlu0
      %v6766 = vpop.trf.xlu0
      %v6767 = vpop.trf.xlu0
      %v6768 = vpop.trf.xlu0
      %v6769 = vpop.trf.xlu0
      %6771 = vset.pattern.permute.xlu0 0
      %6772 = vperm.xlu0 %6771, %v6754
      %v6773 = vpop.permute.xlu0 %6772
      %6776 = vset.pattern.permute.xlu0 0
      %6777 = vperm.xlu0 %6776, %v6755
      %v6778 = vpop.permute.xlu0 %6777
      %6781 = vset.pattern.permute.xlu0 0
      %6782 = vperm.xlu0 %6781, %v6756
      %v6783 = vpop.permute.xlu0 %6782
      %6786 = vset.pattern.permute.xlu0 0
      %6787 = vperm.xlu0 %6786, %v6757
      %v6788 = vpop.permute.xlu0 %6787
      %6791 = vset.pattern.permute.xlu0 0
      %6792 = vperm.xlu0 %6791, %v6758
      %v6793 = vpop.permute.xlu0 %6792
      %6796 = vset.pattern.permute.xlu0 0
      %6797 = vperm.xlu0 %6796, %v6759
      %v6798 = vpop.permute.xlu0 %6797
      %6801 = vset.pattern.permute.xlu0 0
      %6802 = vperm.xlu0 %6801, %v6760
      %v6803 = vpop.permute.xlu0 %6802
      %6806 = vset.pattern.permute.xlu0 0
      %6807 = vperm.xlu0 %6806, %v6761
      %v6808 = vpop.permute.xlu0 %6807
      %v6810 = vsub.f32 %v6737, %v6773
      %v6811 = vsub.f32 %v6737, %v6778
      %v6812 = vsub.f32 %v6737, %v6783
      %v6813 = vsub.f32 %v6737, %v6788
      %v6814 = vsub.f32 %v6737, %v6793
      %v6815 = vsub.f32 %v6737, %v6798
      %v6816 = vsub.f32 %v6737, %v6803
      %v6817 = vsub.f32 %v6737, %v6808
      %v6818 = vmul.f32 %v6810, %v6810
      %v6819 = vmul.f32 %v6811, %v6811
      %v6820 = vmul.f32 %v6812, %v6812
      %v6821 = vmul.f32 %v6813, %v6813
      %v6822 = vmul.f32 %v6814, %v6814
      %v6823 = vmul.f32 %v6815, %v6815
      %v6824 = vmul.f32 %v6816, %v6816
      %v6825 = vmul.f32 %v6817, %v6817
      %v6826 = vsub.f32 0.0, %v6818
      %v6827 = vsub.f32 0.0, %v6819
      %v6828 = vsub.f32 0.0, %v6820
      %v6829 = vsub.f32 0.0, %v6821
      %v6830 = vsub.f32 0.0, %v6822
      %v6831 = vsub.f32 0.0, %v6823
      %v6832 = vsub.f32 0.0, %v6824
      %v6833 = vsub.f32 0.0, %v6825
      %v6834 = vsel %vm2974, %v6826, -inf
      %v6835 = vsel %vm2974, %v6827, -inf
      %v6836 = vsel %vm2974, %v6828, -inf
      %v6837 = vsel %vm2974, %v6829, -inf
      %v6838 = vsel %vm2974, %v6830, -inf
      %v6839 = vmax.f32 %v6834, %v6838
      %v6840 = vsel %vm2974, %v6831, -inf
      %v6841 = vmax.f32 %v6835, %v6840
      %v6842 = vsel %vm2974, %v6832, -inf
      %v6843 = vmax.f32 %v6836, %v6842
      %v6844 = vsel %vm2974, %v6833, -inf
      %v6845 = vmax.f32 %v6837, %v6844
      %v6846 = vmax.f32 %v6839, %v6841
      %v6847 = vmax.f32 %v6843, %v6845
      %v6848 = vmax.f32 %v6846, %v6847
      %v6849 = vrot.slane %v6848, 4
      %v6850 = vmax.f32 %v6848, %v6849
      %v6851 = vrot.slane %v6850, 2
      %v6852 = vmax.f32 %v6850, %v6851
      %v6853 = vrot.slane %v6852, 1
      %v6854 = vmax.f32 %v6852, %v6853
      %v6855 = vsub.f32 %v6826, %v6854
      %v6856 = vsub.f32 %v6827, %v6854
      %v6857 = vsub.f32 %v6828, %v6854
      %v6858 = vsub.f32 %v6829, %v6854
      %v6859 = vsub.f32 %v6830, %v6854
      %v6860 = vsub.f32 %v6831, %v6854
      %v6861 = vsub.f32 %v6832, %v6854
      %v6862 = vsub.f32 %v6833, %v6854
      %v6863 = vmul.f32 %v6855, 1.442695
      %v6864 = vpow.pop %v6863
      %v6865 = vmul.f32 %v6856, 1.442695
      %v6866 = vpow.pop %v6865
      %v6867 = vmul.f32 %v6857, 1.442695
      %v6868 = vpow.pop %v6867
      %v6869 = vmul.f32 %v6858, 1.442695
      %v6870 = vpow.pop %v6869
      %v6871 = vmul.f32 %v6859, 1.442695
      %v6872 = vpow.pop %v6871
      %v6873 = vmul.f32 %v6860, 1.442695
      %v6874 = vpow.pop %v6873
      %v6875 = vmul.f32 %v6861, 1.442695
      %v6876 = vpow.pop %v6875
      %v6877 = vmul.f32 %v6862, 1.442695
      %v6878 = vpow.pop %v6877
      %v6879 = vsel %vm2974, %v6864, 0.0
      %v6880 = vsel %vm2974, %v6866, 0.0
      %v6881 = vadd.f32 %v6879, %v6880
      %v6882 = vsel %vm2974, %v6868, 0.0
      %v6883 = vadd.f32 %v6881, %v6882
      %v6884 = vsel %vm2974, %v6870, 0.0
      %v6885 = vadd.f32 %v6883, %v6884
      %v6886 = vsel %vm2974, %v6872, 0.0
      %v6887 = vadd.f32 %v6885, %v6886
      %v6888 = vsel %vm2974, %v6874, 0.0
      %v6889 = vadd.f32 %v6887, %v6888
      %v6890 = vsel %vm2974, %v6876, 0.0
      %v6891 = vadd.f32 %v6889, %v6890
      %v6892 = vsel %vm2974, %v6878, 0.0
      %v6893 = vadd.f32 %v6891, %v6892
      %v6894 = vrot.slane %v6893, 4
      %v6895 = vadd.f32 %v6893, %v6894
      %v6896 = vrot.slane %v6895, 2
      %v6897 = vadd.f32 %v6895, %v6896
      %v6898 = vrot.slane %v6897, 1
      %v6899 = vadd.f32 %v6897, %v6898
      %v6900 = vrcp.pop %v6899
      %v6901 = vmul.f32 %v6899, %v6900
      %v6902 = vsub.f32 1.0, %v6901
      %v6903 = vmul.f32 %v6900, %v6902
      %v6904 = vadd.f32 %v6900, %v6903
      %vm6905 = vweird.f32 %v6899
      %vm6906 = vweird.f32 %v6900
      %vm6907 = vmor %vm6905, %vm6906
      %v6908 = vsel %vm6907, %v6900, %v6904
      %v6909 = vand.u32 2147483647, %v6899
      %vm6910 = vcmp.eq.f32.partialorder %v6909, 8.507059e+37
      %v6911 = vand.u32 %v6899, 2147483648
      %v6912 = vor.u32 1.1754944e-38, %v6911
      %v6913 = vsel %vm6910, %v6912, %v6908
      %v6914 = vmul.f32 %v6864, %v6913
      %v6915 = vmul.f32 %v6866, %v6913
      %v6916 = vmul.f32 %v6868, %v6913
      %v6917 = vmul.f32 %v6870, %v6913
      %v6918 = vmul.f32 %v6872, %v6913
      %v6919 = vmul.f32 %v6874, %v6913
      %v6920 = vmul.f32 %v6876, %v6913
      %v6921 = vmul.f32 %v6878, %v6913
      %v6923 = vsel %vm2974, %v6636, 0
      %v6926 = vsel %vm2974, %v6637, 0
      %v6929 = vsel %vm2974, %v6638, 0
      %v6932 = vsel %vm2974, %v6639, 0
      %v6935 = vsel %vm2974, %v6640, 0
      %v6938 = vsel %vm2974, %v6641, 0
      %v6941 = vsel %vm2974, %v6642, 0
      %v6944 = vsel %vm2974, %v6643, 0
      %v6947 = vsel %vm2974, %v6644, 0
      %v6950 = vsel %vm2974, %v6645, 0
      %v6953 = vsel %vm2974, %v6646, 0
      %v6956 = vsel %vm2974, %v6647, 0
      %v6959 = vsel %vm2974, %v6648, 0
      %v6962 = vsel %vm2974, %v6649, 0
      %v6965 = vsel %vm2974, %v6650, 0
      %v6968 = vsel %vm2974, %v6651, 0
      %v6971 = vsel %vm2974, %v6652, 0
      %v6974 = vsel %vm2974, %v6653, 0
      %v6977 = vsel %vm2974, %v6654, 0
      %v6980 = vsel %vm2974, %v6655, 0
      %v6983 = vsel %vm2974, %v6656, 0
      %v6986 = vsel %vm2974, %v6657, 0
      %v6989 = vsel %vm2974, %v6658, 0
      %v6992 = vsel %vm2974, %v6659, 0
      %v6995 = vsel %vm2974, %v6660, 0
      %v6998 = vsel %vm2974, %v6661, 0
      %v7001 = vsel %vm2974, %v6662, 0
      %v7004 = vsel %vm2974, %v6663, 0
      %v7007 = vsel %vm2974, %v6664, 0
      %v7010 = vsel %vm2974, %v6665, 0
      %v7013 = vsel %vm2974, %v6666, 0
      %v7016 = vsel %vm2974, %v6667, 0
      %7018 = vmatpush.msra.mxu0 0.0
      %7019 = vmatpush.msra.mxu0 0.0
      %7020 = vmatpush.msra.mxu0 0.0
      %7021 = vmatpush.msra.mxu0 0.0
      %7022 = vmatpush.msra.mxu0 0.0
      %7023 = vmatpush.msra.mxu0 0.0
      %7024 = vmatpush.msra.mxu0 0.0
      %7025 = vmatpush.msra.mxu0 0.0
      %7026 = vmatpush.msra.mxu0 %v6921
      %7027 = vmatpush.msra.mxu0 %v6920
      %7028 = vmatpush.msra.mxu0 %v6919
      %7029 = vmatpush.msra.mxu0 %v6918
      %7030 = vmatpush.msra.mxu0 %v6917
      %7031 = vmatpush.msra.mxu0 %v6916
      %7032 = vmatpush.msra.mxu0 %v6915
      %7033 = vmatpush.msra.mxu0 %v6914
      %7034 = vmatmul.f32.gmra.mxu0 %v6923
      %v7035 = vpop.f32.mrf.mxu0
      %v7036 = vadd.f32 0.0, %v7035
      %7037 = vmatmul.f32.gmra.mxu0 %v6926
      %v7038 = vpop.f32.mrf.mxu0
      %v7039 = vadd.f32 0.0, %v7038
      %7040 = vmatmul.f32.gmra.mxu0 %v6929
      %v7041 = vpop.f32.mrf.mxu0
      %v7042 = vadd.f32 0.0, %v7041
      %7043 = vmatmul.f32.gmra.mxu0 %v6932
      %v7044 = vpop.f32.mrf.mxu0
      %v7045 = vadd.f32 0.0, %v7044
      %7046 = vmatmul.f32.gmra.mxu0 %v6935
      %v7047 = vpop.f32.mrf.mxu0
      %v7048 = vadd.f32 0.0, %v7047
      %7049 = vmatmul.f32.gmra.mxu0 %v6938
      %v7050 = vpop.f32.mrf.mxu0
      %v7051 = vadd.f32 0.0, %v7050
      %7052 = vmatmul.f32.gmra.mxu0 %v6941
      %v7053 = vpop.f32.mrf.mxu0
      %v7054 = vadd.f32 0.0, %v7053
      %7055 = vmatmul.f32.gmra.mxu0 %v6944
      %v7056 = vpop.f32.mrf.mxu0
      %v7057 = vadd.f32 0.0, %v7056
      %7058 = vmatmul.f32.gmra.mxu0 %v6947
      %v7059 = vpop.f32.mrf.mxu0
      %v7060 = vadd.f32 0.0, %v7059
      %7061 = vmatmul.f32.gmra.mxu0 %v6950
      %v7062 = vpop.f32.mrf.mxu0
      %v7063 = vadd.f32 0.0, %v7062
      %7064 = vmatmul.f32.gmra.mxu0 %v6953
      %v7065 = vpop.f32.mrf.mxu0
      %v7066 = vadd.f32 0.0, %v7065
      %7067 = vmatmul.f32.gmra.mxu0 %v6956
      %v7068 = vpop.f32.mrf.mxu0
      %v7069 = vadd.f32 0.0, %v7068
      %7070 = vmatmul.f32.gmra.mxu0 %v6959
      %v7071 = vpop.f32.mrf.mxu0
      %v7072 = vadd.f32 0.0, %v7071
      %7073 = vmatmul.f32.gmra.mxu0 %v6962
      %v7074 = vpop.f32.mrf.mxu0
      %v7075 = vadd.f32 0.0, %v7074
      %7076 = vmatmul.f32.gmra.mxu0 %v6965
      %v7077 = vpop.f32.mrf.mxu0
      %v7078 = vadd.f32 0.0, %v7077
      %7079 = vmatmul.f32.gmra.mxu0 %v6968
      %v7080 = vpop.f32.mrf.mxu0
      %v7081 = vadd.f32 0.0, %v7080
      %7082 = vmatmul.f32.gmra.mxu0 %v6971
      %v7083 = vpop.f32.mrf.mxu0
      %v7084 = vadd.f32 0.0, %v7083
      %7085 = vmatmul.f32.gmra.mxu0 %v6974
      %v7086 = vpop.f32.mrf.mxu0
      %v7087 = vadd.f32 0.0, %v7086
      %7088 = vmatmul.f32.gmra.mxu0 %v6977
      %v7089 = vpop.f32.mrf.mxu0
      %v7090 = vadd.f32 0.0, %v7089
      %7091 = vmatmul.f32.gmra.mxu0 %v6980
      %v7092 = vpop.f32.mrf.mxu0
      %v7093 = vadd.f32 0.0, %v7092
      %7094 = vmatmul.f32.gmra.mxu0 %v6983
      %v7095 = vpop.f32.mrf.mxu0
      %v7096 = vadd.f32 0.0, %v7095
      %7097 = vmatmul.f32.gmra.mxu0 %v6986
      %v7098 = vpop.f32.mrf.mxu0
      %v7099 = vadd.f32 0.0, %v7098
      %7100 = vmatmul.f32.gmra.mxu0 %v6989
      %v7101 = vpop.f32.mrf.mxu0
      %v7102 = vadd.f32 0.0, %v7101
      %7103 = vmatmul.f32.gmra.mxu0 %v6992
      %v7104 = vpop.f32.mrf.mxu0
      %v7105 = vadd.f32 0.0, %v7104
      %7106 = vmatmul.f32.gmra.mxu0 %v6995
      %v7107 = vpop.f32.mrf.mxu0
      %v7108 = vadd.f32 0.0, %v7107
      %7109 = vmatmul.f32.gmra.mxu0 %v6998
      %v7110 = vpop.f32.mrf.mxu0
      %v7111 = vadd.f32 0.0, %v7110
      %7112 = vmatmul.f32.gmra.mxu0 %v7001
      %v7113 = vpop.f32.mrf.mxu0
      %v7114 = vadd.f32 0.0, %v7113
      %7115 = vmatmul.f32.gmra.mxu0 %v7004
      %v7116 = vpop.f32.mrf.mxu0
      %v7117 = vadd.f32 0.0, %v7116
      %7118 = vmatmul.f32.gmra.mxu0 %v7007
      %v7119 = vpop.f32.mrf.mxu0
      %v7120 = vadd.f32 0.0, %v7119
      %7121 = vmatmul.f32.gmra.mxu0 %v7010
      %v7122 = vpop.f32.mrf.mxu0
      %v7123 = vadd.f32 0.0, %v7122
      %7124 = vmatmul.f32.gmra.mxu0 %v7013
      %v7125 = vpop.f32.mrf.mxu0
      %v7126 = vadd.f32 0.0, %v7125
      %7127 = vmatmul.f32.gmra.mxu0 %v7016
      %v7128 = vpop.f32.mrf.mxu0
      %v7129 = vadd.f32 0.0, %v7128
      %7130 = vdwg.mxu0
      %v7131 = vmul.f32 %v7036, 0.1
      %v7132 = vmul.f32 %v7039, 0.1
      %v7133 = vmul.f32 %v7042, 0.1
      %v7134 = vmul.f32 %v7045, 0.1
      %v7135 = vmul.f32 %v7048, 0.1
      %v7136 = vmul.f32 %v7051, 0.1
      %v7137 = vmul.f32 %v7054, 0.1
      %v7138 = vmul.f32 %v7057, 0.1
      %v7139 = vmul.f32 %v7060, 0.1
      %v7140 = vmul.f32 %v7063, 0.1
      %v7141 = vmul.f32 %v7066, 0.1
      %v7142 = vmul.f32 %v7069, 0.1
      %v7143 = vmul.f32 %v7072, 0.1
      %v7144 = vmul.f32 %v7075, 0.1
      %v7145 = vmul.f32 %v7078, 0.1
      %v7146 = vmul.f32 %v7081, 0.1
      %v7147 = vmul.f32 %v7084, 0.1
      %v7148 = vmul.f32 %v7087, 0.1
      %v7149 = vmul.f32 %v7090, 0.1
      %v7150 = vmul.f32 %v7093, 0.1
      %v7151 = vmul.f32 %v7096, 0.1
      %v7152 = vmul.f32 %v7099, 0.1
      %v7153 = vmul.f32 %v7102, 0.1
      %v7154 = vmul.f32 %v7105, 0.1
      %v7155 = vmul.f32 %v7108, 0.1
      %v7156 = vmul.f32 %v7111, 0.1
      %v7157 = vmul.f32 %v7114, 0.1
      %v7158 = vmul.f32 %v7117, 0.1
      %v7159 = vmul.f32 %v7120, 0.1
      %v7160 = vmul.f32 %v7123, 0.1
      %v7161 = vmul.f32 %v7126, 0.1
      %v7162 = vmul.f32 %v7129, 0.1
      %v7163 = vadd.f32 %v6636, %v7131
      %v7164 = vadd.f32 %v6637, %v7132
      %v7165 = vadd.f32 %v6638, %v7133
      %v7166 = vadd.f32 %v6639, %v7134
      %v7167 = vadd.f32 %v6640, %v7135
      %v7168 = vadd.f32 %v6641, %v7136
      %v7169 = vadd.f32 %v6642, %v7137
      %v7170 = vadd.f32 %v6643, %v7138
      %v7171 = vadd.f32 %v6644, %v7139
      %v7172 = vadd.f32 %v6645, %v7140
      %v7173 = vadd.f32 %v6646, %v7141
      %v7174 = vadd.f32 %v6647, %v7142
      %v7175 = vadd.f32 %v6648, %v7143
      %v7176 = vadd.f32 %v6649, %v7144
      %v7177 = vadd.f32 %v6650, %v7145
      %v7178 = vadd.f32 %v6651, %v7146
      %v7179 = vadd.f32 %v6652, %v7147
      %v7180 = vadd.f32 %v6653, %v7148
      %v7181 = vadd.f32 %v6654, %v7149
      %v7182 = vadd.f32 %v6655, %v7150
      %v7183 = vadd.f32 %v6656, %v7151
      %v7184 = vadd.f32 %v6657, %v7152
      %v7185 = vadd.f32 %v6658, %v7153
      %v7186 = vadd.f32 %v6659, %v7154
      %v7187 = vadd.f32 %v6660, %v7155
      %v7188 = vadd.f32 %v6661, %v7156
      %v7189 = vadd.f32 %v6662, %v7157
      %v7190 = vadd.f32 %v6663, %v7158
      %v7191 = vadd.f32 %v6664, %v7159
      %v7192 = vadd.f32 %v6665, %v7160
      %v7193 = vadd.f32 %v6666, %v7161
      %v7194 = vadd.f32 %v6667, %v7162
      %v7195 = vmax.f32 %v7163, 0.0
      %v7196 = vmax.f32 %v7164, 0.0
      %v7197 = vmax.f32 %v7165, 0.0
      %v7198 = vmax.f32 %v7166, 0.0
      %v7199 = vmax.f32 %v7167, 0.0
      %v7200 = vmax.f32 %v7168, 0.0
      %v7201 = vmax.f32 %v7169, 0.0
      %v7202 = vmax.f32 %v7170, 0.0
      %v7203 = vmax.f32 %v7171, 0.0
      %v7204 = vmax.f32 %v7172, 0.0
      %v7205 = vmax.f32 %v7173, 0.0
      %v7206 = vmax.f32 %v7174, 0.0
      %v7207 = vmax.f32 %v7175, 0.0
      %v7208 = vmax.f32 %v7176, 0.0
      %v7209 = vmax.f32 %v7177, 0.0
      %v7210 = vmax.f32 %v7178, 0.0
      %v7211 = vmax.f32 %v7179, 0.0
      %v7212 = vmax.f32 %v7180, 0.0
      %v7213 = vmax.f32 %v7181, 0.0
      %v7214 = vmax.f32 %v7182, 0.0
      %v7215 = vmax.f32 %v7183, 0.0
      %v7216 = vmax.f32 %v7184, 0.0
      %v7217 = vmax.f32 %v7185, 0.0
      %v7218 = vmax.f32 %v7186, 0.0
      %v7219 = vmax.f32 %v7187, 0.0
      %v7220 = vmax.f32 %v7188, 0.0
      %v7221 = vmax.f32 %v7189, 0.0
      %v7222 = vmax.f32 %v7190, 0.0
      %v7223 = vmax.f32 %v7191, 0.0
      %v7224 = vmax.f32 %v7192, 0.0
      %v7225 = vmax.f32 %v7193, 0.0
      %v7226 = vmax.f32 %v7194, 0.0
      %7227 = vst.msk [vmem:[#allocation3] sm:$0xff] %vm2974, 0.0
      %7228 = vst.msk [vmem:[#allocation3 + $0x8] sm:$0xff] %vm2974, 0.0
      %7229 = vst.msk [vmem:[#allocation3 + $0x10] sm:$0xff] %vm2974, 0.0
      %7230 = vst.msk [vmem:[#allocation3 + $0x18] sm:$0xff] %vm2974, 0.0
      %7231 = vst.msk [vmem:[#allocation3 + $0x20] sm:$0xff] %vm2974, 0.0
      %7232 = vst.msk [vmem:[#allocation3 + $0x28] sm:$0xff] %vm2974, 0.0
      %7233 = vst.msk [vmem:[#allocation3 + $0x30] sm:$0xff] %vm2974, 0.0
      %7234 = vst.msk [vmem:[#allocation3 + $0x38] sm:$0xff] %vm2974, 0.0
      %7235 = vst.msk [vmem:[#allocation3 + $0x40] sm:$0xff] %vm2974, 0.0
      %7236 = vst.msk [vmem:[#allocation3 + $0x48] sm:$0xff] %vm2974, 0.0
      %7237 = vst.msk [vmem:[#allocation3 + $0x50] sm:$0xff] %vm2974, 0.0
      %7238 = vst.msk [vmem:[#allocation3 + $0x58] sm:$0xff] %vm2974, 0.0
      %7239 = vst.msk [vmem:[#allocation3 + $0x60] sm:$0xff] %vm2974, 0.0
      %7240 = vst.msk [vmem:[#allocation3 + $0x68] sm:$0xff] %vm2974, 0.0
      %7241 = vst.msk [vmem:[#allocation3 + $0x70] sm:$0xff] %vm2974, 0.0
      %7242 = vst.msk [vmem:[#allocation3 + $0x78] sm:$0xff] %vm2974, 0.0
      %7243 = vst.msk [vmem:[#allocation3 + $0x80] sm:$0xff] %vm2974, 0.0
      %7244 = vst.msk [vmem:[#allocation3 + $0x88] sm:$0xff] %vm2974, 0.0
      %7245 = vst.msk [vmem:[#allocation3 + $0x90] sm:$0xff] %vm2974, 0.0
      %7246 = vst.msk [vmem:[#allocation3 + $0x98] sm:$0xff] %vm2974, 0.0
      %7247 = vst.msk [vmem:[#allocation3 + $0xa0] sm:$0xff] %vm2974, 0.0
      %7248 = vst.msk [vmem:[#allocation3 + $0xa8] sm:$0xff] %vm2974, 0.0
      %7249 = vst.msk [vmem:[#allocation3 + $0xb0] sm:$0xff] %vm2974, 0.0
      %7250 = vst.msk [vmem:[#allocation3 + $0xb8] sm:$0xff] %vm2974, 0.0
      %7251 = vst.msk [vmem:[#allocation3 + $0xc0] sm:$0xff] %vm2974, 0.0
      %7252 = vst.msk [vmem:[#allocation3 + $0xc8] sm:$0xff] %vm2974, 0.0
      %7253 = vst.msk [vmem:[#allocation3 + $0xd0] sm:$0xff] %vm2974, 0.0
      %7254 = vst.msk [vmem:[#allocation3 + $0xd8] sm:$0xff] %vm2974, 0.0
      %7255 = vst.msk [vmem:[#allocation3 + $0xe0] sm:$0xff] %vm2974, 0.0
      %7256 = vst.msk [vmem:[#allocation3 + $0xe8] sm:$0xff] %vm2974, 0.0
      %7257 = vst.msk [vmem:[#allocation3 + $0xf0] sm:$0xff] %vm2974, 0.0
      %7258 = vst.msk [vmem:[#allocation3 + $0xf8] sm:$0xff] %vm2974, 0.0
      %7259 = vst.msk [vmem:[#allocation3 + $0x100] sm:$0xff] %vm2974, 0.0
      %7260 = vst.msk [vmem:[#allocation3 + $0x108] sm:$0xff] %vm2974, 0.0
      %7261 = vst.msk [vmem:[#allocation3 + $0x110] sm:$0xff] %vm2974, 0.0
      %7262 = vst.msk [vmem:[#allocation3 + $0x118] sm:$0xff] %vm2974, 0.0
      %7263 = vst.msk [vmem:[#allocation3 + $0x120] sm:$0xff] %vm2974, 0.0
      %7264 = vst.msk [vmem:[#allocation3 + $0x128] sm:$0xff] %vm2974, 0.0
      %7265 = vst.msk [vmem:[#allocation3 + $0x130] sm:$0xff] %vm2974, 0.0
      %7266 = vst.msk [vmem:[#allocation3 + $0x138] sm:$0xff] %vm2974, 0.0
      %7267 = vst.msk [vmem:[#allocation3 + $0x140] sm:$0xff] %vm2974, 0.0
      %7268 = vst.msk [vmem:[#allocation3 + $0x148] sm:$0xff] %vm2974, 0.0
      %7269 = vst.msk [vmem:[#allocation3 + $0x150] sm:$0xff] %vm2974, 0.0
      %7270 = vst.msk [vmem:[#allocation3 + $0x158] sm:$0xff] %vm2974, 0.0
      %7271 = vst.msk [vmem:[#allocation3 + $0x160] sm:$0xff] %vm2974, 0.0
      %7272 = vst.msk [vmem:[#allocation3 + $0x168] sm:$0xff] %vm2974, 0.0
      %7273 = vst.msk [vmem:[#allocation3 + $0x170] sm:$0xff] %vm2974, 0.0
      %7274 = vst.msk [vmem:[#allocation3 + $0x178] sm:$0xff] %vm2974, 0.0
      %7275 = vst.msk [vmem:[#allocation3 + $0x180] sm:$0xff] %vm2974, 0.0
      %7276 = vst.msk [vmem:[#allocation3 + $0x188] sm:$0xff] %vm2974, 0.0
      %7277 = vst.msk [vmem:[#allocation3 + $0x190] sm:$0xff] %vm2974, 0.0
      %7278 = vst.msk [vmem:[#allocation3 + $0x198] sm:$0xff] %vm2974, 0.0
      %7279 = vst.msk [vmem:[#allocation3 + $0x1a0] sm:$0xff] %vm2974, 0.0
      %7280 = vst.msk [vmem:[#allocation3 + $0x1a8] sm:$0xff] %vm2974, 0.0
      %7281 = vst.msk [vmem:[#allocation3 + $0x1b0] sm:$0xff] %vm2974, 0.0
      %7282 = vst.msk [vmem:[#allocation3 + $0x1b8] sm:$0xff] %vm2974, 0.0
      %7283 = vst.msk [vmem:[#allocation3 + $0x1c0] sm:$0xff] %vm2974, 0.0
      %7284 = vst.msk [vmem:[#allocation3 + $0x1c8] sm:$0xff] %vm2974, 0.0
      %7285 = vst.msk [vmem:[#allocation3 + $0x1d0] sm:$0xff] %vm2974, 0.0
      %7286 = vst.msk [vmem:[#allocation3 + $0x1d8] sm:$0xff] %vm2974, 0.0
      %7287 = vst.msk [vmem:[#allocation3 + $0x1e0] sm:$0xff] %vm2974, 0.0
      %7288 = vst.msk [vmem:[#allocation3 + $0x1e8] sm:$0xff] %vm2974, 0.0
      %7289 = vst.msk [vmem:[#allocation3 + $0x1f0] sm:$0xff] %vm2974, 0.0
      %7290 = vst.msk [vmem:[#allocation3 + $0x1f8] sm:$0xff] %vm2974, 0.0
      %7291 = vst.msk [vmem:[#allocation3 + $0x200] sm:$0xff] %vm2974, 0.0
      %7292 = vst.msk [vmem:[#allocation3 + $0x208] sm:$0xff] %vm2974, 0.0
      %7293 = vst.msk [vmem:[#allocation3 + $0x210] sm:$0xff] %vm2974, 0.0
      %7294 = vst.msk [vmem:[#allocation3 + $0x218] sm:$0xff] %vm2974, 0.0
      %7295 = vst.msk [vmem:[#allocation3 + $0x220] sm:$0xff] %vm2974, 0.0
      %7296 = vst.msk [vmem:[#allocation3 + $0x228] sm:$0xff] %vm2974, 0.0
      %7297 = vst.msk [vmem:[#allocation3 + $0x230] sm:$0xff] %vm2974, 0.0
      %7298 = vst.msk [vmem:[#allocation3 + $0x238] sm:$0xff] %vm2974, 0.0
      %7299 = vst.msk [vmem:[%s4125 + $0x8] sm:$0xff] %vm2974, %v7195
      %7300 = vst.msk [vmem:[%s4125 + $0x10] sm:$0xff] %vm2974, %v7196
      %7301 = vst.msk [vmem:[%s4125 + $0x28] sm:$0xff] %vm2974, %v7197
      %7302 = vst.msk [vmem:[%s4125 + $0x30] sm:$0xff] %vm2974, %v7198
      %7303 = vst.msk [vmem:[%s4125 + $0x48] sm:$0xff] %vm2974, %v7199
      %7304 = vst.msk [vmem:[%s4125 + $0x50] sm:$0xff] %vm2974, %v7200
      %7305 = vst.msk [vmem:[%s4125 + $0x68] sm:$0xff] %vm2974, %v7201
      %7306 = vst.msk [vmem:[%s4125 + $0x70] sm:$0xff] %vm2974, %v7202
      %7307 = vst.msk [vmem:[%s4125 + $0x88] sm:$0xff] %vm2974, %v7203
      %7308 = vst.msk [vmem:[%s4125 + $0x90] sm:$0xff] %vm2974, %v7204
      %7309 = vst.msk [vmem:[%s4125 + $0xa8] sm:$0xff] %vm2974, %v7205
      %7310 = vst.msk [vmem:[%s4125 + $0xb0] sm:$0xff] %vm2974, %v7206
      %7311 = vst.msk [vmem:[%s4125 + $0xc8] sm:$0xff] %vm2974, %v7207
      %7312 = vst.msk [vmem:[%s4125 + $0xd0] sm:$0xff] %vm2974, %v7208
      %7313 = vst.msk [vmem:[%s4125 + $0xe8] sm:$0xff] %vm2974, %v7209
      %7314 = vst.msk [vmem:[%s4125 + $0xf0] sm:$0xff] %vm2974, %v7210
      %7315 = vst.msk [vmem:[%s4125 + $0x108] sm:$0xff] %vm2974, %v7211
      %7316 = vst.msk [vmem:[%s4125 + $0x110] sm:$0xff] %vm2974, %v7212
      %7317 = vst.msk [vmem:[%s4125 + $0x128] sm:$0xff] %vm2974, %v7213
      %7318 = vst.msk [vmem:[%s4125 + $0x130] sm:$0xff] %vm2974, %v7214
      %7319 = vst.msk [vmem:[%s4125 + $0x148] sm:$0xff] %vm2974, %v7215
      %7320 = vst.msk [vmem:[%s4125 + $0x150] sm:$0xff] %vm2974, %v7216
      %7321 = vst.msk [vmem:[%s4125 + $0x168] sm:$0xff] %vm2974, %v7217
      %7322 = vst.msk [vmem:[%s4125 + $0x170] sm:$0xff] %vm2974, %v7218
      %7323 = vst.msk [vmem:[%s4125 + $0x188] sm:$0xff] %vm2974, %v7219
      %7324 = vst.msk [vmem:[%s4125 + $0x190] sm:$0xff] %vm2974, %v7220
      %7325 = vst.msk [vmem:[%s4125 + $0x1a8] sm:$0xff] %vm2974, %v7221
      %7326 = vst.msk [vmem:[%s4125 + $0x1b0] sm:$0xff] %vm2974, %v7222
      %7327 = vst.msk [vmem:[%s4125 + $0x1c8] sm:$0xff] %vm2974, %v7223
      %7328 = vst.msk [vmem:[%s4125 + $0x1d0] sm:$0xff] %vm2974, %v7224
      %7329 = vst.msk [vmem:[%s4125 + $0x1e8] sm:$0xff] %vm2974, %v7225
      %7330 = vst.msk [vmem:[%s4125 + $0x1f0] sm:$0xff] %vm2974, %v7226
      %v7331 = vld [vmem:[#allocation3 + $0x7] sm:$0xff]
      %v7332 = vld [vmem:[#allocation3 + $0xf] sm:$0xff]
      %v7333 = vld [vmem:[#allocation3 + $0x27] sm:$0xff]
      %v7334 = vld [vmem:[#allocation3 + $0x2f] sm:$0xff]
      %v7335 = vld [vmem:[#allocation3 + $0x47] sm:$0xff]
      %v7336 = vld [vmem:[#allocation3 + $0x4f] sm:$0xff]
      %v7337 = vld [vmem:[#allocation3 + $0x67] sm:$0xff]
      %v7338 = vld [vmem:[#allocation3 + $0x6f] sm:$0xff]
      %v7339 = vld [vmem:[#allocation3 + $0x87] sm:$0xff]
      %v7340 = vld [vmem:[#allocation3 + $0x8f] sm:$0xff]
      %v7341 = vld [vmem:[#allocation3 + $0xa7] sm:$0xff]
      %v7342 = vld [vmem:[#allocation3 + $0xaf] sm:$0xff]
      %v7343 = vld [vmem:[#allocation3 + $0xc7] sm:$0xff]
      %v7344 = vld [vmem:[#allocation3 + $0xcf] sm:$0xff]
      %v7345 = vld [vmem:[#allocation3 + $0xe7] sm:$0xff]
      %v7346 = vld [vmem:[#allocation3 + $0xef] sm:$0xff]
      %v7347 = vld [vmem:[#allocation3 + $0x107] sm:$0xff]
      %v7348 = vld [vmem:[#allocation3 + $0x10f] sm:$0xff]
      %v7349 = vld [vmem:[#allocation3 + $0x127] sm:$0xff]
      %v7350 = vld [vmem:[#allocation3 + $0x12f] sm:$0xff]
      %v7351 = vld [vmem:[#allocation3 + $0x147] sm:$0xff]
      %v7352 = vld [vmem:[#allocation3 + $0x14f] sm:$0xff]
      %v7353 = vld [vmem:[#allocation3 + $0x167] sm:$0xff]
      %v7354 = vld [vmem:[#allocation3 + $0x16f] sm:$0xff]
      %v7355 = vld [vmem:[#allocation3 + $0x187] sm:$0xff]
      %v7356 = vld [vmem:[#allocation3 + $0x18f] sm:$0xff]
      %v7357 = vld [vmem:[#allocation3 + $0x1a7] sm:$0xff]
      %v7358 = vld [vmem:[#allocation3 + $0x1af] sm:$0xff]
      %v7359 = vld [vmem:[#allocation3 + $0x1c7] sm:$0xff]
      %v7360 = vld [vmem:[#allocation3 + $0x1cf] sm:$0xff]
      %v7361 = vld [vmem:[#allocation3 + $0x1e7] sm:$0xff]
      %v7362 = vld [vmem:[#allocation3 + $0x1ef] sm:$0xff]
      %v7363 = vld [vmem:[%s6] sm:$0xff]
      %v7364 = vld [vmem:[%s6 + $0x8] sm:$0xff]
      %v7365 = vld [vmem:[%s6 + $0x10] sm:$0xff]
      %v7366 = vld [vmem:[%s6 + $0x18] sm:$0xff]
      %v7367 = vld [vmem:[%s6 + $0x20] sm:$0xff]
      %v7368 = vld [vmem:[%s6 + $0x28] sm:$0xff]
      %v7369 = vld [vmem:[%s6 + $0x30] sm:$0xff]
      %v7370 = vld [vmem:[%s6 + $0x38] sm:$0xff]
      %v7371 = vld [vmem:[#allocation3 + $0x8] sm:$0xff]
      %v7372 = vld [vmem:[#allocation3 + $0x10] sm:$0xff]
      %v7373 = vld [vmem:[#allocation3 + $0x28] sm:$0xff]
      %v7374 = vld [vmem:[#allocation3 + $0x30] sm:$0xff]
      %v7375 = vld [vmem:[#allocation3 + $0x48] sm:$0xff]
      %v7376 = vld [vmem:[#allocation3 + $0x50] sm:$0xff]
      %v7377 = vld [vmem:[#allocation3 + $0x68] sm:$0xff]
      %v7378 = vld [vmem:[#allocation3 + $0x70] sm:$0xff]
      %v7379 = vld [vmem:[#allocation3 + $0x88] sm:$0xff]
      %v7380 = vld [vmem:[#allocation3 + $0x90] sm:$0xff]
      %v7381 = vld [vmem:[#allocation3 + $0xa8] sm:$0xff]
      %v7382 = vld [vmem:[#allocation3 + $0xb0] sm:$0xff]
      %v7383 = vld [vmem:[#allocation3 + $0xc8] sm:$0xff]
      %v7384 = vld [vmem:[#allocation3 + $0xd0] sm:$0xff]
      %v7385 = vld [vmem:[#allocation3 + $0xe8] sm:$0xff]
      %v7386 = vld [vmem:[#allocation3 + $0xf0] sm:$0xff]
      %v7387 = vld [vmem:[#allocation3 + $0x108] sm:$0xff]
      %v7388 = vld [vmem:[#allocation3 + $0x110] sm:$0xff]
      %v7389 = vld [vmem:[#allocation3 + $0x128] sm:$0xff]
      %v7390 = vld [vmem:[#allocation3 + $0x130] sm:$0xff]
      %v7391 = vld [vmem:[#allocation3 + $0x148] sm:$0xff]
      %v7392 = vld [vmem:[#allocation3 + $0x150] sm:$0xff]
      %v7393 = vld [vmem:[#allocation3 + $0x168] sm:$0xff]
      %v7394 = vld [vmem:[#allocation3 + $0x170] sm:$0xff]
      %v7395 = vld [vmem:[#allocation3 + $0x188] sm:$0xff]
      %v7396 = vld [vmem:[#allocation3 + $0x190] sm:$0xff]
      %v7397 = vld [vmem:[#allocation3 + $0x1a8] sm:$0xff]
      %v7398 = vld [vmem:[#allocation3 + $0x1b0] sm:$0xff]
      %v7399 = vld [vmem:[#allocation3 + $0x1c8] sm:$0xff]
      %v7400 = vld [vmem:[#allocation3 + $0x1d0] sm:$0xff]
      %v7401 = vld [vmem:[#allocation3 + $0x1e8] sm:$0xff]
      %v7402 = vld [vmem:[#allocation3 + $0x1f0] sm:$0xff]
      %s7403 = scalar_lea.vmem %s6, 64
      %v7404 = vld [vmem:[%s7403] sm:$0xff]
      %v7405 = vld [vmem:[%s7403 + $0x8] sm:$0xff]
      %v7406 = vld [vmem:[%s7403 + $0x10] sm:$0xff]
      %v7407 = vld [vmem:[%s7403 + $0x18] sm:$0xff]
      %v7408 = vld [vmem:[%s7403 + $0x20] sm:$0xff]
      %v7409 = vld [vmem:[%s7403 + $0x28] sm:$0xff]
      %v7410 = vld [vmem:[%s7403 + $0x30] sm:$0xff]
      %v7411 = vld [vmem:[%s7403 + $0x38] sm:$0xff]
      %v7413 = vsel %vm2974, %v7371, 0
      %v7416 = vsel %vm2974, %v7372, 0
      %v7419 = vsel %vm2974, %v7373, 0
      %v7422 = vsel %vm2974, %v7374, 0
      %v7425 = vsel %vm2974, %v7375, 0
      %v7428 = vsel %vm2974, %v7376, 0
      %v7431 = vsel %vm2974, %v7377, 0
      %v7434 = vsel %vm2974, %v7378, 0
      %v7437 = vsel %vm2974, %v7379, 0
      %v7440 = vsel %vm2974, %v7380, 0
      %v7443 = vsel %vm2974, %v7381, 0
      %v7446 = vsel %vm2974, %v7382, 0
      %v7449 = vsel %vm2974, %v7383, 0
      %v7452 = vsel %vm2974, %v7384, 0
      %v7455 = vsel %vm2974, %v7385, 0
      %v7458 = vsel %vm2974, %v7386, 0
      %v7461 = vsel %vm2974, %v7387, 0
      %v7464 = vsel %vm2974, %v7388, 0
      %v7467 = vsel %vm2974, %v7389, 0
      %v7470 = vsel %vm2974, %v7390, 0
      %v7473 = vsel %vm2974, %v7391, 0
      %v7476 = vsel %vm2974, %v7392, 0
      %v7479 = vsel %vm2974, %v7393, 0
      %v7482 = vsel %vm2974, %v7394, 0
      %v7485 = vsel %vm2974, %v7395, 0
      %v7488 = vsel %vm2974, %v7396, 0
      %v7491 = vsel %vm2974, %v7397, 0
      %v7494 = vsel %vm2974, %v7398, 0
      %v7497 = vsel %vm2974, %v7399, 0
      %v7500 = vsel %vm2974, %v7400, 0
      %v7503 = vsel %vm2974, %v7401, 0
      %v7506 = vsel %vm2974, %v7402, 0
      %7508 = vmatpush.msra.mxu0 0.0
      %7509 = vmatpush.msra.mxu0 0.0
      %7510 = vmatpush.msra.mxu0 0.0
      %7511 = vmatpush.msra.mxu0 0.0
      %7512 = vmatpush.msra.mxu0 0.0
      %7513 = vmatpush.msra.mxu0 0.0
      %7514 = vmatpush.msra.mxu0 0.0
      %7515 = vmatpush.msra.mxu0 0.0
      %7516 = vmatpush.msra.mxu0 %v7411
      %7517 = vmatpush.msra.mxu0 %v7410
      %7518 = vmatpush.msra.mxu0 %v7409
      %7519 = vmatpush.msra.mxu0 %v7408
      %7520 = vmatpush.msra.mxu0 %v7407
      %7521 = vmatpush.msra.mxu0 %v7406
      %7522 = vmatpush.msra.mxu0 %v7405
      %7523 = vmatpush.msra.mxu0 %v7404
      %7524 = vmatmul.f32.gmra.mxu0 %v7413
      %v7525 = vpop.f32.mrf.mxu0
      %v7526 = vadd.f32 0.0, %v7525
      %7527 = vmatmul.f32.gmra.mxu0 %v7416
      %v7528 = vpop.f32.mrf.mxu0
      %v7529 = vadd.f32 0.0, %v7528
      %7530 = vmatmul.f32.gmra.mxu0 %v7419
      %v7531 = vpop.f32.mrf.mxu0
      %v7532 = vadd.f32 0.0, %v7531
      %7533 = vmatmul.f32.gmra.mxu0 %v7422
      %v7534 = vpop.f32.mrf.mxu0
      %v7535 = vadd.f32 0.0, %v7534
      %7536 = vmatmul.f32.gmra.mxu0 %v7425
      %v7537 = vpop.f32.mrf.mxu0
      %v7538 = vadd.f32 0.0, %v7537
      %7539 = vmatmul.f32.gmra.mxu0 %v7428
      %v7540 = vpop.f32.mrf.mxu0
      %v7541 = vadd.f32 0.0, %v7540
      %7542 = vmatmul.f32.gmra.mxu0 %v7431
      %v7543 = vpop.f32.mrf.mxu0
      %v7544 = vadd.f32 0.0, %v7543
      %7545 = vmatmul.f32.gmra.mxu0 %v7434
      %v7546 = vpop.f32.mrf.mxu0
      %v7547 = vadd.f32 0.0, %v7546
      %7548 = vmatmul.f32.gmra.mxu0 %v7437
      %v7549 = vpop.f32.mrf.mxu0
      %v7550 = vadd.f32 0.0, %v7549
      %7551 = vmatmul.f32.gmra.mxu0 %v7440
      %v7552 = vpop.f32.mrf.mxu0
      %v7553 = vadd.f32 0.0, %v7552
      %7554 = vmatmul.f32.gmra.mxu0 %v7443
      %v7555 = vpop.f32.mrf.mxu0
      %v7556 = vadd.f32 0.0, %v7555
      %7557 = vmatmul.f32.gmra.mxu0 %v7446
      %v7558 = vpop.f32.mrf.mxu0
      %v7559 = vadd.f32 0.0, %v7558
      %7560 = vmatmul.f32.gmra.mxu0 %v7449
      %v7561 = vpop.f32.mrf.mxu0
      %v7562 = vadd.f32 0.0, %v7561
      %7563 = vmatmul.f32.gmra.mxu0 %v7452
      %v7564 = vpop.f32.mrf.mxu0
      %v7565 = vadd.f32 0.0, %v7564
      %7566 = vmatmul.f32.gmra.mxu0 %v7455
      %v7567 = vpop.f32.mrf.mxu0
      %v7568 = vadd.f32 0.0, %v7567
      %7569 = vmatmul.f32.gmra.mxu0 %v7458
      %v7570 = vpop.f32.mrf.mxu0
      %v7571 = vadd.f32 0.0, %v7570
      %7572 = vmatmul.f32.gmra.mxu0 %v7461
      %v7573 = vpop.f32.mrf.mxu0
      %v7574 = vadd.f32 0.0, %v7573
      %7575 = vmatmul.f32.gmra.mxu0 %v7464
      %v7576 = vpop.f32.mrf.mxu0
      %v7577 = vadd.f32 0.0, %v7576
      %7578 = vmatmul.f32.gmra.mxu0 %v7467
      %v7579 = vpop.f32.mrf.mxu0
      %v7580 = vadd.f32 0.0, %v7579
      %7581 = vmatmul.f32.gmra.mxu0 %v7470
      %v7582 = vpop.f32.mrf.mxu0
      %v7583 = vadd.f32 0.0, %v7582
      %7584 = vmatmul.f32.gmra.mxu0 %v7473
      %v7585 = vpop.f32.mrf.mxu0
      %v7586 = vadd.f32 0.0, %v7585
      %7587 = vmatmul.f32.gmra.mxu0 %v7476
      %v7588 = vpop.f32.mrf.mxu0
      %v7589 = vadd.f32 0.0, %v7588
      %7590 = vmatmul.f32.gmra.mxu0 %v7479
      %v7591 = vpop.f32.mrf.mxu0
      %v7592 = vadd.f32 0.0, %v7591
      %7593 = vmatmul.f32.gmra.mxu0 %v7482
      %v7594 = vpop.f32.mrf.mxu0
      %v7595 = vadd.f32 0.0, %v7594
      %7596 = vmatmul.f32.gmra.mxu0 %v7485
      %v7597 = vpop.f32.mrf.mxu0
      %v7598 = vadd.f32 0.0, %v7597
      %7599 = vmatmul.f32.gmra.mxu0 %v7488
      %v7600 = vpop.f32.mrf.mxu0
      %v7601 = vadd.f32 0.0, %v7600
      %7602 = vmatmul.f32.gmra.mxu0 %v7491
      %v7603 = vpop.f32.mrf.mxu0
      %v7604 = vadd.f32 0.0, %v7603
      %7605 = vmatmul.f32.gmra.mxu0 %v7494
      %v7606 = vpop.f32.mrf.mxu0
      %v7607 = vadd.f32 0.0, %v7606
      %7608 = vmatmul.f32.gmra.mxu0 %v7497
      %v7609 = vpop.f32.mrf.mxu0
      %v7610 = vadd.f32 0.0, %v7609
      %7611 = vmatmul.f32.gmra.mxu0 %v7500
      %v7612 = vpop.f32.mrf.mxu0
      %v7613 = vadd.f32 0.0, %v7612
      %7614 = vmatmul.f32.gmra.mxu0 %v7503
      %v7615 = vpop.f32.mrf.mxu0
      %v7616 = vadd.f32 0.0, %v7615
      %7617 = vmatmul.f32.gmra.mxu0 %v7506
      %v7618 = vpop.f32.mrf.mxu0
      %v7619 = vadd.f32 0.0, %v7618
      %7620 = vdwg.mxu0
      %v7622 = vsel %vm2974, %v7331, 0
      %v7625 = vsel %vm2974, %v7332, 0
      %v7628 = vsel %vm2974, %v7333, 0
      %v7631 = vsel %vm2974, %v7334, 0
      %v7634 = vsel %vm2974, %v7335, 0
      %v7637 = vsel %vm2974, %v7336, 0
      %v7640 = vsel %vm2974, %v7337, 0
      %v7643 = vsel %vm2974, %v7338, 0
      %v7646 = vsel %vm2974, %v7339, 0
      %v7649 = vsel %vm2974, %v7340, 0
      %v7652 = vsel %vm2974, %v7341, 0
      %v7655 = vsel %vm2974, %v7342, 0
      %v7658 = vsel %vm2974, %v7343, 0
      %v7661 = vsel %vm2974, %v7344, 0
      %v7664 = vsel %vm2974, %v7345, 0
      %v7667 = vsel %vm2974, %v7346, 0
      %v7670 = vsel %vm2974, %v7347, 0
      %v7673 = vsel %vm2974, %v7348, 0
      %v7676 = vsel %vm2974, %v7349, 0
      %v7679 = vsel %vm2974, %v7350, 0
      %v7682 = vsel %vm2974, %v7351, 0
      %v7685 = vsel %vm2974, %v7352, 0
      %v7688 = vsel %vm2974, %v7353, 0
      %v7691 = vsel %vm2974, %v7354, 0
      %v7694 = vsel %vm2974, %v7355, 0
      %v7697 = vsel %vm2974, %v7356, 0
      %v7700 = vsel %vm2974, %v7357, 0
      %v7703 = vsel %vm2974, %v7358, 0
      %v7706 = vsel %vm2974, %v7359, 0
      %v7709 = vsel %vm2974, %v7360, 0
      %v7712 = vsel %vm2974, %v7361, 0
      %v7715 = vsel %vm2974, %v7362, 0
      %7717 = vmatpush.msra.mxu0 0.0
      %7718 = vmatpush.msra.mxu0 0.0
      %7719 = vmatpush.msra.mxu0 0.0
      %7720 = vmatpush.msra.mxu0 0.0
      %7721 = vmatpush.msra.mxu0 0.0
      %7722 = vmatpush.msra.mxu0 0.0
      %7723 = vmatpush.msra.mxu0 0.0
      %7724 = vmatpush.msra.mxu0 0.0
      %7725 = vmatpush.msra.mxu0 %v7370
      %7726 = vmatpush.msra.mxu0 %v7369
      %7727 = vmatpush.msra.mxu0 %v7368
      %7728 = vmatpush.msra.mxu0 %v7367
      %7729 = vmatpush.msra.mxu0 %v7366
      %7730 = vmatpush.msra.mxu0 %v7365
      %7731 = vmatpush.msra.mxu0 %v7364
      %7732 = vmatpush.msra.mxu0 %v7363
      %7733 = vmatmul.f32.gmra.mxu0 %v7622
      %v7734 = vpop.f32.mrf.mxu0
      %v7735 = vadd.f32 %v7526, %v7734
      %7736 = vmatmul.f32.gmra.mxu0 %v7625
      %v7737 = vpop.f32.mrf.mxu0
      %v7738 = vadd.f32 %v7529, %v7737
      %7739 = vmatmul.f32.gmra.mxu0 %v7628
      %v7740 = vpop.f32.mrf.mxu0
      %v7741 = vadd.f32 %v7532, %v7740
      %7742 = vmatmul.f32.gmra.mxu0 %v7631
      %v7743 = vpop.f32.mrf.mxu0
      %v7744 = vadd.f32 %v7535, %v7743
      %7745 = vmatmul.f32.gmra.mxu0 %v7634
      %v7746 = vpop.f32.mrf.mxu0
      %v7747 = vadd.f32 %v7538, %v7746
      %7748 = vmatmul.f32.gmra.mxu0 %v7637
      %v7749 = vpop.f32.mrf.mxu0
      %v7750 = vadd.f32 %v7541, %v7749
      %7751 = vmatmul.f32.gmra.mxu0 %v7640
      %v7752 = vpop.f32.mrf.mxu0
      %v7753 = vadd.f32 %v7544, %v7752
      %7754 = vmatmul.f32.gmra.mxu0 %v7643
      %v7755 = vpop.f32.mrf.mxu0
      %v7756 = vadd.f32 %v7547, %v7755
      %7757 = vmatmul.f32.gmra.mxu0 %v7646
      %v7758 = vpop.f32.mrf.mxu0
      %v7759 = vadd.f32 %v7550, %v7758
      %7760 = vmatmul.f32.gmra.mxu0 %v7649
      %v7761 = vpop.f32.mrf.mxu0
      %v7762 = vadd.f32 %v7553, %v7761
      %7763 = vmatmul.f32.gmra.mxu0 %v7652
      %v7764 = vpop.f32.mrf.mxu0
      %v7765 = vadd.f32 %v7556, %v7764
      %7766 = vmatmul.f32.gmra.mxu0 %v7655
      %v7767 = vpop.f32.mrf.mxu0
      %v7768 = vadd.f32 %v7559, %v7767
      %7769 = vmatmul.f32.gmra.mxu0 %v7658
      %v7770 = vpop.f32.mrf.mxu0
      %v7771 = vadd.f32 %v7562, %v7770
      %7772 = vmatmul.f32.gmra.mxu0 %v7661
      %v7773 = vpop.f32.mrf.mxu0
      %v7774 = vadd.f32 %v7565, %v7773
      %7775 = vmatmul.f32.gmra.mxu0 %v7664
      %v7776 = vpop.f32.mrf.mxu0
      %v7777 = vadd.f32 %v7568, %v7776
      %7778 = vmatmul.f32.gmra.mxu0 %v7667
      %v7779 = vpop.f32.mrf.mxu0
      %v7780 = vadd.f32 %v7571, %v7779
      %7781 = vmatmul.f32.gmra.mxu0 %v7670
      %v7782 = vpop.f32.mrf.mxu0
      %v7783 = vadd.f32 %v7574, %v7782
      %7784 = vmatmul.f32.gmra.mxu0 %v7673
      %v7785 = vpop.f32.mrf.mxu0
      %v7786 = vadd.f32 %v7577, %v7785
      %7787 = vmatmul.f32.gmra.mxu0 %v7676
      %v7788 = vpop.f32.mrf.mxu0
      %v7789 = vadd.f32 %v7580, %v7788
      %7790 = vmatmul.f32.gmra.mxu0 %v7679
      %v7791 = vpop.f32.mrf.mxu0
      %v7792 = vadd.f32 %v7583, %v7791
      %7793 = vmatmul.f32.gmra.mxu0 %v7682
      %v7794 = vpop.f32.mrf.mxu0
      %v7795 = vadd.f32 %v7586, %v7794
      %7796 = vmatmul.f32.gmra.mxu0 %v7685
      %v7797 = vpop.f32.mrf.mxu0
      %v7798 = vadd.f32 %v7589, %v7797
      %7799 = vmatmul.f32.gmra.mxu0 %v7688
      %v7800 = vpop.f32.mrf.mxu0
      %v7801 = vadd.f32 %v7592, %v7800
      %7802 = vmatmul.f32.gmra.mxu0 %v7691
      %v7803 = vpop.f32.mrf.mxu0
      %v7804 = vadd.f32 %v7595, %v7803
      %7805 = vmatmul.f32.gmra.mxu0 %v7694
      %v7806 = vpop.f32.mrf.mxu0
      %v7807 = vadd.f32 %v7598, %v7806
      %7808 = vmatmul.f32.gmra.mxu0 %v7697
      %v7809 = vpop.f32.mrf.mxu0
      %v7810 = vadd.f32 %v7601, %v7809
      %7811 = vmatmul.f32.gmra.mxu0 %v7700
      %v7812 = vpop.f32.mrf.mxu0
      %v7813 = vadd.f32 %v7604, %v7812
      %7814 = vmatmul.f32.gmra.mxu0 %v7703
      %v7815 = vpop.f32.mrf.mxu0
      %v7816 = vadd.f32 %v7607, %v7815
      %7817 = vmatmul.f32.gmra.mxu0 %v7706
      %v7818 = vpop.f32.mrf.mxu0
      %v7819 = vadd.f32 %v7610, %v7818
      %7820 = vmatmul.f32.gmra.mxu0 %v7709
      %v7821 = vpop.f32.mrf.mxu0
      %v7822 = vadd.f32 %v7613, %v7821
      %7823 = vmatmul.f32.gmra.mxu0 %v7712
      %v7824 = vpop.f32.mrf.mxu0
      %v7825 = vadd.f32 %v7616, %v7824
      %7826 = vmatmul.f32.gmra.mxu0 %v7715
      %v7827 = vpop.f32.mrf.mxu0
      %v7828 = vadd.f32 %v7619, %v7827
      %7829 = vdwg.mxu0
      %v7830 = vld [vmem:[#allocation3 + $0x9] sm:$0xff]
      %v7831 = vld [vmem:[#allocation3 + $0x11] sm:$0xff]
      %v7832 = vld [vmem:[#allocation3 + $0x29] sm:$0xff]
      %v7833 = vld [vmem:[#allocation3 + $0x31] sm:$0xff]
      %v7834 = vld [vmem:[#allocation3 + $0x49] sm:$0xff]
      %v7835 = vld [vmem:[#allocation3 + $0x51] sm:$0xff]
      %v7836 = vld [vmem:[#allocation3 + $0x69] sm:$0xff]
      %v7837 = vld [vmem:[#allocation3 + $0x71] sm:$0xff]
      %v7838 = vld [vmem:[#allocation3 + $0x89] sm:$0xff]
      %v7839 = vld [vmem:[#allocation3 + $0x91] sm:$0xff]
      %v7840 = vld [vmem:[#allocation3 + $0xa9] sm:$0xff]
      %v7841 = vld [vmem:[#allocation3 + $0xb1] sm:$0xff]
      %v7842 = vld [vmem:[#allocation3 + $0xc9] sm:$0xff]
      %v7843 = vld [vmem:[#allocation3 + $0xd1] sm:$0xff]
      %v7844 = vld [vmem:[#allocation3 + $0xe9] sm:$0xff]
      %v7845 = vld [vmem:[#allocation3 + $0xf1] sm:$0xff]
      %v7846 = vld [vmem:[#allocation3 + $0x109] sm:$0xff]
      %v7847 = vld [vmem:[#allocation3 + $0x111] sm:$0xff]
      %v7848 = vld [vmem:[#allocation3 + $0x129] sm:$0xff]
      %v7849 = vld [vmem:[#allocation3 + $0x131] sm:$0xff]
      %v7850 = vld [vmem:[#allocation3 + $0x149] sm:$0xff]
      %v7851 = vld [vmem:[#allocation3 + $0x151] sm:$0xff]
      %v7852 = vld [vmem:[#allocation3 + $0x169] sm:$0xff]
      %v7853 = vld [vmem:[#allocation3 + $0x171] sm:$0xff]
      %v7854 = vld [vmem:[#allocation3 + $0x189] sm:$0xff]
      %v7855 = vld [vmem:[#allocation3 + $0x191] sm:$0xff]
      %v7856 = vld [vmem:[#allocation3 + $0x1a9] sm:$0xff]
      %v7857 = vld [vmem:[#allocation3 + $0x1b1] sm:$0xff]
      %v7858 = vld [vmem:[#allocation3 + $0x1c9] sm:$0xff]
      %v7859 = vld [vmem:[#allocation3 + $0x1d1] sm:$0xff]
      %v7860 = vld [vmem:[#allocation3 + $0x1e9] sm:$0xff]
      %v7861 = vld [vmem:[#allocation3 + $0x1f1] sm:$0xff]
      %s7862 = scalar_lea.vmem %s6, 128
      %v7863 = vld [vmem:[%s7862] sm:$0xff]
      %v7864 = vld [vmem:[%s7862 + $0x8] sm:$0xff]
      %v7865 = vld [vmem:[%s7862 + $0x10] sm:$0xff]
      %v7866 = vld [vmem:[%s7862 + $0x18] sm:$0xff]
      %v7867 = vld [vmem:[%s7862 + $0x20] sm:$0xff]
      %v7868 = vld [vmem:[%s7862 + $0x28] sm:$0xff]
      %v7869 = vld [vmem:[%s7862 + $0x30] sm:$0xff]
      %v7870 = vld [vmem:[%s7862 + $0x38] sm:$0xff]
      %v7872 = vsel %vm2974, %v7830, 0
      %v7875 = vsel %vm2974, %v7831, 0
      %v7878 = vsel %vm2974, %v7832, 0
      %v7881 = vsel %vm2974, %v7833, 0
      %v7884 = vsel %vm2974, %v7834, 0
      %v7887 = vsel %vm2974, %v7835, 0
      %v7890 = vsel %vm2974, %v7836, 0
      %v7893 = vsel %vm2974, %v7837, 0
      %v7896 = vsel %vm2974, %v7838, 0
      %v7899 = vsel %vm2974, %v7839, 0
      %v7902 = vsel %vm2974, %v7840, 0
      %v7905 = vsel %vm2974, %v7841, 0
      %v7908 = vsel %vm2974, %v7842, 0
      %v7911 = vsel %vm2974, %v7843, 0
      %v7914 = vsel %vm2974, %v7844, 0
      %v7917 = vsel %vm2974, %v7845, 0
      %v7920 = vsel %vm2974, %v7846, 0
      %v7923 = vsel %vm2974, %v7847, 0
      %v7926 = vsel %vm2974, %v7848, 0
      %v7929 = vsel %vm2974, %v7849, 0
      %v7932 = vsel %vm2974, %v7850, 0
      %v7935 = vsel %vm2974, %v7851, 0
      %v7938 = vsel %vm2974, %v7852, 0
      %v7941 = vsel %vm2974, %v7853, 0
      %v7944 = vsel %vm2974, %v7854, 0
      %v7947 = vsel %vm2974, %v7855, 0
      %v7950 = vsel %vm2974, %v7856, 0
      %v7953 = vsel %vm2974, %v7857, 0
      %v7956 = vsel %vm2974, %v7858, 0
      %v7959 = vsel %vm2974, %v7859, 0
      %v7962 = vsel %vm2974, %v7860, 0
      %v7965 = vsel %vm2974, %v7861, 0
      %7967 = vmatpush.msra.mxu0 0.0
      %7968 = vmatpush.msra.mxu0 0.0
      %7969 = vmatpush.msra.mxu0 0.0
      %7970 = vmatpush.msra.mxu0 0.0
      %7971 = vmatpush.msra.mxu0 0.0
      %7972 = vmatpush.msra.mxu0 0.0
      %7973 = vmatpush.msra.mxu0 0.0
      %7974 = vmatpush.msra.mxu0 0.0
      %7975 = vmatpush.msra.mxu0 %v7870
      %7976 = vmatpush.msra.mxu0 %v7869
      %7977 = vmatpush.msra.mxu0 %v7868
      %7978 = vmatpush.msra.mxu0 %v7867
      %7979 = vmatpush.msra.mxu0 %v7866
      %7980 = vmatpush.msra.mxu0 %v7865
      %7981 = vmatpush.msra.mxu0 %v7864
      %7982 = vmatpush.msra.mxu0 %v7863
      %7983 = vmatmul.f32.gmra.mxu0 %v7872
      %v7984 = vpop.f32.mrf.mxu0
      %v7985 = vadd.f32 0.0, %v7984
      %7986 = vmatmul.f32.gmra.mxu0 %v7875
      %v7987 = vpop.f32.mrf.mxu0
      %v7988 = vadd.f32 0.0, %v7987
      %7989 = vmatmul.f32.gmra.mxu0 %v7878
      %v7990 = vpop.f32.mrf.mxu0
      %v7991 = vadd.f32 0.0, %v7990
      %7992 = vmatmul.f32.gmra.mxu0 %v7881
      %v7993 = vpop.f32.mrf.mxu0
      %v7994 = vadd.f32 0.0, %v7993
      %7995 = vmatmul.f32.gmra.mxu0 %v7884
      %v7996 = vpop.f32.mrf.mxu0
      %v7997 = vadd.f32 0.0, %v7996
      %7998 = vmatmul.f32.gmra.mxu0 %v7887
      %v7999 = vpop.f32.mrf.mxu0
      %v8000 = vadd.f32 0.0, %v7999
      %8001 = vmatmul.f32.gmra.mxu0 %v7890
      %v8002 = vpop.f32.mrf.mxu0
      %v8003 = vadd.f32 0.0, %v8002
      %8004 = vmatmul.f32.gmra.mxu0 %v7893
      %v8005 = vpop.f32.mrf.mxu0
      %v8006 = vadd.f32 0.0, %v8005
      %8007 = vmatmul.f32.gmra.mxu0 %v7896
      %v8008 = vpop.f32.mrf.mxu0
      %v8009 = vadd.f32 0.0, %v8008
      %8010 = vmatmul.f32.gmra.mxu0 %v7899
      %v8011 = vpop.f32.mrf.mxu0
      %v8012 = vadd.f32 0.0, %v8011
      %8013 = vmatmul.f32.gmra.mxu0 %v7902
      %v8014 = vpop.f32.mrf.mxu0
      %v8015 = vadd.f32 0.0, %v8014
      %8016 = vmatmul.f32.gmra.mxu0 %v7905
      %v8017 = vpop.f32.mrf.mxu0
      %v8018 = vadd.f32 0.0, %v8017
      %8019 = vmatmul.f32.gmra.mxu0 %v7908
      %v8020 = vpop.f32.mrf.mxu0
      %v8021 = vadd.f32 0.0, %v8020
      %8022 = vmatmul.f32.gmra.mxu0 %v7911
      %v8023 = vpop.f32.mrf.mxu0
      %v8024 = vadd.f32 0.0, %v8023
      %8025 = vmatmul.f32.gmra.mxu0 %v7914
      %v8026 = vpop.f32.mrf.mxu0
      %v8027 = vadd.f32 0.0, %v8026
      %8028 = vmatmul.f32.gmra.mxu0 %v7917
      %v8029 = vpop.f32.mrf.mxu0
      %v8030 = vadd.f32 0.0, %v8029
      %8031 = vmatmul.f32.gmra.mxu0 %v7920
      %v8032 = vpop.f32.mrf.mxu0
      %v8033 = vadd.f32 0.0, %v8032
      %8034 = vmatmul.f32.gmra.mxu0 %v7923
      %v8035 = vpop.f32.mrf.mxu0
      %v8036 = vadd.f32 0.0, %v8035
      %8037 = vmatmul.f32.gmra.mxu0 %v7926
      %v8038 = vpop.f32.mrf.mxu0
      %v8039 = vadd.f32 0.0, %v8038
      %8040 = vmatmul.f32.gmra.mxu0 %v7929
      %v8041 = vpop.f32.mrf.mxu0
      %v8042 = vadd.f32 0.0, %v8041
      %8043 = vmatmul.f32.gmra.mxu0 %v7932
      %v8044 = vpop.f32.mrf.mxu0
      %v8045 = vadd.f32 0.0, %v8044
      %8046 = vmatmul.f32.gmra.mxu0 %v7935
      %v8047 = vpop.f32.mrf.mxu0
      %v8048 = vadd.f32 0.0, %v8047
      %8049 = vmatmul.f32.gmra.mxu0 %v7938
      %v8050 = vpop.f32.mrf.mxu0
      %v8051 = vadd.f32 0.0, %v8050
      %8052 = vmatmul.f32.gmra.mxu0 %v7941
      %v8053 = vpop.f32.mrf.mxu0
      %v8054 = vadd.f32 0.0, %v8053
      %8055 = vmatmul.f32.gmra.mxu0 %v7944
      %v8056 = vpop.f32.mrf.mxu0
      %v8057 = vadd.f32 0.0, %v8056
      %8058 = vmatmul.f32.gmra.mxu0 %v7947
      %v8059 = vpop.f32.mrf.mxu0
      %v8060 = vadd.f32 0.0, %v8059
      %8061 = vmatmul.f32.gmra.mxu0 %v7950
      %v8062 = vpop.f32.mrf.mxu0
      %v8063 = vadd.f32 0.0, %v8062
      %8064 = vmatmul.f32.gmra.mxu0 %v7953
      %v8065 = vpop.f32.mrf.mxu0
      %v8066 = vadd.f32 0.0, %v8065
      %8067 = vmatmul.f32.gmra.mxu0 %v7956
      %v8068 = vpop.f32.mrf.mxu0
      %v8069 = vadd.f32 0.0, %v8068
      %8070 = vmatmul.f32.gmra.mxu0 %v7959
      %v8071 = vpop.f32.mrf.mxu0
      %v8072 = vadd.f32 0.0, %v8071
      %8073 = vmatmul.f32.gmra.mxu0 %v7962
      %v8074 = vpop.f32.mrf.mxu0
      %v8075 = vadd.f32 0.0, %v8074
      %8076 = vmatmul.f32.gmra.mxu0 %v7965
      %v8077 = vpop.f32.mrf.mxu0
      %v8078 = vadd.f32 0.0, %v8077
      %8079 = vdwg.mxu0
      %v8080 = vadd.f32 %v7735, %v7985
      %v8081 = vadd.f32 %v7738, %v7988
      %v8082 = vadd.f32 %v7741, %v7991
      %v8083 = vadd.f32 %v7744, %v7994
      %v8084 = vadd.f32 %v7747, %v7997
      %v8085 = vadd.f32 %v7750, %v8000
      %v8086 = vadd.f32 %v7753, %v8003
      %v8087 = vadd.f32 %v7756, %v8006
      %v8088 = vadd.f32 %v7759, %v8009
      %v8089 = vadd.f32 %v7762, %v8012
      %v8090 = vadd.f32 %v7765, %v8015
      %v8091 = vadd.f32 %v7768, %v8018
      %v8092 = vadd.f32 %v7771, %v8021
      %v8093 = vadd.f32 %v7774, %v8024
      %v8094 = vadd.f32 %v7777, %v8027
      %v8095 = vadd.f32 %v7780, %v8030
      %v8096 = vadd.f32 %v7783, %v8033
      %v8097 = vadd.f32 %v7786, %v8036
      %v8098 = vadd.f32 %v7789, %v8039
      %v8099 = vadd.f32 %v7792, %v8042
      %v8100 = vadd.f32 %v7795, %v8045
      %v8101 = vadd.f32 %v7798, %v8048
      %v8102 = vadd.f32 %v7801, %v8051
      %v8103 = vadd.f32 %v7804, %v8054
      %v8104 = vadd.f32 %v7807, %v8057
      %v8105 = vadd.f32 %v7810, %v8060
      %v8106 = vadd.f32 %v7813, %v8063
      %v8107 = vadd.f32 %v7816, %v8066
      %v8108 = vadd.f32 %v7819, %v8069
      %v8109 = vadd.f32 %v7822, %v8072
      %v8110 = vadd.f32 %v7825, %v8075
      %v8111 = vadd.f32 %v7828, %v8078
      %v8112 = vld [vmem:[%s4125 + $0x7] sm:$0xff]
      %v8113 = vld [vmem:[%s4125 + $0xf] sm:$0xff]
      %v8114 = vld [vmem:[%s4125 + $0x27] sm:$0xff]
      %v8115 = vld [vmem:[%s4125 + $0x2f] sm:$0xff]
      %v8116 = vld [vmem:[%s4125 + $0x47] sm:$0xff]
      %v8117 = vld [vmem:[%s4125 + $0x4f] sm:$0xff]
      %v8118 = vld [vmem:[%s4125 + $0x67] sm:$0xff]
      %v8119 = vld [vmem:[%s4125 + $0x6f] sm:$0xff]
      %v8120 = vld [vmem:[%s4125 + $0x87] sm:$0xff]
      %v8121 = vld [vmem:[%s4125 + $0x8f] sm:$0xff]
      %v8122 = vld [vmem:[%s4125 + $0xa7] sm:$0xff]
      %v8123 = vld [vmem:[%s4125 + $0xaf] sm:$0xff]
      %v8124 = vld [vmem:[%s4125 + $0xc7] sm:$0xff]
      %v8125 = vld [vmem:[%s4125 + $0xcf] sm:$0xff]
      %v8126 = vld [vmem:[%s4125 + $0xe7] sm:$0xff]
      %v8127 = vld [vmem:[%s4125 + $0xef] sm:$0xff]
      %v8128 = vld [vmem:[%s4125 + $0x107] sm:$0xff]
      %v8129 = vld [vmem:[%s4125 + $0x10f] sm:$0xff]
      %v8130 = vld [vmem:[%s4125 + $0x127] sm:$0xff]
      %v8131 = vld [vmem:[%s4125 + $0x12f] sm:$0xff]
      %v8132 = vld [vmem:[%s4125 + $0x147] sm:$0xff]
      %v8133 = vld [vmem:[%s4125 + $0x14f] sm:$0xff]
      %v8134 = vld [vmem:[%s4125 + $0x167] sm:$0xff]
      %v8135 = vld [vmem:[%s4125 + $0x16f] sm:$0xff]
      %v8136 = vld [vmem:[%s4125 + $0x187] sm:$0xff]
      %v8137 = vld [vmem:[%s4125 + $0x18f] sm:$0xff]
      %v8138 = vld [vmem:[%s4125 + $0x1a7] sm:$0xff]
      %v8139 = vld [vmem:[%s4125 + $0x1af] sm:$0xff]
      %v8140 = vld [vmem:[%s4125 + $0x1c7] sm:$0xff]
      %v8141 = vld [vmem:[%s4125 + $0x1cf] sm:$0xff]
      %v8142 = vld [vmem:[%s4125 + $0x1e7] sm:$0xff]
      %v8143 = vld [vmem:[%s4125 + $0x1ef] sm:$0xff]
      %s8144 = scalar_lea.vmem %s6, 192
      %v8145 = vld [vmem:[%s8144] sm:$0xff]
      %v8146 = vld [vmem:[%s8144 + $0x8] sm:$0xff]
      %v8147 = vld [vmem:[%s8144 + $0x10] sm:$0xff]
      %v8148 = vld [vmem:[%s8144 + $0x18] sm:$0xff]
      %v8149 = vld [vmem:[%s8144 + $0x20] sm:$0xff]
      %v8150 = vld [vmem:[%s8144 + $0x28] sm:$0xff]
      %v8151 = vld [vmem:[%s8144 + $0x30] sm:$0xff]
      %v8152 = vld [vmem:[%s8144 + $0x38] sm:$0xff]
      %v8154 = vsel %vm2974, %v8112, 0
      %v8157 = vsel %vm2974, %v8113, 0
      %v8160 = vsel %vm2974, %v8114, 0
      %v8163 = vsel %vm2974, %v8115, 0
      %v8166 = vsel %vm2974, %v8116, 0
      %v8169 = vsel %vm2974, %v8117, 0
      %v8172 = vsel %vm2974, %v8118, 0
      %v8175 = vsel %vm2974, %v8119, 0
      %v8178 = vsel %vm2974, %v8120, 0
      %v8181 = vsel %vm2974, %v8121, 0
      %v8184 = vsel %vm2974, %v8122, 0
      %v8187 = vsel %vm2974, %v8123, 0
      %v8190 = vsel %vm2974, %v8124, 0
      %v8193 = vsel %vm2974, %v8125, 0
      %v8196 = vsel %vm2974, %v8126, 0
      %v8199 = vsel %vm2974, %v8127, 0
      %v8202 = vsel %vm2974, %v8128, 0
      %v8205 = vsel %vm2974, %v8129, 0
      %v8208 = vsel %vm2974, %v8130, 0
      %v8211 = vsel %vm2974, %v8131, 0
      %v8214 = vsel %vm2974, %v8132, 0
      %v8217 = vsel %vm2974, %v8133, 0
      %v8220 = vsel %vm2974, %v8134, 0
      %v8223 = vsel %vm2974, %v8135, 0
      %v8226 = vsel %vm2974, %v8136, 0
      %v8229 = vsel %vm2974, %v8137, 0
      %v8232 = vsel %vm2974, %v8138, 0
      %v8235 = vsel %vm2974, %v8139, 0
      %v8238 = vsel %vm2974, %v8140, 0
      %v8241 = vsel %vm2974, %v8141, 0
      %v8244 = vsel %vm2974, %v8142, 0
      %v8247 = vsel %vm2974, %v8143, 0
      %8249 = vmatpush.msra.mxu0 0.0
      %8250 = vmatpush.msra.mxu0 0.0
      %8251 = vmatpush.msra.mxu0 0.0
      %8252 = vmatpush.msra.mxu0 0.0
      %8253 = vmatpush.msra.mxu0 0.0
      %8254 = vmatpush.msra.mxu0 0.0
      %8255 = vmatpush.msra.mxu0 0.0
      %8256 = vmatpush.msra.mxu0 0.0
      %8257 = vmatpush.msra.mxu0 %v8152
      %8258 = vmatpush.msra.mxu0 %v8151
      %8259 = vmatpush.msra.mxu0 %v8150
      %8260 = vmatpush.msra.mxu0 %v8149
      %8261 = vmatpush.msra.mxu0 %v8148
      %8262 = vmatpush.msra.mxu0 %v8147
      %8263 = vmatpush.msra.mxu0 %v8146
      %8264 = vmatpush.msra.mxu0 %v8145
      %8265 = vmatmul.f32.gmra.mxu0 %v8154
      %v8266 = vpop.f32.mrf.mxu0
      %v8267 = vadd.f32 0.0, %v8266
      %8268 = vmatmul.f32.gmra.mxu0 %v8157
      %v8269 = vpop.f32.mrf.mxu0
      %v8270 = vadd.f32 0.0, %v8269
      %8271 = vmatmul.f32.gmra.mxu0 %v8160
      %v8272 = vpop.f32.mrf.mxu0
      %v8273 = vadd.f32 0.0, %v8272
      %8274 = vmatmul.f32.gmra.mxu0 %v8163
      %v8275 = vpop.f32.mrf.mxu0
      %v8276 = vadd.f32 0.0, %v8275
      %8277 = vmatmul.f32.gmra.mxu0 %v8166
      %v8278 = vpop.f32.mrf.mxu0
      %v8279 = vadd.f32 0.0, %v8278
      %8280 = vmatmul.f32.gmra.mxu0 %v8169
      %v8281 = vpop.f32.mrf.mxu0
      %v8282 = vadd.f32 0.0, %v8281
      %8283 = vmatmul.f32.gmra.mxu0 %v8172
      %v8284 = vpop.f32.mrf.mxu0
      %v8285 = vadd.f32 0.0, %v8284
      %8286 = vmatmul.f32.gmra.mxu0 %v8175
      %v8287 = vpop.f32.mrf.mxu0
      %v8288 = vadd.f32 0.0, %v8287
      %8289 = vmatmul.f32.gmra.mxu0 %v8178
      %v8290 = vpop.f32.mrf.mxu0
      %v8291 = vadd.f32 0.0, %v8290
      %8292 = vmatmul.f32.gmra.mxu0 %v8181
      %v8293 = vpop.f32.mrf.mxu0
      %v8294 = vadd.f32 0.0, %v8293
      %8295 = vmatmul.f32.gmra.mxu0 %v8184
      %v8296 = vpop.f32.mrf.mxu0
      %v8297 = vadd.f32 0.0, %v8296
      %8298 = vmatmul.f32.gmra.mxu0 %v8187
      %v8299 = vpop.f32.mrf.mxu0
      %v8300 = vadd.f32 0.0, %v8299
      %8301 = vmatmul.f32.gmra.mxu0 %v8190
      %v8302 = vpop.f32.mrf.mxu0
      %v8303 = vadd.f32 0.0, %v8302
      %8304 = vmatmul.f32.gmra.mxu0 %v8193
      %v8305 = vpop.f32.mrf.mxu0
      %v8306 = vadd.f32 0.0, %v8305
      %8307 = vmatmul.f32.gmra.mxu0 %v8196
      %v8308 = vpop.f32.mrf.mxu0
      %v8309 = vadd.f32 0.0, %v8308
      %8310 = vmatmul.f32.gmra.mxu0 %v8199
      %v8311 = vpop.f32.mrf.mxu0
      %v8312 = vadd.f32 0.0, %v8311
      %8313 = vmatmul.f32.gmra.mxu0 %v8202
      %v8314 = vpop.f32.mrf.mxu0
      %v8315 = vadd.f32 0.0, %v8314
      %8316 = vmatmul.f32.gmra.mxu0 %v8205
      %v8317 = vpop.f32.mrf.mxu0
      %v8318 = vadd.f32 0.0, %v8317
      %8319 = vmatmul.f32.gmra.mxu0 %v8208
      %v8320 = vpop.f32.mrf.mxu0
      %v8321 = vadd.f32 0.0, %v8320
      %8322 = vmatmul.f32.gmra.mxu0 %v8211
      %v8323 = vpop.f32.mrf.mxu0
      %v8324 = vadd.f32 0.0, %v8323
      %8325 = vmatmul.f32.gmra.mxu0 %v8214
      %v8326 = vpop.f32.mrf.mxu0
      %v8327 = vadd.f32 0.0, %v8326
      %8328 = vmatmul.f32.gmra.mxu0 %v8217
      %v8329 = vpop.f32.mrf.mxu0
      %v8330 = vadd.f32 0.0, %v8329
      %8331 = vmatmul.f32.gmra.mxu0 %v8220
      %v8332 = vpop.f32.mrf.mxu0
      %v8333 = vadd.f32 0.0, %v8332
      %8334 = vmatmul.f32.gmra.mxu0 %v8223
      %v8335 = vpop.f32.mrf.mxu0
      %v8336 = vadd.f32 0.0, %v8335
      %8337 = vmatmul.f32.gmra.mxu0 %v8226
      %v8338 = vpop.f32.mrf.mxu0
      %v8339 = vadd.f32 0.0, %v8338
      %8340 = vmatmul.f32.gmra.mxu0 %v8229
      %v8341 = vpop.f32.mrf.mxu0
      %v8342 = vadd.f32 0.0, %v8341
      %8343 = vmatmul.f32.gmra.mxu0 %v8232
      %v8344 = vpop.f32.mrf.mxu0
      %v8345 = vadd.f32 0.0, %v8344
      %8346 = vmatmul.f32.gmra.mxu0 %v8235
      %v8347 = vpop.f32.mrf.mxu0
      %v8348 = vadd.f32 0.0, %v8347
      %8349 = vmatmul.f32.gmra.mxu0 %v8238
      %v8350 = vpop.f32.mrf.mxu0
      %v8351 = vadd.f32 0.0, %v8350
      %8352 = vmatmul.f32.gmra.mxu0 %v8241
      %v8353 = vpop.f32.mrf.mxu0
      %v8354 = vadd.f32 0.0, %v8353
      %8355 = vmatmul.f32.gmra.mxu0 %v8244
      %v8356 = vpop.f32.mrf.mxu0
      %v8357 = vadd.f32 0.0, %v8356
      %8358 = vmatmul.f32.gmra.mxu0 %v8247
      %v8359 = vpop.f32.mrf.mxu0
      %v8360 = vadd.f32 0.0, %v8359
      %8361 = vdwg.mxu0
      %v8362 = vadd.f32 %v8080, %v8267
      %v8363 = vadd.f32 %v8081, %v8270
      %v8364 = vadd.f32 %v8082, %v8273
      %v8365 = vadd.f32 %v8083, %v8276
      %v8366 = vadd.f32 %v8084, %v8279
      %v8367 = vadd.f32 %v8085, %v8282
      %v8368 = vadd.f32 %v8086, %v8285
      %v8369 = vadd.f32 %v8087, %v8288
      %v8370 = vadd.f32 %v8088, %v8291
      %v8371 = vadd.f32 %v8089, %v8294
      %v8372 = vadd.f32 %v8090, %v8297
      %v8373 = vadd.f32 %v8091, %v8300
      %v8374 = vadd.f32 %v8092, %v8303
      %v8375 = vadd.f32 %v8093, %v8306
      %v8376 = vadd.f32 %v8094, %v8309
      %v8377 = vadd.f32 %v8095, %v8312
      %v8378 = vadd.f32 %v8096, %v8315
      %v8379 = vadd.f32 %v8097, %v8318
      %v8380 = vadd.f32 %v8098, %v8321
      %v8381 = vadd.f32 %v8099, %v8324
      %v8382 = vadd.f32 %v8100, %v8327
      %v8383 = vadd.f32 %v8101, %v8330
      %v8384 = vadd.f32 %v8102, %v8333
      %v8385 = vadd.f32 %v8103, %v8336
      %v8386 = vadd.f32 %v8104, %v8339
      %v8387 = vadd.f32 %v8105, %v8342
      %v8388 = vadd.f32 %v8106, %v8345
      %v8389 = vadd.f32 %v8107, %v8348
      %v8390 = vadd.f32 %v8108, %v8351
      %v8391 = vadd.f32 %v8109, %v8354
      %v8392 = vadd.f32 %v8110, %v8357
      %v8393 = vadd.f32 %v8111, %v8360
      %v8394 = vld [vmem:[%s4125 + $0x8] sm:$0xff]
      %v8395 = vld [vmem:[%s4125 + $0x10] sm:$0xff]
      %v8396 = vld [vmem:[%s4125 + $0x28] sm:$0xff]
      %v8397 = vld [vmem:[%s4125 + $0x30] sm:$0xff]
      %v8398 = vld [vmem:[%s4125 + $0x48] sm:$0xff]
      %v8399 = vld [vmem:[%s4125 + $0x50] sm:$0xff]
      %v8400 = vld [vmem:[%s4125 + $0x68] sm:$0xff]
      %v8401 = vld [vmem:[%s4125 + $0x70] sm:$0xff]
      %v8402 = vld [vmem:[%s4125 + $0x88] sm:$0xff]
      %v8403 = vld [vmem:[%s4125 + $0x90] sm:$0xff]
      %v8404 = vld [vmem:[%s4125 + $0xa8] sm:$0xff]
      %v8405 = vld [vmem:[%s4125 + $0xb0] sm:$0xff]
      %v8406 = vld [vmem:[%s4125 + $0xc8] sm:$0xff]
      %v8407 = vld [vmem:[%s4125 + $0xd0] sm:$0xff]
      %v8408 = vld [vmem:[%s4125 + $0xe8] sm:$0xff]
      %v8409 = vld [vmem:[%s4125 + $0xf0] sm:$0xff]
      %v8410 = vld [vmem:[%s4125 + $0x108] sm:$0xff]
      %v8411 = vld [vmem:[%s4125 + $0x110] sm:$0xff]
      %v8412 = vld [vmem:[%s4125 + $0x128] sm:$0xff]
      %v8413 = vld [vmem:[%s4125 + $0x130] sm:$0xff]
      %v8414 = vld [vmem:[%s4125 + $0x148] sm:$0xff]
      %v8415 = vld [vmem:[%s4125 + $0x150] sm:$0xff]
      %v8416 = vld [vmem:[%s4125 + $0x168] sm:$0xff]
      %v8417 = vld [vmem:[%s4125 + $0x170] sm:$0xff]
      %v8418 = vld [vmem:[%s4125 + $0x188] sm:$0xff]
      %v8419 = vld [vmem:[%s4125 + $0x190] sm:$0xff]
      %v8420 = vld [vmem:[%s4125 + $0x1a8] sm:$0xff]
      %v8421 = vld [vmem:[%s4125 + $0x1b0] sm:$0xff]
      %v8422 = vld [vmem:[%s4125 + $0x1c8] sm:$0xff]
      %v8423 = vld [vmem:[%s4125 + $0x1d0] sm:$0xff]
      %v8424 = vld [vmem:[%s4125 + $0x1e8] sm:$0xff]
      %v8425 = vld [vmem:[%s4125 + $0x1f0] sm:$0xff]
      %s8426 = scalar_lea.vmem %s6, 256
      %v8427 = vld [vmem:[%s8426] sm:$0xff]
      %v8428 = vld [vmem:[%s8426 + $0x8] sm:$0xff]
      %v8429 = vld [vmem:[%s8426 + $0x10] sm:$0xff]
      %v8430 = vld [vmem:[%s8426 + $0x18] sm:$0xff]
      %v8431 = vld [vmem:[%s8426 + $0x20] sm:$0xff]
      %v8432 = vld [vmem:[%s8426 + $0x28] sm:$0xff]
      %v8433 = vld [vmem:[%s8426 + $0x30] sm:$0xff]
      %v8434 = vld [vmem:[%s8426 + $0x38] sm:$0xff]
      %v8436 = vsel %vm2974, %v8394, 0
      %v8439 = vsel %vm2974, %v8395, 0
      %v8442 = vsel %vm2974, %v8396, 0
      %v8445 = vsel %vm2974, %v8397, 0
      %v8448 = vsel %vm2974, %v8398, 0
      %v8451 = vsel %vm2974, %v8399, 0
      %v8454 = vsel %vm2974, %v8400, 0
      %v8457 = vsel %vm2974, %v8401, 0
      %v8460 = vsel %vm2974, %v8402, 0
      %v8463 = vsel %vm2974, %v8403, 0
      %v8466 = vsel %vm2974, %v8404, 0
      %v8469 = vsel %vm2974, %v8405, 0
      %v8472 = vsel %vm2974, %v8406, 0
      %v8475 = vsel %vm2974, %v8407, 0
      %v8478 = vsel %vm2974, %v8408, 0
      %v8481 = vsel %vm2974, %v8409, 0
      %v8484 = vsel %vm2974, %v8410, 0
      %v8487 = vsel %vm2974, %v8411, 0
      %v8490 = vsel %vm2974, %v8412, 0
      %v8493 = vsel %vm2974, %v8413, 0
      %v8496 = vsel %vm2974, %v8414, 0
      %v8499 = vsel %vm2974, %v8415, 0
      %v8502 = vsel %vm2974, %v8416, 0
      %v8505 = vsel %vm2974, %v8417, 0
      %v8508 = vsel %vm2974, %v8418, 0
      %v8511 = vsel %vm2974, %v8419, 0
      %v8514 = vsel %vm2974, %v8420, 0
      %v8517 = vsel %vm2974, %v8421, 0
      %v8520 = vsel %vm2974, %v8422, 0
      %v8523 = vsel %vm2974, %v8423, 0
      %v8526 = vsel %vm2974, %v8424, 0
      %v8529 = vsel %vm2974, %v8425, 0
      %8531 = vmatpush.msra.mxu0 0.0
      %8532 = vmatpush.msra.mxu0 0.0
      %8533 = vmatpush.msra.mxu0 0.0
      %8534 = vmatpush.msra.mxu0 0.0
      %8535 = vmatpush.msra.mxu0 0.0
      %8536 = vmatpush.msra.mxu0 0.0
      %8537 = vmatpush.msra.mxu0 0.0
      %8538 = vmatpush.msra.mxu0 0.0
      %8539 = vmatpush.msra.mxu0 %v8434
      %8540 = vmatpush.msra.mxu0 %v8433
      %8541 = vmatpush.msra.mxu0 %v8432
      %8542 = vmatpush.msra.mxu0 %v8431
      %8543 = vmatpush.msra.mxu0 %v8430
      %8544 = vmatpush.msra.mxu0 %v8429
      %8545 = vmatpush.msra.mxu0 %v8428
      %8546 = vmatpush.msra.mxu0 %v8427
      %8547 = vmatmul.f32.gmra.mxu0 %v8436
      %v8548 = vpop.f32.mrf.mxu0
      %v8549 = vadd.f32 0.0, %v8548
      %8550 = vmatmul.f32.gmra.mxu0 %v8439
      %v8551 = vpop.f32.mrf.mxu0
      %v8552 = vadd.f32 0.0, %v8551
      %8553 = vmatmul.f32.gmra.mxu0 %v8442
      %v8554 = vpop.f32.mrf.mxu0
      %v8555 = vadd.f32 0.0, %v8554
      %8556 = vmatmul.f32.gmra.mxu0 %v8445
      %v8557 = vpop.f32.mrf.mxu0
      %v8558 = vadd.f32 0.0, %v8557
      %8559 = vmatmul.f32.gmra.mxu0 %v8448
      %v8560 = vpop.f32.mrf.mxu0
      %v8561 = vadd.f32 0.0, %v8560
      %8562 = vmatmul.f32.gmra.mxu0 %v8451
      %v8563 = vpop.f32.mrf.mxu0
      %v8564 = vadd.f32 0.0, %v8563
      %8565 = vmatmul.f32.gmra.mxu0 %v8454
      %v8566 = vpop.f32.mrf.mxu0
      %v8567 = vadd.f32 0.0, %v8566
      %8568 = vmatmul.f32.gmra.mxu0 %v8457
      %v8569 = vpop.f32.mrf.mxu0
      %v8570 = vadd.f32 0.0, %v8569
      %8571 = vmatmul.f32.gmra.mxu0 %v8460
      %v8572 = vpop.f32.mrf.mxu0
      %v8573 = vadd.f32 0.0, %v8572
      %8574 = vmatmul.f32.gmra.mxu0 %v8463
      %v8575 = vpop.f32.mrf.mxu0
      %v8576 = vadd.f32 0.0, %v8575
      %8577 = vmatmul.f32.gmra.mxu0 %v8466
      %v8578 = vpop.f32.mrf.mxu0
      %v8579 = vadd.f32 0.0, %v8578
      %8580 = vmatmul.f32.gmra.mxu0 %v8469
      %v8581 = vpop.f32.mrf.mxu0
      %v8582 = vadd.f32 0.0, %v8581
      %8583 = vmatmul.f32.gmra.mxu0 %v8472
      %v8584 = vpop.f32.mrf.mxu0
      %v8585 = vadd.f32 0.0, %v8584
      %8586 = vmatmul.f32.gmra.mxu0 %v8475
      %v8587 = vpop.f32.mrf.mxu0
      %v8588 = vadd.f32 0.0, %v8587
      %8589 = vmatmul.f32.gmra.mxu0 %v8478
      %v8590 = vpop.f32.mrf.mxu0
      %v8591 = vadd.f32 0.0, %v8590
      %8592 = vmatmul.f32.gmra.mxu0 %v8481
      %v8593 = vpop.f32.mrf.mxu0
      %v8594 = vadd.f32 0.0, %v8593
      %8595 = vmatmul.f32.gmra.mxu0 %v8484
      %v8596 = vpop.f32.mrf.mxu0
      %v8597 = vadd.f32 0.0, %v8596
      %8598 = vmatmul.f32.gmra.mxu0 %v8487
      %v8599 = vpop.f32.mrf.mxu0
      %v8600 = vadd.f32 0.0, %v8599
      %8601 = vmatmul.f32.gmra.mxu0 %v8490
      %v8602 = vpop.f32.mrf.mxu0
      %v8603 = vadd.f32 0.0, %v8602
      %8604 = vmatmul.f32.gmra.mxu0 %v8493
      %v8605 = vpop.f32.mrf.mxu0
      %v8606 = vadd.f32 0.0, %v8605
      %8607 = vmatmul.f32.gmra.mxu0 %v8496
      %v8608 = vpop.f32.mrf.mxu0
      %v8609 = vadd.f32 0.0, %v8608
      %8610 = vmatmul.f32.gmra.mxu0 %v8499
      %v8611 = vpop.f32.mrf.mxu0
      %v8612 = vadd.f32 0.0, %v8611
      %8613 = vmatmul.f32.gmra.mxu0 %v8502
      %v8614 = vpop.f32.mrf.mxu0
      %v8615 = vadd.f32 0.0, %v8614
      %8616 = vmatmul.f32.gmra.mxu0 %v8505
      %v8617 = vpop.f32.mrf.mxu0
      %v8618 = vadd.f32 0.0, %v8617
      %8619 = vmatmul.f32.gmra.mxu0 %v8508
      %v8620 = vpop.f32.mrf.mxu0
      %v8621 = vadd.f32 0.0, %v8620
      %8622 = vmatmul.f32.gmra.mxu0 %v8511
      %v8623 = vpop.f32.mrf.mxu0
      %v8624 = vadd.f32 0.0, %v8623
      %8625 = vmatmul.f32.gmra.mxu0 %v8514
      %v8626 = vpop.f32.mrf.mxu0
      %v8627 = vadd.f32 0.0, %v8626
      %8628 = vmatmul.f32.gmra.mxu0 %v8517
      %v8629 = vpop.f32.mrf.mxu0
      %v8630 = vadd.f32 0.0, %v8629
      %8631 = vmatmul.f32.gmra.mxu0 %v8520
      %v8632 = vpop.f32.mrf.mxu0
      %v8633 = vadd.f32 0.0, %v8632
      %8634 = vmatmul.f32.gmra.mxu0 %v8523
      %v8635 = vpop.f32.mrf.mxu0
      %v8636 = vadd.f32 0.0, %v8635
      %8637 = vmatmul.f32.gmra.mxu0 %v8526
      %v8638 = vpop.f32.mrf.mxu0
      %v8639 = vadd.f32 0.0, %v8638
      %8640 = vmatmul.f32.gmra.mxu0 %v8529
      %v8641 = vpop.f32.mrf.mxu0
      %v8642 = vadd.f32 0.0, %v8641
      %8643 = vdwg.mxu0
      %v8644 = vadd.f32 %v8362, %v8549
      %v8645 = vadd.f32 %v8363, %v8552
      %v8646 = vadd.f32 %v8364, %v8555
      %v8647 = vadd.f32 %v8365, %v8558
      %v8648 = vadd.f32 %v8366, %v8561
      %v8649 = vadd.f32 %v8367, %v8564
      %v8650 = vadd.f32 %v8368, %v8567
      %v8651 = vadd.f32 %v8369, %v8570
      %v8652 = vadd.f32 %v8370, %v8573
      %v8653 = vadd.f32 %v8371, %v8576
      %v8654 = vadd.f32 %v8372, %v8579
      %v8655 = vadd.f32 %v8373, %v8582
      %v8656 = vadd.f32 %v8374, %v8585
      %v8657 = vadd.f32 %v8375, %v8588
      %v8658 = vadd.f32 %v8376, %v8591
      %v8659 = vadd.f32 %v8377, %v8594
      %v8660 = vadd.f32 %v8378, %v8597
      %v8661 = vadd.f32 %v8379, %v8600
      %v8662 = vadd.f32 %v8380, %v8603
      %v8663 = vadd.f32 %v8381, %v8606
      %v8664 = vadd.f32 %v8382, %v8609
      %v8665 = vadd.f32 %v8383, %v8612
      %v8666 = vadd.f32 %v8384, %v8615
      %v8667 = vadd.f32 %v8385, %v8618
      %v8668 = vadd.f32 %v8386, %v8621
      %v8669 = vadd.f32 %v8387, %v8624
      %v8670 = vadd.f32 %v8388, %v8627
      %v8671 = vadd.f32 %v8389, %v8630
      %v8672 = vadd.f32 %v8390, %v8633
      %v8673 = vadd.f32 %v8391, %v8636
      %v8674 = vadd.f32 %v8392, %v8639
      %v8675 = vadd.f32 %v8393, %v8642
      %v8676 = vld [vmem:[%s4125 + $0x9] sm:$0xff]
      %v8677 = vld [vmem:[%s4125 + $0x11] sm:$0xff]
      %v8678 = vld [vmem:[%s4125 + $0x29] sm:$0xff]
      %v8679 = vld [vmem:[%s4125 + $0x31] sm:$0xff]
      %v8680 = vld [vmem:[%s4125 + $0x49] sm:$0xff]
      %v8681 = vld [vmem:[%s4125 + $0x51] sm:$0xff]
      %v8682 = vld [vmem:[%s4125 + $0x69] sm:$0xff]
      %v8683 = vld [vmem:[%s4125 + $0x71] sm:$0xff]
      %v8684 = vld [vmem:[%s4125 + $0x89] sm:$0xff]
      %v8685 = vld [vmem:[%s4125 + $0x91] sm:$0xff]
      %v8686 = vld [vmem:[%s4125 + $0xa9] sm:$0xff]
      %v8687 = vld [vmem:[%s4125 + $0xb1] sm:$0xff]
      %v8688 = vld [vmem:[%s4125 + $0xc9] sm:$0xff]
      %v8689 = vld [vmem:[%s4125 + $0xd1] sm:$0xff]
      %v8690 = vld [vmem:[%s4125 + $0xe9] sm:$0xff]
      %v8691 = vld [vmem:[%s4125 + $0xf1] sm:$0xff]
      %v8692 = vld [vmem:[%s4125 + $0x109] sm:$0xff]
      %v8693 = vld [vmem:[%s4125 + $0x111] sm:$0xff]
      %v8694 = vld [vmem:[%s4125 + $0x129] sm:$0xff]
      %v8695 = vld [vmem:[%s4125 + $0x131] sm:$0xff]
      %v8696 = vld [vmem:[%s4125 + $0x149] sm:$0xff]
      %v8697 = vld [vmem:[%s4125 + $0x151] sm:$0xff]
      %v8698 = vld [vmem:[%s4125 + $0x169] sm:$0xff]
      %v8699 = vld [vmem:[%s4125 + $0x171] sm:$0xff]
      %v8700 = vld [vmem:[%s4125 + $0x189] sm:$0xff]
      %v8701 = vld [vmem:[%s4125 + $0x191] sm:$0xff]
      %v8702 = vld [vmem:[%s4125 + $0x1a9] sm:$0xff]
      %v8703 = vld [vmem:[%s4125 + $0x1b1] sm:$0xff]
      %v8704 = vld [vmem:[%s4125 + $0x1c9] sm:$0xff]
      %v8705 = vld [vmem:[%s4125 + $0x1d1] sm:$0xff]
      %v8706 = vld [vmem:[%s4125 + $0x1e9] sm:$0xff]
      %v8707 = vld [vmem:[%s4125 + $0x1f1] sm:$0xff]
      %s8708 = scalar_lea.vmem %s6, 320
      %v8709 = vld [vmem:[%s8708] sm:$0xff]
      %v8710 = vld [vmem:[%s8708 + $0x8] sm:$0xff]
      %v8711 = vld [vmem:[%s8708 + $0x10] sm:$0xff]
      %v8712 = vld [vmem:[%s8708 + $0x18] sm:$0xff]
      %v8713 = vld [vmem:[%s8708 + $0x20] sm:$0xff]
      %v8714 = vld [vmem:[%s8708 + $0x28] sm:$0xff]
      %v8715 = vld [vmem:[%s8708 + $0x30] sm:$0xff]
      %v8716 = vld [vmem:[%s8708 + $0x38] sm:$0xff]
      %v8718 = vsel %vm2974, %v8676, 0
      %v8721 = vsel %vm2974, %v8677, 0
      %v8724 = vsel %vm2974, %v8678, 0
      %v8727 = vsel %vm2974, %v8679, 0
      %v8730 = vsel %vm2974, %v8680, 0
      %v8733 = vsel %vm2974, %v8681, 0
      %v8736 = vsel %vm2974, %v8682, 0
      %v8739 = vsel %vm2974, %v8683, 0
      %v8742 = vsel %vm2974, %v8684, 0
      %v8745 = vsel %vm2974, %v8685, 0
      %v8748 = vsel %vm2974, %v8686, 0
      %v8751 = vsel %vm2974, %v8687, 0
      %v8754 = vsel %vm2974, %v8688, 0
      %v8757 = vsel %vm2974, %v8689, 0
      %v8760 = vsel %vm2974, %v8690, 0
      %v8763 = vsel %vm2974, %v8691, 0
      %v8766 = vsel %vm2974, %v8692, 0
      %v8769 = vsel %vm2974, %v8693, 0
      %v8772 = vsel %vm2974, %v8694, 0
      %v8775 = vsel %vm2974, %v8695, 0
      %v8778 = vsel %vm2974, %v8696, 0
      %v8781 = vsel %vm2974, %v8697, 0
      %v8784 = vsel %vm2974, %v8698, 0
      %v8787 = vsel %vm2974, %v8699, 0
      %v8790 = vsel %vm2974, %v8700, 0
      %v8793 = vsel %vm2974, %v8701, 0
      %v8796 = vsel %vm2974, %v8702, 0
      %v8799 = vsel %vm2974, %v8703, 0
      %v8802 = vsel %vm2974, %v8704, 0
      %v8805 = vsel %vm2974, %v8705, 0
      %v8808 = vsel %vm2974, %v8706, 0
      %v8811 = vsel %vm2974, %v8707, 0
      %8813 = vmatpush.msra.mxu0 0.0
      %8814 = vmatpush.msra.mxu0 0.0
      %8815 = vmatpush.msra.mxu0 0.0
      %8816 = vmatpush.msra.mxu0 0.0
      %8817 = vmatpush.msra.mxu0 0.0
      %8818 = vmatpush.msra.mxu0 0.0
      %8819 = vmatpush.msra.mxu0 0.0
      %8820 = vmatpush.msra.mxu0 0.0
      %8821 = vmatpush.msra.mxu0 %v8716
      %8822 = vmatpush.msra.mxu0 %v8715
      %8823 = vmatpush.msra.mxu0 %v8714
      %8824 = vmatpush.msra.mxu0 %v8713
      %8825 = vmatpush.msra.mxu0 %v8712
      %8826 = vmatpush.msra.mxu0 %v8711
      %8827 = vmatpush.msra.mxu0 %v8710
      %8828 = vmatpush.msra.mxu0 %v8709
      %8829 = vmatmul.f32.gmra.mxu0 %v8718
      %v8830 = vpop.f32.mrf.mxu0
      %v8831 = vadd.f32 0.0, %v8830
      %8832 = vmatmul.f32.gmra.mxu0 %v8721
      %v8833 = vpop.f32.mrf.mxu0
      %v8834 = vadd.f32 0.0, %v8833
      %8835 = vmatmul.f32.gmra.mxu0 %v8724
      %v8836 = vpop.f32.mrf.mxu0
      %v8837 = vadd.f32 0.0, %v8836
      %8838 = vmatmul.f32.gmra.mxu0 %v8727
      %v8839 = vpop.f32.mrf.mxu0
      %v8840 = vadd.f32 0.0, %v8839
      %8841 = vmatmul.f32.gmra.mxu0 %v8730
      %v8842 = vpop.f32.mrf.mxu0
      %v8843 = vadd.f32 0.0, %v8842
      %8844 = vmatmul.f32.gmra.mxu0 %v8733
      %v8845 = vpop.f32.mrf.mxu0
      %v8846 = vadd.f32 0.0, %v8845
      %8847 = vmatmul.f32.gmra.mxu0 %v8736
      %v8848 = vpop.f32.mrf.mxu0
      %v8849 = vadd.f32 0.0, %v8848
      %8850 = vmatmul.f32.gmra.mxu0 %v8739
      %v8851 = vpop.f32.mrf.mxu0
      %v8852 = vadd.f32 0.0, %v8851
      %8853 = vmatmul.f32.gmra.mxu0 %v8742
      %v8854 = vpop.f32.mrf.mxu0
      %v8855 = vadd.f32 0.0, %v8854
      %8856 = vmatmul.f32.gmra.mxu0 %v8745
      %v8857 = vpop.f32.mrf.mxu0
      %v8858 = vadd.f32 0.0, %v8857
      %8859 = vmatmul.f32.gmra.mxu0 %v8748
      %v8860 = vpop.f32.mrf.mxu0
      %v8861 = vadd.f32 0.0, %v8860
      %8862 = vmatmul.f32.gmra.mxu0 %v8751
      %v8863 = vpop.f32.mrf.mxu0
      %v8864 = vadd.f32 0.0, %v8863
      %8865 = vmatmul.f32.gmra.mxu0 %v8754
      %v8866 = vpop.f32.mrf.mxu0
      %v8867 = vadd.f32 0.0, %v8866
      %8868 = vmatmul.f32.gmra.mxu0 %v8757
      %v8869 = vpop.f32.mrf.mxu0
      %v8870 = vadd.f32 0.0, %v8869
      %8871 = vmatmul.f32.gmra.mxu0 %v8760
      %v8872 = vpop.f32.mrf.mxu0
      %v8873 = vadd.f32 0.0, %v8872
      %8874 = vmatmul.f32.gmra.mxu0 %v8763
      %v8875 = vpop.f32.mrf.mxu0
      %v8876 = vadd.f32 0.0, %v8875
      %8877 = vmatmul.f32.gmra.mxu0 %v8766
      %v8878 = vpop.f32.mrf.mxu0
      %v8879 = vadd.f32 0.0, %v8878
      %8880 = vmatmul.f32.gmra.mxu0 %v8769
      %v8881 = vpop.f32.mrf.mxu0
      %v8882 = vadd.f32 0.0, %v8881
      %8883 = vmatmul.f32.gmra.mxu0 %v8772
      %v8884 = vpop.f32.mrf.mxu0
      %v8885 = vadd.f32 0.0, %v8884
      %8886 = vmatmul.f32.gmra.mxu0 %v8775
      %v8887 = vpop.f32.mrf.mxu0
      %v8888 = vadd.f32 0.0, %v8887
      %8889 = vmatmul.f32.gmra.mxu0 %v8778
      %v8890 = vpop.f32.mrf.mxu0
      %v8891 = vadd.f32 0.0, %v8890
      %8892 = vmatmul.f32.gmra.mxu0 %v8781
      %v8893 = vpop.f32.mrf.mxu0
      %v8894 = vadd.f32 0.0, %v8893
      %8895 = vmatmul.f32.gmra.mxu0 %v8784
      %v8896 = vpop.f32.mrf.mxu0
      %v8897 = vadd.f32 0.0, %v8896
      %8898 = vmatmul.f32.gmra.mxu0 %v8787
      %v8899 = vpop.f32.mrf.mxu0
      %v8900 = vadd.f32 0.0, %v8899
      %8901 = vmatmul.f32.gmra.mxu0 %v8790
      %v8902 = vpop.f32.mrf.mxu0
      %v8903 = vadd.f32 0.0, %v8902
      %8904 = vmatmul.f32.gmra.mxu0 %v8793
      %v8905 = vpop.f32.mrf.mxu0
      %v8906 = vadd.f32 0.0, %v8905
      %8907 = vmatmul.f32.gmra.mxu0 %v8796
      %v8908 = vpop.f32.mrf.mxu0
      %v8909 = vadd.f32 0.0, %v8908
      %8910 = vmatmul.f32.gmra.mxu0 %v8799
      %v8911 = vpop.f32.mrf.mxu0
      %v8912 = vadd.f32 0.0, %v8911
      %8913 = vmatmul.f32.gmra.mxu0 %v8802
      %v8914 = vpop.f32.mrf.mxu0
      %v8915 = vadd.f32 0.0, %v8914
      %8916 = vmatmul.f32.gmra.mxu0 %v8805
      %v8917 = vpop.f32.mrf.mxu0
      %v8918 = vadd.f32 0.0, %v8917
      %8919 = vmatmul.f32.gmra.mxu0 %v8808
      %v8920 = vpop.f32.mrf.mxu0
      %v8921 = vadd.f32 0.0, %v8920
      %8922 = vmatmul.f32.gmra.mxu0 %v8811
      %v8923 = vpop.f32.mrf.mxu0
      %v8924 = vadd.f32 0.0, %v8923
      %8925 = vdwg.mxu0
      %v8926 = vadd.f32 %v8644, %v8831
      %v8927 = vadd.f32 %v8645, %v8834
      %v8928 = vadd.f32 %v8646, %v8837
      %v8929 = vadd.f32 %v8647, %v8840
      %v8930 = vadd.f32 %v8648, %v8843
      %v8931 = vadd.f32 %v8649, %v8846
      %v8932 = vadd.f32 %v8650, %v8849
      %v8933 = vadd.f32 %v8651, %v8852
      %v8934 = vadd.f32 %v8652, %v8855
      %v8935 = vadd.f32 %v8653, %v8858
      %v8936 = vadd.f32 %v8654, %v8861
      %v8937 = vadd.f32 %v8655, %v8864
      %v8938 = vadd.f32 %v8656, %v8867
      %v8939 = vadd.f32 %v8657, %v8870
      %v8940 = vadd.f32 %v8658, %v8873
      %v8941 = vadd.f32 %v8659, %v8876
      %v8942 = vadd.f32 %v8660, %v8879
      %v8943 = vadd.f32 %v8661, %v8882
      %v8944 = vadd.f32 %v8662, %v8885
      %v8945 = vadd.f32 %v8663, %v8888
      %v8946 = vadd.f32 %v8664, %v8891
      %v8947 = vadd.f32 %v8665, %v8894
      %v8948 = vadd.f32 %v8666, %v8897
      %v8949 = vadd.f32 %v8667, %v8900
      %v8950 = vadd.f32 %v8668, %v8903
      %v8951 = vadd.f32 %v8669, %v8906
      %v8952 = vadd.f32 %v8670, %v8909
      %v8953 = vadd.f32 %v8671, %v8912
      %v8954 = vadd.f32 %v8672, %v8915
      %v8955 = vadd.f32 %v8673, %v8918
      %v8956 = vadd.f32 %v8674, %v8921
      %v8957 = vadd.f32 %v8675, %v8924
      %v8958 = vld [vmem:[%s5785 + $0x7] sm:$0xff]
      %v8959 = vld [vmem:[%s5785 + $0xf] sm:$0xff]
      %v8960 = vld [vmem:[%s5785 + $0x27] sm:$0xff]
      %v8961 = vld [vmem:[%s5785 + $0x2f] sm:$0xff]
      %v8962 = vld [vmem:[%s5785 + $0x47] sm:$0xff]
      %v8963 = vld [vmem:[%s5785 + $0x4f] sm:$0xff]
      %v8964 = vld [vmem:[%s5785 + $0x67] sm:$0xff]
      %v8965 = vld [vmem:[%s5785 + $0x6f] sm:$0xff]
      %v8966 = vld [vmem:[%s5785 + $0x87] sm:$0xff]
      %v8967 = vld [vmem:[%s5785 + $0x8f] sm:$0xff]
      %v8968 = vld [vmem:[%s5785 + $0xa7] sm:$0xff]
      %v8969 = vld [vmem:[%s5785 + $0xaf] sm:$0xff]
      %v8970 = vld [vmem:[%s5785 + $0xc7] sm:$0xff]
      %v8971 = vld [vmem:[%s5785 + $0xcf] sm:$0xff]
      %v8972 = vld [vmem:[%s5785 + $0xe7] sm:$0xff]
      %v8973 = vld [vmem:[%s5785 + $0xef] sm:$0xff]
      %v8974 = vld [vmem:[%s5785 + $0x107] sm:$0xff]
      %v8975 = vld [vmem:[%s5785 + $0x10f] sm:$0xff]
      %v8976 = vld [vmem:[%s5785 + $0x127] sm:$0xff]
      %v8977 = vld [vmem:[%s5785 + $0x12f] sm:$0xff]
      %v8978 = vld [vmem:[%s5785 + $0x147] sm:$0xff]
      %v8979 = vld [vmem:[%s5785 + $0x14f] sm:$0xff]
      %v8980 = vld [vmem:[%s5785 + $0x167] sm:$0xff]
      %v8981 = vld [vmem:[%s5785 + $0x16f] sm:$0xff]
      %v8982 = vld [vmem:[%s5785 + $0x187] sm:$0xff]
      %v8983 = vld [vmem:[%s5785 + $0x18f] sm:$0xff]
      %v8984 = vld [vmem:[%s5785 + $0x1a7] sm:$0xff]
      %v8985 = vld [vmem:[%s5785 + $0x1af] sm:$0xff]
      %v8986 = vld [vmem:[%s5785 + $0x1c7] sm:$0xff]
      %v8987 = vld [vmem:[%s5785 + $0x1cf] sm:$0xff]
      %v8988 = vld [vmem:[%s5785 + $0x1e7] sm:$0xff]
      %v8989 = vld [vmem:[%s5785 + $0x1ef] sm:$0xff]
      %s8990 = scalar_lea.vmem %s6, 384
      %v8991 = vld [vmem:[%s8990] sm:$0xff]
      %v8992 = vld [vmem:[%s8990 + $0x8] sm:$0xff]
      %v8993 = vld [vmem:[%s8990 + $0x10] sm:$0xff]
      %v8994 = vld [vmem:[%s8990 + $0x18] sm:$0xff]
      %v8995 = vld [vmem:[%s8990 + $0x20] sm:$0xff]
      %v8996 = vld [vmem:[%s8990 + $0x28] sm:$0xff]
      %v8997 = vld [vmem:[%s8990 + $0x30] sm:$0xff]
      %v8998 = vld [vmem:[%s8990 + $0x38] sm:$0xff]
      %v9000 = vsel %vm2974, %v8958, 0
      %v9003 = vsel %vm2974, %v8959, 0
      %v9006 = vsel %vm2974, %v8960, 0
      %v9009 = vsel %vm2974, %v8961, 0
      %v9012 = vsel %vm2974, %v8962, 0
      %v9015 = vsel %vm2974, %v8963, 0
      %v9018 = vsel %vm2974, %v8964, 0
      %v9021 = vsel %vm2974, %v8965, 0
      %v9024 = vsel %vm2974, %v8966, 0
      %v9027 = vsel %vm2974, %v8967, 0
      %v9030 = vsel %vm2974, %v8968, 0
      %v9033 = vsel %vm2974, %v8969, 0
      %v9036 = vsel %vm2974, %v8970, 0
      %v9039 = vsel %vm2974, %v8971, 0
      %v9042 = vsel %vm2974, %v8972, 0
      %v9045 = vsel %vm2974, %v8973, 0
      %v9048 = vsel %vm2974, %v8974, 0
      %v9051 = vsel %vm2974, %v8975, 0
      %v9054 = vsel %vm2974, %v8976, 0
      %v9057 = vsel %vm2974, %v8977, 0
      %v9060 = vsel %vm2974, %v8978, 0
      %v9063 = vsel %vm2974, %v8979, 0
      %v9066 = vsel %vm2974, %v8980, 0
      %v9069 = vsel %vm2974, %v8981, 0
      %v9072 = vsel %vm2974, %v8982, 0
      %v9075 = vsel %vm2974, %v8983, 0
      %v9078 = vsel %vm2974, %v8984, 0
      %v9081 = vsel %vm2974, %v8985, 0
      %v9084 = vsel %vm2974, %v8986, 0
      %v9087 = vsel %vm2974, %v8987, 0
      %v9090 = vsel %vm2974, %v8988, 0
      %v9093 = vsel %vm2974, %v8989, 0
      %9095 = vmatpush.msra.mxu0 0.0
      %9096 = vmatpush.msra.mxu0 0.0
      %9097 = vmatpush.msra.mxu0 0.0
      %9098 = vmatpush.msra.mxu0 0.0
      %9099 = vmatpush.msra.mxu0 0.0
      %9100 = vmatpush.msra.mxu0 0.0
      %9101 = vmatpush.msra.mxu0 0.0
      %9102 = vmatpush.msra.mxu0 0.0
      %9103 = vmatpush.msra.mxu0 %v8998
      %9104 = vmatpush.msra.mxu0 %v8997
      %9105 = vmatpush.msra.mxu0 %v8996
      %9106 = vmatpush.msra.mxu0 %v8995
      %9107 = vmatpush.msra.mxu0 %v8994
      %9108 = vmatpush.msra.mxu0 %v8993
      %9109 = vmatpush.msra.mxu0 %v8992
      %9110 = vmatpush.msra.mxu0 %v8991
      %9111 = vmatmul.f32.gmra.mxu0 %v9000
      %v9112 = vpop.f32.mrf.mxu0
      %v9113 = vadd.f32 0.0, %v9112
      %9114 = vmatmul.f32.gmra.mxu0 %v9003
      %v9115 = vpop.f32.mrf.mxu0
      %v9116 = vadd.f32 0.0, %v9115
      %9117 = vmatmul.f32.gmra.mxu0 %v9006
      %v9118 = vpop.f32.mrf.mxu0
      %v9119 = vadd.f32 0.0, %v9118
      %9120 = vmatmul.f32.gmra.mxu0 %v9009
      %v9121 = vpop.f32.mrf.mxu0
      %v9122 = vadd.f32 0.0, %v9121
      %9123 = vmatmul.f32.gmra.mxu0 %v9012
      %v9124 = vpop.f32.mrf.mxu0
      %v9125 = vadd.f32 0.0, %v9124
      %9126 = vmatmul.f32.gmra.mxu0 %v9015
      %v9127 = vpop.f32.mrf.mxu0
      %v9128 = vadd.f32 0.0, %v9127
      %9129 = vmatmul.f32.gmra.mxu0 %v9018
      %v9130 = vpop.f32.mrf.mxu0
      %v9131 = vadd.f32 0.0, %v9130
      %9132 = vmatmul.f32.gmra.mxu0 %v9021
      %v9133 = vpop.f32.mrf.mxu0
      %v9134 = vadd.f32 0.0, %v9133
      %9135 = vmatmul.f32.gmra.mxu0 %v9024
      %v9136 = vpop.f32.mrf.mxu0
      %v9137 = vadd.f32 0.0, %v9136
      %9138 = vmatmul.f32.gmra.mxu0 %v9027
      %v9139 = vpop.f32.mrf.mxu0
      %v9140 = vadd.f32 0.0, %v9139
      %9141 = vmatmul.f32.gmra.mxu0 %v9030
      %v9142 = vpop.f32.mrf.mxu0
      %v9143 = vadd.f32 0.0, %v9142
      %9144 = vmatmul.f32.gmra.mxu0 %v9033
      %v9145 = vpop.f32.mrf.mxu0
      %v9146 = vadd.f32 0.0, %v9145
      %9147 = vmatmul.f32.gmra.mxu0 %v9036
      %v9148 = vpop.f32.mrf.mxu0
      %v9149 = vadd.f32 0.0, %v9148
      %9150 = vmatmul.f32.gmra.mxu0 %v9039
      %v9151 = vpop.f32.mrf.mxu0
      %v9152 = vadd.f32 0.0, %v9151
      %9153 = vmatmul.f32.gmra.mxu0 %v9042
      %v9154 = vpop.f32.mrf.mxu0
      %v9155 = vadd.f32 0.0, %v9154
      %9156 = vmatmul.f32.gmra.mxu0 %v9045
      %v9157 = vpop.f32.mrf.mxu0
      %v9158 = vadd.f32 0.0, %v9157
      %9159 = vmatmul.f32.gmra.mxu0 %v9048
      %v9160 = vpop.f32.mrf.mxu0
      %v9161 = vadd.f32 0.0, %v9160
      %9162 = vmatmul.f32.gmra.mxu0 %v9051
      %v9163 = vpop.f32.mrf.mxu0
      %v9164 = vadd.f32 0.0, %v9163
      %9165 = vmatmul.f32.gmra.mxu0 %v9054
      %v9166 = vpop.f32.mrf.mxu0
      %v9167 = vadd.f32 0.0, %v9166
      %9168 = vmatmul.f32.gmra.mxu0 %v9057
      %v9169 = vpop.f32.mrf.mxu0
      %v9170 = vadd.f32 0.0, %v9169
      %9171 = vmatmul.f32.gmra.mxu0 %v9060
      %v9172 = vpop.f32.mrf.mxu0
      %v9173 = vadd.f32 0.0, %v9172
      %9174 = vmatmul.f32.gmra.mxu0 %v9063
      %v9175 = vpop.f32.mrf.mxu0
      %v9176 = vadd.f32 0.0, %v9175
      %9177 = vmatmul.f32.gmra.mxu0 %v9066
      %v9178 = vpop.f32.mrf.mxu0
      %v9179 = vadd.f32 0.0, %v9178
      %9180 = vmatmul.f32.gmra.mxu0 %v9069
      %v9181 = vpop.f32.mrf.mxu0
      %v9182 = vadd.f32 0.0, %v9181
      %9183 = vmatmul.f32.gmra.mxu0 %v9072
      %v9184 = vpop.f32.mrf.mxu0
      %v9185 = vadd.f32 0.0, %v9184
      %9186 = vmatmul.f32.gmra.mxu0 %v9075
      %v9187 = vpop.f32.mrf.mxu0
      %v9188 = vadd.f32 0.0, %v9187
      %9189 = vmatmul.f32.gmra.mxu0 %v9078
      %v9190 = vpop.f32.mrf.mxu0
      %v9191 = vadd.f32 0.0, %v9190
      %9192 = vmatmul.f32.gmra.mxu0 %v9081
      %v9193 = vpop.f32.mrf.mxu0
      %v9194 = vadd.f32 0.0, %v9193
      %9195 = vmatmul.f32.gmra.mxu0 %v9084
      %v9196 = vpop.f32.mrf.mxu0
      %v9197 = vadd.f32 0.0, %v9196
      %9198 = vmatmul.f32.gmra.mxu0 %v9087
      %v9199 = vpop.f32.mrf.mxu0
      %v9200 = vadd.f32 0.0, %v9199
      %9201 = vmatmul.f32.gmra.mxu0 %v9090
      %v9202 = vpop.f32.mrf.mxu0
      %v9203 = vadd.f32 0.0, %v9202
      %9204 = vmatmul.f32.gmra.mxu0 %v9093
      %v9205 = vpop.f32.mrf.mxu0
      %v9206 = vadd.f32 0.0, %v9205
      %9207 = vdwg.mxu0
      %v9208 = vadd.f32 %v8926, %v9113
      %v9209 = vadd.f32 %v8927, %v9116
      %v9210 = vadd.f32 %v8928, %v9119
      %v9211 = vadd.f32 %v8929, %v9122
      %v9212 = vadd.f32 %v8930, %v9125
      %v9213 = vadd.f32 %v8931, %v9128
      %v9214 = vadd.f32 %v8932, %v9131
      %v9215 = vadd.f32 %v8933, %v9134
      %v9216 = vadd.f32 %v8934, %v9137
      %v9217 = vadd.f32 %v8935, %v9140
      %v9218 = vadd.f32 %v8936, %v9143
      %v9219 = vadd.f32 %v8937, %v9146
      %v9220 = vadd.f32 %v8938, %v9149
      %v9221 = vadd.f32 %v8939, %v9152
      %v9222 = vadd.f32 %v8940, %v9155
      %v9223 = vadd.f32 %v8941, %v9158
      %v9224 = vadd.f32 %v8942, %v9161
      %v9225 = vadd.f32 %v8943, %v9164
      %v9226 = vadd.f32 %v8944, %v9167
      %v9227 = vadd.f32 %v8945, %v9170
      %v9228 = vadd.f32 %v8946, %v9173
      %v9229 = vadd.f32 %v8947, %v9176
      %v9230 = vadd.f32 %v8948, %v9179
      %v9231 = vadd.f32 %v8949, %v9182
      %v9232 = vadd.f32 %v8950, %v9185
      %v9233 = vadd.f32 %v8951, %v9188
      %v9234 = vadd.f32 %v8952, %v9191
      %v9235 = vadd.f32 %v8953, %v9194
      %v9236 = vadd.f32 %v8954, %v9197
      %v9237 = vadd.f32 %v8955, %v9200
      %v9238 = vadd.f32 %v8956, %v9203
      %v9239 = vadd.f32 %v8957, %v9206
      %v9240 = vld [vmem:[%s5785 + $0x8] sm:$0xff]
      %v9241 = vld [vmem:[%s5785 + $0x10] sm:$0xff]
      %v9242 = vld [vmem:[%s5785 + $0x28] sm:$0xff]
      %v9243 = vld [vmem:[%s5785 + $0x30] sm:$0xff]
      %v9244 = vld [vmem:[%s5785 + $0x48] sm:$0xff]
      %v9245 = vld [vmem:[%s5785 + $0x50] sm:$0xff]
      %v9246 = vld [vmem:[%s5785 + $0x68] sm:$0xff]
      %v9247 = vld [vmem:[%s5785 + $0x70] sm:$0xff]
      %v9248 = vld [vmem:[%s5785 + $0x88] sm:$0xff]
      %v9249 = vld [vmem:[%s5785 + $0x90] sm:$0xff]
      %v9250 = vld [vmem:[%s5785 + $0xa8] sm:$0xff]
      %v9251 = vld [vmem:[%s5785 + $0xb0] sm:$0xff]
      %v9252 = vld [vmem:[%s5785 + $0xc8] sm:$0xff]
      %v9253 = vld [vmem:[%s5785 + $0xd0] sm:$0xff]
      %v9254 = vld [vmem:[%s5785 + $0xe8] sm:$0xff]
      %v9255 = vld [vmem:[%s5785 + $0xf0] sm:$0xff]
      %v9256 = vld [vmem:[%s5785 + $0x108] sm:$0xff]
      %v9257 = vld [vmem:[%s5785 + $0x110] sm:$0xff]
      %v9258 = vld [vmem:[%s5785 + $0x128] sm:$0xff]
      %v9259 = vld [vmem:[%s5785 + $0x130] sm:$0xff]
      %v9260 = vld [vmem:[%s5785 + $0x148] sm:$0xff]
      %v9261 = vld [vmem:[%s5785 + $0x150] sm:$0xff]
      %v9262 = vld [vmem:[%s5785 + $0x168] sm:$0xff]
      %v9263 = vld [vmem:[%s5785 + $0x170] sm:$0xff]
      %v9264 = vld [vmem:[%s5785 + $0x188] sm:$0xff]
      %v9265 = vld [vmem:[%s5785 + $0x190] sm:$0xff]
      %v9266 = vld [vmem:[%s5785 + $0x1a8] sm:$0xff]
      %v9267 = vld [vmem:[%s5785 + $0x1b0] sm:$0xff]
      %v9268 = vld [vmem:[%s5785 + $0x1c8] sm:$0xff]
      %v9269 = vld [vmem:[%s5785 + $0x1d0] sm:$0xff]
      %v9270 = vld [vmem:[%s5785 + $0x1e8] sm:$0xff]
      %v9271 = vld [vmem:[%s5785 + $0x1f0] sm:$0xff]
      %s9272 = scalar_lea.vmem %s6, 448
      %v9273 = vld [vmem:[%s9272] sm:$0xff]
      %v9274 = vld [vmem:[%s9272 + $0x8] sm:$0xff]
      %v9275 = vld [vmem:[%s9272 + $0x10] sm:$0xff]
      %v9276 = vld [vmem:[%s9272 + $0x18] sm:$0xff]
      %v9277 = vld [vmem:[%s9272 + $0x20] sm:$0xff]
      %v9278 = vld [vmem:[%s9272 + $0x28] sm:$0xff]
      %v9279 = vld [vmem:[%s9272 + $0x30] sm:$0xff]
      %v9280 = vld [vmem:[%s9272 + $0x38] sm:$0xff]
      %v9282 = vsel %vm2974, %v9240, 0
      %v9285 = vsel %vm2974, %v9241, 0
      %v9288 = vsel %vm2974, %v9242, 0
      %v9291 = vsel %vm2974, %v9243, 0
      %v9294 = vsel %vm2974, %v9244, 0
      %v9297 = vsel %vm2974, %v9245, 0
      %v9300 = vsel %vm2974, %v9246, 0
      %v9303 = vsel %vm2974, %v9247, 0
      %v9306 = vsel %vm2974, %v9248, 0
      %v9309 = vsel %vm2974, %v9249, 0
      %v9312 = vsel %vm2974, %v9250, 0
      %v9315 = vsel %vm2974, %v9251, 0
      %v9318 = vsel %vm2974, %v9252, 0
      %v9321 = vsel %vm2974, %v9253, 0
      %v9324 = vsel %vm2974, %v9254, 0
      %v9327 = vsel %vm2974, %v9255, 0
      %v9330 = vsel %vm2974, %v9256, 0
      %v9333 = vsel %vm2974, %v9257, 0
      %v9336 = vsel %vm2974, %v9258, 0
      %v9339 = vsel %vm2974, %v9259, 0
      %v9342 = vsel %vm2974, %v9260, 0
      %v9345 = vsel %vm2974, %v9261, 0
      %v9348 = vsel %vm2974, %v9262, 0
      %v9351 = vsel %vm2974, %v9263, 0
      %v9354 = vsel %vm2974, %v9264, 0
      %v9357 = vsel %vm2974, %v9265, 0
      %v9360 = vsel %vm2974, %v9266, 0
      %v9363 = vsel %vm2974, %v9267, 0
      %v9366 = vsel %vm2974, %v9268, 0
      %v9369 = vsel %vm2974, %v9269, 0
      %v9372 = vsel %vm2974, %v9270, 0
      %v9375 = vsel %vm2974, %v9271, 0
      %9377 = vmatpush.msra.mxu0 0.0
      %9378 = vmatpush.msra.mxu0 0.0
      %9379 = vmatpush.msra.mxu0 0.0
      %9380 = vmatpush.msra.mxu0 0.0
      %9381 = vmatpush.msra.mxu0 0.0
      %9382 = vmatpush.msra.mxu0 0.0
      %9383 = vmatpush.msra.mxu0 0.0
      %9384 = vmatpush.msra.mxu0 0.0
      %9385 = vmatpush.msra.mxu0 %v9280
      %9386 = vmatpush.msra.mxu0 %v9279
      %9387 = vmatpush.msra.mxu0 %v9278
      %9388 = vmatpush.msra.mxu0 %v9277
      %9389 = vmatpush.msra.mxu0 %v9276
      %9390 = vmatpush.msra.mxu0 %v9275
      %9391 = vmatpush.msra.mxu0 %v9274
      %9392 = vmatpush.msra.mxu0 %v9273
      %9393 = vmatmul.f32.gmra.mxu0 %v9282
      %v9394 = vpop.f32.mrf.mxu0
      %v9395 = vadd.f32 0.0, %v9394
      %9396 = vmatmul.f32.gmra.mxu0 %v9285
      %v9397 = vpop.f32.mrf.mxu0
      %v9398 = vadd.f32 0.0, %v9397
      %9399 = vmatmul.f32.gmra.mxu0 %v9288
      %v9400 = vpop.f32.mrf.mxu0
      %v9401 = vadd.f32 0.0, %v9400
      %9402 = vmatmul.f32.gmra.mxu0 %v9291
      %v9403 = vpop.f32.mrf.mxu0
      %v9404 = vadd.f32 0.0, %v9403
      %9405 = vmatmul.f32.gmra.mxu0 %v9294
      %v9406 = vpop.f32.mrf.mxu0
      %v9407 = vadd.f32 0.0, %v9406
      %9408 = vmatmul.f32.gmra.mxu0 %v9297
      %v9409 = vpop.f32.mrf.mxu0
      %v9410 = vadd.f32 0.0, %v9409
      %9411 = vmatmul.f32.gmra.mxu0 %v9300
      %v9412 = vpop.f32.mrf.mxu0
      %v9413 = vadd.f32 0.0, %v9412
      %9414 = vmatmul.f32.gmra.mxu0 %v9303
      %v9415 = vpop.f32.mrf.mxu0
      %v9416 = vadd.f32 0.0, %v9415
      %9417 = vmatmul.f32.gmra.mxu0 %v9306
      %v9418 = vpop.f32.mrf.mxu0
      %v9419 = vadd.f32 0.0, %v9418
      %9420 = vmatmul.f32.gmra.mxu0 %v9309
      %v9421 = vpop.f32.mrf.mxu0
      %v9422 = vadd.f32 0.0, %v9421
      %9423 = vmatmul.f32.gmra.mxu0 %v9312
      %v9424 = vpop.f32.mrf.mxu0
      %v9425 = vadd.f32 0.0, %v9424
      %9426 = vmatmul.f32.gmra.mxu0 %v9315
      %v9427 = vpop.f32.mrf.mxu0
      %v9428 = vadd.f32 0.0, %v9427
      %9429 = vmatmul.f32.gmra.mxu0 %v9318
      %v9430 = vpop.f32.mrf.mxu0
      %v9431 = vadd.f32 0.0, %v9430
      %9432 = vmatmul.f32.gmra.mxu0 %v9321
      %v9433 = vpop.f32.mrf.mxu0
      %v9434 = vadd.f32 0.0, %v9433
      %9435 = vmatmul.f32.gmra.mxu0 %v9324
      %v9436 = vpop.f32.mrf.mxu0
      %v9437 = vadd.f32 0.0, %v9436
      %9438 = vmatmul.f32.gmra.mxu0 %v9327
      %v9439 = vpop.f32.mrf.mxu0
      %v9440 = vadd.f32 0.0, %v9439
      %9441 = vmatmul.f32.gmra.mxu0 %v9330
      %v9442 = vpop.f32.mrf.mxu0
      %v9443 = vadd.f32 0.0, %v9442
      %9444 = vmatmul.f32.gmra.mxu0 %v9333
      %v9445 = vpop.f32.mrf.mxu0
      %v9446 = vadd.f32 0.0, %v9445
      %9447 = vmatmul.f32.gmra.mxu0 %v9336
      %v9448 = vpop.f32.mrf.mxu0
      %v9449 = vadd.f32 0.0, %v9448
      %9450 = vmatmul.f32.gmra.mxu0 %v9339
      %v9451 = vpop.f32.mrf.mxu0
      %v9452 = vadd.f32 0.0, %v9451
      %9453 = vmatmul.f32.gmra.mxu0 %v9342
      %v9454 = vpop.f32.mrf.mxu0
      %v9455 = vadd.f32 0.0, %v9454
      %9456 = vmatmul.f32.gmra.mxu0 %v9345
      %v9457 = vpop.f32.mrf.mxu0
      %v9458 = vadd.f32 0.0, %v9457
      %9459 = vmatmul.f32.gmra.mxu0 %v9348
      %v9460 = vpop.f32.mrf.mxu0
      %v9461 = vadd.f32 0.0, %v9460
      %9462 = vmatmul.f32.gmra.mxu0 %v9351
      %v9463 = vpop.f32.mrf.mxu0
      %v9464 = vadd.f32 0.0, %v9463
      %9465 = vmatmul.f32.gmra.mxu0 %v9354
      %v9466 = vpop.f32.mrf.mxu0
      %v9467 = vadd.f32 0.0, %v9466
      %9468 = vmatmul.f32.gmra.mxu0 %v9357
      %v9469 = vpop.f32.mrf.mxu0
      %v9470 = vadd.f32 0.0, %v9469
      %9471 = vmatmul.f32.gmra.mxu0 %v9360
      %v9472 = vpop.f32.mrf.mxu0
      %v9473 = vadd.f32 0.0, %v9472
      %9474 = vmatmul.f32.gmra.mxu0 %v9363
      %v9475 = vpop.f32.mrf.mxu0
      %v9476 = vadd.f32 0.0, %v9475
      %9477 = vmatmul.f32.gmra.mxu0 %v9366
      %v9478 = vpop.f32.mrf.mxu0
      %v9479 = vadd.f32 0.0, %v9478
      %9480 = vmatmul.f32.gmra.mxu0 %v9369
      %v9481 = vpop.f32.mrf.mxu0
      %v9482 = vadd.f32 0.0, %v9481
      %9483 = vmatmul.f32.gmra.mxu0 %v9372
      %v9484 = vpop.f32.mrf.mxu0
      %v9485 = vadd.f32 0.0, %v9484
      %9486 = vmatmul.f32.gmra.mxu0 %v9375
      %v9487 = vpop.f32.mrf.mxu0
      %v9488 = vadd.f32 0.0, %v9487
      %9489 = vdwg.mxu0
      %v9490 = vadd.f32 %v9208, %v9395
      %v9491 = vadd.f32 %v9209, %v9398
      %v9492 = vadd.f32 %v9210, %v9401
      %v9493 = vadd.f32 %v9211, %v9404
      %v9494 = vadd.f32 %v9212, %v9407
      %v9495 = vadd.f32 %v9213, %v9410
      %v9496 = vadd.f32 %v9214, %v9413
      %v9497 = vadd.f32 %v9215, %v9416
      %v9498 = vadd.f32 %v9216, %v9419
      %v9499 = vadd.f32 %v9217, %v9422
      %v9500 = vadd.f32 %v9218, %v9425
      %v9501 = vadd.f32 %v9219, %v9428
      %v9502 = vadd.f32 %v9220, %v9431
      %v9503 = vadd.f32 %v9221, %v9434
      %v9504 = vadd.f32 %v9222, %v9437
      %v9505 = vadd.f32 %v9223, %v9440
      %v9506 = vadd.f32 %v9224, %v9443
      %v9507 = vadd.f32 %v9225, %v9446
      %v9508 = vadd.f32 %v9226, %v9449
      %v9509 = vadd.f32 %v9227, %v9452
      %v9510 = vadd.f32 %v9228, %v9455
      %v9511 = vadd.f32 %v9229, %v9458
      %v9512 = vadd.f32 %v9230, %v9461
      %v9513 = vadd.f32 %v9231, %v9464
      %v9514 = vadd.f32 %v9232, %v9467
      %v9515 = vadd.f32 %v9233, %v9470
      %v9516 = vadd.f32 %v9234, %v9473
      %v9517 = vadd.f32 %v9235, %v9476
      %v9518 = vadd.f32 %v9236, %v9479
      %v9519 = vadd.f32 %v9237, %v9482
      %v9520 = vadd.f32 %v9238, %v9485
      %v9521 = vadd.f32 %v9239, %v9488
      %v9522 = vld [vmem:[%s5785 + $0x9] sm:$0xff]
      %v9523 = vld [vmem:[%s5785 + $0x11] sm:$0xff]
      %v9524 = vld [vmem:[%s5785 + $0x29] sm:$0xff]
      %v9525 = vld [vmem:[%s5785 + $0x31] sm:$0xff]
      %v9526 = vld [vmem:[%s5785 + $0x49] sm:$0xff]
      %v9527 = vld [vmem:[%s5785 + $0x51] sm:$0xff]
      %v9528 = vld [vmem:[%s5785 + $0x69] sm:$0xff]
      %v9529 = vld [vmem:[%s5785 + $0x71] sm:$0xff]
      %v9530 = vld [vmem:[%s5785 + $0x89] sm:$0xff]
      %v9531 = vld [vmem:[%s5785 + $0x91] sm:$0xff]
      %v9532 = vld [vmem:[%s5785 + $0xa9] sm:$0xff]
      %v9533 = vld [vmem:[%s5785 + $0xb1] sm:$0xff]
      %v9534 = vld [vmem:[%s5785 + $0xc9] sm:$0xff]
      %v9535 = vld [vmem:[%s5785 + $0xd1] sm:$0xff]
      %v9536 = vld [vmem:[%s5785 + $0xe9] sm:$0xff]
      %v9537 = vld [vmem:[%s5785 + $0xf1] sm:$0xff]
      %v9538 = vld [vmem:[%s5785 + $0x109] sm:$0xff]
      %v9539 = vld [vmem:[%s5785 + $0x111] sm:$0xff]
      %v9540 = vld [vmem:[%s5785 + $0x129] sm:$0xff]
      %v9541 = vld [vmem:[%s5785 + $0x131] sm:$0xff]
      %v9542 = vld [vmem:[%s5785 + $0x149] sm:$0xff]
      %v9543 = vld [vmem:[%s5785 + $0x151] sm:$0xff]
      %v9544 = vld [vmem:[%s5785 + $0x169] sm:$0xff]
      %v9545 = vld [vmem:[%s5785 + $0x171] sm:$0xff]
      %v9546 = vld [vmem:[%s5785 + $0x189] sm:$0xff]
      %v9547 = vld [vmem:[%s5785 + $0x191] sm:$0xff]
      %v9548 = vld [vmem:[%s5785 + $0x1a9] sm:$0xff]
      %v9549 = vld [vmem:[%s5785 + $0x1b1] sm:$0xff]
      %v9550 = vld [vmem:[%s5785 + $0x1c9] sm:$0xff]
      %v9551 = vld [vmem:[%s5785 + $0x1d1] sm:$0xff]
      %v9552 = vld [vmem:[%s5785 + $0x1e9] sm:$0xff]
      %v9553 = vld [vmem:[%s5785 + $0x1f1] sm:$0xff]
      %s9554 = scalar_lea.vmem %s6, 512
      %v9555 = vld [vmem:[%s9554] sm:$0xff]
      %v9556 = vld [vmem:[%s9554 + $0x8] sm:$0xff]
      %v9557 = vld [vmem:[%s9554 + $0x10] sm:$0xff]
      %v9558 = vld [vmem:[%s9554 + $0x18] sm:$0xff]
      %v9559 = vld [vmem:[%s9554 + $0x20] sm:$0xff]
      %v9560 = vld [vmem:[%s9554 + $0x28] sm:$0xff]
      %v9561 = vld [vmem:[%s9554 + $0x30] sm:$0xff]
      %v9562 = vld [vmem:[%s9554 + $0x38] sm:$0xff]
      %v9564 = vsel %vm2974, %v9522, 0
      %v9567 = vsel %vm2974, %v9523, 0
      %v9570 = vsel %vm2974, %v9524, 0
      %v9573 = vsel %vm2974, %v9525, 0
      %v9576 = vsel %vm2974, %v9526, 0
      %v9579 = vsel %vm2974, %v9527, 0
      %v9582 = vsel %vm2974, %v9528, 0
      %v9585 = vsel %vm2974, %v9529, 0
      %v9588 = vsel %vm2974, %v9530, 0
      %v9591 = vsel %vm2974, %v9531, 0
      %v9594 = vsel %vm2974, %v9532, 0
      %v9597 = vsel %vm2974, %v9533, 0
      %v9600 = vsel %vm2974, %v9534, 0
      %v9603 = vsel %vm2974, %v9535, 0
      %v9606 = vsel %vm2974, %v9536, 0
      %v9609 = vsel %vm2974, %v9537, 0
      %v9612 = vsel %vm2974, %v9538, 0
      %v9615 = vsel %vm2974, %v9539, 0
      %v9618 = vsel %vm2974, %v9540, 0
      %v9621 = vsel %vm2974, %v9541, 0
      %v9624 = vsel %vm2974, %v9542, 0
      %v9627 = vsel %vm2974, %v9543, 0
      %v9630 = vsel %vm2974, %v9544, 0
      %v9633 = vsel %vm2974, %v9545, 0
      %v9636 = vsel %vm2974, %v9546, 0
      %v9639 = vsel %vm2974, %v9547, 0
      %v9642 = vsel %vm2974, %v9548, 0
      %v9645 = vsel %vm2974, %v9549, 0
      %v9648 = vsel %vm2974, %v9550, 0
      %v9651 = vsel %vm2974, %v9551, 0
      %v9654 = vsel %vm2974, %v9552, 0
      %v9657 = vsel %vm2974, %v9553, 0
      %9659 = vmatpush.msra.mxu0 0.0
      %9660 = vmatpush.msra.mxu0 0.0
      %9661 = vmatpush.msra.mxu0 0.0
      %9662 = vmatpush.msra.mxu0 0.0
      %9663 = vmatpush.msra.mxu0 0.0
      %9664 = vmatpush.msra.mxu0 0.0
      %9665 = vmatpush.msra.mxu0 0.0
      %9666 = vmatpush.msra.mxu0 0.0
      %9667 = vmatpush.msra.mxu0 %v9562
      %9668 = vmatpush.msra.mxu0 %v9561
      %9669 = vmatpush.msra.mxu0 %v9560
      %9670 = vmatpush.msra.mxu0 %v9559
      %9671 = vmatpush.msra.mxu0 %v9558
      %9672 = vmatpush.msra.mxu0 %v9557
      %9673 = vmatpush.msra.mxu0 %v9556
      %9674 = vmatpush.msra.mxu0 %v9555
      %9675 = vmatmul.f32.gmra.mxu0 %v9564
      %v9676 = vpop.f32.mrf.mxu0
      %v9677 = vadd.f32 0.0, %v9676
      %9678 = vmatmul.f32.gmra.mxu0 %v9567
      %v9679 = vpop.f32.mrf.mxu0
      %v9680 = vadd.f32 0.0, %v9679
      %9681 = vmatmul.f32.gmra.mxu0 %v9570
      %v9682 = vpop.f32.mrf.mxu0
      %v9683 = vadd.f32 0.0, %v9682
      %9684 = vmatmul.f32.gmra.mxu0 %v9573
      %v9685 = vpop.f32.mrf.mxu0
      %v9686 = vadd.f32 0.0, %v9685
      %9687 = vmatmul.f32.gmra.mxu0 %v9576
      %v9688 = vpop.f32.mrf.mxu0
      %v9689 = vadd.f32 0.0, %v9688
      %9690 = vmatmul.f32.gmra.mxu0 %v9579
      %v9691 = vpop.f32.mrf.mxu0
      %v9692 = vadd.f32 0.0, %v9691
      %9693 = vmatmul.f32.gmra.mxu0 %v9582
      %v9694 = vpop.f32.mrf.mxu0
      %v9695 = vadd.f32 0.0, %v9694
      %9696 = vmatmul.f32.gmra.mxu0 %v9585
      %v9697 = vpop.f32.mrf.mxu0
      %v9698 = vadd.f32 0.0, %v9697
      %9699 = vmatmul.f32.gmra.mxu0 %v9588
      %v9700 = vpop.f32.mrf.mxu0
      %v9701 = vadd.f32 0.0, %v9700
      %9702 = vmatmul.f32.gmra.mxu0 %v9591
      %v9703 = vpop.f32.mrf.mxu0
      %v9704 = vadd.f32 0.0, %v9703
      %9705 = vmatmul.f32.gmra.mxu0 %v9594
      %v9706 = vpop.f32.mrf.mxu0
      %v9707 = vadd.f32 0.0, %v9706
      %9708 = vmatmul.f32.gmra.mxu0 %v9597
      %v9709 = vpop.f32.mrf.mxu0
      %v9710 = vadd.f32 0.0, %v9709
      %9711 = vmatmul.f32.gmra.mxu0 %v9600
      %v9712 = vpop.f32.mrf.mxu0
      %v9713 = vadd.f32 0.0, %v9712
      %9714 = vmatmul.f32.gmra.mxu0 %v9603
      %v9715 = vpop.f32.mrf.mxu0
      %v9716 = vadd.f32 0.0, %v9715
      %9717 = vmatmul.f32.gmra.mxu0 %v9606
      %v9718 = vpop.f32.mrf.mxu0
      %v9719 = vadd.f32 0.0, %v9718
      %9720 = vmatmul.f32.gmra.mxu0 %v9609
      %v9721 = vpop.f32.mrf.mxu0
      %v9722 = vadd.f32 0.0, %v9721
      %9723 = vmatmul.f32.gmra.mxu0 %v9612
      %v9724 = vpop.f32.mrf.mxu0
      %v9725 = vadd.f32 0.0, %v9724
      %9726 = vmatmul.f32.gmra.mxu0 %v9615
      %v9727 = vpop.f32.mrf.mxu0
      %v9728 = vadd.f32 0.0, %v9727
      %9729 = vmatmul.f32.gmra.mxu0 %v9618
      %v9730 = vpop.f32.mrf.mxu0
      %v9731 = vadd.f32 0.0, %v9730
      %9732 = vmatmul.f32.gmra.mxu0 %v9621
      %v9733 = vpop.f32.mrf.mxu0
      %v9734 = vadd.f32 0.0, %v9733
      %9735 = vmatmul.f32.gmra.mxu0 %v9624
      %v9736 = vpop.f32.mrf.mxu0
      %v9737 = vadd.f32 0.0, %v9736
      %9738 = vmatmul.f32.gmra.mxu0 %v9627
      %v9739 = vpop.f32.mrf.mxu0
      %v9740 = vadd.f32 0.0, %v9739
      %9741 = vmatmul.f32.gmra.mxu0 %v9630
      %v9742 = vpop.f32.mrf.mxu0
      %v9743 = vadd.f32 0.0, %v9742
      %9744 = vmatmul.f32.gmra.mxu0 %v9633
      %v9745 = vpop.f32.mrf.mxu0
      %v9746 = vadd.f32 0.0, %v9745
      %9747 = vmatmul.f32.gmra.mxu0 %v9636
      %v9748 = vpop.f32.mrf.mxu0
      %v9749 = vadd.f32 0.0, %v9748
      %9750 = vmatmul.f32.gmra.mxu0 %v9639
      %v9751 = vpop.f32.mrf.mxu0
      %v9752 = vadd.f32 0.0, %v9751
      %9753 = vmatmul.f32.gmra.mxu0 %v9642
      %v9754 = vpop.f32.mrf.mxu0
      %v9755 = vadd.f32 0.0, %v9754
      %9756 = vmatmul.f32.gmra.mxu0 %v9645
      %v9757 = vpop.f32.mrf.mxu0
      %v9758 = vadd.f32 0.0, %v9757
      %9759 = vmatmul.f32.gmra.mxu0 %v9648
      %v9760 = vpop.f32.mrf.mxu0
      %v9761 = vadd.f32 0.0, %v9760
      %9762 = vmatmul.f32.gmra.mxu0 %v9651
      %v9763 = vpop.f32.mrf.mxu0
      %v9764 = vadd.f32 0.0, %v9763
      %9765 = vmatmul.f32.gmra.mxu0 %v9654
      %v9766 = vpop.f32.mrf.mxu0
      %v9767 = vadd.f32 0.0, %v9766
      %9768 = vmatmul.f32.gmra.mxu0 %v9657
      %v9769 = vpop.f32.mrf.mxu0
      %v9770 = vadd.f32 0.0, %v9769
      %9771 = vdwg.mxu0
      %v9772 = vadd.f32 %v9490, %v9677
      %v9773 = vadd.f32 %v9491, %v9680
      %v9774 = vadd.f32 %v9492, %v9683
      %v9775 = vadd.f32 %v9493, %v9686
      %v9776 = vadd.f32 %v9494, %v9689
      %v9777 = vadd.f32 %v9495, %v9692
      %v9778 = vadd.f32 %v9496, %v9695
      %v9779 = vadd.f32 %v9497, %v9698
      %v9780 = vadd.f32 %v9498, %v9701
      %v9781 = vadd.f32 %v9499, %v9704
      %v9782 = vadd.f32 %v9500, %v9707
      %v9783 = vadd.f32 %v9501, %v9710
      %v9784 = vadd.f32 %v9502, %v9713
      %v9785 = vadd.f32 %v9503, %v9716
      %v9786 = vadd.f32 %v9504, %v9719
      %v9787 = vadd.f32 %v9505, %v9722
      %v9788 = vadd.f32 %v9506, %v9725
      %v9789 = vadd.f32 %v9507, %v9728
      %v9790 = vadd.f32 %v9508, %v9731
      %v9791 = vadd.f32 %v9509, %v9734
      %v9792 = vadd.f32 %v9510, %v9737
      %v9793 = vadd.f32 %v9511, %v9740
      %v9794 = vadd.f32 %v9512, %v9743
      %v9795 = vadd.f32 %v9513, %v9746
      %v9796 = vadd.f32 %v9514, %v9749
      %v9797 = vadd.f32 %v9515, %v9752
      %v9798 = vadd.f32 %v9516, %v9755
      %v9799 = vadd.f32 %v9517, %v9758
      %v9800 = vadd.f32 %v9518, %v9761
      %v9801 = vadd.f32 %v9519, %v9764
      %v9802 = vadd.f32 %v9520, %v9767
      %v9803 = vadd.f32 %v9521, %v9770
      %v9804 = vld [vmem:[%s7] sm:$0x1]
      %v9806 = vperm.slane %v9804, 0
      %v9808 = vadd.f32 %v9772, %v9806
      %v9809 = vadd.f32 %v9773, %v9806
      %v9810 = vadd.f32 %v9774, %v9806
      %v9811 = vadd.f32 %v9775, %v9806
      %v9812 = vadd.f32 %v9776, %v9806
      %v9813 = vadd.f32 %v9777, %v9806
      %v9814 = vadd.f32 %v9778, %v9806
      %v9815 = vadd.f32 %v9779, %v9806
      %v9816 = vadd.f32 %v9780, %v9806
      %v9817 = vadd.f32 %v9781, %v9806
      %v9818 = vadd.f32 %v9782, %v9806
      %v9819 = vadd.f32 %v9783, %v9806
      %v9820 = vadd.f32 %v9784, %v9806
      %v9821 = vadd.f32 %v9785, %v9806
      %v9822 = vadd.f32 %v9786, %v9806
      %v9823 = vadd.f32 %v9787, %v9806
      %v9824 = vadd.f32 %v9788, %v9806
      %v9825 = vadd.f32 %v9789, %v9806
      %v9826 = vadd.f32 %v9790, %v9806
      %v9827 = vadd.f32 %v9791, %v9806
      %v9828 = vadd.f32 %v9792, %v9806
      %v9829 = vadd.f32 %v9793, %v9806
      %v9830 = vadd.f32 %v9794, %v9806
      %v9831 = vadd.f32 %v9795, %v9806
      %v9832 = vadd.f32 %v9796, %v9806
      %v9833 = vadd.f32 %v9797, %v9806
      %v9834 = vadd.f32 %v9798, %v9806
      %v9835 = vadd.f32 %v9799, %v9806
      %v9836 = vadd.f32 %v9800, %v9806
      %v9837 = vadd.f32 %v9801, %v9806
      %v9838 = vadd.f32 %v9802, %v9806
      %v9839 = vadd.f32 %v9803, %v9806
      %vm9840 = vcmask 261120
      %9841 = vst.msk [vmem:[#allocation4] sm:$0xff] %vm9840, 0.0
      %9842 = vst.msk [vmem:[#allocation4 + $0x8] sm:$0xff] %vm9840, 0.0
      %9843 = vst.msk [vmem:[#allocation4 + $0x10] sm:$0xff] %vm9840, 0.0
      %9844 = vst.msk [vmem:[#allocation4 + $0x18] sm:$0xff] %vm9840, 0.0
      %9845 = vst.msk [vmem:[#allocation4 + $0x20] sm:$0xff] %vm9840, 0.0
      %9846 = vst.msk [vmem:[#allocation4 + $0x28] sm:$0xff] %vm9840, 0.0
      %9847 = vst.msk [vmem:[#allocation4 + $0x30] sm:$0xff] %vm9840, 0.0
      %9848 = vst.msk [vmem:[#allocation4 + $0x38] sm:$0xff] %vm9840, 0.0
      %9849 = vst.msk [vmem:[#allocation4 + $0x40] sm:$0xff] %vm9840, 0.0
      %9850 = vst.msk [vmem:[#allocation4 + $0x48] sm:$0xff] %vm9840, 0.0
      %9851 = vst.msk [vmem:[#allocation4 + $0x50] sm:$0xff] %vm9840, 0.0
      %9852 = vst.msk [vmem:[#allocation4 + $0x58] sm:$0xff] %vm9840, 0.0
      %9853 = vst.msk [vmem:[#allocation4 + $0x60] sm:$0xff] %vm9840, 0.0
      %9854 = vst.msk [vmem:[#allocation4 + $0x68] sm:$0xff] %vm9840, 0.0
      %9855 = vst.msk [vmem:[#allocation4 + $0x70] sm:$0xff] %vm9840, 0.0
      %9856 = vst.msk [vmem:[#allocation4 + $0x78] sm:$0xff] %vm9840, 0.0
      %9857 = vst.msk [vmem:[#allocation4 + $0x80] sm:$0xff] %vm9840, 0.0
      %9858 = vst.msk [vmem:[#allocation4 + $0x88] sm:$0xff] %vm9840, 0.0
      %9859 = vst.msk [vmem:[#allocation4 + $0x90] sm:$0xff] %vm9840, 0.0
      %9860 = vst.msk [vmem:[#allocation4 + $0x98] sm:$0xff] %vm9840, 0.0
      %9861 = vst.msk [vmem:[#allocation4 + $0xa0] sm:$0xff] %vm9840, 0.0
      %9862 = vst.msk [vmem:[#allocation4 + $0xa8] sm:$0xff] %vm9840, 0.0
      %9863 = vst.msk [vmem:[#allocation4 + $0xb0] sm:$0xff] %vm9840, 0.0
      %9864 = vst.msk [vmem:[#allocation4 + $0xb8] sm:$0xff] %vm9840, 0.0
      %9865 = vst.msk [vmem:[#allocation4 + $0xc0] sm:$0xff] %vm9840, 0.0
      %9866 = vst.msk [vmem:[#allocation4 + $0xc8] sm:$0xff] %vm9840, 0.0
      %9867 = vst.msk [vmem:[#allocation4 + $0xd0] sm:$0xff] %vm9840, 0.0
      %9868 = vst.msk [vmem:[#allocation4 + $0xd8] sm:$0xff] %vm9840, 0.0
      %9869 = vst.msk [vmem:[#allocation4 + $0xe0] sm:$0xff] %vm9840, 0.0
      %9870 = vst.msk [vmem:[#allocation4 + $0xe8] sm:$0xff] %vm9840, 0.0
      %9871 = vst.msk [vmem:[#allocation4 + $0xf0] sm:$0xff] %vm9840, 0.0
      %9872 = vst.msk [vmem:[#allocation4 + $0xf8] sm:$0xff] %vm9840, 0.0
      %9873 = vst.msk [vmem:[#allocation4 + $0x100] sm:$0xff] %vm9840, 0.0
      %9874 = vst.msk [vmem:[#allocation4 + $0x108] sm:$0xff] %vm9840, 0.0
      %9875 = vst.msk [vmem:[#allocation4 + $0x110] sm:$0xff] %vm9840, 0.0
      %9876 = vst.msk [vmem:[#allocation4 + $0x118] sm:$0xff] %vm9840, 0.0
      %9877 = vst.msk [vmem:[#allocation4 + $0x120] sm:$0xff] %vm9840, 0.0
      %9878 = vst.msk [vmem:[#allocation4 + $0x128] sm:$0xff] %vm9840, 0.0
      %9879 = vst.msk [vmem:[#allocation4 + $0x130] sm:$0xff] %vm9840, 0.0
      %9880 = vst.msk [vmem:[#allocation4 + $0x138] sm:$0xff] %vm9840, 0.0
      %9881 = vst.msk [vmem:[#allocation4 + $0x140] sm:$0xff] %vm9840, 0.0
      %9882 = vst.msk [vmem:[#allocation4 + $0x148] sm:$0xff] %vm9840, 0.0
      %9883 = vst.msk [vmem:[#allocation4 + $0x150] sm:$0xff] %vm9840, 0.0
      %9884 = vst.msk [vmem:[#allocation4 + $0x158] sm:$0xff] %vm9840, 0.0
      %9885 = vst.msk [vmem:[#allocation4 + $0x160] sm:$0xff] %vm9840, 0.0
      %9886 = vst.msk [vmem:[#allocation4 + $0x168] sm:$0xff] %vm9840, 0.0
      %9887 = vst.msk [vmem:[#allocation4 + $0x170] sm:$0xff] %vm9840, 0.0
      %9888 = vst.msk [vmem:[#allocation4 + $0x178] sm:$0xff] %vm9840, 0.0
      %9889 = vst.msk [vmem:[#allocation4 + $0x180] sm:$0xff] %vm9840, 0.0
      %9890 = vst.msk [vmem:[#allocation4 + $0x188] sm:$0xff] %vm9840, 0.0
      %9891 = vst.msk [vmem:[#allocation4 + $0x190] sm:$0xff] %vm9840, 0.0
      %9892 = vst.msk [vmem:[#allocation4 + $0x198] sm:$0xff] %vm9840, 0.0
      %9893 = vst.msk [vmem:[#allocation4 + $0x1a0] sm:$0xff] %vm9840, 0.0
      %9894 = vst.msk [vmem:[#allocation4 + $0x1a8] sm:$0xff] %vm9840, 0.0
      %9895 = vst.msk [vmem:[#allocation4 + $0x1b0] sm:$0xff] %vm9840, 0.0
      %9896 = vst.msk [vmem:[#allocation4 + $0x1b8] sm:$0xff] %vm9840, 0.0
      %9897 = vst.msk [vmem:[#allocation4 + $0x1c0] sm:$0xff] %vm9840, 0.0
      %9898 = vst.msk [vmem:[#allocation4 + $0x1c8] sm:$0xff] %vm9840, 0.0
      %9899 = vst.msk [vmem:[#allocation4 + $0x1d0] sm:$0xff] %vm9840, 0.0
      %9900 = vst.msk [vmem:[#allocation4 + $0x1d8] sm:$0xff] %vm9840, 0.0
      %9901 = vst.msk [vmem:[#allocation4 + $0x1e0] sm:$0xff] %vm9840, 0.0
      %9902 = vst.msk [vmem:[#allocation4 + $0x1e8] sm:$0xff] %vm9840, 0.0
      %9903 = vst.msk [vmem:[#allocation4 + $0x1f0] sm:$0xff] %vm9840, 0.0
      %9904 = vst.msk [vmem:[#allocation4 + $0x1f8] sm:$0xff] %vm9840, 0.0
      %9905 = vst.msk [vmem:[#allocation4 + $0x200] sm:$0xff] %vm9840, 0.0
      %9906 = vst.msk [vmem:[#allocation4 + $0x208] sm:$0xff] %vm9840, 0.0
      %9907 = vst.msk [vmem:[#allocation4 + $0x210] sm:$0xff] %vm9840, 0.0
      %9908 = vst.msk [vmem:[#allocation4 + $0x218] sm:$0xff] %vm9840, 0.0
      %9909 = vst.msk [vmem:[#allocation4 + $0x220] sm:$0xff] %vm9840, 0.0
      %9910 = vst.msk [vmem:[#allocation4 + $0x228] sm:$0xff] %vm9840, 0.0
      %9911 = vst.msk [vmem:[#allocation4 + $0x230] sm:$0xff] %vm9840, 0.0
      %9912 = vst.msk [vmem:[#allocation4 + $0x238] sm:$0xff] %vm9840, 0.0
      %s9913 = scalar_lea.vmem [#allocation4], 32
      %9914 = vst.msk [vmem:[%s9913 + $0x8] sm:$0xff] %vm9840, %v9808
      %9915 = vst.msk [vmem:[%s9913 + $0x10] sm:$0xff] %vm9840, %v9809
      %9916 = vst.msk [vmem:[%s9913 + $0x28] sm:$0xff] %vm9840, %v9810
      %9917 = vst.msk [vmem:[%s9913 + $0x30] sm:$0xff] %vm9840, %v9811
      %9918 = vst.msk [vmem:[%s9913 + $0x48] sm:$0xff] %vm9840, %v9812
      %9919 = vst.msk [vmem:[%s9913 + $0x50] sm:$0xff] %vm9840, %v9813
      %9920 = vst.msk [vmem:[%s9913 + $0x68] sm:$0xff] %vm9840, %v9814
      %9921 = vst.msk [vmem:[%s9913 + $0x70] sm:$0xff] %vm9840, %v9815
      %9922 = vst.msk [vmem:[%s9913 + $0x88] sm:$0xff] %vm9840, %v9816
      %9923 = vst.msk [vmem:[%s9913 + $0x90] sm:$0xff] %vm9840, %v9817
      %9924 = vst.msk [vmem:[%s9913 + $0xa8] sm:$0xff] %vm9840, %v9818
      %9925 = vst.msk [vmem:[%s9913 + $0xb0] sm:$0xff] %vm9840, %v9819
      %9926 = vst.msk [vmem:[%s9913 + $0xc8] sm:$0xff] %vm9840, %v9820
      %9927 = vst.msk [vmem:[%s9913 + $0xd0] sm:$0xff] %vm9840, %v9821
      %9928 = vst.msk [vmem:[%s9913 + $0xe8] sm:$0xff] %vm9840, %v9822
      %9929 = vst.msk [vmem:[%s9913 + $0xf0] sm:$0xff] %vm9840, %v9823
      %9930 = vst.msk [vmem:[%s9913 + $0x108] sm:$0xff] %vm9840, %v9824
      %9931 = vst.msk [vmem:[%s9913 + $0x110] sm:$0xff] %vm9840, %v9825
      %9932 = vst.msk [vmem:[%s9913 + $0x128] sm:$0xff] %vm9840, %v9826
      %9933 = vst.msk [vmem:[%s9913 + $0x130] sm:$0xff] %vm9840, %v9827
      %9934 = vst.msk [vmem:[%s9913 + $0x148] sm:$0xff] %vm9840, %v9828
      %9935 = vst.msk [vmem:[%s9913 + $0x150] sm:$0xff] %vm9840, %v9829
      %9936 = vst.msk [vmem:[%s9913 + $0x168] sm:$0xff] %vm9840, %v9830
      %9937 = vst.msk [vmem:[%s9913 + $0x170] sm:$0xff] %vm9840, %v9831
      %9938 = vst.msk [vmem:[%s9913 + $0x188] sm:$0xff] %vm9840, %v9832
      %9939 = vst.msk [vmem:[%s9913 + $0x190] sm:$0xff] %vm9840, %v9833
      %9940 = vst.msk [vmem:[%s9913 + $0x1a8] sm:$0xff] %vm9840, %v9834
      %9941 = vst.msk [vmem:[%s9913 + $0x1b0] sm:$0xff] %vm9840, %v9835
      %9942 = vst.msk [vmem:[%s9913 + $0x1c8] sm:$0xff] %vm9840, %v9836
      %9943 = vst.msk [vmem:[%s9913 + $0x1d0] sm:$0xff] %vm9840, %v9837
      %9944 = vst.msk [vmem:[%s9913 + $0x1e8] sm:$0xff] %vm9840, %v9838
      %9945 = vst.msk [vmem:[%s9913 + $0x1f0] sm:$0xff] %vm9840, %v9839
      %v9946 = vld [vmem:[#allocation4 + $0x7] sm:$0xff]
      %v9947 = vld [vmem:[#allocation4 + $0xf] sm:$0xff]
      %v9948 = vld [vmem:[#allocation4 + $0x27] sm:$0xff]
      %v9949 = vld [vmem:[#allocation4 + $0x2f] sm:$0xff]
      %v9950 = vld [vmem:[#allocation4 + $0x47] sm:$0xff]
      %v9951 = vld [vmem:[#allocation4 + $0x4f] sm:$0xff]
      %v9952 = vld [vmem:[#allocation4 + $0x67] sm:$0xff]
      %v9953 = vld [vmem:[#allocation4 + $0x6f] sm:$0xff]
      %v9954 = vld [vmem:[#allocation4 + $0x87] sm:$0xff]
      %v9955 = vld [vmem:[#allocation4 + $0x8f] sm:$0xff]
      %v9956 = vld [vmem:[#allocation4 + $0xa7] sm:$0xff]
      %v9957 = vld [vmem:[#allocation4 + $0xaf] sm:$0xff]
      %v9958 = vld [vmem:[#allocation4 + $0xc7] sm:$0xff]
      %v9959 = vld [vmem:[#allocation4 + $0xcf] sm:$0xff]
      %v9960 = vld [vmem:[#allocation4 + $0xe7] sm:$0xff]
      %v9961 = vld [vmem:[#allocation4 + $0xef] sm:$0xff]
      %v9962 = vld [vmem:[#allocation4 + $0x107] sm:$0xff]
      %v9963 = vld [vmem:[#allocation4 + $0x10f] sm:$0xff]
      %v9964 = vld [vmem:[#allocation4 + $0x127] sm:$0xff]
      %v9965 = vld [vmem:[#allocation4 + $0x12f] sm:$0xff]
      %v9966 = vld [vmem:[#allocation4 + $0x147] sm:$0xff]
      %v9967 = vld [vmem:[#allocation4 + $0x14f] sm:$0xff]
      %v9968 = vld [vmem:[#allocation4 + $0x167] sm:$0xff]
      %v9969 = vld [vmem:[#allocation4 + $0x16f] sm:$0xff]
      %v9970 = vld [vmem:[#allocation4 + $0x187] sm:$0xff]
      %v9971 = vld [vmem:[#allocation4 + $0x18f] sm:$0xff]
      %v9972 = vld [vmem:[#allocation4 + $0x1a7] sm:$0xff]
      %v9973 = vld [vmem:[#allocation4 + $0x1af] sm:$0xff]
      %v9974 = vld [vmem:[#allocation4 + $0x1c7] sm:$0xff]
      %v9975 = vld [vmem:[#allocation4 + $0x1cf] sm:$0xff]
      %v9976 = vld [vmem:[#allocation4 + $0x1e7] sm:$0xff]
      %v9977 = vld [vmem:[#allocation4 + $0x1ef] sm:$0xff]
      %v9978 = vld [vmem:[%s8] sm:$0xff]
      %v9979 = vld [vmem:[%s8 + $0x8] sm:$0xff]
      %v9980 = vld [vmem:[%s8 + $0x10] sm:$0xff]
      %v9981 = vld [vmem:[%s8 + $0x18] sm:$0xff]
      %v9982 = vld [vmem:[#allocation4 + $0x8] sm:$0xff]
      %v9983 = vld [vmem:[#allocation4 + $0x10] sm:$0xff]
      %v9984 = vld [vmem:[#allocation4 + $0x28] sm:$0xff]
      %v9985 = vld [vmem:[#allocation4 + $0x30] sm:$0xff]
      %v9986 = vld [vmem:[#allocation4 + $0x48] sm:$0xff]
      %v9987 = vld [vmem:[#allocation4 + $0x50] sm:$0xff]
      %v9988 = vld [vmem:[#allocation4 + $0x68] sm:$0xff]
      %v9989 = vld [vmem:[#allocation4 + $0x70] sm:$0xff]
      %v9990 = vld [vmem:[#allocation4 + $0x88] sm:$0xff]
      %v9991 = vld [vmem:[#allocation4 + $0x90] sm:$0xff]
      %v9992 = vld [vmem:[#allocation4 + $0xa8] sm:$0xff]
      %v9993 = vld [vmem:[#allocation4 + $0xb0] sm:$0xff]
      %v9994 = vld [vmem:[#allocation4 + $0xc8] sm:$0xff]
      %v9995 = vld [vmem:[#allocation4 + $0xd0] sm:$0xff]
      %v9996 = vld [vmem:[#allocation4 + $0xe8] sm:$0xff]
      %v9997 = vld [vmem:[#allocation4 + $0xf0] sm:$0xff]
      %v9998 = vld [vmem:[#allocation4 + $0x108] sm:$0xff]
      %v9999 = vld [vmem:[#allocation4 + $0x110] sm:$0xff]
      %v10000 = vld [vmem:[#allocation4 + $0x128] sm:$0xff]
      %v10001 = vld [vmem:[#allocation4 + $0x130] sm:$0xff]
      %v10002 = vld [vmem:[#allocation4 + $0x148] sm:$0xff]
      %v10003 = vld [vmem:[#allocation4 + $0x150] sm:$0xff]
      %v10004 = vld [vmem:[#allocation4 + $0x168] sm:$0xff]
      %v10005 = vld [vmem:[#allocation4 + $0x170] sm:$0xff]
      %v10006 = vld [vmem:[#allocation4 + $0x188] sm:$0xff]
      %v10007 = vld [vmem:[#allocation4 + $0x190] sm:$0xff]
      %v10008 = vld [vmem:[#allocation4 + $0x1a8] sm:$0xff]
      %v10009 = vld [vmem:[#allocation4 + $0x1b0] sm:$0xff]
      %v10010 = vld [vmem:[#allocation4 + $0x1c8] sm:$0xff]
      %v10011 = vld [vmem:[#allocation4 + $0x1d0] sm:$0xff]
      %v10012 = vld [vmem:[#allocation4 + $0x1e8] sm:$0xff]
      %v10013 = vld [vmem:[#allocation4 + $0x1f0] sm:$0xff]
      %s10014 = scalar_lea.vmem %s8, 32
      %v10015 = vld [vmem:[%s10014] sm:$0xff]
      %v10016 = vld [vmem:[%s10014 + $0x8] sm:$0xff]
      %v10017 = vld [vmem:[%s10014 + $0x10] sm:$0xff]
      %v10018 = vld [vmem:[%s10014 + $0x18] sm:$0xff]
      %v10020 = vsel %vm9840, %v9982, 0
      %v10023 = vsel %vm9840, %v9983, 0
      %v10026 = vsel %vm9840, %v9984, 0
      %v10029 = vsel %vm9840, %v9985, 0
      %v10032 = vsel %vm9840, %v9986, 0
      %v10035 = vsel %vm9840, %v9987, 0
      %v10038 = vsel %vm9840, %v9988, 0
      %v10041 = vsel %vm9840, %v9989, 0
      %v10044 = vsel %vm9840, %v9990, 0
      %v10047 = vsel %vm9840, %v9991, 0
      %v10050 = vsel %vm9840, %v9992, 0
      %v10053 = vsel %vm9840, %v9993, 0
      %v10056 = vsel %vm9840, %v9994, 0
      %v10059 = vsel %vm9840, %v9995, 0
      %v10062 = vsel %vm9840, %v9996, 0
      %v10065 = vsel %vm9840, %v9997, 0
      %v10068 = vsel %vm9840, %v9998, 0
      %v10071 = vsel %vm9840, %v9999, 0
      %v10074 = vsel %vm9840, %v10000, 0
      %v10077 = vsel %vm9840, %v10001, 0
      %v10080 = vsel %vm9840, %v10002, 0
      %v10083 = vsel %vm9840, %v10003, 0
      %v10086 = vsel %vm9840, %v10004, 0
      %v10089 = vsel %vm9840, %v10005, 0
      %v10092 = vsel %vm9840, %v10006, 0
      %v10095 = vsel %vm9840, %v10007, 0
      %v10098 = vsel %vm9840, %v10008, 0
      %v10101 = vsel %vm9840, %v10009, 0
      %v10104 = vsel %vm9840, %v10010, 0
      %v10107 = vsel %vm9840, %v10011, 0
      %v10110 = vsel %vm9840, %v10012, 0
      %v10113 = vsel %vm9840, %v10013, 0
      %10115 = vmatpush.msra.mxu0 0.0
      %10116 = vmatpush.msra.mxu0 0.0
      %10117 = vmatpush.msra.mxu0 0.0
      %10118 = vmatpush.msra.mxu0 0.0
      %10119 = vmatpush.msra.mxu0 0.0
      %10120 = vmatpush.msra.mxu0 0.0
      %10121 = vmatpush.msra.mxu0 0.0
      %10122 = vmatpush.msra.mxu0 0.0
      %10123 = vmatpush.msra.mxu0 0.0
      %10124 = vmatpush.msra.mxu0 0.0
      %10125 = vmatpush.msra.mxu0 0.0
      %10126 = vmatpush.msra.mxu0 0.0
      %10127 = vmatpush.msra.mxu0 %v10018
      %10128 = vmatpush.msra.mxu0 %v10017
      %10129 = vmatpush.msra.mxu0 %v10016
      %10130 = vmatpush.msra.mxu0 %v10015
      %10131 = vmatmul.f32.gmra.mxu0 %v10020
      %v10132 = vpop.f32.mrf.mxu0
      %v10133 = vadd.f32 0.0, %v10132
      %10134 = vmatmul.f32.gmra.mxu0 %v10023
      %v10135 = vpop.f32.mrf.mxu0
      %v10136 = vadd.f32 0.0, %v10135
      %10137 = vmatmul.f32.gmra.mxu0 %v10026
      %v10138 = vpop.f32.mrf.mxu0
      %v10139 = vadd.f32 0.0, %v10138
      %10140 = vmatmul.f32.gmra.mxu0 %v10029
      %v10141 = vpop.f32.mrf.mxu0
      %v10142 = vadd.f32 0.0, %v10141
      %10143 = vmatmul.f32.gmra.mxu0 %v10032
      %v10144 = vpop.f32.mrf.mxu0
      %v10145 = vadd.f32 0.0, %v10144
      %10146 = vmatmul.f32.gmra.mxu0 %v10035
      %v10147 = vpop.f32.mrf.mxu0
      %v10148 = vadd.f32 0.0, %v10147
      %10149 = vmatmul.f32.gmra.mxu0 %v10038
      %v10150 = vpop.f32.mrf.mxu0
      %v10151 = vadd.f32 0.0, %v10150
      %10152 = vmatmul.f32.gmra.mxu0 %v10041
      %v10153 = vpop.f32.mrf.mxu0
      %v10154 = vadd.f32 0.0, %v10153
      %10155 = vmatmul.f32.gmra.mxu0 %v10044
      %v10156 = vpop.f32.mrf.mxu0
      %v10157 = vadd.f32 0.0, %v10156
      %10158 = vmatmul.f32.gmra.mxu0 %v10047
      %v10159 = vpop.f32.mrf.mxu0
      %v10160 = vadd.f32 0.0, %v10159
      %10161 = vmatmul.f32.gmra.mxu0 %v10050
      %v10162 = vpop.f32.mrf.mxu0
      %v10163 = vadd.f32 0.0, %v10162
      %10164 = vmatmul.f32.gmra.mxu0 %v10053
      %v10165 = vpop.f32.mrf.mxu0
      %v10166 = vadd.f32 0.0, %v10165
      %10167 = vmatmul.f32.gmra.mxu0 %v10056
      %v10168 = vpop.f32.mrf.mxu0
      %v10169 = vadd.f32 0.0, %v10168
      %10170 = vmatmul.f32.gmra.mxu0 %v10059
      %v10171 = vpop.f32.mrf.mxu0
      %v10172 = vadd.f32 0.0, %v10171
      %10173 = vmatmul.f32.gmra.mxu0 %v10062
      %v10174 = vpop.f32.mrf.mxu0
      %v10175 = vadd.f32 0.0, %v10174
      %10176 = vmatmul.f32.gmra.mxu0 %v10065
      %v10177 = vpop.f32.mrf.mxu0
      %v10178 = vadd.f32 0.0, %v10177
      %10179 = vmatmul.f32.gmra.mxu0 %v10068
      %v10180 = vpop.f32.mrf.mxu0
      %v10181 = vadd.f32 0.0, %v10180
      %10182 = vmatmul.f32.gmra.mxu0 %v10071
      %v10183 = vpop.f32.mrf.mxu0
      %v10184 = vadd.f32 0.0, %v10183
      %10185 = vmatmul.f32.gmra.mxu0 %v10074
      %v10186 = vpop.f32.mrf.mxu0
      %v10187 = vadd.f32 0.0, %v10186
      %10188 = vmatmul.f32.gmra.mxu0 %v10077
      %v10189 = vpop.f32.mrf.mxu0
      %v10190 = vadd.f32 0.0, %v10189
      %10191 = vmatmul.f32.gmra.mxu0 %v10080
      %v10192 = vpop.f32.mrf.mxu0
      %v10193 = vadd.f32 0.0, %v10192
      %10194 = vmatmul.f32.gmra.mxu0 %v10083
      %v10195 = vpop.f32.mrf.mxu0
      %v10196 = vadd.f32 0.0, %v10195
      %10197 = vmatmul.f32.gmra.mxu0 %v10086
      %v10198 = vpop.f32.mrf.mxu0
      %v10199 = vadd.f32 0.0, %v10198
      %10200 = vmatmul.f32.gmra.mxu0 %v10089
      %v10201 = vpop.f32.mrf.mxu0
      %v10202 = vadd.f32 0.0, %v10201
      %10203 = vmatmul.f32.gmra.mxu0 %v10092
      %v10204 = vpop.f32.mrf.mxu0
      %v10205 = vadd.f32 0.0, %v10204
      %10206 = vmatmul.f32.gmra.mxu0 %v10095
      %v10207 = vpop.f32.mrf.mxu0
      %v10208 = vadd.f32 0.0, %v10207
      %10209 = vmatmul.f32.gmra.mxu0 %v10098
      %v10210 = vpop.f32.mrf.mxu0
      %v10211 = vadd.f32 0.0, %v10210
      %10212 = vmatmul.f32.gmra.mxu0 %v10101
      %v10213 = vpop.f32.mrf.mxu0
      %v10214 = vadd.f32 0.0, %v10213
      %10215 = vmatmul.f32.gmra.mxu0 %v10104
      %v10216 = vpop.f32.mrf.mxu0
      %v10217 = vadd.f32 0.0, %v10216
      %10218 = vmatmul.f32.gmra.mxu0 %v10107
      %v10219 = vpop.f32.mrf.mxu0
      %v10220 = vadd.f32 0.0, %v10219
      %10221 = vmatmul.f32.gmra.mxu0 %v10110
      %v10222 = vpop.f32.mrf.mxu0
      %v10223 = vadd.f32 0.0, %v10222
      %10224 = vmatmul.f32.gmra.mxu0 %v10113
      %v10225 = vpop.f32.mrf.mxu0
      %v10226 = vadd.f32 0.0, %v10225
      %10227 = vdwg.mxu0
      %v10229 = vsel %vm9840, %v9946, 0
      %v10232 = vsel %vm9840, %v9947, 0
      %v10235 = vsel %vm9840, %v9948, 0
      %v10238 = vsel %vm9840, %v9949, 0
      %v10241 = vsel %vm9840, %v9950, 0
      %v10244 = vsel %vm9840, %v9951, 0
      %v10247 = vsel %vm9840, %v9952, 0
      %v10250 = vsel %vm9840, %v9953, 0
      %v10253 = vsel %vm9840, %v9954, 0
      %v10256 = vsel %vm9840, %v9955, 0
      %v10259 = vsel %vm9840, %v9956, 0
      %v10262 = vsel %vm9840, %v9957, 0
      %v10265 = vsel %vm9840, %v9958, 0
      %v10268 = vsel %vm9840, %v9959, 0
      %v10271 = vsel %vm9840, %v9960, 0
      %v10274 = vsel %vm9840, %v9961, 0
      %v10277 = vsel %vm9840, %v9962, 0
      %v10280 = vsel %vm9840, %v9963, 0
      %v10283 = vsel %vm9840, %v9964, 0
      %v10286 = vsel %vm9840, %v9965, 0
      %v10289 = vsel %vm9840, %v9966, 0
      %v10292 = vsel %vm9840, %v9967, 0
      %v10295 = vsel %vm9840, %v9968, 0
      %v10298 = vsel %vm9840, %v9969, 0
      %v10301 = vsel %vm9840, %v9970, 0
      %v10304 = vsel %vm9840, %v9971, 0
      %v10307 = vsel %vm9840, %v9972, 0
      %v10310 = vsel %vm9840, %v9973, 0
      %v10313 = vsel %vm9840, %v9974, 0
      %v10316 = vsel %vm9840, %v9975, 0
      %v10319 = vsel %vm9840, %v9976, 0
      %v10322 = vsel %vm9840, %v9977, 0
      %10324 = vmatpush.msra.mxu0 0.0
      %10325 = vmatpush.msra.mxu0 0.0
      %10326 = vmatpush.msra.mxu0 0.0
      %10327 = vmatpush.msra.mxu0 0.0
      %10328 = vmatpush.msra.mxu0 0.0
      %10329 = vmatpush.msra.mxu0 0.0
      %10330 = vmatpush.msra.mxu0 0.0
      %10331 = vmatpush.msra.mxu0 0.0
      %10332 = vmatpush.msra.mxu0 0.0
      %10333 = vmatpush.msra.mxu0 0.0
      %10334 = vmatpush.msra.mxu0 0.0
      %10335 = vmatpush.msra.mxu0 0.0
      %10336 = vmatpush.msra.mxu0 %v9981
      %10337 = vmatpush.msra.mxu0 %v9980
      %10338 = vmatpush.msra.mxu0 %v9979
      %10339 = vmatpush.msra.mxu0 %v9978
      %10340 = vmatmul.f32.gmra.mxu0 %v10229
      %v10341 = vpop.f32.mrf.mxu0
      %v10342 = vadd.f32 %v10133, %v10341
      %10343 = vmatmul.f32.gmra.mxu0 %v10232
      %v10344 = vpop.f32.mrf.mxu0
      %v10345 = vadd.f32 %v10136, %v10344
      %10346 = vmatmul.f32.gmra.mxu0 %v10235
      %v10347 = vpop.f32.mrf.mxu0
      %v10348 = vadd.f32 %v10139, %v10347
      %10349 = vmatmul.f32.gmra.mxu0 %v10238
      %v10350 = vpop.f32.mrf.mxu0
      %v10351 = vadd.f32 %v10142, %v10350
      %10352 = vmatmul.f32.gmra.mxu0 %v10241
      %v10353 = vpop.f32.mrf.mxu0
      %v10354 = vadd.f32 %v10145, %v10353
      %10355 = vmatmul.f32.gmra.mxu0 %v10244
      %v10356 = vpop.f32.mrf.mxu0
      %v10357 = vadd.f32 %v10148, %v10356
      %10358 = vmatmul.f32.gmra.mxu0 %v10247
      %v10359 = vpop.f32.mrf.mxu0
      %v10360 = vadd.f32 %v10151, %v10359
      %10361 = vmatmul.f32.gmra.mxu0 %v10250
      %v10362 = vpop.f32.mrf.mxu0
      %v10363 = vadd.f32 %v10154, %v10362
      %10364 = vmatmul.f32.gmra.mxu0 %v10253
      %v10365 = vpop.f32.mrf.mxu0
      %v10366 = vadd.f32 %v10157, %v10365
      %10367 = vmatmul.f32.gmra.mxu0 %v10256
      %v10368 = vpop.f32.mrf.mxu0
      %v10369 = vadd.f32 %v10160, %v10368
      %10370 = vmatmul.f32.gmra.mxu0 %v10259
      %v10371 = vpop.f32.mrf.mxu0
      %v10372 = vadd.f32 %v10163, %v10371
      %10373 = vmatmul.f32.gmra.mxu0 %v10262
      %v10374 = vpop.f32.mrf.mxu0
      %v10375 = vadd.f32 %v10166, %v10374
      %10376 = vmatmul.f32.gmra.mxu0 %v10265
      %v10377 = vpop.f32.mrf.mxu0
      %v10378 = vadd.f32 %v10169, %v10377
      %10379 = vmatmul.f32.gmra.mxu0 %v10268
      %v10380 = vpop.f32.mrf.mxu0
      %v10381 = vadd.f32 %v10172, %v10380
      %10382 = vmatmul.f32.gmra.mxu0 %v10271
      %v10383 = vpop.f32.mrf.mxu0
      %v10384 = vadd.f32 %v10175, %v10383
      %10385 = vmatmul.f32.gmra.mxu0 %v10274
      %v10386 = vpop.f32.mrf.mxu0
      %v10387 = vadd.f32 %v10178, %v10386
      %10388 = vmatmul.f32.gmra.mxu0 %v10277
      %v10389 = vpop.f32.mrf.mxu0
      %v10390 = vadd.f32 %v10181, %v10389
      %10391 = vmatmul.f32.gmra.mxu0 %v10280
      %v10392 = vpop.f32.mrf.mxu0
      %v10393 = vadd.f32 %v10184, %v10392
      %10394 = vmatmul.f32.gmra.mxu0 %v10283
      %v10395 = vpop.f32.mrf.mxu0
      %v10396 = vadd.f32 %v10187, %v10395
      %10397 = vmatmul.f32.gmra.mxu0 %v10286
      %v10398 = vpop.f32.mrf.mxu0
      %v10399 = vadd.f32 %v10190, %v10398
      %10400 = vmatmul.f32.gmra.mxu0 %v10289
      %v10401 = vpop.f32.mrf.mxu0
      %v10402 = vadd.f32 %v10193, %v10401
      %10403 = vmatmul.f32.gmra.mxu0 %v10292
      %v10404 = vpop.f32.mrf.mxu0
      %v10405 = vadd.f32 %v10196, %v10404
      %10406 = vmatmul.f32.gmra.mxu0 %v10295
      %v10407 = vpop.f32.mrf.mxu0
      %v10408 = vadd.f32 %v10199, %v10407
      %10409 = vmatmul.f32.gmra.mxu0 %v10298
      %v10410 = vpop.f32.mrf.mxu0
      %v10411 = vadd.f32 %v10202, %v10410
      %10412 = vmatmul.f32.gmra.mxu0 %v10301
      %v10413 = vpop.f32.mrf.mxu0
      %v10414 = vadd.f32 %v10205, %v10413
      %10415 = vmatmul.f32.gmra.mxu0 %v10304
      %v10416 = vpop.f32.mrf.mxu0
      %v10417 = vadd.f32 %v10208, %v10416
      %10418 = vmatmul.f32.gmra.mxu0 %v10307
      %v10419 = vpop.f32.mrf.mxu0
      %v10420 = vadd.f32 %v10211, %v10419
      %10421 = vmatmul.f32.gmra.mxu0 %v10310
      %v10422 = vpop.f32.mrf.mxu0
      %v10423 = vadd.f32 %v10214, %v10422
      %10424 = vmatmul.f32.gmra.mxu0 %v10313
      %v10425 = vpop.f32.mrf.mxu0
      %v10426 = vadd.f32 %v10217, %v10425
      %10427 = vmatmul.f32.gmra.mxu0 %v10316
      %v10428 = vpop.f32.mrf.mxu0
      %v10429 = vadd.f32 %v10220, %v10428
      %10430 = vmatmul.f32.gmra.mxu0 %v10319
      %v10431 = vpop.f32.mrf.mxu0
      %v10432 = vadd.f32 %v10223, %v10431
      %10433 = vmatmul.f32.gmra.mxu0 %v10322
      %v10434 = vpop.f32.mrf.mxu0
      %v10435 = vadd.f32 %v10226, %v10434
      %10436 = vdwg.mxu0
      %v10437 = vld [vmem:[#allocation4 + $0x9] sm:$0xff]
      %v10438 = vld [vmem:[#allocation4 + $0x11] sm:$0xff]
      %v10439 = vld [vmem:[#allocation4 + $0x29] sm:$0xff]
      %v10440 = vld [vmem:[#allocation4 + $0x31] sm:$0xff]
      %v10441 = vld [vmem:[#allocation4 + $0x49] sm:$0xff]
      %v10442 = vld [vmem:[#allocation4 + $0x51] sm:$0xff]
      %v10443 = vld [vmem:[#allocation4 + $0x69] sm:$0xff]
      %v10444 = vld [vmem:[#allocation4 + $0x71] sm:$0xff]
      %v10445 = vld [vmem:[#allocation4 + $0x89] sm:$0xff]
      %v10446 = vld [vmem:[#allocation4 + $0x91] sm:$0xff]
      %v10447 = vld [vmem:[#allocation4 + $0xa9] sm:$0xff]
      %v10448 = vld [vmem:[#allocation4 + $0xb1] sm:$0xff]
      %v10449 = vld [vmem:[#allocation4 + $0xc9] sm:$0xff]
      %v10450 = vld [vmem:[#allocation4 + $0xd1] sm:$0xff]
      %v10451 = vld [vmem:[#allocation4 + $0xe9] sm:$0xff]
      %v10452 = vld [vmem:[#allocation4 + $0xf1] sm:$0xff]
      %v10453 = vld [vmem:[#allocation4 + $0x109] sm:$0xff]
      %v10454 = vld [vmem:[#allocation4 + $0x111] sm:$0xff]
      %v10455 = vld [vmem:[#allocation4 + $0x129] sm:$0xff]
      %v10456 = vld [vmem:[#allocation4 + $0x131] sm:$0xff]
      %v10457 = vld [vmem:[#allocation4 + $0x149] sm:$0xff]
      %v10458 = vld [vmem:[#allocation4 + $0x151] sm:$0xff]
      %v10459 = vld [vmem:[#allocation4 + $0x169] sm:$0xff]
      %v10460 = vld [vmem:[#allocation4 + $0x171] sm:$0xff]
      %v10461 = vld [vmem:[#allocation4 + $0x189] sm:$0xff]
      %v10462 = vld [vmem:[#allocation4 + $0x191] sm:$0xff]
      %v10463 = vld [vmem:[#allocation4 + $0x1a9] sm:$0xff]
      %v10464 = vld [vmem:[#allocation4 + $0x1b1] sm:$0xff]
      %v10465 = vld [vmem:[#allocation4 + $0x1c9] sm:$0xff]
      %v10466 = vld [vmem:[#allocation4 + $0x1d1] sm:$0xff]
      %v10467 = vld [vmem:[#allocation4 + $0x1e9] sm:$0xff]
      %v10468 = vld [vmem:[#allocation4 + $0x1f1] sm:$0xff]
      %s10469 = scalar_lea.vmem %s8, 64
      %v10470 = vld [vmem:[%s10469] sm:$0xff]
      %v10471 = vld [vmem:[%s10469 + $0x8] sm:$0xff]
      %v10472 = vld [vmem:[%s10469 + $0x10] sm:$0xff]
      %v10473 = vld [vmem:[%s10469 + $0x18] sm:$0xff]
      %v10475 = vsel %vm9840, %v10437, 0
      %v10478 = vsel %vm9840, %v10438, 0
      %v10481 = vsel %vm9840, %v10439, 0
      %v10484 = vsel %vm9840, %v10440, 0
      %v10487 = vsel %vm9840, %v10441, 0
      %v10490 = vsel %vm9840, %v10442, 0
      %v10493 = vsel %vm9840, %v10443, 0
      %v10496 = vsel %vm9840, %v10444, 0
      %v10499 = vsel %vm9840, %v10445, 0
      %v10502 = vsel %vm9840, %v10446, 0
      %v10505 = vsel %vm9840, %v10447, 0
      %v10508 = vsel %vm9840, %v10448, 0
      %v10511 = vsel %vm9840, %v10449, 0
      %v10514 = vsel %vm9840, %v10450, 0
      %v10517 = vsel %vm9840, %v10451, 0
      %v10520 = vsel %vm9840, %v10452, 0
      %v10523 = vsel %vm9840, %v10453, 0
      %v10526 = vsel %vm9840, %v10454, 0
      %v10529 = vsel %vm9840, %v10455, 0
      %v10532 = vsel %vm9840, %v10456, 0
      %v10535 = vsel %vm9840, %v10457, 0
      %v10538 = vsel %vm9840, %v10458, 0
      %v10541 = vsel %vm9840, %v10459, 0
      %v10544 = vsel %vm9840, %v10460, 0
      %v10547 = vsel %vm9840, %v10461, 0
      %v10550 = vsel %vm9840, %v10462, 0
      %v10553 = vsel %vm9840, %v10463, 0
      %v10556 = vsel %vm9840, %v10464, 0
      %v10559 = vsel %vm9840, %v10465, 0
      %v10562 = vsel %vm9840, %v10466, 0
      %v10565 = vsel %vm9840, %v10467, 0
      %v10568 = vsel %vm9840, %v10468, 0
      %10570 = vmatpush.msra.mxu0 0.0
      %10571 = vmatpush.msra.mxu0 0.0
      %10572 = vmatpush.msra.mxu0 0.0
      %10573 = vmatpush.msra.mxu0 0.0
      %10574 = vmatpush.msra.mxu0 0.0
      %10575 = vmatpush.msra.mxu0 0.0
      %10576 = vmatpush.msra.mxu0 0.0
      %10577 = vmatpush.msra.mxu0 0.0
      %10578 = vmatpush.msra.mxu0 0.0
      %10579 = vmatpush.msra.mxu0 0.0
      %10580 = vmatpush.msra.mxu0 0.0
      %10581 = vmatpush.msra.mxu0 0.0
      %10582 = vmatpush.msra.mxu0 %v10473
      %10583 = vmatpush.msra.mxu0 %v10472
      %10584 = vmatpush.msra.mxu0 %v10471
      %10585 = vmatpush.msra.mxu0 %v10470
      %10586 = vmatmul.f32.gmra.mxu0 %v10475
      %v10587 = vpop.f32.mrf.mxu0
      %v10588 = vadd.f32 0.0, %v10587
      %10589 = vmatmul.f32.gmra.mxu0 %v10478
      %v10590 = vpop.f32.mrf.mxu0
      %v10591 = vadd.f32 0.0, %v10590
      %10592 = vmatmul.f32.gmra.mxu0 %v10481
      %v10593 = vpop.f32.mrf.mxu0
      %v10594 = vadd.f32 0.0, %v10593
      %10595 = vmatmul.f32.gmra.mxu0 %v10484
      %v10596 = vpop.f32.mrf.mxu0
      %v10597 = vadd.f32 0.0, %v10596
      %10598 = vmatmul.f32.gmra.mxu0 %v10487
      %v10599 = vpop.f32.mrf.mxu0
      %v10600 = vadd.f32 0.0, %v10599
      %10601 = vmatmul.f32.gmra.mxu0 %v10490
      %v10602 = vpop.f32.mrf.mxu0
      %v10603 = vadd.f32 0.0, %v10602
      %10604 = vmatmul.f32.gmra.mxu0 %v10493
      %v10605 = vpop.f32.mrf.mxu0
      %v10606 = vadd.f32 0.0, %v10605
      %10607 = vmatmul.f32.gmra.mxu0 %v10496
      %v10608 = vpop.f32.mrf.mxu0
      %v10609 = vadd.f32 0.0, %v10608
      %10610 = vmatmul.f32.gmra.mxu0 %v10499
      %v10611 = vpop.f32.mrf.mxu0
      %v10612 = vadd.f32 0.0, %v10611
      %10613 = vmatmul.f32.gmra.mxu0 %v10502
      %v10614 = vpop.f32.mrf.mxu0
      %v10615 = vadd.f32 0.0, %v10614
      %10616 = vmatmul.f32.gmra.mxu0 %v10505
      %v10617 = vpop.f32.mrf.mxu0
      %v10618 = vadd.f32 0.0, %v10617
      %10619 = vmatmul.f32.gmra.mxu0 %v10508
      %v10620 = vpop.f32.mrf.mxu0
      %v10621 = vadd.f32 0.0, %v10620
      %10622 = vmatmul.f32.gmra.mxu0 %v10511
      %v10623 = vpop.f32.mrf.mxu0
      %v10624 = vadd.f32 0.0, %v10623
      %10625 = vmatmul.f32.gmra.mxu0 %v10514
      %v10626 = vpop.f32.mrf.mxu0
      %v10627 = vadd.f32 0.0, %v10626
      %10628 = vmatmul.f32.gmra.mxu0 %v10517
      %v10629 = vpop.f32.mrf.mxu0
      %v10630 = vadd.f32 0.0, %v10629
      %10631 = vmatmul.f32.gmra.mxu0 %v10520
      %v10632 = vpop.f32.mrf.mxu0
      %v10633 = vadd.f32 0.0, %v10632
      %10634 = vmatmul.f32.gmra.mxu0 %v10523
      %v10635 = vpop.f32.mrf.mxu0
      %v10636 = vadd.f32 0.0, %v10635
      %10637 = vmatmul.f32.gmra.mxu0 %v10526
      %v10638 = vpop.f32.mrf.mxu0
      %v10639 = vadd.f32 0.0, %v10638
      %10640 = vmatmul.f32.gmra.mxu0 %v10529
      %v10641 = vpop.f32.mrf.mxu0
      %v10642 = vadd.f32 0.0, %v10641
      %10643 = vmatmul.f32.gmra.mxu0 %v10532
      %v10644 = vpop.f32.mrf.mxu0
      %v10645 = vadd.f32 0.0, %v10644
      %10646 = vmatmul.f32.gmra.mxu0 %v10535
      %v10647 = vpop.f32.mrf.mxu0
      %v10648 = vadd.f32 0.0, %v10647
      %10649 = vmatmul.f32.gmra.mxu0 %v10538
      %v10650 = vpop.f32.mrf.mxu0
      %v10651 = vadd.f32 0.0, %v10650
      %10652 = vmatmul.f32.gmra.mxu0 %v10541
      %v10653 = vpop.f32.mrf.mxu0
      %v10654 = vadd.f32 0.0, %v10653
      %10655 = vmatmul.f32.gmra.mxu0 %v10544
      %v10656 = vpop.f32.mrf.mxu0
      %v10657 = vadd.f32 0.0, %v10656
      %10658 = vmatmul.f32.gmra.mxu0 %v10547
      %v10659 = vpop.f32.mrf.mxu0
      %v10660 = vadd.f32 0.0, %v10659
      %10661 = vmatmul.f32.gmra.mxu0 %v10550
      %v10662 = vpop.f32.mrf.mxu0
      %v10663 = vadd.f32 0.0, %v10662
      %10664 = vmatmul.f32.gmra.mxu0 %v10553
      %v10665 = vpop.f32.mrf.mxu0
      %v10666 = vadd.f32 0.0, %v10665
      %10667 = vmatmul.f32.gmra.mxu0 %v10556
      %v10668 = vpop.f32.mrf.mxu0
      %v10669 = vadd.f32 0.0, %v10668
      %10670 = vmatmul.f32.gmra.mxu0 %v10559
      %v10671 = vpop.f32.mrf.mxu0
      %v10672 = vadd.f32 0.0, %v10671
      %10673 = vmatmul.f32.gmra.mxu0 %v10562
      %v10674 = vpop.f32.mrf.mxu0
      %v10675 = vadd.f32 0.0, %v10674
      %10676 = vmatmul.f32.gmra.mxu0 %v10565
      %v10677 = vpop.f32.mrf.mxu0
      %v10678 = vadd.f32 0.0, %v10677
      %10679 = vmatmul.f32.gmra.mxu0 %v10568
      %v10680 = vpop.f32.mrf.mxu0
      %v10681 = vadd.f32 0.0, %v10680
      %10682 = vdwg.mxu0
      %v10683 = vadd.f32 %v10342, %v10588
      %v10684 = vadd.f32 %v10345, %v10591
      %v10685 = vadd.f32 %v10348, %v10594
      %v10686 = vadd.f32 %v10351, %v10597
      %v10687 = vadd.f32 %v10354, %v10600
      %v10688 = vadd.f32 %v10357, %v10603
      %v10689 = vadd.f32 %v10360, %v10606
      %v10690 = vadd.f32 %v10363, %v10609
      %v10691 = vadd.f32 %v10366, %v10612
      %v10692 = vadd.f32 %v10369, %v10615
      %v10693 = vadd.f32 %v10372, %v10618
      %v10694 = vadd.f32 %v10375, %v10621
      %v10695 = vadd.f32 %v10378, %v10624
      %v10696 = vadd.f32 %v10381, %v10627
      %v10697 = vadd.f32 %v10384, %v10630
      %v10698 = vadd.f32 %v10387, %v10633
      %v10699 = vadd.f32 %v10390, %v10636
      %v10700 = vadd.f32 %v10393, %v10639
      %v10701 = vadd.f32 %v10396, %v10642
      %v10702 = vadd.f32 %v10399, %v10645
      %v10703 = vadd.f32 %v10402, %v10648
      %v10704 = vadd.f32 %v10405, %v10651
      %v10705 = vadd.f32 %v10408, %v10654
      %v10706 = vadd.f32 %v10411, %v10657
      %v10707 = vadd.f32 %v10414, %v10660
      %v10708 = vadd.f32 %v10417, %v10663
      %v10709 = vadd.f32 %v10420, %v10666
      %v10710 = vadd.f32 %v10423, %v10669
      %v10711 = vadd.f32 %v10426, %v10672
      %v10712 = vadd.f32 %v10429, %v10675
      %v10713 = vadd.f32 %v10432, %v10678
      %v10714 = vadd.f32 %v10435, %v10681
      %v10715 = vld [vmem:[%s9913 + $0x7] sm:$0xff]
      %v10716 = vld [vmem:[%s9913 + $0xf] sm:$0xff]
      %v10717 = vld [vmem:[%s9913 + $0x27] sm:$0xff]
      %v10718 = vld [vmem:[%s9913 + $0x2f] sm:$0xff]
      %v10719 = vld [vmem:[%s9913 + $0x47] sm:$0xff]
      %v10720 = vld [vmem:[%s9913 + $0x4f] sm:$0xff]
      %v10721 = vld [vmem:[%s9913 + $0x67] sm:$0xff]
      %v10722 = vld [vmem:[%s9913 + $0x6f] sm:$0xff]
      %v10723 = vld [vmem:[%s9913 + $0x87] sm:$0xff]
      %v10724 = vld [vmem:[%s9913 + $0x8f] sm:$0xff]
      %v10725 = vld [vmem:[%s9913 + $0xa7] sm:$0xff]
      %v10726 = vld [vmem:[%s9913 + $0xaf] sm:$0xff]
      %v10727 = vld [vmem:[%s9913 + $0xc7] sm:$0xff]
      %v10728 = vld [vmem:[%s9913 + $0xcf] sm:$0xff]
      %v10729 = vld [vmem:[%s9913 + $0xe7] sm:$0xff]
      %v10730 = vld [vmem:[%s9913 + $0xef] sm:$0xff]
      %v10731 = vld [vmem:[%s9913 + $0x107] sm:$0xff]
      %v10732 = vld [vmem:[%s9913 + $0x10f] sm:$0xff]
      %v10733 = vld [vmem:[%s9913 + $0x127] sm:$0xff]
      %v10734 = vld [vmem:[%s9913 + $0x12f] sm:$0xff]
      %v10735 = vld [vmem:[%s9913 + $0x147] sm:$0xff]
      %v10736 = vld [vmem:[%s9913 + $0x14f] sm:$0xff]
      %v10737 = vld [vmem:[%s9913 + $0x167] sm:$0xff]
      %v10738 = vld [vmem:[%s9913 + $0x16f] sm:$0xff]
      %v10739 = vld [vmem:[%s9913 + $0x187] sm:$0xff]
      %v10740 = vld [vmem:[%s9913 + $0x18f] sm:$0xff]
      %v10741 = vld [vmem:[%s9913 + $0x1a7] sm:$0xff]
      %v10742 = vld [vmem:[%s9913 + $0x1af] sm:$0xff]
      %v10743 = vld [vmem:[%s9913 + $0x1c7] sm:$0xff]
      %v10744 = vld [vmem:[%s9913 + $0x1cf] sm:$0xff]
      %v10745 = vld [vmem:[%s9913 + $0x1e7] sm:$0xff]
      %v10746 = vld [vmem:[%s9913 + $0x1ef] sm:$0xff]
      %s10747 = scalar_lea.vmem %s8, 96
      %v10748 = vld [vmem:[%s10747] sm:$0xff]
      %v10749 = vld [vmem:[%s10747 + $0x8] sm:$0xff]
      %v10750 = vld [vmem:[%s10747 + $0x10] sm:$0xff]
      %v10751 = vld [vmem:[%s10747 + $0x18] sm:$0xff]
      %v10753 = vsel %vm9840, %v10715, 0
      %v10756 = vsel %vm9840, %v10716, 0
      %v10759 = vsel %vm9840, %v10717, 0
      %v10762 = vsel %vm9840, %v10718, 0
      %v10765 = vsel %vm9840, %v10719, 0
      %v10768 = vsel %vm9840, %v10720, 0
      %v10771 = vsel %vm9840, %v10721, 0
      %v10774 = vsel %vm9840, %v10722, 0
      %v10777 = vsel %vm9840, %v10723, 0
      %v10780 = vsel %vm9840, %v10724, 0
      %v10783 = vsel %vm9840, %v10725, 0
      %v10786 = vsel %vm9840, %v10726, 0
      %v10789 = vsel %vm9840, %v10727, 0
      %v10792 = vsel %vm9840, %v10728, 0
      %v10795 = vsel %vm9840, %v10729, 0
      %v10798 = vsel %vm9840, %v10730, 0
      %v10801 = vsel %vm9840, %v10731, 0
      %v10804 = vsel %vm9840, %v10732, 0
      %v10807 = vsel %vm9840, %v10733, 0
      %v10810 = vsel %vm9840, %v10734, 0
      %v10813 = vsel %vm9840, %v10735, 0
      %v10816 = vsel %vm9840, %v10736, 0
      %v10819 = vsel %vm9840, %v10737, 0
      %v10822 = vsel %vm9840, %v10738, 0
      %v10825 = vsel %vm9840, %v10739, 0
      %v10828 = vsel %vm9840, %v10740, 0
      %v10831 = vsel %vm9840, %v10741, 0
      %v10834 = vsel %vm9840, %v10742, 0
      %v10837 = vsel %vm9840, %v10743, 0
      %v10840 = vsel %vm9840, %v10744, 0
      %v10843 = vsel %vm9840, %v10745, 0
      %v10846 = vsel %vm9840, %v10746, 0
      %10848 = vmatpush.msra.mxu0 0.0
      %10849 = vmatpush.msra.mxu0 0.0
      %10850 = vmatpush.msra.mxu0 0.0
      %10851 = vmatpush.msra.mxu0 0.0
      %10852 = vmatpush.msra.mxu0 0.0
      %10853 = vmatpush.msra.mxu0 0.0
      %10854 = vmatpush.msra.mxu0 0.0
      %10855 = vmatpush.msra.mxu0 0.0
      %10856 = vmatpush.msra.mxu0 0.0
      %10857 = vmatpush.msra.mxu0 0.0
      %10858 = vmatpush.msra.mxu0 0.0
      %10859 = vmatpush.msra.mxu0 0.0
      %10860 = vmatpush.msra.mxu0 %v10751
      %10861 = vmatpush.msra.mxu0 %v10750
      %10862 = vmatpush.msra.mxu0 %v10749
      %10863 = vmatpush.msra.mxu0 %v10748
      %10864 = vmatmul.f32.gmra.mxu0 %v10753
      %v10865 = vpop.f32.mrf.mxu0
      %v10866 = vadd.f32 0.0, %v10865
      %10867 = vmatmul.f32.gmra.mxu0 %v10756
      %v10868 = vpop.f32.mrf.mxu0
      %v10869 = vadd.f32 0.0, %v10868
      %10870 = vmatmul.f32.gmra.mxu0 %v10759
      %v10871 = vpop.f32.mrf.mxu0
      %v10872 = vadd.f32 0.0, %v10871
      %10873 = vmatmul.f32.gmra.mxu0 %v10762
      %v10874 = vpop.f32.mrf.mxu0
      %v10875 = vadd.f32 0.0, %v10874
      %10876 = vmatmul.f32.gmra.mxu0 %v10765
      %v10877 = vpop.f32.mrf.mxu0
      %v10878 = vadd.f32 0.0, %v10877
      %10879 = vmatmul.f32.gmra.mxu0 %v10768
      %v10880 = vpop.f32.mrf.mxu0
      %v10881 = vadd.f32 0.0, %v10880
      %10882 = vmatmul.f32.gmra.mxu0 %v10771
      %v10883 = vpop.f32.mrf.mxu0
      %v10884 = vadd.f32 0.0, %v10883
      %10885 = vmatmul.f32.gmra.mxu0 %v10774
      %v10886 = vpop.f32.mrf.mxu0
      %v10887 = vadd.f32 0.0, %v10886
      %10888 = vmatmul.f32.gmra.mxu0 %v10777
      %v10889 = vpop.f32.mrf.mxu0
      %v10890 = vadd.f32 0.0, %v10889
      %10891 = vmatmul.f32.gmra.mxu0 %v10780
      %v10892 = vpop.f32.mrf.mxu0
      %v10893 = vadd.f32 0.0, %v10892
      %10894 = vmatmul.f32.gmra.mxu0 %v10783
      %v10895 = vpop.f32.mrf.mxu0
      %v10896 = vadd.f32 0.0, %v10895
      %10897 = vmatmul.f32.gmra.mxu0 %v10786
      %v10898 = vpop.f32.mrf.mxu0
      %v10899 = vadd.f32 0.0, %v10898
      %10900 = vmatmul.f32.gmra.mxu0 %v10789
      %v10901 = vpop.f32.mrf.mxu0
      %v10902 = vadd.f32 0.0, %v10901
      %10903 = vmatmul.f32.gmra.mxu0 %v10792
      %v10904 = vpop.f32.mrf.mxu0
      %v10905 = vadd.f32 0.0, %v10904
      %10906 = vmatmul.f32.gmra.mxu0 %v10795
      %v10907 = vpop.f32.mrf.mxu0
      %v10908 = vadd.f32 0.0, %v10907
      %10909 = vmatmul.f32.gmra.mxu0 %v10798
      %v10910 = vpop.f32.mrf.mxu0
      %v10911 = vadd.f32 0.0, %v10910
      %10912 = vmatmul.f32.gmra.mxu0 %v10801
      %v10913 = vpop.f32.mrf.mxu0
      %v10914 = vadd.f32 0.0, %v10913
      %10915 = vmatmul.f32.gmra.mxu0 %v10804
      %v10916 = vpop.f32.mrf.mxu0
      %v10917 = vadd.f32 0.0, %v10916
      %10918 = vmatmul.f32.gmra.mxu0 %v10807
      %v10919 = vpop.f32.mrf.mxu0
      %v10920 = vadd.f32 0.0, %v10919
      %10921 = vmatmul.f32.gmra.mxu0 %v10810
      %v10922 = vpop.f32.mrf.mxu0
      %v10923 = vadd.f32 0.0, %v10922
      %10924 = vmatmul.f32.gmra.mxu0 %v10813
      %v10925 = vpop.f32.mrf.mxu0
      %v10926 = vadd.f32 0.0, %v10925
      %10927 = vmatmul.f32.gmra.mxu0 %v10816
      %v10928 = vpop.f32.mrf.mxu0
      %v10929 = vadd.f32 0.0, %v10928
      %10930 = vmatmul.f32.gmra.mxu0 %v10819
      %v10931 = vpop.f32.mrf.mxu0
      %v10932 = vadd.f32 0.0, %v10931
      %10933 = vmatmul.f32.gmra.mxu0 %v10822
      %v10934 = vpop.f32.mrf.mxu0
      %v10935 = vadd.f32 0.0, %v10934
      %10936 = vmatmul.f32.gmra.mxu0 %v10825
      %v10937 = vpop.f32.mrf.mxu0
      %v10938 = vadd.f32 0.0, %v10937
      %10939 = vmatmul.f32.gmra.mxu0 %v10828
      %v10940 = vpop.f32.mrf.mxu0
      %v10941 = vadd.f32 0.0, %v10940
      %10942 = vmatmul.f32.gmra.mxu0 %v10831
      %v10943 = vpop.f32.mrf.mxu0
      %v10944 = vadd.f32 0.0, %v10943
      %10945 = vmatmul.f32.gmra.mxu0 %v10834
      %v10946 = vpop.f32.mrf.mxu0
      %v10947 = vadd.f32 0.0, %v10946
      %10948 = vmatmul.f32.gmra.mxu0 %v10837
      %v10949 = vpop.f32.mrf.mxu0
      %v10950 = vadd.f32 0.0, %v10949
      %10951 = vmatmul.f32.gmra.mxu0 %v10840
      %v10952 = vpop.f32.mrf.mxu0
      %v10953 = vadd.f32 0.0, %v10952
      %10954 = vmatmul.f32.gmra.mxu0 %v10843
      %v10955 = vpop.f32.mrf.mxu0
      %v10956 = vadd.f32 0.0, %v10955
      %10957 = vmatmul.f32.gmra.mxu0 %v10846
      %v10958 = vpop.f32.mrf.mxu0
      %v10959 = vadd.f32 0.0, %v10958
      %10960 = vdwg.mxu0
      %v10961 = vadd.f32 %v10683, %v10866
      %v10962 = vadd.f32 %v10684, %v10869
      %v10963 = vadd.f32 %v10685, %v10872
      %v10964 = vadd.f32 %v10686, %v10875
      %v10965 = vadd.f32 %v10687, %v10878
      %v10966 = vadd.f32 %v10688, %v10881
      %v10967 = vadd.f32 %v10689, %v10884
      %v10968 = vadd.f32 %v10690, %v10887
      %v10969 = vadd.f32 %v10691, %v10890
      %v10970 = vadd.f32 %v10692, %v10893
      %v10971 = vadd.f32 %v10693, %v10896
      %v10972 = vadd.f32 %v10694, %v10899
      %v10973 = vadd.f32 %v10695, %v10902
      %v10974 = vadd.f32 %v10696, %v10905
      %v10975 = vadd.f32 %v10697, %v10908
      %v10976 = vadd.f32 %v10698, %v10911
      %v10977 = vadd.f32 %v10699, %v10914
      %v10978 = vadd.f32 %v10700, %v10917
      %v10979 = vadd.f32 %v10701, %v10920
      %v10980 = vadd.f32 %v10702, %v10923
      %v10981 = vadd.f32 %v10703, %v10926
      %v10982 = vadd.f32 %v10704, %v10929
      %v10983 = vadd.f32 %v10705, %v10932
      %v10984 = vadd.f32 %v10706, %v10935
      %v10985 = vadd.f32 %v10707, %v10938
      %v10986 = vadd.f32 %v10708, %v10941
      %v10987 = vadd.f32 %v10709, %v10944
      %v10988 = vadd.f32 %v10710, %v10947
      %v10989 = vadd.f32 %v10711, %v10950
      %v10990 = vadd.f32 %v10712, %v10953
      %v10991 = vadd.f32 %v10713, %v10956
      %v10992 = vadd.f32 %v10714, %v10959
      %v10993 = vld [vmem:[%s9913 + $0x8] sm:$0xff]
      %v10994 = vld [vmem:[%s9913 + $0x10] sm:$0xff]
      %v10995 = vld [vmem:[%s9913 + $0x28] sm:$0xff]
      %v10996 = vld [vmem:[%s9913 + $0x30] sm:$0xff]
      %v10997 = vld [vmem:[%s9913 + $0x48] sm:$0xff]
      %v10998 = vld [vmem:[%s9913 + $0x50] sm:$0xff]
      %v10999 = vld [vmem:[%s9913 + $0x68] sm:$0xff]
      %v11000 = vld [vmem:[%s9913 + $0x70] sm:$0xff]
      %v11001 = vld [vmem:[%s9913 + $0x88] sm:$0xff]
      %v11002 = vld [vmem:[%s9913 + $0x90] sm:$0xff]
      %v11003 = vld [vmem:[%s9913 + $0xa8] sm:$0xff]
      %v11004 = vld [vmem:[%s9913 + $0xb0] sm:$0xff]
      %v11005 = vld [vmem:[%s9913 + $0xc8] sm:$0xff]
      %v11006 = vld [vmem:[%s9913 + $0xd0] sm:$0xff]
      %v11007 = vld [vmem:[%s9913 + $0xe8] sm:$0xff]
      %v11008 = vld [vmem:[%s9913 + $0xf0] sm:$0xff]
      %v11009 = vld [vmem:[%s9913 + $0x108] sm:$0xff]
      %v11010 = vld [vmem:[%s9913 + $0x110] sm:$0xff]
      %v11011 = vld [vmem:[%s9913 + $0x128] sm:$0xff]
      %v11012 = vld [vmem:[%s9913 + $0x130] sm:$0xff]
      %v11013 = vld [vmem:[%s9913 + $0x148] sm:$0xff]
      %v11014 = vld [vmem:[%s9913 + $0x150] sm:$0xff]
      %v11015 = vld [vmem:[%s9913 + $0x168] sm:$0xff]
      %v11016 = vld [vmem:[%s9913 + $0x170] sm:$0xff]
      %v11017 = vld [vmem:[%s9913 + $0x188] sm:$0xff]
      %v11018 = vld [vmem:[%s9913 + $0x190] sm:$0xff]
      %v11019 = vld [vmem:[%s9913 + $0x1a8] sm:$0xff]
      %v11020 = vld [vmem:[%s9913 + $0x1b0] sm:$0xff]
      %v11021 = vld [vmem:[%s9913 + $0x1c8] sm:$0xff]
      %v11022 = vld [vmem:[%s9913 + $0x1d0] sm:$0xff]
      %v11023 = vld [vmem:[%s9913 + $0x1e8] sm:$0xff]
      %v11024 = vld [vmem:[%s9913 + $0x1f0] sm:$0xff]
      %s11025 = scalar_lea.vmem %s8, 128
      %v11026 = vld [vmem:[%s11025] sm:$0xff]
      %v11027 = vld [vmem:[%s11025 + $0x8] sm:$0xff]
      %v11028 = vld [vmem:[%s11025 + $0x10] sm:$0xff]
      %v11029 = vld [vmem:[%s11025 + $0x18] sm:$0xff]
      %v11031 = vsel %vm9840, %v10993, 0
      %v11034 = vsel %vm9840, %v10994, 0
      %v11037 = vsel %vm9840, %v10995, 0
      %v11040 = vsel %vm9840, %v10996, 0
      %v11043 = vsel %vm9840, %v10997, 0
      %v11046 = vsel %vm9840, %v10998, 0
      %v11049 = vsel %vm9840, %v10999, 0
      %v11052 = vsel %vm9840, %v11000, 0
      %v11055 = vsel %vm9840, %v11001, 0
      %v11058 = vsel %vm9840, %v11002, 0
      %v11061 = vsel %vm9840, %v11003, 0
      %v11064 = vsel %vm9840, %v11004, 0
      %v11067 = vsel %vm9840, %v11005, 0
      %v11070 = vsel %vm9840, %v11006, 0
      %v11073 = vsel %vm9840, %v11007, 0
      %v11076 = vsel %vm9840, %v11008, 0
      %v11079 = vsel %vm9840, %v11009, 0
      %v11082 = vsel %vm9840, %v11010, 0
      %v11085 = vsel %vm9840, %v11011, 0
      %v11088 = vsel %vm9840, %v11012, 0
      %v11091 = vsel %vm9840, %v11013, 0
      %v11094 = vsel %vm9840, %v11014, 0
      %v11097 = vsel %vm9840, %v11015, 0
      %v11100 = vsel %vm9840, %v11016, 0
      %v11103 = vsel %vm9840, %v11017, 0
      %v11106 = vsel %vm9840, %v11018, 0
      %v11109 = vsel %vm9840, %v11019, 0
      %v11112 = vsel %vm9840, %v11020, 0
      %v11115 = vsel %vm9840, %v11021, 0
      %v11118 = vsel %vm9840, %v11022, 0
      %v11121 = vsel %vm9840, %v11023, 0
      %v11124 = vsel %vm9840, %v11024, 0
      %11126 = vmatpush.msra.mxu0 0.0
      %11127 = vmatpush.msra.mxu0 0.0
      %11128 = vmatpush.msra.mxu0 0.0
      %11129 = vmatpush.msra.mxu0 0.0
      %11130 = vmatpush.msra.mxu0 0.0
      %11131 = vmatpush.msra.mxu0 0.0
      %11132 = vmatpush.msra.mxu0 0.0
      %11133 = vmatpush.msra.mxu0 0.0
      %11134 = vmatpush.msra.mxu0 0.0
      %11135 = vmatpush.msra.mxu0 0.0
      %11136 = vmatpush.msra.mxu0 0.0
      %11137 = vmatpush.msra.mxu0 0.0
      %11138 = vmatpush.msra.mxu0 %v11029
      %11139 = vmatpush.msra.mxu0 %v11028
      %11140 = vmatpush.msra.mxu0 %v11027
      %11141 = vmatpush.msra.mxu0 %v11026
      %11142 = vmatmul.f32.gmra.mxu0 %v11031
      %v11143 = vpop.f32.mrf.mxu0
      %v11144 = vadd.f32 0.0, %v11143
      %11145 = vmatmul.f32.gmra.mxu0 %v11034
      %v11146 = vpop.f32.mrf.mxu0
      %v11147 = vadd.f32 0.0, %v11146
      %11148 = vmatmul.f32.gmra.mxu0 %v11037
      %v11149 = vpop.f32.mrf.mxu0
      %v11150 = vadd.f32 0.0, %v11149
      %11151 = vmatmul.f32.gmra.mxu0 %v11040
      %v11152 = vpop.f32.mrf.mxu0
      %v11153 = vadd.f32 0.0, %v11152
      %11154 = vmatmul.f32.gmra.mxu0 %v11043
      %v11155 = vpop.f32.mrf.mxu0
      %v11156 = vadd.f32 0.0, %v11155
      %11157 = vmatmul.f32.gmra.mxu0 %v11046
      %v11158 = vpop.f32.mrf.mxu0
      %v11159 = vadd.f32 0.0, %v11158
      %11160 = vmatmul.f32.gmra.mxu0 %v11049
      %v11161 = vpop.f32.mrf.mxu0
      %v11162 = vadd.f32 0.0, %v11161
      %11163 = vmatmul.f32.gmra.mxu0 %v11052
      %v11164 = vpop.f32.mrf.mxu0
      %v11165 = vadd.f32 0.0, %v11164
      %11166 = vmatmul.f32.gmra.mxu0 %v11055
      %v11167 = vpop.f32.mrf.mxu0
      %v11168 = vadd.f32 0.0, %v11167
      %11169 = vmatmul.f32.gmra.mxu0 %v11058
      %v11170 = vpop.f32.mrf.mxu0
      %v11171 = vadd.f32 0.0, %v11170
      %11172 = vmatmul.f32.gmra.mxu0 %v11061
      %v11173 = vpop.f32.mrf.mxu0
      %v11174 = vadd.f32 0.0, %v11173
      %11175 = vmatmul.f32.gmra.mxu0 %v11064
      %v11176 = vpop.f32.mrf.mxu0
      %v11177 = vadd.f32 0.0, %v11176
      %11178 = vmatmul.f32.gmra.mxu0 %v11067
      %v11179 = vpop.f32.mrf.mxu0
      %v11180 = vadd.f32 0.0, %v11179
      %11181 = vmatmul.f32.gmra.mxu0 %v11070
      %v11182 = vpop.f32.mrf.mxu0
      %v11183 = vadd.f32 0.0, %v11182
      %11184 = vmatmul.f32.gmra.mxu0 %v11073
      %v11185 = vpop.f32.mrf.mxu0
      %v11186 = vadd.f32 0.0, %v11185
      %11187 = vmatmul.f32.gmra.mxu0 %v11076
      %v11188 = vpop.f32.mrf.mxu0
      %v11189 = vadd.f32 0.0, %v11188
      %11190 = vmatmul.f32.gmra.mxu0 %v11079
      %v11191 = vpop.f32.mrf.mxu0
      %v11192 = vadd.f32 0.0, %v11191
      %11193 = vmatmul.f32.gmra.mxu0 %v11082
      %v11194 = vpop.f32.mrf.mxu0
      %v11195 = vadd.f32 0.0, %v11194
      %11196 = vmatmul.f32.gmra.mxu0 %v11085
      %v11197 = vpop.f32.mrf.mxu0
      %v11198 = vadd.f32 0.0, %v11197
      %11199 = vmatmul.f32.gmra.mxu0 %v11088
      %v11200 = vpop.f32.mrf.mxu0
      %v11201 = vadd.f32 0.0, %v11200
      %11202 = vmatmul.f32.gmra.mxu0 %v11091
      %v11203 = vpop.f32.mrf.mxu0
      %v11204 = vadd.f32 0.0, %v11203
      %11205 = vmatmul.f32.gmra.mxu0 %v11094
      %v11206 = vpop.f32.mrf.mxu0
      %v11207 = vadd.f32 0.0, %v11206
      %11208 = vmatmul.f32.gmra.mxu0 %v11097
      %v11209 = vpop.f32.mrf.mxu0
      %v11210 = vadd.f32 0.0, %v11209
      %11211 = vmatmul.f32.gmra.mxu0 %v11100
      %v11212 = vpop.f32.mrf.mxu0
      %v11213 = vadd.f32 0.0, %v11212
      %11214 = vmatmul.f32.gmra.mxu0 %v11103
      %v11215 = vpop.f32.mrf.mxu0
      %v11216 = vadd.f32 0.0, %v11215
      %11217 = vmatmul.f32.gmra.mxu0 %v11106
      %v11218 = vpop.f32.mrf.mxu0
      %v11219 = vadd.f32 0.0, %v11218
      %11220 = vmatmul.f32.gmra.mxu0 %v11109
      %v11221 = vpop.f32.mrf.mxu0
      %v11222 = vadd.f32 0.0, %v11221
      %11223 = vmatmul.f32.gmra.mxu0 %v11112
      %v11224 = vpop.f32.mrf.mxu0
      %v11225 = vadd.f32 0.0, %v11224
      %11226 = vmatmul.f32.gmra.mxu0 %v11115
      %v11227 = vpop.f32.mrf.mxu0
      %v11228 = vadd.f32 0.0, %v11227
      %11229 = vmatmul.f32.gmra.mxu0 %v11118
      %v11230 = vpop.f32.mrf.mxu0
      %v11231 = vadd.f32 0.0, %v11230
      %11232 = vmatmul.f32.gmra.mxu0 %v11121
      %v11233 = vpop.f32.mrf.mxu0
      %v11234 = vadd.f32 0.0, %v11233
      %11235 = vmatmul.f32.gmra.mxu0 %v11124
      %v11236 = vpop.f32.mrf.mxu0
      %v11237 = vadd.f32 0.0, %v11236
      %11238 = vdwg.mxu0
      %v11239 = vadd.f32 %v10961, %v11144
      %v11240 = vadd.f32 %v10962, %v11147
      %v11241 = vadd.f32 %v10963, %v11150
      %v11242 = vadd.f32 %v10964, %v11153
      %v11243 = vadd.f32 %v10965, %v11156
      %v11244 = vadd.f32 %v10966, %v11159
      %v11245 = vadd.f32 %v10967, %v11162
      %v11246 = vadd.f32 %v10968, %v11165
      %v11247 = vadd.f32 %v10969, %v11168
      %v11248 = vadd.f32 %v10970, %v11171
      %v11249 = vadd.f32 %v10971, %v11174
      %v11250 = vadd.f32 %v10972, %v11177
      %v11251 = vadd.f32 %v10973, %v11180
      %v11252 = vadd.f32 %v10974, %v11183
      %v11253 = vadd.f32 %v10975, %v11186
      %v11254 = vadd.f32 %v10976, %v11189
      %v11255 = vadd.f32 %v10977, %v11192
      %v11256 = vadd.f32 %v10978, %v11195
      %v11257 = vadd.f32 %v10979, %v11198
      %v11258 = vadd.f32 %v10980, %v11201
      %v11259 = vadd.f32 %v10981, %v11204
      %v11260 = vadd.f32 %v10982, %v11207
      %v11261 = vadd.f32 %v10983, %v11210
      %v11262 = vadd.f32 %v10984, %v11213
      %v11263 = vadd.f32 %v10985, %v11216
      %v11264 = vadd.f32 %v10986, %v11219
      %v11265 = vadd.f32 %v10987, %v11222
      %v11266 = vadd.f32 %v10988, %v11225
      %v11267 = vadd.f32 %v10989, %v11228
      %v11268 = vadd.f32 %v10990, %v11231
      %v11269 = vadd.f32 %v10991, %v11234
      %v11270 = vadd.f32 %v10992, %v11237
      %v11271 = vld [vmem:[%s9913 + $0x9] sm:$0xff]
      %v11272 = vld [vmem:[%s9913 + $0x11] sm:$0xff]
      %v11273 = vld [vmem:[%s9913 + $0x29] sm:$0xff]
      %v11274 = vld [vmem:[%s9913 + $0x31] sm:$0xff]
      %v11275 = vld [vmem:[%s9913 + $0x49] sm:$0xff]
      %v11276 = vld [vmem:[%s9913 + $0x51] sm:$0xff]
      %v11277 = vld [vmem:[%s9913 + $0x69] sm:$0xff]
      %v11278 = vld [vmem:[%s9913 + $0x71] sm:$0xff]
      %v11279 = vld [vmem:[%s9913 + $0x89] sm:$0xff]
      %v11280 = vld [vmem:[%s9913 + $0x91] sm:$0xff]
      %v11281 = vld [vmem:[%s9913 + $0xa9] sm:$0xff]
      %v11282 = vld [vmem:[%s9913 + $0xb1] sm:$0xff]
      %v11283 = vld [vmem:[%s9913 + $0xc9] sm:$0xff]
      %v11284 = vld [vmem:[%s9913 + $0xd1] sm:$0xff]
      %v11285 = vld [vmem:[%s9913 + $0xe9] sm:$0xff]
      %v11286 = vld [vmem:[%s9913 + $0xf1] sm:$0xff]
      %v11287 = vld [vmem:[%s9913 + $0x109] sm:$0xff]
      %v11288 = vld [vmem:[%s9913 + $0x111] sm:$0xff]
      %v11289 = vld [vmem:[%s9913 + $0x129] sm:$0xff]
      %v11290 = vld [vmem:[%s9913 + $0x131] sm:$0xff]
      %v11291 = vld [vmem:[%s9913 + $0x149] sm:$0xff]
      %v11292 = vld [vmem:[%s9913 + $0x151] sm:$0xff]
      %v11293 = vld [vmem:[%s9913 + $0x169] sm:$0xff]
      %v11294 = vld [vmem:[%s9913 + $0x171] sm:$0xff]
      %v11295 = vld [vmem:[%s9913 + $0x189] sm:$0xff]
      %v11296 = vld [vmem:[%s9913 + $0x191] sm:$0xff]
      %v11297 = vld [vmem:[%s9913 + $0x1a9] sm:$0xff]
      %v11298 = vld [vmem:[%s9913 + $0x1b1] sm:$0xff]
      %v11299 = vld [vmem:[%s9913 + $0x1c9] sm:$0xff]
      %v11300 = vld [vmem:[%s9913 + $0x1d1] sm:$0xff]
      %v11301 = vld [vmem:[%s9913 + $0x1e9] sm:$0xff]
      %v11302 = vld [vmem:[%s9913 + $0x1f1] sm:$0xff]
      %s11303 = scalar_lea.vmem %s8, 160
      %v11304 = vld [vmem:[%s11303] sm:$0xff]
      %v11305 = vld [vmem:[%s11303 + $0x8] sm:$0xff]
      %v11306 = vld [vmem:[%s11303 + $0x10] sm:$0xff]
      %v11307 = vld [vmem:[%s11303 + $0x18] sm:$0xff]
      %v11309 = vsel %vm9840, %v11271, 0
      %v11312 = vsel %vm9840, %v11272, 0
      %v11315 = vsel %vm9840, %v11273, 0
      %v11318 = vsel %vm9840, %v11274, 0
      %v11321 = vsel %vm9840, %v11275, 0
      %v11324 = vsel %vm9840, %v11276, 0
      %v11327 = vsel %vm9840, %v11277, 0
      %v11330 = vsel %vm9840, %v11278, 0
      %v11333 = vsel %vm9840, %v11279, 0
      %v11336 = vsel %vm9840, %v11280, 0
      %v11339 = vsel %vm9840, %v11281, 0
      %v11342 = vsel %vm9840, %v11282, 0
      %v11345 = vsel %vm9840, %v11283, 0
      %v11348 = vsel %vm9840, %v11284, 0
      %v11351 = vsel %vm9840, %v11285, 0
      %v11354 = vsel %vm9840, %v11286, 0
      %v11357 = vsel %vm9840, %v11287, 0
      %v11360 = vsel %vm9840, %v11288, 0
      %v11363 = vsel %vm9840, %v11289, 0
      %v11366 = vsel %vm9840, %v11290, 0
      %v11369 = vsel %vm9840, %v11291, 0
      %v11372 = vsel %vm9840, %v11292, 0
      %v11375 = vsel %vm9840, %v11293, 0
      %v11378 = vsel %vm9840, %v11294, 0
      %v11381 = vsel %vm9840, %v11295, 0
      %v11384 = vsel %vm9840, %v11296, 0
      %v11387 = vsel %vm9840, %v11297, 0
      %v11390 = vsel %vm9840, %v11298, 0
      %v11393 = vsel %vm9840, %v11299, 0
      %v11396 = vsel %vm9840, %v11300, 0
      %v11399 = vsel %vm9840, %v11301, 0
      %v11402 = vsel %vm9840, %v11302, 0
      %11404 = vmatpush.msra.mxu0 0.0
      %11405 = vmatpush.msra.mxu0 0.0
      %11406 = vmatpush.msra.mxu0 0.0
      %11407 = vmatpush.msra.mxu0 0.0
      %11408 = vmatpush.msra.mxu0 0.0
      %11409 = vmatpush.msra.mxu0 0.0
      %11410 = vmatpush.msra.mxu0 0.0
      %11411 = vmatpush.msra.mxu0 0.0
      %11412 = vmatpush.msra.mxu0 0.0
      %11413 = vmatpush.msra.mxu0 0.0
      %11414 = vmatpush.msra.mxu0 0.0
      %11415 = vmatpush.msra.mxu0 0.0
      %11416 = vmatpush.msra.mxu0 %v11307
      %11417 = vmatpush.msra.mxu0 %v11306
      %11418 = vmatpush.msra.mxu0 %v11305
      %11419 = vmatpush.msra.mxu0 %v11304
      %11420 = vmatmul.f32.gmra.mxu0 %v11309
      %v11421 = vpop.f32.mrf.mxu0
      %v11422 = vadd.f32 0.0, %v11421
      %11423 = vmatmul.f32.gmra.mxu0 %v11312
      %v11424 = vpop.f32.mrf.mxu0
      %v11425 = vadd.f32 0.0, %v11424
      %11426 = vmatmul.f32.gmra.mxu0 %v11315
      %v11427 = vpop.f32.mrf.mxu0
      %v11428 = vadd.f32 0.0, %v11427
      %11429 = vmatmul.f32.gmra.mxu0 %v11318
      %v11430 = vpop.f32.mrf.mxu0
      %v11431 = vadd.f32 0.0, %v11430
      %11432 = vmatmul.f32.gmra.mxu0 %v11321
      %v11433 = vpop.f32.mrf.mxu0
      %v11434 = vadd.f32 0.0, %v11433
      %11435 = vmatmul.f32.gmra.mxu0 %v11324
      %v11436 = vpop.f32.mrf.mxu0
      %v11437 = vadd.f32 0.0, %v11436
      %11438 = vmatmul.f32.gmra.mxu0 %v11327
      %v11439 = vpop.f32.mrf.mxu0
      %v11440 = vadd.f32 0.0, %v11439
      %11441 = vmatmul.f32.gmra.mxu0 %v11330
      %v11442 = vpop.f32.mrf.mxu0
      %v11443 = vadd.f32 0.0, %v11442
      %11444 = vmatmul.f32.gmra.mxu0 %v11333
      %v11445 = vpop.f32.mrf.mxu0
      %v11446 = vadd.f32 0.0, %v11445
      %11447 = vmatmul.f32.gmra.mxu0 %v11336
      %v11448 = vpop.f32.mrf.mxu0
      %v11449 = vadd.f32 0.0, %v11448
      %11450 = vmatmul.f32.gmra.mxu0 %v11339
      %v11451 = vpop.f32.mrf.mxu0
      %v11452 = vadd.f32 0.0, %v11451
      %11453 = vmatmul.f32.gmra.mxu0 %v11342
      %v11454 = vpop.f32.mrf.mxu0
      %v11455 = vadd.f32 0.0, %v11454
      %11456 = vmatmul.f32.gmra.mxu0 %v11345
      %v11457 = vpop.f32.mrf.mxu0
      %v11458 = vadd.f32 0.0, %v11457
      %11459 = vmatmul.f32.gmra.mxu0 %v11348
      %v11460 = vpop.f32.mrf.mxu0
      %v11461 = vadd.f32 0.0, %v11460
      %11462 = vmatmul.f32.gmra.mxu0 %v11351
      %v11463 = vpop.f32.mrf.mxu0
      %v11464 = vadd.f32 0.0, %v11463
      %11465 = vmatmul.f32.gmra.mxu0 %v11354
      %v11466 = vpop.f32.mrf.mxu0
      %v11467 = vadd.f32 0.0, %v11466
      %11468 = vmatmul.f32.gmra.mxu0 %v11357
      %v11469 = vpop.f32.mrf.mxu0
      %v11470 = vadd.f32 0.0, %v11469
      %11471 = vmatmul.f32.gmra.mxu0 %v11360
      %v11472 = vpop.f32.mrf.mxu0
      %v11473 = vadd.f32 0.0, %v11472
      %11474 = vmatmul.f32.gmra.mxu0 %v11363
      %v11475 = vpop.f32.mrf.mxu0
      %v11476 = vadd.f32 0.0, %v11475
      %11477 = vmatmul.f32.gmra.mxu0 %v11366
      %v11478 = vpop.f32.mrf.mxu0
      %v11479 = vadd.f32 0.0, %v11478
      %11480 = vmatmul.f32.gmra.mxu0 %v11369
      %v11481 = vpop.f32.mrf.mxu0
      %v11482 = vadd.f32 0.0, %v11481
      %11483 = vmatmul.f32.gmra.mxu0 %v11372
      %v11484 = vpop.f32.mrf.mxu0
      %v11485 = vadd.f32 0.0, %v11484
      %11486 = vmatmul.f32.gmra.mxu0 %v11375
      %v11487 = vpop.f32.mrf.mxu0
      %v11488 = vadd.f32 0.0, %v11487
      %11489 = vmatmul.f32.gmra.mxu0 %v11378
      %v11490 = vpop.f32.mrf.mxu0
      %v11491 = vadd.f32 0.0, %v11490
      %11492 = vmatmul.f32.gmra.mxu0 %v11381
      %v11493 = vpop.f32.mrf.mxu0
      %v11494 = vadd.f32 0.0, %v11493
      %11495 = vmatmul.f32.gmra.mxu0 %v11384
      %v11496 = vpop.f32.mrf.mxu0
      %v11497 = vadd.f32 0.0, %v11496
      %11498 = vmatmul.f32.gmra.mxu0 %v11387
      %v11499 = vpop.f32.mrf.mxu0
      %v11500 = vadd.f32 0.0, %v11499
      %11501 = vmatmul.f32.gmra.mxu0 %v11390
      %v11502 = vpop.f32.mrf.mxu0
      %v11503 = vadd.f32 0.0, %v11502
      %11504 = vmatmul.f32.gmra.mxu0 %v11393
      %v11505 = vpop.f32.mrf.mxu0
      %v11506 = vadd.f32 0.0, %v11505
      %11507 = vmatmul.f32.gmra.mxu0 %v11396
      %v11508 = vpop.f32.mrf.mxu0
      %v11509 = vadd.f32 0.0, %v11508
      %11510 = vmatmul.f32.gmra.mxu0 %v11399
      %v11511 = vpop.f32.mrf.mxu0
      %v11512 = vadd.f32 0.0, %v11511
      %11513 = vmatmul.f32.gmra.mxu0 %v11402
      %v11514 = vpop.f32.mrf.mxu0
      %v11515 = vadd.f32 0.0, %v11514
      %11516 = vdwg.mxu0
      %v11517 = vadd.f32 %v11239, %v11422
      %v11518 = vadd.f32 %v11240, %v11425
      %v11519 = vadd.f32 %v11241, %v11428
      %v11520 = vadd.f32 %v11242, %v11431
      %v11521 = vadd.f32 %v11243, %v11434
      %v11522 = vadd.f32 %v11244, %v11437
      %v11523 = vadd.f32 %v11245, %v11440
      %v11524 = vadd.f32 %v11246, %v11443
      %v11525 = vadd.f32 %v11247, %v11446
      %v11526 = vadd.f32 %v11248, %v11449
      %v11527 = vadd.f32 %v11249, %v11452
      %v11528 = vadd.f32 %v11250, %v11455
      %v11529 = vadd.f32 %v11251, %v11458
      %v11530 = vadd.f32 %v11252, %v11461
      %v11531 = vadd.f32 %v11253, %v11464
      %v11532 = vadd.f32 %v11254, %v11467
      %v11533 = vadd.f32 %v11255, %v11470
      %v11534 = vadd.f32 %v11256, %v11473
      %v11535 = vadd.f32 %v11257, %v11476
      %v11536 = vadd.f32 %v11258, %v11479
      %v11537 = vadd.f32 %v11259, %v11482
      %v11538 = vadd.f32 %v11260, %v11485
      %v11539 = vadd.f32 %v11261, %v11488
      %v11540 = vadd.f32 %v11262, %v11491
      %v11541 = vadd.f32 %v11263, %v11494
      %v11542 = vadd.f32 %v11264, %v11497
      %v11543 = vadd.f32 %v11265, %v11500
      %v11544 = vadd.f32 %v11266, %v11503
      %v11545 = vadd.f32 %v11267, %v11506
      %v11546 = vadd.f32 %v11268, %v11509
      %v11547 = vadd.f32 %v11269, %v11512
      %v11548 = vadd.f32 %v11270, %v11515
      %s11549 = scalar_lea.vmem [#allocation4], 64
      %v11550 = vld [vmem:[%s11549 + $0x7] sm:$0xff]
      %v11551 = vld [vmem:[%s11549 + $0xf] sm:$0xff]
      %v11552 = vld [vmem:[%s11549 + $0x27] sm:$0xff]
      %v11553 = vld [vmem:[%s11549 + $0x2f] sm:$0xff]
      %v11554 = vld [vmem:[%s11549 + $0x47] sm:$0xff]
      %v11555 = vld [vmem:[%s11549 + $0x4f] sm:$0xff]
      %v11556 = vld [vmem:[%s11549 + $0x67] sm:$0xff]
      %v11557 = vld [vmem:[%s11549 + $0x6f] sm:$0xff]
      %v11558 = vld [vmem:[%s11549 + $0x87] sm:$0xff]
      %v11559 = vld [vmem:[%s11549 + $0x8f] sm:$0xff]
      %v11560 = vld [vmem:[%s11549 + $0xa7] sm:$0xff]
      %v11561 = vld [vmem:[%s11549 + $0xaf] sm:$0xff]
      %v11562 = vld [vmem:[%s11549 + $0xc7] sm:$0xff]
      %v11563 = vld [vmem:[%s11549 + $0xcf] sm:$0xff]
      %v11564 = vld [vmem:[%s11549 + $0xe7] sm:$0xff]
      %v11565 = vld [vmem:[%s11549 + $0xef] sm:$0xff]
      %v11566 = vld [vmem:[%s11549 + $0x107] sm:$0xff]
      %v11567 = vld [vmem:[%s11549 + $0x10f] sm:$0xff]
      %v11568 = vld [vmem:[%s11549 + $0x127] sm:$0xff]
      %v11569 = vld [vmem:[%s11549 + $0x12f] sm:$0xff]
      %v11570 = vld [vmem:[%s11549 + $0x147] sm:$0xff]
      %v11571 = vld [vmem:[%s11549 + $0x14f] sm:$0xff]
      %v11572 = vld [vmem:[%s11549 + $0x167] sm:$0xff]
      %v11573 = vld [vmem:[%s11549 + $0x16f] sm:$0xff]
      %v11574 = vld [vmem:[%s11549 + $0x187] sm:$0xff]
      %v11575 = vld [vmem:[%s11549 + $0x18f] sm:$0xff]
      %v11576 = vld [vmem:[%s11549 + $0x1a7] sm:$0xff]
      %v11577 = vld [vmem:[%s11549 + $0x1af] sm:$0xff]
      %v11578 = vld [vmem:[%s11549 + $0x1c7] sm:$0xff]
      %v11579 = vld [vmem:[%s11549 + $0x1cf] sm:$0xff]
      %v11580 = vld [vmem:[%s11549 + $0x1e7] sm:$0xff]
      %v11581 = vld [vmem:[%s11549 + $0x1ef] sm:$0xff]
      %s11582 = scalar_lea.vmem %s8, 192
      %v11583 = vld [vmem:[%s11582] sm:$0xff]
      %v11584 = vld [vmem:[%s11582 + $0x8] sm:$0xff]
      %v11585 = vld [vmem:[%s11582 + $0x10] sm:$0xff]
      %v11586 = vld [vmem:[%s11582 + $0x18] sm:$0xff]
      %v11588 = vsel %vm9840, %v11550, 0
      %v11591 = vsel %vm9840, %v11551, 0
      %v11594 = vsel %vm9840, %v11552, 0
      %v11597 = vsel %vm9840, %v11553, 0
      %v11600 = vsel %vm9840, %v11554, 0
      %v11603 = vsel %vm9840, %v11555, 0
      %v11606 = vsel %vm9840, %v11556, 0
      %v11609 = vsel %vm9840, %v11557, 0
      %v11612 = vsel %vm9840, %v11558, 0
      %v11615 = vsel %vm9840, %v11559, 0
      %v11618 = vsel %vm9840, %v11560, 0
      %v11621 = vsel %vm9840, %v11561, 0
      %v11624 = vsel %vm9840, %v11562, 0
      %v11627 = vsel %vm9840, %v11563, 0
      %v11630 = vsel %vm9840, %v11564, 0
      %v11633 = vsel %vm9840, %v11565, 0
      %v11636 = vsel %vm9840, %v11566, 0
      %v11639 = vsel %vm9840, %v11567, 0
      %v11642 = vsel %vm9840, %v11568, 0
      %v11645 = vsel %vm9840, %v11569, 0
      %v11648 = vsel %vm9840, %v11570, 0
      %v11651 = vsel %vm9840, %v11571, 0
      %v11654 = vsel %vm9840, %v11572, 0
      %v11657 = vsel %vm9840, %v11573, 0
      %v11660 = vsel %vm9840, %v11574, 0
      %v11663 = vsel %vm9840, %v11575, 0
      %v11666 = vsel %vm9840, %v11576, 0
      %v11669 = vsel %vm9840, %v11577, 0
      %v11672 = vsel %vm9840, %v11578, 0
      %v11675 = vsel %vm9840, %v11579, 0
      %v11678 = vsel %vm9840, %v11580, 0
      %v11681 = vsel %vm9840, %v11581, 0
      %11683 = vmatpush.msra.mxu0 0.0
      %11684 = vmatpush.msra.mxu0 0.0
      %11685 = vmatpush.msra.mxu0 0.0
      %11686 = vmatpush.msra.mxu0 0.0
      %11687 = vmatpush.msra.mxu0 0.0
      %11688 = vmatpush.msra.mxu0 0.0
      %11689 = vmatpush.msra.mxu0 0.0
      %11690 = vmatpush.msra.mxu0 0.0
      %11691 = vmatpush.msra.mxu0 0.0
      %11692 = vmatpush.msra.mxu0 0.0
      %11693 = vmatpush.msra.mxu0 0.0
      %11694 = vmatpush.msra.mxu0 0.0
      %11695 = vmatpush.msra.mxu0 %v11586
      %11696 = vmatpush.msra.mxu0 %v11585
      %11697 = vmatpush.msra.mxu0 %v11584
      %11698 = vmatpush.msra.mxu0 %v11583
      %11699 = vmatmul.f32.gmra.mxu0 %v11588
      %v11700 = vpop.f32.mrf.mxu0
      %v11701 = vadd.f32 0.0, %v11700
      %11702 = vmatmul.f32.gmra.mxu0 %v11591
      %v11703 = vpop.f32.mrf.mxu0
      %v11704 = vadd.f32 0.0, %v11703
      %11705 = vmatmul.f32.gmra.mxu0 %v11594
      %v11706 = vpop.f32.mrf.mxu0
      %v11707 = vadd.f32 0.0, %v11706
      %11708 = vmatmul.f32.gmra.mxu0 %v11597
      %v11709 = vpop.f32.mrf.mxu0
      %v11710 = vadd.f32 0.0, %v11709
      %11711 = vmatmul.f32.gmra.mxu0 %v11600
      %v11712 = vpop.f32.mrf.mxu0
      %v11713 = vadd.f32 0.0, %v11712
      %11714 = vmatmul.f32.gmra.mxu0 %v11603
      %v11715 = vpop.f32.mrf.mxu0
      %v11716 = vadd.f32 0.0, %v11715
      %11717 = vmatmul.f32.gmra.mxu0 %v11606
      %v11718 = vpop.f32.mrf.mxu0
      %v11719 = vadd.f32 0.0, %v11718
      %11720 = vmatmul.f32.gmra.mxu0 %v11609
      %v11721 = vpop.f32.mrf.mxu0
      %v11722 = vadd.f32 0.0, %v11721
      %11723 = vmatmul.f32.gmra.mxu0 %v11612
      %v11724 = vpop.f32.mrf.mxu0
      %v11725 = vadd.f32 0.0, %v11724
      %11726 = vmatmul.f32.gmra.mxu0 %v11615
      %v11727 = vpop.f32.mrf.mxu0
      %v11728 = vadd.f32 0.0, %v11727
      %11729 = vmatmul.f32.gmra.mxu0 %v11618
      %v11730 = vpop.f32.mrf.mxu0
      %v11731 = vadd.f32 0.0, %v11730
      %11732 = vmatmul.f32.gmra.mxu0 %v11621
      %v11733 = vpop.f32.mrf.mxu0
      %v11734 = vadd.f32 0.0, %v11733
      %11735 = vmatmul.f32.gmra.mxu0 %v11624
      %v11736 = vpop.f32.mrf.mxu0
      %v11737 = vadd.f32 0.0, %v11736
      %11738 = vmatmul.f32.gmra.mxu0 %v11627
      %v11739 = vpop.f32.mrf.mxu0
      %v11740 = vadd.f32 0.0, %v11739
      %11741 = vmatmul.f32.gmra.mxu0 %v11630
      %v11742 = vpop.f32.mrf.mxu0
      %v11743 = vadd.f32 0.0, %v11742
      %11744 = vmatmul.f32.gmra.mxu0 %v11633
      %v11745 = vpop.f32.mrf.mxu0
      %v11746 = vadd.f32 0.0, %v11745
      %11747 = vmatmul.f32.gmra.mxu0 %v11636
      %v11748 = vpop.f32.mrf.mxu0
      %v11749 = vadd.f32 0.0, %v11748
      %11750 = vmatmul.f32.gmra.mxu0 %v11639
      %v11751 = vpop.f32.mrf.mxu0
      %v11752 = vadd.f32 0.0, %v11751
      %11753 = vmatmul.f32.gmra.mxu0 %v11642
      %v11754 = vpop.f32.mrf.mxu0
      %v11755 = vadd.f32 0.0, %v11754
      %11756 = vmatmul.f32.gmra.mxu0 %v11645
      %v11757 = vpop.f32.mrf.mxu0
      %v11758 = vadd.f32 0.0, %v11757
      %11759 = vmatmul.f32.gmra.mxu0 %v11648
      %v11760 = vpop.f32.mrf.mxu0
      %v11761 = vadd.f32 0.0, %v11760
      %11762 = vmatmul.f32.gmra.mxu0 %v11651
      %v11763 = vpop.f32.mrf.mxu0
      %v11764 = vadd.f32 0.0, %v11763
      %11765 = vmatmul.f32.gmra.mxu0 %v11654
      %v11766 = vpop.f32.mrf.mxu0
      %v11767 = vadd.f32 0.0, %v11766
      %11768 = vmatmul.f32.gmra.mxu0 %v11657
      %v11769 = vpop.f32.mrf.mxu0
      %v11770 = vadd.f32 0.0, %v11769
      %11771 = vmatmul.f32.gmra.mxu0 %v11660
      %v11772 = vpop.f32.mrf.mxu0
      %v11773 = vadd.f32 0.0, %v11772
      %11774 = vmatmul.f32.gmra.mxu0 %v11663
      %v11775 = vpop.f32.mrf.mxu0
      %v11776 = vadd.f32 0.0, %v11775
      %11777 = vmatmul.f32.gmra.mxu0 %v11666
      %v11778 = vpop.f32.mrf.mxu0
      %v11779 = vadd.f32 0.0, %v11778
      %11780 = vmatmul.f32.gmra.mxu0 %v11669
      %v11781 = vpop.f32.mrf.mxu0
      %v11782 = vadd.f32 0.0, %v11781
      %11783 = vmatmul.f32.gmra.mxu0 %v11672
      %v11784 = vpop.f32.mrf.mxu0
      %v11785 = vadd.f32 0.0, %v11784
      %11786 = vmatmul.f32.gmra.mxu0 %v11675
      %v11787 = vpop.f32.mrf.mxu0
      %v11788 = vadd.f32 0.0, %v11787
      %11789 = vmatmul.f32.gmra.mxu0 %v11678
      %v11790 = vpop.f32.mrf.mxu0
      %v11791 = vadd.f32 0.0, %v11790
      %11792 = vmatmul.f32.gmra.mxu0 %v11681
      %v11793 = vpop.f32.mrf.mxu0
      %v11794 = vadd.f32 0.0, %v11793
      %11795 = vdwg.mxu0
      %v11796 = vadd.f32 %v11517, %v11701
      %v11797 = vadd.f32 %v11518, %v11704
      %v11798 = vadd.f32 %v11519, %v11707
      %v11799 = vadd.f32 %v11520, %v11710
      %v11800 = vadd.f32 %v11521, %v11713
      %v11801 = vadd.f32 %v11522, %v11716
      %v11802 = vadd.f32 %v11523, %v11719
      %v11803 = vadd.f32 %v11524, %v11722
      %v11804 = vadd.f32 %v11525, %v11725
      %v11805 = vadd.f32 %v11526, %v11728
      %v11806 = vadd.f32 %v11527, %v11731
      %v11807 = vadd.f32 %v11528, %v11734
      %v11808 = vadd.f32 %v11529, %v11737
      %v11809 = vadd.f32 %v11530, %v11740
      %v11810 = vadd.f32 %v11531, %v11743
      %v11811 = vadd.f32 %v11532, %v11746
      %v11812 = vadd.f32 %v11533, %v11749
      %v11813 = vadd.f32 %v11534, %v11752
      %v11814 = vadd.f32 %v11535, %v11755
      %v11815 = vadd.f32 %v11536, %v11758
      %v11816 = vadd.f32 %v11537, %v11761
      %v11817 = vadd.f32 %v11538, %v11764
      %v11818 = vadd.f32 %v11539, %v11767
      %v11819 = vadd.f32 %v11540, %v11770
      %v11820 = vadd.f32 %v11541, %v11773
      %v11821 = vadd.f32 %v11542, %v11776
      %v11822 = vadd.f32 %v11543, %v11779
      %v11823 = vadd.f32 %v11544, %v11782
      %v11824 = vadd.f32 %v11545, %v11785
      %v11825 = vadd.f32 %v11546, %v11788
      %v11826 = vadd.f32 %v11547, %v11791
      %v11827 = vadd.f32 %v11548, %v11794
      %v11828 = vld [vmem:[%s11549 + $0x8] sm:$0xff]
      %v11829 = vld [vmem:[%s11549 + $0x10] sm:$0xff]
      %v11830 = vld [vmem:[%s11549 + $0x28] sm:$0xff]
      %v11831 = vld [vmem:[%s11549 + $0x30] sm:$0xff]
      %v11832 = vld [vmem:[%s11549 + $0x48] sm:$0xff]
      %v11833 = vld [vmem:[%s11549 + $0x50] sm:$0xff]
      %v11834 = vld [vmem:[%s11549 + $0x68] sm:$0xff]
      %v11835 = vld [vmem:[%s11549 + $0x70] sm:$0xff]
      %v11836 = vld [vmem:[%s11549 + $0x88] sm:$0xff]
      %v11837 = vld [vmem:[%s11549 + $0x90] sm:$0xff]
      %v11838 = vld [vmem:[%s11549 + $0xa8] sm:$0xff]
      %v11839 = vld [vmem:[%s11549 + $0xb0] sm:$0xff]
      %v11840 = vld [vmem:[%s11549 + $0xc8] sm:$0xff]
      %v11841 = vld [vmem:[%s11549 + $0xd0] sm:$0xff]
      %v11842 = vld [vmem:[%s11549 + $0xe8] sm:$0xff]
      %v11843 = vld [vmem:[%s11549 + $0xf0] sm:$0xff]
      %v11844 = vld [vmem:[%s11549 + $0x108] sm:$0xff]
      %v11845 = vld [vmem:[%s11549 + $0x110] sm:$0xff]
      %v11846 = vld [vmem:[%s11549 + $0x128] sm:$0xff]
      %v11847 = vld [vmem:[%s11549 + $0x130] sm:$0xff]
      %v11848 = vld [vmem:[%s11549 + $0x148] sm:$0xff]
      %v11849 = vld [vmem:[%s11549 + $0x150] sm:$0xff]
      %v11850 = vld [vmem:[%s11549 + $0x168] sm:$0xff]
      %v11851 = vld [vmem:[%s11549 + $0x170] sm:$0xff]
      %v11852 = vld [vmem:[%s11549 + $0x188] sm:$0xff]
      %v11853 = vld [vmem:[%s11549 + $0x190] sm:$0xff]
      %v11854 = vld [vmem:[%s11549 + $0x1a8] sm:$0xff]
      %v11855 = vld [vmem:[%s11549 + $0x1b0] sm:$0xff]
      %v11856 = vld [vmem:[%s11549 + $0x1c8] sm:$0xff]
      %v11857 = vld [vmem:[%s11549 + $0x1d0] sm:$0xff]
      %v11858 = vld [vmem:[%s11549 + $0x1e8] sm:$0xff]
      %v11859 = vld [vmem:[%s11549 + $0x1f0] sm:$0xff]
      %s11860 = scalar_lea.vmem %s8, 224
      %v11861 = vld [vmem:[%s11860] sm:$0xff]
      %v11862 = vld [vmem:[%s11860 + $0x8] sm:$0xff]
      %v11863 = vld [vmem:[%s11860 + $0x10] sm:$0xff]
      %v11864 = vld [vmem:[%s11860 + $0x18] sm:$0xff]
      %v11866 = vsel %vm9840, %v11828, 0
      %v11869 = vsel %vm9840, %v11829, 0
      %v11872 = vsel %vm9840, %v11830, 0
      %v11875 = vsel %vm9840, %v11831, 0
      %v11878 = vsel %vm9840, %v11832, 0
      %v11881 = vsel %vm9840, %v11833, 0
      %v11884 = vsel %vm9840, %v11834, 0
      %v11887 = vsel %vm9840, %v11835, 0
      %v11890 = vsel %vm9840, %v11836, 0
      %v11893 = vsel %vm9840, %v11837, 0
      %v11896 = vsel %vm9840, %v11838, 0
      %v11899 = vsel %vm9840, %v11839, 0
      %v11902 = vsel %vm9840, %v11840, 0
      %v11905 = vsel %vm9840, %v11841, 0
      %v11908 = vsel %vm9840, %v11842, 0
      %v11911 = vsel %vm9840, %v11843, 0
      %v11914 = vsel %vm9840, %v11844, 0
      %v11917 = vsel %vm9840, %v11845, 0
      %v11920 = vsel %vm9840, %v11846, 0
      %v11923 = vsel %vm9840, %v11847, 0
      %v11926 = vsel %vm9840, %v11848, 0
      %v11929 = vsel %vm9840, %v11849, 0
      %v11932 = vsel %vm9840, %v11850, 0
      %v11935 = vsel %vm9840, %v11851, 0
      %v11938 = vsel %vm9840, %v11852, 0
      %v11941 = vsel %vm9840, %v11853, 0
      %v11944 = vsel %vm9840, %v11854, 0
      %v11947 = vsel %vm9840, %v11855, 0
      %v11950 = vsel %vm9840, %v11856, 0
      %v11953 = vsel %vm9840, %v11857, 0
      %v11956 = vsel %vm9840, %v11858, 0
      %v11959 = vsel %vm9840, %v11859, 0
      %11961 = vmatpush.msra.mxu0 0.0
      %11962 = vmatpush.msra.mxu0 0.0
      %11963 = vmatpush.msra.mxu0 0.0
      %11964 = vmatpush.msra.mxu0 0.0
      %11965 = vmatpush.msra.mxu0 0.0
      %11966 = vmatpush.msra.mxu0 0.0
      %11967 = vmatpush.msra.mxu0 0.0
      %11968 = vmatpush.msra.mxu0 0.0
      %11969 = vmatpush.msra.mxu0 0.0
      %11970 = vmatpush.msra.mxu0 0.0
      %11971 = vmatpush.msra.mxu0 0.0
      %11972 = vmatpush.msra.mxu0 0.0
      %11973 = vmatpush.msra.mxu0 %v11864
      %11974 = vmatpush.msra.mxu0 %v11863
      %11975 = vmatpush.msra.mxu0 %v11862
      %11976 = vmatpush.msra.mxu0 %v11861
      %11977 = vmatmul.f32.gmra.mxu0 %v11866
      %v11978 = vpop.f32.mrf.mxu0
      %v11979 = vadd.f32 0.0, %v11978
      %11980 = vmatmul.f32.gmra.mxu0 %v11869
      %v11981 = vpop.f32.mrf.mxu0
      %v11982 = vadd.f32 0.0, %v11981
      %11983 = vmatmul.f32.gmra.mxu0 %v11872
      %v11984 = vpop.f32.mrf.mxu0
      %v11985 = vadd.f32 0.0, %v11984
      %11986 = vmatmul.f32.gmra.mxu0 %v11875
      %v11987 = vpop.f32.mrf.mxu0
      %v11988 = vadd.f32 0.0, %v11987
      %11989 = vmatmul.f32.gmra.mxu0 %v11878
      %v11990 = vpop.f32.mrf.mxu0
      %v11991 = vadd.f32 0.0, %v11990
      %11992 = vmatmul.f32.gmra.mxu0 %v11881
      %v11993 = vpop.f32.mrf.mxu0
      %v11994 = vadd.f32 0.0, %v11993
      %11995 = vmatmul.f32.gmra.mxu0 %v11884
      %v11996 = vpop.f32.mrf.mxu0
      %v11997 = vadd.f32 0.0, %v11996
      %11998 = vmatmul.f32.gmra.mxu0 %v11887
      %v11999 = vpop.f32.mrf.mxu0
      %v12000 = vadd.f32 0.0, %v11999
      %12001 = vmatmul.f32.gmra.mxu0 %v11890
      %v12002 = vpop.f32.mrf.mxu0
      %v12003 = vadd.f32 0.0, %v12002
      %12004 = vmatmul.f32.gmra.mxu0 %v11893
      %v12005 = vpop.f32.mrf.mxu0
      %v12006 = vadd.f32 0.0, %v12005
      %12007 = vmatmul.f32.gmra.mxu0 %v11896
      %v12008 = vpop.f32.mrf.mxu0
      %v12009 = vadd.f32 0.0, %v12008
      %12010 = vmatmul.f32.gmra.mxu0 %v11899
      %v12011 = vpop.f32.mrf.mxu0
      %v12012 = vadd.f32 0.0, %v12011
      %12013 = vmatmul.f32.gmra.mxu0 %v11902
      %v12014 = vpop.f32.mrf.mxu0
      %v12015 = vadd.f32 0.0, %v12014
      %12016 = vmatmul.f32.gmra.mxu0 %v11905
      %v12017 = vpop.f32.mrf.mxu0
      %v12018 = vadd.f32 0.0, %v12017
      %12019 = vmatmul.f32.gmra.mxu0 %v11908
      %v12020 = vpop.f32.mrf.mxu0
      %v12021 = vadd.f32 0.0, %v12020
      %12022 = vmatmul.f32.gmra.mxu0 %v11911
      %v12023 = vpop.f32.mrf.mxu0
      %v12024 = vadd.f32 0.0, %v12023
      %12025 = vmatmul.f32.gmra.mxu0 %v11914
      %v12026 = vpop.f32.mrf.mxu0
      %v12027 = vadd.f32 0.0, %v12026
      %12028 = vmatmul.f32.gmra.mxu0 %v11917
      %v12029 = vpop.f32.mrf.mxu0
      %v12030 = vadd.f32 0.0, %v12029
      %12031 = vmatmul.f32.gmra.mxu0 %v11920
      %v12032 = vpop.f32.mrf.mxu0
      %v12033 = vadd.f32 0.0, %v12032
      %12034 = vmatmul.f32.gmra.mxu0 %v11923
      %v12035 = vpop.f32.mrf.mxu0
      %v12036 = vadd.f32 0.0, %v12035
      %12037 = vmatmul.f32.gmra.mxu0 %v11926
      %v12038 = vpop.f32.mrf.mxu0
      %v12039 = vadd.f32 0.0, %v12038
      %12040 = vmatmul.f32.gmra.mxu0 %v11929
      %v12041 = vpop.f32.mrf.mxu0
      %v12042 = vadd.f32 0.0, %v12041
      %12043 = vmatmul.f32.gmra.mxu0 %v11932
      %v12044 = vpop.f32.mrf.mxu0
      %v12045 = vadd.f32 0.0, %v12044
      %12046 = vmatmul.f32.gmra.mxu0 %v11935
      %v12047 = vpop.f32.mrf.mxu0
      %v12048 = vadd.f32 0.0, %v12047
      %12049 = vmatmul.f32.gmra.mxu0 %v11938
      %v12050 = vpop.f32.mrf.mxu0
      %v12051 = vadd.f32 0.0, %v12050
      %12052 = vmatmul.f32.gmra.mxu0 %v11941
      %v12053 = vpop.f32.mrf.mxu0
      %v12054 = vadd.f32 0.0, %v12053
      %12055 = vmatmul.f32.gmra.mxu0 %v11944
      %v12056 = vpop.f32.mrf.mxu0
      %v12057 = vadd.f32 0.0, %v12056
      %12058 = vmatmul.f32.gmra.mxu0 %v11947
      %v12059 = vpop.f32.mrf.mxu0
      %v12060 = vadd.f32 0.0, %v12059
      %12061 = vmatmul.f32.gmra.mxu0 %v11950
      %v12062 = vpop.f32.mrf.mxu0
      %v12063 = vadd.f32 0.0, %v12062
      %12064 = vmatmul.f32.gmra.mxu0 %v11953
      %v12065 = vpop.f32.mrf.mxu0
      %v12066 = vadd.f32 0.0, %v12065
      %12067 = vmatmul.f32.gmra.mxu0 %v11956
      %v12068 = vpop.f32.mrf.mxu0
      %v12069 = vadd.f32 0.0, %v12068
      %12070 = vmatmul.f32.gmra.mxu0 %v11959
      %v12071 = vpop.f32.mrf.mxu0
      %v12072 = vadd.f32 0.0, %v12071
      %12073 = vdwg.mxu0
      %v12074 = vadd.f32 %v11796, %v11979
      %v12075 = vadd.f32 %v11797, %v11982
      %v12076 = vadd.f32 %v11798, %v11985
      %v12077 = vadd.f32 %v11799, %v11988
      %v12078 = vadd.f32 %v11800, %v11991
      %v12079 = vadd.f32 %v11801, %v11994
      %v12080 = vadd.f32 %v11802, %v11997
      %v12081 = vadd.f32 %v11803, %v12000
      %v12082 = vadd.f32 %v11804, %v12003
      %v12083 = vadd.f32 %v11805, %v12006
      %v12084 = vadd.f32 %v11806, %v12009
      %v12085 = vadd.f32 %v11807, %v12012
      %v12086 = vadd.f32 %v11808, %v12015
      %v12087 = vadd.f32 %v11809, %v12018
      %v12088 = vadd.f32 %v11810, %v12021
      %v12089 = vadd.f32 %v11811, %v12024
      %v12090 = vadd.f32 %v11812, %v12027
      %v12091 = vadd.f32 %v11813, %v12030
      %v12092 = vadd.f32 %v11814, %v12033
      %v12093 = vadd.f32 %v11815, %v12036
      %v12094 = vadd.f32 %v11816, %v12039
      %v12095 = vadd.f32 %v11817, %v12042
      %v12096 = vadd.f32 %v11818, %v12045
      %v12097 = vadd.f32 %v11819, %v12048
      %v12098 = vadd.f32 %v11820, %v12051
      %v12099 = vadd.f32 %v11821, %v12054
      %v12100 = vadd.f32 %v11822, %v12057
      %v12101 = vadd.f32 %v11823, %v12060
      %v12102 = vadd.f32 %v11824, %v12063
      %v12103 = vadd.f32 %v11825, %v12066
      %v12104 = vadd.f32 %v11826, %v12069
      %v12105 = vadd.f32 %v11827, %v12072
      %v12106 = vld [vmem:[%s11549 + $0x9] sm:$0xff]
      %v12107 = vld [vmem:[%s11549 + $0x11] sm:$0xff]
      %v12108 = vld [vmem:[%s11549 + $0x29] sm:$0xff]
      %v12109 = vld [vmem:[%s11549 + $0x31] sm:$0xff]
      %v12110 = vld [vmem:[%s11549 + $0x49] sm:$0xff]
      %v12111 = vld [vmem:[%s11549 + $0x51] sm:$0xff]
      %v12112 = vld [vmem:[%s11549 + $0x69] sm:$0xff]
      %v12113 = vld [vmem:[%s11549 + $0x71] sm:$0xff]
      %v12114 = vld [vmem:[%s11549 + $0x89] sm:$0xff]
      %v12115 = vld [vmem:[%s11549 + $0x91] sm:$0xff]
      %v12116 = vld [vmem:[%s11549 + $0xa9] sm:$0xff]
      %v12117 = vld [vmem:[%s11549 + $0xb1] sm:$0xff]
      %v12118 = vld [vmem:[%s11549 + $0xc9] sm:$0xff]
      %v12119 = vld [vmem:[%s11549 + $0xd1] sm:$0xff]
      %v12120 = vld [vmem:[%s11549 + $0xe9] sm:$0xff]
      %v12121 = vld [vmem:[%s11549 + $0xf1] sm:$0xff]
      %v12122 = vld [vmem:[%s11549 + $0x109] sm:$0xff]
      %v12123 = vld [vmem:[%s11549 + $0x111] sm:$0xff]
      %v12124 = vld [vmem:[%s11549 + $0x129] sm:$0xff]
      %v12125 = vld [vmem:[%s11549 + $0x131] sm:$0xff]
      %v12126 = vld [vmem:[%s11549 + $0x149] sm:$0xff]
      %v12127 = vld [vmem:[%s11549 + $0x151] sm:$0xff]
      %v12128 = vld [vmem:[%s11549 + $0x169] sm:$0xff]
      %v12129 = vld [vmem:[%s11549 + $0x171] sm:$0xff]
      %v12130 = vld [vmem:[%s11549 + $0x189] sm:$0xff]
      %v12131 = vld [vmem:[%s11549 + $0x191] sm:$0xff]
      %v12132 = vld [vmem:[%s11549 + $0x1a9] sm:$0xff]
      %v12133 = vld [vmem:[%s11549 + $0x1b1] sm:$0xff]
      %v12134 = vld [vmem:[%s11549 + $0x1c9] sm:$0xff]
      %v12135 = vld [vmem:[%s11549 + $0x1d1] sm:$0xff]
      %v12136 = vld [vmem:[%s11549 + $0x1e9] sm:$0xff]
      %v12137 = vld [vmem:[%s11549 + $0x1f1] sm:$0xff]
      %s12138 = scalar_lea.vmem %s8, 256
      %v12139 = vld [vmem:[%s12138] sm:$0xff]
      %v12140 = vld [vmem:[%s12138 + $0x8] sm:$0xff]
      %v12141 = vld [vmem:[%s12138 + $0x10] sm:$0xff]
      %v12142 = vld [vmem:[%s12138 + $0x18] sm:$0xff]
      %v12144 = vsel %vm9840, %v12106, 0
      %v12147 = vsel %vm9840, %v12107, 0
      %v12150 = vsel %vm9840, %v12108, 0
      %v12153 = vsel %vm9840, %v12109, 0
      %v12156 = vsel %vm9840, %v12110, 0
      %v12159 = vsel %vm9840, %v12111, 0
      %v12162 = vsel %vm9840, %v12112, 0
      %v12165 = vsel %vm9840, %v12113, 0
      %v12168 = vsel %vm9840, %v12114, 0
      %v12171 = vsel %vm9840, %v12115, 0
      %v12174 = vsel %vm9840, %v12116, 0
      %v12177 = vsel %vm9840, %v12117, 0
      %v12180 = vsel %vm9840, %v12118, 0
      %v12183 = vsel %vm9840, %v12119, 0
      %v12186 = vsel %vm9840, %v12120, 0
      %v12189 = vsel %vm9840, %v12121, 0
      %v12192 = vsel %vm9840, %v12122, 0
      %v12195 = vsel %vm9840, %v12123, 0
      %v12198 = vsel %vm9840, %v12124, 0
      %v12201 = vsel %vm9840, %v12125, 0
      %v12204 = vsel %vm9840, %v12126, 0
      %v12207 = vsel %vm9840, %v12127, 0
      %v12210 = vsel %vm9840, %v12128, 0
      %v12213 = vsel %vm9840, %v12129, 0
      %v12216 = vsel %vm9840, %v12130, 0
      %v12219 = vsel %vm9840, %v12131, 0
      %v12222 = vsel %vm9840, %v12132, 0
      %v12225 = vsel %vm9840, %v12133, 0
      %v12228 = vsel %vm9840, %v12134, 0
      %v12231 = vsel %vm9840, %v12135, 0
      %v12234 = vsel %vm9840, %v12136, 0
      %v12237 = vsel %vm9840, %v12137, 0
      %12239 = vmatpush.msra.mxu0 0.0
      %12240 = vmatpush.msra.mxu0 0.0
      %12241 = vmatpush.msra.mxu0 0.0
      %12242 = vmatpush.msra.mxu0 0.0
      %12243 = vmatpush.msra.mxu0 0.0
      %12244 = vmatpush.msra.mxu0 0.0
      %12245 = vmatpush.msra.mxu0 0.0
      %12246 = vmatpush.msra.mxu0 0.0
      %12247 = vmatpush.msra.mxu0 0.0
      %12248 = vmatpush.msra.mxu0 0.0
      %12249 = vmatpush.msra.mxu0 0.0
      %12250 = vmatpush.msra.mxu0 0.0
      %12251 = vmatpush.msra.mxu0 %v12142
      %12252 = vmatpush.msra.mxu0 %v12141
      %12253 = vmatpush.msra.mxu0 %v12140
      %12254 = vmatpush.msra.mxu0 %v12139
      %12255 = vmatmul.f32.gmra.mxu0 %v12144
      %v12256 = vpop.f32.mrf.mxu0
      %v12257 = vadd.f32 0.0, %v12256
      %12258 = vmatmul.f32.gmra.mxu0 %v12147
      %v12259 = vpop.f32.mrf.mxu0
      %v12260 = vadd.f32 0.0, %v12259
      %12261 = vmatmul.f32.gmra.mxu0 %v12150
      %v12262 = vpop.f32.mrf.mxu0
      %v12263 = vadd.f32 0.0, %v12262
      %12264 = vmatmul.f32.gmra.mxu0 %v12153
      %v12265 = vpop.f32.mrf.mxu0
      %v12266 = vadd.f32 0.0, %v12265
      %12267 = vmatmul.f32.gmra.mxu0 %v12156
      %v12268 = vpop.f32.mrf.mxu0
      %v12269 = vadd.f32 0.0, %v12268
      %12270 = vmatmul.f32.gmra.mxu0 %v12159
      %v12271 = vpop.f32.mrf.mxu0
      %v12272 = vadd.f32 0.0, %v12271
      %12273 = vmatmul.f32.gmra.mxu0 %v12162
      %v12274 = vpop.f32.mrf.mxu0
      %v12275 = vadd.f32 0.0, %v12274
      %12276 = vmatmul.f32.gmra.mxu0 %v12165
      %v12277 = vpop.f32.mrf.mxu0
      %v12278 = vadd.f32 0.0, %v12277
      %12279 = vmatmul.f32.gmra.mxu0 %v12168
      %v12280 = vpop.f32.mrf.mxu0
      %v12281 = vadd.f32 0.0, %v12280
      %12282 = vmatmul.f32.gmra.mxu0 %v12171
      %v12283 = vpop.f32.mrf.mxu0
      %v12284 = vadd.f32 0.0, %v12283
      %12285 = vmatmul.f32.gmra.mxu0 %v12174
      %v12286 = vpop.f32.mrf.mxu0
      %v12287 = vadd.f32 0.0, %v12286
      %12288 = vmatmul.f32.gmra.mxu0 %v12177
      %v12289 = vpop.f32.mrf.mxu0
      %v12290 = vadd.f32 0.0, %v12289
      %12291 = vmatmul.f32.gmra.mxu0 %v12180
      %v12292 = vpop.f32.mrf.mxu0
      %v12293 = vadd.f32 0.0, %v12292
      %12294 = vmatmul.f32.gmra.mxu0 %v12183
      %v12295 = vpop.f32.mrf.mxu0
      %v12296 = vadd.f32 0.0, %v12295
      %12297 = vmatmul.f32.gmra.mxu0 %v12186
      %v12298 = vpop.f32.mrf.mxu0
      %v12299 = vadd.f32 0.0, %v12298
      %12300 = vmatmul.f32.gmra.mxu0 %v12189
      %v12301 = vpop.f32.mrf.mxu0
      %v12302 = vadd.f32 0.0, %v12301
      %12303 = vmatmul.f32.gmra.mxu0 %v12192
      %v12304 = vpop.f32.mrf.mxu0
      %v12305 = vadd.f32 0.0, %v12304
      %12306 = vmatmul.f32.gmra.mxu0 %v12195
      %v12307 = vpop.f32.mrf.mxu0
      %v12308 = vadd.f32 0.0, %v12307
      %12309 = vmatmul.f32.gmra.mxu0 %v12198
      %v12310 = vpop.f32.mrf.mxu0
      %v12311 = vadd.f32 0.0, %v12310
      %12312 = vmatmul.f32.gmra.mxu0 %v12201
      %v12313 = vpop.f32.mrf.mxu0
      %v12314 = vadd.f32 0.0, %v12313
      %12315 = vmatmul.f32.gmra.mxu0 %v12204
      %v12316 = vpop.f32.mrf.mxu0
      %v12317 = vadd.f32 0.0, %v12316
      %12318 = vmatmul.f32.gmra.mxu0 %v12207
      %v12319 = vpop.f32.mrf.mxu0
      %v12320 = vadd.f32 0.0, %v12319
      %12321 = vmatmul.f32.gmra.mxu0 %v12210
      %v12322 = vpop.f32.mrf.mxu0
      %v12323 = vadd.f32 0.0, %v12322
      %12324 = vmatmul.f32.gmra.mxu0 %v12213
      %v12325 = vpop.f32.mrf.mxu0
      %v12326 = vadd.f32 0.0, %v12325
      %12327 = vmatmul.f32.gmra.mxu0 %v12216
      %v12328 = vpop.f32.mrf.mxu0
      %v12329 = vadd.f32 0.0, %v12328
      %12330 = vmatmul.f32.gmra.mxu0 %v12219
      %v12331 = vpop.f32.mrf.mxu0
      %v12332 = vadd.f32 0.0, %v12331
      %12333 = vmatmul.f32.gmra.mxu0 %v12222
      %v12334 = vpop.f32.mrf.mxu0
      %v12335 = vadd.f32 0.0, %v12334
      %12336 = vmatmul.f32.gmra.mxu0 %v12225
      %v12337 = vpop.f32.mrf.mxu0
      %v12338 = vadd.f32 0.0, %v12337
      %12339 = vmatmul.f32.gmra.mxu0 %v12228
      %v12340 = vpop.f32.mrf.mxu0
      %v12341 = vadd.f32 0.0, %v12340
      %12342 = vmatmul.f32.gmra.mxu0 %v12231
      %v12343 = vpop.f32.mrf.mxu0
      %v12344 = vadd.f32 0.0, %v12343
      %12345 = vmatmul.f32.gmra.mxu0 %v12234
      %v12346 = vpop.f32.mrf.mxu0
      %v12347 = vadd.f32 0.0, %v12346
      %12348 = vmatmul.f32.gmra.mxu0 %v12237
      %v12349 = vpop.f32.mrf.mxu0
      %v12350 = vadd.f32 0.0, %v12349
      %12351 = vdwg.mxu0
      %v12352 = vadd.f32 %v12074, %v12257
      %v12353 = vadd.f32 %v12075, %v12260
      %v12354 = vadd.f32 %v12076, %v12263
      %v12355 = vadd.f32 %v12077, %v12266
      %v12356 = vadd.f32 %v12078, %v12269
      %v12357 = vadd.f32 %v12079, %v12272
      %v12358 = vadd.f32 %v12080, %v12275
      %v12359 = vadd.f32 %v12081, %v12278
      %v12360 = vadd.f32 %v12082, %v12281
      %v12361 = vadd.f32 %v12083, %v12284
      %v12362 = vadd.f32 %v12084, %v12287
      %v12363 = vadd.f32 %v12085, %v12290
      %v12364 = vadd.f32 %v12086, %v12293
      %v12365 = vadd.f32 %v12087, %v12296
      %v12366 = vadd.f32 %v12088, %v12299
      %v12367 = vadd.f32 %v12089, %v12302
      %v12368 = vadd.f32 %v12090, %v12305
      %v12369 = vadd.f32 %v12091, %v12308
      %v12370 = vadd.f32 %v12092, %v12311
      %v12371 = vadd.f32 %v12093, %v12314
      %v12372 = vadd.f32 %v12094, %v12317
      %v12373 = vadd.f32 %v12095, %v12320
      %v12374 = vadd.f32 %v12096, %v12323
      %v12375 = vadd.f32 %v12097, %v12326
      %v12376 = vadd.f32 %v12098, %v12329
      %v12377 = vadd.f32 %v12099, %v12332
      %v12378 = vadd.f32 %v12100, %v12335
      %v12379 = vadd.f32 %v12101, %v12338
      %v12380 = vadd.f32 %v12102, %v12341
      %v12381 = vadd.f32 %v12103, %v12344
      %v12382 = vadd.f32 %v12104, %v12347
      %v12383 = vadd.f32 %v12105, %v12350
      %v12384 = vld [vmem:[%s9] sm:$0x1]
      %v12386 = vperm.slane %v12384, 0
      %v12388 = vadd.f32 %v12352, %v12386
      %v12389 = vadd.f32 %v12353, %v12386
      %v12390 = vadd.f32 %v12354, %v12386
      %v12391 = vadd.f32 %v12355, %v12386
      %v12392 = vadd.f32 %v12356, %v12386
      %v12393 = vadd.f32 %v12357, %v12386
      %v12394 = vadd.f32 %v12358, %v12386
      %v12395 = vadd.f32 %v12359, %v12386
      %v12396 = vadd.f32 %v12360, %v12386
      %v12397 = vadd.f32 %v12361, %v12386
      %v12398 = vadd.f32 %v12362, %v12386
      %v12399 = vadd.f32 %v12363, %v12386
      %v12400 = vadd.f32 %v12364, %v12386
      %v12401 = vadd.f32 %v12365, %v12386
      %v12402 = vadd.f32 %v12366, %v12386
      %v12403 = vadd.f32 %v12367, %v12386
      %v12404 = vadd.f32 %v12368, %v12386
      %v12405 = vadd.f32 %v12369, %v12386
      %v12406 = vadd.f32 %v12370, %v12386
      %v12407 = vadd.f32 %v12371, %v12386
      %v12408 = vadd.f32 %v12372, %v12386
      %v12409 = vadd.f32 %v12373, %v12386
      %v12410 = vadd.f32 %v12374, %v12386
      %v12411 = vadd.f32 %v12375, %v12386
      %v12412 = vadd.f32 %v12376, %v12386
      %v12413 = vadd.f32 %v12377, %v12386
      %v12414 = vadd.f32 %v12378, %v12386
      %v12415 = vadd.f32 %v12379, %v12386
      %v12416 = vadd.f32 %v12380, %v12386
      %v12417 = vadd.f32 %v12381, %v12386
      %v12418 = vadd.f32 %v12382, %v12386
      %v12419 = vadd.f32 %v12383, %v12386
      %vm12420 = vcmask 31744
      %12421 = vst.msk [vmem:[%s359] sm:$0xff] %vm12420, %v12388
      %12422 = vst.msk [vmem:[%s359 + $0x8] sm:$0xff] %vm12420, %v12389
      %12423 = vst.msk [vmem:[%s359 + $0x10] sm:$0xff] %vm12420, %v12390
      %12424 = vst.msk [vmem:[%s359 + $0x18] sm:$0xff] %vm12420, %v12391
      %12425 = vst.msk [vmem:[%s359 + $0x20] sm:$0xff] %vm12420, %v12392
      %12426 = vst.msk [vmem:[%s359 + $0x28] sm:$0xff] %vm12420, %v12393
      %12427 = vst.msk [vmem:[%s359 + $0x30] sm:$0xff] %vm12420, %v12394
      %12428 = vst.msk [vmem:[%s359 + $0x38] sm:$0xff] %vm12420, %v12395
      %12429 = vst.msk [vmem:[%s359 + $0x40] sm:$0xff] %vm12420, %v12396
      %12430 = vst.msk [vmem:[%s359 + $0x48] sm:$0xff] %vm12420, %v12397
      %12431 = vst.msk [vmem:[%s359 + $0x50] sm:$0xff] %vm12420, %v12398
      %12432 = vst.msk [vmem:[%s359 + $0x58] sm:$0xff] %vm12420, %v12399
      %12433 = vst.msk [vmem:[%s359 + $0x60] sm:$0xff] %vm12420, %v12400
      %12434 = vst.msk [vmem:[%s359 + $0x68] sm:$0xff] %vm12420, %v12401
      %12435 = vst.msk [vmem:[%s359 + $0x70] sm:$0xff] %vm12420, %v12402
      %12436 = vst.msk [vmem:[%s359 + $0x78] sm:$0xff] %vm12420, %v12403
      %12437 = vst.msk [vmem:[%s359 + $0x80] sm:$0xff] %vm12420, %v12404
      %12438 = vst.msk [vmem:[%s359 + $0x88] sm:$0xff] %vm12420, %v12405
      %12439 = vst.msk [vmem:[%s359 + $0x90] sm:$0xff] %vm12420, %v12406
      %12440 = vst.msk [vmem:[%s359 + $0x98] sm:$0xff] %vm12420, %v12407
      %12441 = vst.msk [vmem:[%s359 + $0xa0] sm:$0xff] %vm12420, %v12408
      %12442 = vst.msk [vmem:[%s359 + $0xa8] sm:$0xff] %vm12420, %v12409
      %12443 = vst.msk [vmem:[%s359 + $0xb0] sm:$0xff] %vm12420, %v12410
      %12444 = vst.msk [vmem:[%s359 + $0xb8] sm:$0xff] %vm12420, %v12411
      %12445 = vst.msk [vmem:[%s359 + $0xc0] sm:$0xff] %vm12420, %v12412
      %12446 = vst.msk [vmem:[%s359 + $0xc8] sm:$0xff] %vm12420, %v12413
      %12447 = vst.msk [vmem:[%s359 + $0xd0] sm:$0xff] %vm12420, %v12414
      %12448 = vst.msk [vmem:[%s359 + $0xd8] sm:$0xff] %vm12420, %v12415
      %12449 = vst.msk [vmem:[%s359 + $0xe0] sm:$0xff] %vm12420, %v12416
      %12450 = vst.msk [vmem:[%s359 + $0xe8] sm:$0xff] %vm12420, %v12417
      %12451 = vst.msk [vmem:[%s359 + $0xf0] sm:$0xff] %vm12420, %v12418
      %12452 = vst.msk [vmem:[%s359 + $0xf8] sm:$0xff] %vm12420, %v12419
      %p12453 = scmp.lt.s32.totalorder %s21, 1
      %s12454 = scalar_select %p12453, %s21, 1
      %s12455 = smul.addr %s12454, 32
      %s12456 = smul.addr %s12455, 8
      %s12457 = scalar_lea.vmem %s10, %s12456
      // Predicated region
      $region61: #{net_forward.1} parent=59 // pred_check
        %p12458 = pneg %p254
      $region62: #{net_forward.1} parent=59 // pred_check_branch
        %12460 = sbr.rel (%p12458) target = $region64
      $region63: #{net_forward.1} parent=59 // pred_region
        _
      $region64: #{net_forward.1} parent=59 // pred_fallthru
        _
    $region60: #{net_forward.1} parent=5 // pred_fallthru
      _
    %p12461 = scmp.le.s32.totalorder 2, %s16
    // Predicated region
    $region65: #{net_forward.1} parent=5 // pred_check
      %p12462 = pneg %p12461
    $region66: #{net_forward.1} parent=5 // pred_check_branch
      %12464 = sbr.rel (%p12462) target = $region68
    $region67: #{net_forward.1} parent=5 // pred_region
      %s12465 = ssub.s32 %s16, 2
      // Predicated region
      $region69: #{net_forward.1} parent=67 // pred_check
        %p12466 = pneg %p260
      $region70: #{net_forward.1} parent=67 // pred_check_branch
        %12468 = sbr.rel (%p12466) target = $region72
      $region71: #{net_forward.1} parent=67 // pred_region
        %p12469 = scmp.lt.s32.totalorder %s22, 1
        %s12470 = scalar_select %p12469, %s22, 1
        %s12471 = smul.addr %s12470, 32
        %s12472 = smul.addr %s12471, 8
        %s12473 = scalar_lea.vmem %s10, %s12472
      $region72: #{net_forward.1} parent=67 // pred_fallthru
        _
    $region68: #{net_forward.1} parent=5 // pred_fallthru
      _
  $region6: #{net_forward.1} parent=0 // loop_footer
    %s20 = sadd.s32 1, %s16
  $region7: #{net_forward.1} parent=0 // loop_footer_branch
    %15 = sbr.rel target = $region3
  $region8: #{net_forward.1} parent=0 // loop_exit
    _

</llo_original>
